<compile_context>
chip_gen: v7x
topology: tpu7x:2x2x1
jax: 0.10.0
libtpu: 0.0.40
codegen_flags: <defaults>
</compile_context>

<pallas_src>
import jax
import jax.numpy as jnp
from jax.experimental import pallas as pl
from jax.experimental.pallas import tpu as pltpu


# --------------------------- Pallas kernels ---------------------------------

def fused_conv_bn_pool_kernel(p_ref, w_ref, g_ref, be_ref, o_ref):
    """Conv-as-GEMM + train-mode BN + ReLU + 2x2 max-pool, fully in VMEM.

    p_ref : (4, Q, Kp) bf16  im2col patches; leading axis is position
            (2*di + dj) inside each 2x2 pool window, rows ordered (b, h', w').
    w_ref : (Kp, C)    bf16  conv weights (HWIO flattened, K zero-padded).
    g_ref : (1, C)     f32   BN gamma.
    be_ref: (1, C)     f32   BN beta.
    o_ref : (Q, C)     f32   pooled output, rows ordered (b, h', w').
    """
    w = w_ref[...]
    c0 = jnp.dot(p_ref[0], w, preferred_element_type=jnp.float32)
    c1 = jnp.dot(p_ref[1], w, preferred_element_type=jnp.float32)
    c2 = jnp.dot(p_ref[2], w, preferred_element_type=jnp.float32)
    c3 = jnp.dot(p_ref[3], w, preferred_element_type=jnp.float32)

    # Per-channel batch statistics over all B*H*W conv outputs (f32).
    n = 4.0 * c0.shape[0]
    s = (jnp.sum(c0, axis=0, keepdims=True) + jnp.sum(c1, axis=0, keepdims=True)
         + jnp.sum(c2, axis=0, keepdims=True) + jnp.sum(c3, axis=0, keepdims=True))
    q = (jnp.sum(c0 * c0, axis=0, keepdims=True)
         + jnp.sum(c1 * c1, axis=0, keepdims=True)
         + jnp.sum(c2 * c2, axis=0, keepdims=True)
         + jnp.sum(c3 * c3, axis=0, keepdims=True))
    mean = s / n
    var = q / n - mean * mean                       # biased var (BN train mode)
    scale = g_ref[...] * jax.lax.rsqrt(var + 1e-5)
    shift = be_ref[...] - mean * scale

    y0 = jnp.maximum(c0 * scale + shift, 0.0)
    y1 = jnp.maximum(c1 * scale + shift, 0.0)
    y2 = jnp.maximum(c2 * scale + shift, 0.0)
    y3 = jnp.maximum(c3 * scale + shift, 0.0)
    o_ref[...] = jnp.maximum(jnp.maximum(y0, y1), jnp.maximum(y2, y3))


def linear_kernel(x_ref, w_ref, b_ref, o_ref):
    o_ref[...] = jnp.dot(x_ref[...], w_ref[...],
                         preferred_element_type=jnp.float32) + b_ref[...]


# --------------------------- Pallas wrappers ---------------------------------

def fused_conv_bn_pool(patches4, w2d, gamma, beta):
    _, Q, Kp = patches4.shape
    C = w2d.shape[1]
    return pl.pallas_call(
        fused_conv_bn_pool_kernel,
        out_shape=jax.ShapeDtypeStruct((Q, C), jnp.float32),
        grid=(1,),
        in_specs=[pl.BlockSpec((4, Q, Kp), lambda i: (0, 0, 0)),
                  pl.BlockSpec((Kp, C), lambda i: (0, 0)),
                  pl.BlockSpec((1, C), lambda i: (0, 0)),
                  pl.BlockSpec((1, C), lambda i: (0, 0))],
        out_specs=pl.BlockSpec((Q, C), lambda i: (0, 0)),
        compiler_params=pltpu.CompilerParams(
            dimension_semantics=("arbitrary",)),
    )(patches4, w2d, gamma, beta)


def linear(x, w, b):
    B, K = x.shape
    N = w.shape[1]
    return pl.pallas_call(
        linear_kernel,
        out_shape=jax.ShapeDtypeStruct((B, N), jnp.float32),
        grid=(1,),
        in_specs=[pl.BlockSpec((B, K), lambda i: (0, 0)),
                  pl.BlockSpec((K, N), lambda i: (0, 0)),
                  pl.BlockSpec((1, N), lambda i: (0, 0))],
        out_specs=pl.BlockSpec((B, N), lambda i: (0, 0)),
    )(x, w, b)


# --------------------------- JAX glue ----------------------------------------

def im2col_pool_groups(x, k=5, pad=2):
    """(B, H, W, C) -> (4, B*(H//2)*(W//2), k*k*C) im2col patches.

    Leading axis enumerates the 4 positions (2*di + dj) of each 2x2 pool
    window; rows are ordered (b, h', w'); feature order is (kh, kw, ci),
    matching HWIO conv weights flattened to 2-D.
    """
    B, H, W, C = x.shape
    xp = jnp.pad(x, ((0, 0), (pad, pad), (pad, pad), (0, 0)))
    cols = [xp[:, kh:kh + H, kw:kw + W, :] for kh in range(k) for kw in range(k)]
    patches = jnp.stack(cols, axis=3).reshape(B, H, W, k * k * C)
    patches = patches.reshape(B, H // 2, 2, W // 2, 2, k * k * C)
    patches = jnp.transpose(patches, (2, 4, 0, 1, 3, 5))   # (di, dj, B, h', w', K)
    return patches.reshape(4, B * (H // 2) * (W // 2), k * k * C)


def conv_bn_relu_pool_layer(x_nhwc, w4, gamma, beta):
    # Conv bias is intentionally omitted here: training-mode BN subtracts the
    # per-channel batch mean, which cancels a per-channel bias exactly.
    B, H, W, Cin = x_nhwc.shape
    Cout = w4.shape[-1]
    K = 5 * 5 * Cin
    Kp = ((K + 127) // 128) * 128                 # pad K: 75 -> 128, 400 -> 512
    patches = im2col_pool_groups(x_nhwc)
    patches = jnp.pad(patches, ((0, 0), (0, 0), (0, Kp - K)))
    w2 = jnp.pad(w4.reshape(K, Cout), ((0, Kp - K), (0, 0)))
    pooled = fused_conv_bn_pool(patches.astype(jnp.bfloat16),
                                w2.astype(jnp.bfloat16), gamma, beta)
    return pooled.reshape(B, H // 2, W // 2, Cout)   # row-major split: free


def cnn_forward(x_nchw, params):
    x = jnp.transpose(x_nchw, (0, 2, 3, 1)).astype(jnp.float32)   # NCHW -> NHWC
    B = x.shape[0]

    y = conv_bn_relu_pool_layer(x, params['w1_4d'], params['g1'], params['be1'])
    y = conv_bn_relu_pool_layer(y, params['w2_4d'], params['g2'], params['be2'])

    # PyTorch flattens NCHW; fold that permutation into the FC weight rows
    # instead of transposing the activation at runtime.
    _, Hp, Wp, C2 = y.shape
    N = params['wfc'].shape[1]
    wfc_nhwc = (params['wfc'].reshape(C2, Hp, Wp, N)
                .transpose(1, 2, 0, 3).reshape(Hp * Wp * C2, N))
    feats = y.reshape(B, Hp * Wp * C2)               # NHWC flatten (free)
    return linear(feats, wfc_nhwc, params['bfc'])


# --------------------------- params ------------------------------------------

def init_params(key):
    ks = jax.random.split(key, 12)
    f32 = jnp.float32
    return {
        # conv weights generated directly in HWIO (kh, kw, Cin, Cout)
        'w1_4d': jax.random.normal(ks[0], (5, 5, 3, 16), f32) * 0.1,
        'b1':    jax.random.normal(ks[1], (1, 16), f32) * 0.1,
        'g1':    1.0 + 0.1 * jax.random.normal(ks[2], (1, 16), f32),
        'be1':   0.1 * jax.random.normal(ks[3], (1, 16), f32),
        'w2_4d': jax.random.normal(ks[4], (5, 5, 16, 32), f32) * 0.05,
        'b2':    jax.random.normal(ks[5], (1, 32), f32) * 0.1,
        'g2':    1.0 + 0.1 * jax.random.normal(ks[6], (1, 32), f32),
        'be2':   0.1 * jax.random.normal(ks[7], (1, 32), f32),
        'wfc':   jax.random.normal(ks[8], (8 * 8 * 32, 10), f32) * 0.02,
        'bfc':   jax.random.normal(ks[9], (1, 10), f32) * 0.1,
    }


# --------------------------- pure-JAX reference -------------------------------

def reference_forward(x_nchw, params):
    eps = 1e-5
    x = jnp.transpose(x_nchw, (0, 2, 3, 1)).astype(jnp.float32)

    def layer(x_nhwc, w4, b, g, be):
        y = jax.lax.conv_general_dilated(
            x_nhwc, w4, window_strides=(1, 1), padding=((2, 2), (2, 2)),
            dimension_numbers=('NHWC', 'HWIO', 'NHWC')) + b[0]
        n = y.shape[0] * y.shape[1] * y.shape[2]
        m = jnp.sum(y, axis=(0, 1, 2)) / n
        v = jnp.sum(y * y, axis=(0, 1, 2)) / n - m * m
        scale = g[0] * jax.lax.rsqrt(v + eps)
        y = jnp.maximum(y * scale + (be[0] - m * scale), 0.0)
        B, H, W, C = y.shape
        return y.reshape(B, H // 2, 2, W // 2, 2, C).max(axis=(2, 4))

    y = layer(x, params['w1_4d'], params['b1'], params['g1'], params['be1'])
    y = layer(y, params['w2_4d'], params['b2'], params['g2'], params['be2'])
    f = jnp.transpose(y, (0, 3, 1, 2)).reshape(y.shape[0], -1)
    return f @ params['wfc'] + params['bfc'][0]


# --------------------------- main ---------------------------------------------

if __name__ == "__main__":
    key = jax.random.PRNGKey(0)
    pkey, xkey = jax.random.split(key)
    params = init_params(pkey)
    # fc expects 8*8*32 features, so the module implies 3x32x32 inputs.
    x = jax.random.normal(xkey, (2, 3, 32, 32), jnp.float32)   # PyTorch NCHW input

    out = jax.jit(cnn_forward)(x, params)
    out = jax.block_until_ready(out)

    ref = reference_forward(x, params)
    assert out.shape == (2, 10), out.shape
    # bf16 MXU operands in the conv GEMMs vs the f32 reference -> 5e-2 tolerance.
    assert jnp.allclose(out, ref, rtol=5e-2, atol=5e-2), float(jnp.max(jnp.abs(out - ref)))

    print("KERNEL_OK")
</pallas_src>

<mosaic_0001>
module attributes {stable_mosaic.version = 11 : i64} {
  func.func @fused_conv_bn_pool_kernel(%arg0: i32, %arg1: memref<4x512x128xbf16, #tpu.memory_space<vmem>>, %arg2: memref<128x16xbf16, #tpu.memory_space<vmem>>, %arg3: memref<1x16xf32, #tpu.memory_space<vmem>>, %arg4: memref<1x16xf32, #tpu.memory_space<vmem>>, %arg5: memref<512x16xf32, #tpu.memory_space<vmem>>) attributes {dimension_semantics = [#tpu.dimension_semantics<arbitrary>], iteration_bounds = array<i64: 1>, scalar_prefetch = 0 : i64, scratch_operands = 0 : i64, tpu.core_type = #tpu.core_type<tc>, window_params = [{pipeline_mode = #tpu.pipeline_mode<synchronous>, transform_indices = @transform_0, window_bounds = array<i64: 4, 512, 128>}, {pipeline_mode = #tpu.pipeline_mode<synchronous>, transform_indices = @transform_1, window_bounds = array<i64: 128, 16>}, {pipeline_mode = #tpu.pipeline_mode<synchronous>, transform_indices = @transform_2, window_bounds = array<i64: 1, 16>}, {pipeline_mode = #tpu.pipeline_mode<synchronous>, transform_indices = @transform_3, window_bounds = array<i64: 1, 16>}, {pipeline_mode = #tpu.pipeline_mode<synchronous>, transform_indices = @transform_4, window_bounds = array<i64: 512, 16>}]} {
    %c0 = arith.constant 0 : index
    %c0_0 = arith.constant 0 : index
    %0 = vector.load %arg2[%c0, %c0_0] : memref<128x16xbf16, #tpu.memory_space<vmem>>, vector<128x16xbf16>
    %c0_1 = arith.constant 0 : index
    %c0_2 = arith.constant 0 : index
    %c0_3 = arith.constant 0 : index
    %1 = vector.load %arg1[%c0_1, %c0_2, %c0_3] : memref<4x512x128xbf16, #tpu.memory_space<vmem>>, vector<1x512x128xbf16>
    %2 = vector.shape_cast %1 : vector<1x512x128xbf16> to vector<512x128xbf16>
    %cst = arith.constant dense<0.000000e+00> : vector<512x16xf32>
    %3 = tpu.matmul %2, %0, %cst {dimension_numbers = #tpu.dot_dimension_numbers<[1], [0], [0], [1], [0, 0, 1, 1], [], []>} : vector<512x128xbf16>, vector<128x16xbf16>, vector<512x16xf32> -> vector<512x16xf32>
    %c1 = arith.constant 1 : index
    %c0_4 = arith.constant 0 : index
    %c0_5 = arith.constant 0 : index
    %4 = vector.load %arg1[%c1, %c0_4, %c0_5] : memref<4x512x128xbf16, #tpu.memory_space<vmem>>, vector<1x512x128xbf16>
    %5 = vector.shape_cast %4 : vector<1x512x128xbf16> to vector<512x128xbf16>
    %cst_6 = arith.constant dense<0.000000e+00> : vector<512x16xf32>
    %6 = tpu.matmul %5, %0, %cst_6 {dimension_numbers = #tpu.dot_dimension_numbers<[1], [0], [0], [1], [0, 0, 1, 1], [], []>} : vector<512x128xbf16>, vector<128x16xbf16>, vector<512x16xf32> -> vector<512x16xf32>
    %c2 = arith.constant 2 : index
    %c0_7 = arith.constant 0 : index
    %c0_8 = arith.constant 0 : index
    %7 = vector.load %arg1[%c2, %c0_7, %c0_8] : memref<4x512x128xbf16, #tpu.memory_space<vmem>>, vector<1x512x128xbf16>
    %8 = vector.shape_cast %7 : vector<1x512x128xbf16> to vector<512x128xbf16>
    %cst_9 = arith.constant dense<0.000000e+00> : vector<512x16xf32>
    %9 = tpu.matmul %8, %0, %cst_9 {dimension_numbers = #tpu.dot_dimension_numbers<[1], [0], [0], [1], [0, 0, 1, 1], [], []>} : vector<512x128xbf16>, vector<128x16xbf16>, vector<512x16xf32> -> vector<512x16xf32>
    %c3 = arith.constant 3 : index
    %c0_10 = arith.constant 0 : index
    %c0_11 = arith.constant 0 : index
    %10 = vector.load %arg1[%c3, %c0_10, %c0_11] : memref<4x512x128xbf16, #tpu.memory_space<vmem>>, vector<1x512x128xbf16>
    %11 = vector.shape_cast %10 : vector<1x512x128xbf16> to vector<512x128xbf16>
    %cst_12 = arith.constant dense<0.000000e+00> : vector<512x16xf32>
    %12 = tpu.matmul %11, %0, %cst_12 {dimension_numbers = #tpu.dot_dimension_numbers<[1], [0], [0], [1], [0, 0, 1, 1], [], []>} : vector<512x128xbf16>, vector<128x16xbf16>, vector<512x16xf32> -> vector<512x16xf32>
    %cst_13 = arith.constant dense<0.000000e+00> : vector<16xf32>
    %13 = vector.multi_reduction <add>, %3, %cst_13 [0] : vector<512x16xf32> to vector<16xf32>
    %14 = vector.shape_cast %13 : vector<16xf32> to vector<1x16xf32>
    %cst_14 = arith.constant dense<0.000000e+00> : vector<16xf32>
    %15 = vector.multi_reduction <add>, %6, %cst_14 [0] : vector<512x16xf32> to vector<16xf32>
    %16 = vector.shape_cast %15 : vector<16xf32> to vector<1x16xf32>
    %17 = arith.addf %14, %16 : vector<1x16xf32>
    %cst_15 = arith.constant dense<0.000000e+00> : vector<16xf32>
    %18 = vector.multi_reduction <add>, %9, %cst_15 [0] : vector<512x16xf32> to vector<16xf32>
    %19 = vector.shape_cast %18 : vector<16xf32> to vector<1x16xf32>
    %20 = arith.addf %17, %19 : vector<1x16xf32>
    %cst_16 = arith.constant dense<0.000000e+00> : vector<16xf32>
    %21 = vector.multi_reduction <add>, %12, %cst_16 [0] : vector<512x16xf32> to vector<16xf32>
    %22 = vector.shape_cast %21 : vector<16xf32> to vector<1x16xf32>
    %23 = arith.addf %20, %22 : vector<1x16xf32>
    %24 = arith.mulf %3, %3 : vector<512x16xf32>
    %cst_17 = arith.constant dense<0.000000e+00> : vector<16xf32>
    %25 = vector.multi_reduction <add>, %24, %cst_17 [0] : vector<512x16xf32> to vector<16xf32>
    %26 = vector.shape_cast %25 : vector<16xf32> to vector<1x16xf32>
    %27 = arith.mulf %6, %6 : vector<512x16xf32>
    %cst_18 = arith.constant dense<0.000000e+00> : vector<16xf32>
    %28 = vector.multi_reduction <add>, %27, %cst_18 [0] : vector<512x16xf32> to vector<16xf32>
    %29 = vector.shape_cast %28 : vector<16xf32> to vector<1x16xf32>
    %30 = arith.addf %26, %29 : vector<1x16xf32>
    %31 = arith.mulf %9, %9 : vector<512x16xf32>
    %cst_19 = arith.constant dense<0.000000e+00> : vector<16xf32>
    %32 = vector.multi_reduction <add>, %31, %cst_19 [0] : vector<512x16xf32> to vector<16xf32>
    %33 = vector.shape_cast %32 : vector<16xf32> to vector<1x16xf32>
    %34 = arith.addf %30, %33 : vector<1x16xf32>
    %35 = arith.mulf %12, %12 : vector<512x16xf32>
    %cst_20 = arith.constant dense<0.000000e+00> : vector<16xf32>
    %36 = vector.multi_reduction <add>, %35, %cst_20 [0] : vector<512x16xf32> to vector<16xf32>
    %37 = vector.shape_cast %36 : vector<16xf32> to vector<1x16xf32>
    %38 = arith.addf %34, %37 : vector<1x16xf32>
    %cst_21 = arith.constant 2.048000e+03 : f32
    %39 = vector.broadcast %cst_21 : f32 to vector<1x16xf32>
    %40 = arith.divf %23, %39 : vector<1x16xf32>
    %cst_22 = arith.constant 2.048000e+03 : f32
    %41 = vector.broadcast %cst_22 : f32 to vector<1x16xf32>
    %42 = arith.divf %38, %41 : vector<1x16xf32>
    %43 = arith.mulf %40, %40 : vector<1x16xf32>
    %44 = arith.subf %42, %43 : vector<1x16xf32>
    %c0_23 = arith.constant 0 : index
    %c0_24 = arith.constant 0 : index
    %45 = vector.load %arg3[%c0_23, %c0_24] : memref<1x16xf32, #tpu.memory_space<vmem>>, vector<1x16xf32>
    %cst_25 = arith.constant 9.99999974E-6 : f32
    %46 = vector.broadcast %cst_25 : f32 to vector<1x16xf32>
    %47 = arith.addf %44, %46 : vector<1x16xf32>
    %48 = math.rsqrt %47 : vector<1x16xf32>
    %49 = arith.mulf %45, %48 : vector<1x16xf32>
    %c0_26 = arith.constant 0 : index
    %c0_27 = arith.constant 0 : index
    %50 = vector.load %arg4[%c0_26, %c0_27] : memref<1x16xf32, #tpu.memory_space<vmem>>, vector<1x16xf32>
    %51 = arith.mulf %40, %49 : vector<1x16xf32>
    %52 = arith.subf %50, %51 : vector<1x16xf32>
    %53 = vector.broadcast %49 : vector<1x16xf32> to vector<512x16xf32>
    %54 = arith.mulf %3, %53 : vector<512x16xf32>
    %55 = vector.broadcast %52 : vector<1x16xf32> to vector<512x16xf32>
    %56 = arith.addf %54, %55 : vector<512x16xf32>
    %cst_28 = arith.constant 0.000000e+00 : f32
    %57 = vector.broadcast %cst_28 : f32 to vector<512x16xf32>
    %58 = arith.maximumf %56, %57 : vector<512x16xf32>
    %59 = vector.broadcast %49 : vector<1x16xf32> to vector<512x16xf32>
    %60 = arith.mulf %6, %59 : vector<512x16xf32>
    %61 = vector.broadcast %52 : vector<1x16xf32> to vector<512x16xf32>
    %62 = arith.addf %60, %61 : vector<512x16xf32>
    %cst_29 = arith.constant 0.000000e+00 : f32
    %63 = vector.broadcast %cst_29 : f32 to vector<512x16xf32>
    %64 = arith.maximumf %62, %63 : vector<512x16xf32>
    %65 = vector.broadcast %49 : vector<1x16xf32> to vector<512x16xf32>
    %66 = arith.mulf %9, %65 : vector<512x16xf32>
    %67 = vector.broadcast %52 : vector<1x16xf32> to vector<512x16xf32>
    %68 = arith.addf %66, %67 : vector<512x16xf32>
    %cst_30 = arith.constant 0.000000e+00 : f32
    %69 = vector.broadcast %cst_30 : f32 to vector<512x16xf32>
    %70 = arith.maximumf %68, %69 : vector<512x16xf32>
    %71 = vector.broadcast %49 : vector<1x16xf32> to vector<512x16xf32>
    %72 = arith.mulf %12, %71 : vector<512x16xf32>
    %73 = vector.broadcast %52 : vector<1x16xf32> to vector<512x16xf32>
    %74 = arith.addf %72, %73 : vector<512x16xf32>
    %cst_31 = arith.constant 0.000000e+00 : f32
    %75 = vector.broadcast %cst_31 : f32 to vector<512x16xf32>
    %76 = arith.maximumf %74, %75 : vector<512x16xf32>
    %77 = arith.maximumf %58, %64 : vector<512x16xf32>
    %78 = arith.maximumf %70, %76 : vector<512x16xf32>
    %79 = arith.maximumf %77, %78 : vector<512x16xf32>
    %c0_32 = arith.constant 0 : index
    %c0_33 = arith.constant 0 : index
    %80 = vector.load %arg5[%c0_32, %c0_33] : memref<512x16xf32, #tpu.memory_space<vmem>>, vector<512x16xf32>
    tpu.vector_store %arg5[%c0_32, %c0_33], %79 {strides = array<i32>} : memref<512x16xf32, #tpu.memory_space<vmem>>, vector<512x16xf32>,
    return
  }
  func.func @transform_0(%arg0: i32) -> (i32, i32, i32) {
    %c0_i32 = arith.constant 0 : i32
    %c0_i32_0 = arith.constant 0 : i32
    %c0_i32_1 = arith.constant 0 : i32
    %c0_i32_2 = arith.constant 0 : i32
    return %c0_i32, %c0_i32_0, %c0_i32_1 : i32, i32, i32
  }
  func.func @transform_1(%arg0: i32) -> (i32, i32) {
    %c0_i32 = arith.constant 0 : i32
    %c0_i32_0 = arith.constant 0 : i32
    %c0_i32_1 = arith.constant 0 : i32
    return %c0_i32, %c0_i32_0 : i32, i32
  }
  func.func @transform_2(%arg0: i32) -> (i32, i32) {
    %c0_i32 = arith.constant 0 : i32
    %c0_i32_0 = arith.constant 0 : i32
    %c0_i32_1 = arith.constant 0 : i32
    return %c0_i32, %c0_i32_0 : i32, i32
  }
  func.func @transform_3(%arg0: i32) -> (i32, i32) {
    %c0_i32 = arith.constant 0 : i32
    %c0_i32_0 = arith.constant 0 : i32
    %c0_i32_1 = arith.constant 0 : i32
    return %c0_i32, %c0_i32_0 : i32, i32
  }
  func.func @transform_4(%arg0: i32) -> (i32, i32) {
    %c0_i32 = arith.constant 0 : i32
    %c0_i32_0 = arith.constant 0 : i32
    %c0_i32_1 = arith.constant 0 : i32
    return %c0_i32, %c0_i32_0 : i32, i32
  }
}

module attributes {stable_mosaic.version = 11 : i64} {
  func.func @fused_conv_bn_pool_kernel(%arg0: i32, %arg1: memref<4x128x512xbf16, #tpu.memory_space<vmem>>, %arg2: memref<512x32xbf16, #tpu.memory_space<vmem>>, %arg3: memref<1x32xf32, #tpu.memory_space<vmem>>, %arg4: memref<1x32xf32, #tpu.memory_space<vmem>>, %arg5: memref<128x32xf32, #tpu.memory_space<vmem>>) attributes {dimension_semantics = [#tpu.dimension_semantics<arbitrary>], iteration_bounds = array<i64: 1>, scalar_prefetch = 0 : i64, scratch_operands = 0 : i64, tpu.core_type = #tpu.core_type<tc>, window_params = [{pipeline_mode = #tpu.pipeline_mode<synchronous>, transform_indices = @transform_0, window_bounds = array<i64: 4, 128, 512>}, {pipeline_mode = #tpu.pipeline_mode<synchronous>, transform_indices = @transform_1, window_bounds = array<i64: 512, 32>}, {pipeline_mode = #tpu.pipeline_mode<synchronous>, transform_indices = @transform_2, window_bounds = array<i64: 1, 32>}, {pipeline_mode = #tpu.pipeline_mode<synchronous>, transform_indices = @transform_3, window_bounds = array<i64: 1, 32>}, {pipeline_mode = #tpu.pipeline_mode<synchronous>, transform_indices = @transform_4, window_bounds = array<i64: 128, 32>}]} {
    %c0 = arith.constant 0 : index
    %c0_0 = arith.constant 0 : index
    %0 = vector.load %arg2[%c0, %c0_0] : memref<512x32xbf16, #tpu.memory_space<vmem>>, vector<512x32xbf16>
    %c0_1 = arith.constant 0 : index
    %c0_2 = arith.constant 0 : index
    %c0_3 = arith.constant 0 : index
    %1 = vector.load %arg1[%c0_1, %c0_2, %c0_3] : memref<4x128x512xbf16, #tpu.memory_space<vmem>>, vector<1x128x512xbf16>
    %2 = vector.shape_cast %1 : vector<1x128x512xbf16> to vector<128x512xbf16>
    %cst = arith.constant dense<0.000000e+00> : vector<128x32xf32>
    %3 = tpu.matmul %2, %0, %cst {dimension_numbers = #tpu.dot_dimension_numbers<[1], [0], [0], [1], [0, 0, 1, 1], [], []>} : vector<128x512xbf16>, vector<512x32xbf16>, vector<128x32xf32> -> vector<128x32xf32>
    %c1 = arith.constant 1 : index
    %c0_4 = arith.constant 0 : index
    %c0_5 = arith.constant 0 : index
    %4 = vector.load %arg1[%c1, %c0_4, %c0_5] : memref<4x128x512xbf16, #tpu.memory_space<vmem>>, vector<1x128x512xbf16>
    %5 = vector.shape_cast %4 : vector<1x128x512xbf16> to vector<128x512xbf16>
    %cst_6 = arith.constant dense<0.000000e+00> : vector<128x32xf32>
    %6 = tpu.matmul %5, %0, %cst_6 {dimension_numbers = #tpu.dot_dimension_numbers<[1], [0], [0], [1], [0, 0, 1, 1], [], []>} : vector<128x512xbf16>, vector<512x32xbf16>, vector<128x32xf32> -> vector<128x32xf32>
    %c2 = arith.constant 2 : index
    %c0_7 = arith.constant 0 : index
    %c0_8 = arith.constant 0 : index
    %7 = vector.load %arg1[%c2, %c0_7, %c0_8] : memref<4x128x512xbf16, #tpu.memory_space<vmem>>, vector<1x128x512xbf16>
    %8 = vector.shape_cast %7 : vector<1x128x512xbf16> to vector<128x512xbf16>
    %cst_9 = arith.constant dense<0.000000e+00> : vector<128x32xf32>
    %9 = tpu.matmul %8, %0, %cst_9 {dimension_numbers = #tpu.dot_dimension_numbers<[1], [0], [0], [1], [0, 0, 1, 1], [], []>} : vector<128x512xbf16>, vector<512x32xbf16>, vector<128x32xf32> -> vector<128x32xf32>
    %c3 = arith.constant 3 : index
    %c0_10 = arith.constant 0 : index
    %c0_11 = arith.constant 0 : index
    %10 = vector.load %arg1[%c3, %c0_10, %c0_11] : memref<4x128x512xbf16, #tpu.memory_space<vmem>>, vector<1x128x512xbf16>
    %11 = vector.shape_cast %10 : vector<1x128x512xbf16> to vector<128x512xbf16>
    %cst_12 = arith.constant dense<0.000000e+00> : vector<128x32xf32>
    %12 = tpu.matmul %11, %0, %cst_12 {dimension_numbers = #tpu.dot_dimension_numbers<[1], [0], [0], [1], [0, 0, 1, 1], [], []>} : vector<128x512xbf16>, vector<512x32xbf16>, vector<128x32xf32> -> vector<128x32xf32>
    %cst_13 = arith.constant dense<0.000000e+00> : vector<32xf32>
    %13 = vector.multi_reduction <add>, %3, %cst_13 [0] : vector<128x32xf32> to vector<32xf32>
    %14 = vector.shape_cast %13 : vector<32xf32> to vector<1x32xf32>
    %cst_14 = arith.constant dense<0.000000e+00> : vector<32xf32>
    %15 = vector.multi_reduction <add>, %6, %cst_14 [0] : vector<128x32xf32> to vector<32xf32>
    %16 = vector.shape_cast %15 : vector<32xf32> to vector<1x32xf32>
    %17 = arith.addf %14, %16 : vector<1x32xf32>
    %cst_15 = arith.constant dense<0.000000e+00> : vector<32xf32>
    %18 = vector.multi_reduction <add>, %9, %cst_15 [0] : vector<128x32xf32> to vector<32xf32>
    %19 = vector.shape_cast %18 : vector<32xf32> to vector<1x32xf32>
    %20 = arith.addf %17, %19 : vector<1x32xf32>
    %cst_16 = arith.constant dense<0.000000e+00> : vector<32xf32>
    %21 = vector.multi_reduction <add>, %12, %cst_16 [0] : vector<128x32xf32> to vector<32xf32>
    %22 = vector.shape_cast %21 : vector<32xf32> to vector<1x32xf32>
    %23 = arith.addf %20, %22 : vector<1x32xf32>
    %24 = arith.mulf %3, %3 : vector<128x32xf32>
    %cst_17 = arith.constant dense<0.000000e+00> : vector<32xf32>
    %25 = vector.multi_reduction <add>, %24, %cst_17 [0] : vector<128x32xf32> to vector<32xf32>
    %26 = vector.shape_cast %25 : vector<32xf32> to vector<1x32xf32>
    %27 = arith.mulf %6, %6 : vector<128x32xf32>
    %cst_18 = arith.constant dense<0.000000e+00> : vector<32xf32>
    %28 = vector.multi_reduction <add>, %27, %cst_18 [0] : vector<128x32xf32> to vector<32xf32>
    %29 = vector.shape_cast %28 : vector<32xf32> to vector<1x32xf32>
    %30 = arith.addf %26, %29 : vector<1x32xf32>
    %31 = arith.mulf %9, %9 : vector<128x32xf32>
    %cst_19 = arith.constant dense<0.000000e+00> : vector<32xf32>
    %32 = vector.multi_reduction <add>, %31, %cst_19 [0] : vector<128x32xf32> to vector<32xf32>
    %33 = vector.shape_cast %32 : vector<32xf32> to vector<1x32xf32>
    %34 = arith.addf %30, %33 : vector<1x32xf32>
    %35 = arith.mulf %12, %12 : vector<128x32xf32>
    %cst_20 = arith.constant dense<0.000000e+00> : vector<32xf32>
    %36 = vector.multi_reduction <add>, %35, %cst_20 [0] : vector<128x32xf32> to vector<32xf32>
    %37 = vector.shape_cast %36 : vector<32xf32> to vector<1x32xf32>
    %38 = arith.addf %34, %37 : vector<1x32xf32>
    %cst_21 = arith.constant 5.120000e+02 : f32
    %39 = vector.broadcast %cst_21 : f32 to vector<1x32xf32>
    %40 = arith.divf %23, %39 : vector<1x32xf32>
    %cst_22 = arith.constant 5.120000e+02 : f32
    %41 = vector.broadcast %cst_22 : f32 to vector<1x32xf32>
    %42 = arith.divf %38, %41 : vector<1x32xf32>
    %43 = arith.mulf %40, %40 : vector<1x32xf32>
    %44 = arith.subf %42, %43 : vector<1x32xf32>
    %c0_23 = arith.constant 0 : index
    %c0_24 = arith.constant 0 : index
    %45 = vector.load %arg3[%c0_23, %c0_24] : memref<1x32xf32, #tpu.memory_space<vmem>>, vector<1x32xf32>
    %cst_25 = arith.constant 9.99999974E-6 : f32
    %46 = vector.broadcast %cst_25 : f32 to vector<1x32xf32>
    %47 = arith.addf %44, %46 : vector<1x32xf32>
    %48 = math.rsqrt %47 : vector<1x32xf32>
    %49 = arith.mulf %45, %48 : vector<1x32xf32>
    %c0_26 = arith.constant 0 : index
    %c0_27 = arith.constant 0 : index
    %50 = vector.load %arg4[%c0_26, %c0_27] : memref<1x32xf32, #tpu.memory_space<vmem>>, vector<1x32xf32>
    %51 = arith.mulf %40, %49 : vector<1x32xf32>
    %52 = arith.subf %50, %51 : vector<1x32xf32>
    %53 = vector.broadcast %49 : vector<1x32xf32> to vector<128x32xf32>
    %54 = arith.mulf %3, %53 : vector<128x32xf32>
    %55 = vector.broadcast %52 : vector<1x32xf32> to vector<128x32xf32>
    %56 = arith.addf %54, %55 : vector<128x32xf32>
    %cst_28 = arith.constant 0.000000e+00 : f32
    %57 = vector.broadcast %cst_28 : f32 to vector<128x32xf32>
    %58 = arith.maximumf %56, %57 : vector<128x32xf32>
    %59 = vector.broadcast %49 : vector<1x32xf32> to vector<128x32xf32>
    %60 = arith.mulf %6, %59 : vector<128x32xf32>
    %61 = vector.broadcast %52 : vector<1x32xf32> to vector<128x32xf32>
    %62 = arith.addf %60, %61 : vector<128x32xf32>
    %cst_29 = arith.constant 0.000000e+00 : f32
    %63 = vector.broadcast %cst_29 : f32 to vector<128x32xf32>
    %64 = arith.maximumf %62, %63 : vector<128x32xf32>
    %65 = vector.broadcast %49 : vector<1x32xf32> to vector<128x32xf32>
    %66 = arith.mulf %9, %65 : vector<128x32xf32>
    %67 = vector.broadcast %52 : vector<1x32xf32> to vector<128x32xf32>
    %68 = arith.addf %66, %67 : vector<128x32xf32>
    %cst_30 = arith.constant 0.000000e+00 : f32
    %69 = vector.broadcast %cst_30 : f32 to vector<128x32xf32>
    %70 = arith.maximumf %68, %69 : vector<128x32xf32>
    %71 = vector.broadcast %49 : vector<1x32xf32> to vector<128x32xf32>
    %72 = arith.mulf %12, %71 : vector<128x32xf32>
    %73 = vector.broadcast %52 : vector<1x32xf32> to vector<128x32xf32>
    %74 = arith.addf %72, %73 : vector<128x32xf32>
    %cst_31 = arith.constant 0.000000e+00 : f32
    %75 = vector.broadcast %cst_31 : f32 to vector<128x32xf32>
    %76 = arith.maximumf %74, %75 : vector<128x32xf32>
    %77 = arith.maximumf %58, %64 : vector<128x32xf32>
    %78 = arith.maximumf %70, %76 : vector<128x32xf32>
    %79 = arith.maximumf %77, %78 : vector<128x32xf32>
    %c0_32 = arith.constant 0 : index
    %c0_33 = arith.constant 0 : index
    %80 = vector.load %arg5[%c0_32, %c0_33] : memref<128x32xf32, #tpu.memory_space<vmem>>, vector<128x32xf32>
    tpu.vector_store %arg5[%c0_32, %c0_33], %79 {strides = array<i32>} : memref<128x32xf32, #tpu.memory_space<vmem>>, vector<128x32xf32>,
    return
  }
  func.func @transform_0(%arg0: i32) -> (i32, i32, i32) {
    %c0_i32 = arith.constant 0 : i32
    %c0_i32_0 = arith.constant 0 : i32
    %c0_i32_1 = arith.constant 0 : i32
    %c0_i32_2 = arith.constant 0 : i32
    return %c0_i32, %c0_i32_0, %c0_i32_1 : i32, i32, i32
  }
  func.func @transform_1(%arg0: i32) -> (i32, i32) {
    %c0_i32 = arith.constant 0 : i32
    %c0_i32_0 = arith.constant 0 : i32
    %c0_i32_1 = arith.constant 0 : i32
    return %c0_i32, %c0_i32_0 : i32, i32
  }
  func.func @transform_2(%arg0: i32) -> (i32, i32) {
    %c0_i32 = arith.constant 0 : i32
    %c0_i32_0 = arith.constant 0 : i32
    %c0_i32_1 = arith.constant 0 : i32
    return %c0_i32, %c0_i32_0 : i32, i32
  }
  func.func @transform_3(%arg0: i32) -> (i32, i32) {
    %c0_i32 = arith.constant 0 : i32
    %c0_i32_0 = arith.constant 0 : i32
    %c0_i32_1 = arith.constant 0 : i32
    return %c0_i32, %c0_i32_0 : i32, i32
  }
  func.func @transform_4(%arg0: i32) -> (i32, i32) {
    %c0_i32 = arith.constant 0 : i32
    %c0_i32_0 = arith.constant 0 : i32
    %c0_i32_1 = arith.constant 0 : i32
    return %c0_i32, %c0_i32_0 : i32, i32
  }
}

module attributes {stable_mosaic.version = 11 : i64} {
  func.func @linear_kernel(%arg0: i32, %arg1: memref<2x2048xf32, #tpu.memory_space<vmem>>, %arg2: memref<2048x10xf32, #tpu.memory_space<vmem>>, %arg3: memref<1x10xf32, #tpu.memory_space<vmem>>, %arg4: memref<2x10xf32, #tpu.memory_space<vmem>>) attributes {dimension_semantics = [#tpu.dimension_semantics<arbitrary>], iteration_bounds = array<i64: 1>, scalar_prefetch = 0 : i64, scratch_operands = 0 : i64, tpu.core_type = #tpu.core_type<tc>, window_params = [{pipeline_mode = #tpu.pipeline_mode<synchronous>, transform_indices = @transform_0, window_bounds = array<i64: 2, 2048>}, {pipeline_mode = #tpu.pipeline_mode<synchronous>, transform_indices = @transform_1, window_bounds = array<i64: 2048, 10>}, {pipeline_mode = #tpu.pipeline_mode<synchronous>, transform_indices = @transform_2, window_bounds = array<i64: 1, 10>}, {pipeline_mode = #tpu.pipeline_mode<synchronous>, transform_indices = @transform_3, window_bounds = array<i64: 2, 10>}]} {
    %c0 = arith.constant 0 : index
    %c0_0 = arith.constant 0 : index
    %0 = vector.load %arg1[%c0, %c0_0] : memref<2x2048xf32, #tpu.memory_space<vmem>>, vector<2x2048xf32>
    %c0_1 = arith.constant 0 : index
    %c0_2 = arith.constant 0 : index
    %1 = vector.load %arg2[%c0_1, %c0_2] : memref<2048x10xf32, #tpu.memory_space<vmem>>, vector<2048x10xf32>
    %cst = arith.constant dense<0.000000e+00> : vector<2x10xf32>
    %2 = tpu.matmul %0, %1, %cst {dimension_numbers = #tpu.dot_dimension_numbers<[1], [0], [0], [1], [0, 0, 1, 1], [], []>} : vector<2x2048xf32>, vector<2048x10xf32>, vector<2x10xf32> -> vector<2x10xf32>
    %c0_3 = arith.constant 0 : index
    %c0_4 = arith.constant 0 : index
    %3 = vector.load %arg3[%c0_3, %c0_4] : memref<1x10xf32, #tpu.memory_space<vmem>>, vector<1x10xf32>
    %4 = vector.broadcast %3 : vector<1x10xf32> to vector<2x10xf32>
    %5 = arith.addf %2, %4 : vector<2x10xf32>
    %c0_5 = arith.constant 0 : index
    %c0_6 = arith.constant 0 : index
    %6 = vector.load %arg4[%c0_5, %c0_6] : memref<2x10xf32, #tpu.memory_space<vmem>>, vector<2x10xf32>
    tpu.vector_store %arg4[%c0_5, %c0_6], %5 {strides = array<i32>} : memref<2x10xf32, #tpu.memory_space<vmem>>, vector<2x10xf32>,
    return
  }
  func.func @transform_0(%arg0: i32) -> (i32, i32) {
    %c0_i32 = arith.constant 0 : i32
    %c0_i32_0 = arith.constant 0 : i32
    %c0_i32_1 = arith.constant 0 : i32
    return %c0_i32, %c0_i32_0 : i32, i32
  }
  func.func @transform_1(%arg0: i32) -> (i32, i32) {
    %c0_i32 = arith.constant 0 : i32
    %c0_i32_0 = arith.constant 0 : i32
    %c0_i32_1 = arith.constant 0 : i32
    return %c0_i32, %c0_i32_0 : i32, i32
  }
  func.func @transform_2(%arg0: i32) -> (i32, i32) {
    %c0_i32 = arith.constant 0 : i32
    %c0_i32_0 = arith.constant 0 : i32
    %c0_i32_1 = arith.constant 0 : i32
    return %c0_i32, %c0_i32_0 : i32, i32
  }
  func.func @transform_3(%arg0: i32) -> (i32, i32) {
    %c0_i32 = arith.constant 0 : i32
    %c0_i32_0 = arith.constant 0 : i32
    %c0_i32_1 = arith.constant 0 : i32
    return %c0_i32, %c0_i32_0 : i32, i32
  }
}

</mosaic_0001>

<llo_original>
// kernel: cnn_forward.3
$region0: #{cnn_forward.3}
  #allocation0 [shape = 'u32[]', space=smem, size = 0x4, offset = 0x4, fixed_abs, tag = 'smem constant byte address 0x4 - core index']
  #allocation1 [shape = 'u32[144,128]{1,0:T(1,128)}', space=vmem, size = 0x12000, scoped, tag = 'internal scratch']
  %s0 = inlined_call_operand.vmem [shape: bf16[4,512,128], index: 0, kind: input, shape index: {}]
  %s1 = inlined_call_operand.vmem [shape: bf16[128,16], index: 1, kind: input, shape index: {}]
  %s2 = inlined_call_operand.vmem [shape: f32[1,16], index: 2, kind: input, shape index: {}]
  %s3 = inlined_call_operand.vmem [shape: f32[1,16], index: 3, kind: input, shape index: {}]
  %s4 = inlined_call_operand.vmem [shape: f32[512,16], index: 4, kind: output, shape index: {}]
  %s5 = sld [smem:[#allocation0]]
  $region26: #{cnn_forward.3} parent=0
    _
  %s7 = ssub.s32 1, %s5
  %s8 = scalar_select 0, %s7, %s5
  // Predicated region
  $region2: #{cnn_forward.3} parent=0 // pred_check
    _
  $region3: #{cnn_forward.3} parent=0 // pred_check_branch
    %10 = sbr.rel (0) target = $region5
  $region4: #{cnn_forward.3} parent=0 // pred_region
    _
  $region5: #{cnn_forward.3} parent=0 // pred_fallthru
    _
  // Predicated region
  $region6: #{cnn_forward.3} parent=0 // pred_check
    _
  $region7: #{cnn_forward.3} parent=0 // pred_check_branch
    %12 = sbr.rel (0) target = $region9
  $region8: #{cnn_forward.3} parent=0 // pred_region
    _
  $region9: #{cnn_forward.3} parent=0 // pred_fallthru
    _
  // Predicated region
  $region10: #{cnn_forward.3} parent=0 // pred_check
    _
  $region11: #{cnn_forward.3} parent=0 // pred_check_branch
    %14 = sbr.rel (0) target = $region13
  $region12: #{cnn_forward.3} parent=0 // pred_region
    _
  $region13: #{cnn_forward.3} parent=0 // pred_fallthru
    _
  // Predicated region
  $region14: #{cnn_forward.3} parent=0 // pred_check
    _
  $region15: #{cnn_forward.3} parent=0 // pred_check_branch
    %16 = sbr.rel (0) target = $region17
  $region16: #{cnn_forward.3} parent=0 // pred_region
    _
  $region17: #{cnn_forward.3} parent=0 // pred_fallthru
    _
  %v18 = vld [vmem:[%s1] sm:$0xf]
  %v19 = vld [vmem:[%s1 + $0x4] sm:$0xf]
  %v20 = vld [vmem:[%s1 + $0x8] sm:$0xf]
  %v21 = vld [vmem:[%s1 + $0xc] sm:$0xf]
  %v22 = vld [vmem:[%s1 + $0x10] sm:$0xf]
  %v23 = vld [vmem:[%s1 + $0x14] sm:$0xf]
  %v24 = vld [vmem:[%s1 + $0x18] sm:$0xf]
  %v25 = vld [vmem:[%s1 + $0x1c] sm:$0xf]
  %v26 = vld [vmem:[%s1 + $0x20] sm:$0xf]
  %v27 = vld [vmem:[%s1 + $0x24] sm:$0xf]
  %v28 = vld [vmem:[%s1 + $0x28] sm:$0xf]
  %v29 = vld [vmem:[%s1 + $0x2c] sm:$0xf]
  %v30 = vld [vmem:[%s1 + $0x30] sm:$0xf]
  %v31 = vld [vmem:[%s1 + $0x34] sm:$0xf]
  %v32 = vld [vmem:[%s1 + $0x38] sm:$0xf]
  %v33 = vld [vmem:[%s1 + $0x3c] sm:$0xf]
  %v34 = vld [vmem:[%s0] sm:$0xf]
  %v35 = vld [vmem:[%s0 + $0x4] sm:$0xf]
  %v36 = vld [vmem:[%s0 + $0x8] sm:$0xf]
  %v37 = vld [vmem:[%s0 + $0xc] sm:$0xf]
  %v38 = vld [vmem:[%s0 + $0x10] sm:$0xf]
  %v39 = vld [vmem:[%s0 + $0x14] sm:$0xf]
  %v40 = vld [vmem:[%s0 + $0x18] sm:$0xf]
  %v41 = vld [vmem:[%s0 + $0x1c] sm:$0xf]
  %v42 = vld [vmem:[%s0 + $0x20] sm:$0xf]
  %v43 = vld [vmem:[%s0 + $0x24] sm:$0xf]
  %v44 = vld [vmem:[%s0 + $0x28] sm:$0xf]
  %v45 = vld [vmem:[%s0 + $0x2c] sm:$0xf]
  %v46 = vld [vmem:[%s0 + $0x30] sm:$0xf]
  %v47 = vld [vmem:[%s0 + $0x34] sm:$0xf]
  %v48 = vld [vmem:[%s0 + $0x38] sm:$0xf]
  %v49 = vld [vmem:[%s0 + $0x3c] sm:$0xf]
  %v50 = vld [vmem:[%s0 + $0x40] sm:$0xf]
  %v51 = vld [vmem:[%s0 + $0x44] sm:$0xf]
  %v52 = vld [vmem:[%s0 + $0x48] sm:$0xf]
  %v53 = vld [vmem:[%s0 + $0x4c] sm:$0xf]
  %v54 = vld [vmem:[%s0 + $0x50] sm:$0xf]
  %v55 = vld [vmem:[%s0 + $0x54] sm:$0xf]
  %v56 = vld [vmem:[%s0 + $0x58] sm:$0xf]
  %v57 = vld [vmem:[%s0 + $0x5c] sm:$0xf]
  %v58 = vld [vmem:[%s0 + $0x60] sm:$0xf]
  %v59 = vld [vmem:[%s0 + $0x64] sm:$0xf]
  %v60 = vld [vmem:[%s0 + $0x68] sm:$0xf]
  %v61 = vld [vmem:[%s0 + $0x6c] sm:$0xf]
  %v62 = vld [vmem:[%s0 + $0x70] sm:$0xf]
  %v63 = vld [vmem:[%s0 + $0x74] sm:$0xf]
  %v64 = vld [vmem:[%s0 + $0x78] sm:$0xf]
  %v65 = vld [vmem:[%s0 + $0x7c] sm:$0xf]
  %v66 = vld [vmem:[%s0 + $0x80] sm:$0xf]
  %v67 = vld [vmem:[%s0 + $0x84] sm:$0xf]
  %v68 = vld [vmem:[%s0 + $0x88] sm:$0xf]
  %v69 = vld [vmem:[%s0 + $0x8c] sm:$0xf]
  %v70 = vld [vmem:[%s0 + $0x90] sm:$0xf]
  %v71 = vld [vmem:[%s0 + $0x94] sm:$0xf]
  %v72 = vld [vmem:[%s0 + $0x98] sm:$0xf]
  %v73 = vld [vmem:[%s0 + $0x9c] sm:$0xf]
  %v74 = vld [vmem:[%s0 + $0xa0] sm:$0xf]
  %v75 = vld [vmem:[%s0 + $0xa4] sm:$0xf]
  %v76 = vld [vmem:[%s0 + $0xa8] sm:$0xf]
  %v77 = vld [vmem:[%s0 + $0xac] sm:$0xf]
  %v78 = vld [vmem:[%s0 + $0xb0] sm:$0xf]
  %v79 = vld [vmem:[%s0 + $0xb4] sm:$0xf]
  %v80 = vld [vmem:[%s0 + $0xb8] sm:$0xf]
  %v81 = vld [vmem:[%s0 + $0xbc] sm:$0xf]
  %v82 = vld [vmem:[%s0 + $0xc0] sm:$0xf]
  %v83 = vld [vmem:[%s0 + $0xc4] sm:$0xf]
  %v84 = vld [vmem:[%s0 + $0xc8] sm:$0xf]
  %v85 = vld [vmem:[%s0 + $0xcc] sm:$0xf]
  %v86 = vld [vmem:[%s0 + $0xd0] sm:$0xf]
  %v87 = vld [vmem:[%s0 + $0xd4] sm:$0xf]
  %v88 = vld [vmem:[%s0 + $0xd8] sm:$0xf]
  %v89 = vld [vmem:[%s0 + $0xdc] sm:$0xf]
  %v90 = vld [vmem:[%s0 + $0xe0] sm:$0xf]
  %v91 = vld [vmem:[%s0 + $0xe4] sm:$0xf]
  %v92 = vld [vmem:[%s0 + $0xe8] sm:$0xf]
  %v93 = vld [vmem:[%s0 + $0xec] sm:$0xf]
  %v94 = vld [vmem:[%s0 + $0xf0] sm:$0xf]
  %v95 = vld [vmem:[%s0 + $0xf4] sm:$0xf]
  %v96 = vld [vmem:[%s0 + $0xf8] sm:$0xf]
  %v97 = vld [vmem:[%s0 + $0xfc] sm:$0xf]
  %v162 = vunpack.c.l.b16 %v34
  %v163 = vunpack.c.l.b16 %v35
  %v164 = vunpack.c.l.b16 %v36
  %v165 = vunpack.c.l.b16 %v37
  %v166 = vunpack.c.l.b16 %v38
  %v167 = vunpack.c.l.b16 %v39
  %v168 = vunpack.c.l.b16 %v40
  %v169 = vunpack.c.l.b16 %v41
  %v170 = vunpack.c.l.b16 %v42
  %v171 = vunpack.c.l.b16 %v43
  %v172 = vunpack.c.l.b16 %v44
  %v173 = vunpack.c.l.b16 %v45
  %v174 = vunpack.c.l.b16 %v46
  %v175 = vunpack.c.l.b16 %v47
  %v176 = vunpack.c.l.b16 %v48
  %v177 = vunpack.c.l.b16 %v49
  %v178 = vunpack.c.l.b16 %v50
  %v179 = vunpack.c.l.b16 %v51
  %v180 = vunpack.c.l.b16 %v52
  %v181 = vunpack.c.l.b16 %v53
  %v182 = vunpack.c.l.b16 %v54
  %v183 = vunpack.c.l.b16 %v55
  %v184 = vunpack.c.l.b16 %v56
  %v185 = vunpack.c.l.b16 %v57
  %v186 = vunpack.c.l.b16 %v58
  %v187 = vunpack.c.l.b16 %v59
  %v188 = vunpack.c.l.b16 %v60
  %v189 = vunpack.c.l.b16 %v61
  %v190 = vunpack.c.l.b16 %v62
  %v191 = vunpack.c.l.b16 %v63
  %v192 = vunpack.c.l.b16 %v64
  %v193 = vunpack.c.l.b16 %v65
  %v194 = vunpack.c.l.b16 %v66
  %v195 = vunpack.c.l.b16 %v67
  %v196 = vunpack.c.l.b16 %v68
  %v197 = vunpack.c.l.b16 %v69
  %v198 = vunpack.c.l.b16 %v70
  %v199 = vunpack.c.l.b16 %v71
  %v200 = vunpack.c.l.b16 %v72
  %v201 = vunpack.c.l.b16 %v73
  %v202 = vunpack.c.l.b16 %v74
  %v203 = vunpack.c.l.b16 %v75
  %v204 = vunpack.c.l.b16 %v76
  %v205 = vunpack.c.l.b16 %v77
  %v206 = vunpack.c.l.b16 %v78
  %v207 = vunpack.c.l.b16 %v79
  %v208 = vunpack.c.l.b16 %v80
  %v209 = vunpack.c.l.b16 %v81
  %v210 = vunpack.c.l.b16 %v82
  %v211 = vunpack.c.l.b16 %v83
  %v212 = vunpack.c.l.b16 %v84
  %v213 = vunpack.c.l.b16 %v85
  %v214 = vunpack.c.l.b16 %v86
  %v215 = vunpack.c.l.b16 %v87
  %v216 = vunpack.c.l.b16 %v88
  %v217 = vunpack.c.l.b16 %v89
  %v218 = vunpack.c.l.b16 %v90
  %v219 = vunpack.c.l.b16 %v91
  %v220 = vunpack.c.l.b16 %v92
  %v221 = vunpack.c.l.b16 %v93
  %v222 = vunpack.c.l.b16 %v94
  %v223 = vunpack.c.l.b16 %v95
  %v224 = vunpack.c.l.b16 %v96
  %v225 = vunpack.c.l.b16 %v97
  %v226 = vpack.c.b16 %v163, %v162
  %v227 = vpack.c.b16 %v165, %v164
  %v228 = vpack.c.b16 %v167, %v166
  %v229 = vpack.c.b16 %v169, %v168
  %v230 = vpack.c.b16 %v171, %v170
  %v231 = vpack.c.b16 %v173, %v172
  %v232 = vpack.c.b16 %v175, %v174
  %v233 = vpack.c.b16 %v177, %v176
  %v234 = vpack.c.b16 %v179, %v178
  %v235 = vpack.c.b16 %v181, %v180
  %v236 = vpack.c.b16 %v183, %v182
  %v237 = vpack.c.b16 %v185, %v184
  %v238 = vpack.c.b16 %v187, %v186
  %v239 = vpack.c.b16 %v189, %v188
  %v240 = vpack.c.b16 %v191, %v190
  %v241 = vpack.c.b16 %v193, %v192
  %v242 = vpack.c.b16 %v195, %v194
  %v243 = vpack.c.b16 %v197, %v196
  %v244 = vpack.c.b16 %v199, %v198
  %v245 = vpack.c.b16 %v201, %v200
  %v246 = vpack.c.b16 %v203, %v202
  %v247 = vpack.c.b16 %v205, %v204
  %v248 = vpack.c.b16 %v207, %v206
  %v249 = vpack.c.b16 %v209, %v208
  %v250 = vpack.c.b16 %v211, %v210
  %v251 = vpack.c.b16 %v213, %v212
  %v252 = vpack.c.b16 %v215, %v214
  %v253 = vpack.c.b16 %v217, %v216
  %v254 = vpack.c.b16 %v219, %v218
  %v255 = vpack.c.b16 %v221, %v220
  %v256 = vpack.c.b16 %v223, %v222
  %v257 = vpack.c.b16 %v225, %v224
  %v306 = vunpack.c.l.b16 %v18
  %v307 = vunpack.c.l.b16 %v19
  %v308 = vunpack.c.l.b16 %v20
  %v309 = vunpack.c.l.b16 %v21
  %v310 = vunpack.c.l.b16 %v22
  %v311 = vunpack.c.l.b16 %v23
  %v312 = vunpack.c.l.b16 %v24
  %v313 = vunpack.c.l.b16 %v25
  %v314 = vunpack.c.l.b16 %v26
  %v315 = vunpack.c.l.b16 %v27
  %v316 = vunpack.c.l.b16 %v28
  %v317 = vunpack.c.l.b16 %v29
  %v318 = vunpack.c.l.b16 %v30
  %v319 = vunpack.c.l.b16 %v31
  %v320 = vunpack.c.l.b16 %v32
  %v321 = vunpack.c.l.b16 %v33
  %v322 = vpack.c.b16 %v307, %v306
  %v323 = vpack.c.b16 %v309, %v308
  %v324 = vpack.c.b16 %v311, %v310
  %v325 = vpack.c.b16 %v313, %v312
  %v326 = vpack.c.b16 %v315, %v314
  %v327 = vpack.c.b16 %v317, %v316
  %v328 = vpack.c.b16 %v319, %v318
  %v329 = vpack.c.b16 %v321, %v320
  %338 = vmatprep.subr.bf16.mxu0 0
  %339 = vmatpush1.bf16.msra.mxu0 %v322
  %340 = vmatprep.subr.bf16.mxu0 0
  %341 = vmatpush1.bf16.msra.mxu0 %v323
  %342 = vmatprep.subr.bf16.mxu0 0
  %343 = vmatpush1.bf16.msra.mxu0 %v324
  %344 = vmatprep.subr.bf16.mxu0 0
  %345 = vmatpush1.bf16.msra.mxu0 %v325
  %346 = vmatprep.subr.bf16.mxu0 0
  %347 = vmatpush1.bf16.msra.mxu0 %v326
  %348 = vmatprep.subr.bf16.mxu0 0
  %349 = vmatpush1.bf16.msra.mxu0 %v327
  %350 = vmatprep.subr.bf16.mxu0 0
  %351 = vmatpush1.bf16.msra.mxu0 %v328
  %352 = vmatprep.subr.bf16.mxu0 0
  %353 = vmatpush1.bf16.msra.mxu0 %v329
  %354 = vmatprep.subr.bf16.mxu0 0
  %355 = vmatpush1.bf16.msra.mxu0 0
  %356 = vmatprep.subr.bf16.mxu0 0
  %357 = vmatpush1.bf16.msra.mxu0 0
  %358 = vmatprep.subr.bf16.mxu0 0
  %359 = vmatpush1.bf16.msra.mxu0 0
  %360 = vmatprep.subr.bf16.mxu0 0
  %361 = vmatpush1.bf16.msra.mxu0 0
  %362 = vmatprep.subr.bf16.mxu0 0
  %363 = vmatpush1.bf16.msra.mxu0 0
  %364 = vmatprep.subr.bf16.mxu0 0
  %365 = vmatpush1.bf16.msra.mxu0 0
  %366 = vmatprep.subr.bf16.mxu0 0
  %367 = vmatpush1.bf16.msra.mxu0 0
  %368 = vmatprep.subr.bf16.mxu0 0
  %369 = vmatpush1.bf16.msra.mxu0 0
  %370 = vmatprep.mubr.bf16.mxu0 0
  %371 = vmatmul.mubr.bf16.gmra.mrb[0].mxu0 %v226
  %v372 = vpop.f32.mrb[0].mxu0
  %v373 = vadd.f32 0.0, %v372
  %v374 = vpop.f32.mrb[0].mxu0
  %v375 = vpop.f32.mrb[0].mxu0
  %v376 = vadd.f32 0.0, %v375
  %v377 = vpop.f32.mrb[0].mxu0
  %378 = vmatprep.mubr.bf16.mxu0 0
  %379 = vmatmul.mubr.bf16.gmra.mrb[0].mxu0 %v227
  %v380 = vpop.f32.mrb[0].mxu0
  %v381 = vadd.f32 0.0, %v380
  %v382 = vpop.f32.mrb[0].mxu0
  %v383 = vpop.f32.mrb[0].mxu0
  %v384 = vadd.f32 0.0, %v383
  %v385 = vpop.f32.mrb[0].mxu0
  %386 = vmatprep.mubr.bf16.mxu0 0
  %387 = vmatmul.mubr.bf16.gmra.mrb[0].mxu0 %v228
  %v388 = vpop.f32.mrb[0].mxu0
  %v389 = vadd.f32 0.0, %v388
  %v390 = vpop.f32.mrb[0].mxu0
  %v391 = vpop.f32.mrb[0].mxu0
  %v392 = vadd.f32 0.0, %v391
  %v393 = vpop.f32.mrb[0].mxu0
  %394 = vmatprep.mubr.bf16.mxu0 0
  %395 = vmatmul.mubr.bf16.gmra.mrb[0].mxu0 %v229
  %v396 = vpop.f32.mrb[0].mxu0
  %v397 = vadd.f32 0.0, %v396
  %v398 = vpop.f32.mrb[0].mxu0
  %v399 = vpop.f32.mrb[0].mxu0
  %v400 = vadd.f32 0.0, %v399
  %v401 = vpop.f32.mrb[0].mxu0
  %402 = vmatprep.mubr.bf16.mxu0 0
  %403 = vmatmul.mubr.bf16.gmra.mrb[0].mxu0 %v230
  %v404 = vpop.f32.mrb[0].mxu0
  %v405 = vadd.f32 0.0, %v404
  %v406 = vpop.f32.mrb[0].mxu0
  %v407 = vpop.f32.mrb[0].mxu0
  %v408 = vadd.f32 0.0, %v407
  %v409 = vpop.f32.mrb[0].mxu0
  %410 = vmatprep.mubr.bf16.mxu0 0
  %411 = vmatmul.mubr.bf16.gmra.mrb[0].mxu0 %v231
  %v412 = vpop.f32.mrb[0].mxu0
  %v413 = vadd.f32 0.0, %v412
  %v414 = vpop.f32.mrb[0].mxu0
  %v415 = vpop.f32.mrb[0].mxu0
  %v416 = vadd.f32 0.0, %v415
  %v417 = vpop.f32.mrb[0].mxu0
  %418 = vmatprep.mubr.bf16.mxu0 0
  %419 = vmatmul.mubr.bf16.gmra.mrb[0].mxu0 %v232
  %v420 = vpop.f32.mrb[0].mxu0
  %v421 = vadd.f32 0.0, %v420
  %v422 = vpop.f32.mrb[0].mxu0
  %v423 = vpop.f32.mrb[0].mxu0
  %v424 = vadd.f32 0.0, %v423
  %v425 = vpop.f32.mrb[0].mxu0
  %426 = vmatprep.mubr.bf16.mxu0 0
  %427 = vmatmul.mubr.bf16.gmra.mrb[0].mxu0 %v233
  %v428 = vpop.f32.mrb[0].mxu0
  %v429 = vadd.f32 0.0, %v428
  %v430 = vpop.f32.mrb[0].mxu0
  %v431 = vpop.f32.mrb[0].mxu0
  %v432 = vadd.f32 0.0, %v431
  %v433 = vpop.f32.mrb[0].mxu0
  %434 = vmatprep.mubr.bf16.mxu0 0
  %435 = vmatmul.mubr.bf16.gmra.mrb[0].mxu0 %v234
  %v436 = vpop.f32.mrb[0].mxu0
  %v437 = vadd.f32 0.0, %v436
  %v438 = vpop.f32.mrb[0].mxu0
  %v439 = vpop.f32.mrb[0].mxu0
  %v440 = vadd.f32 0.0, %v439
  %v441 = vpop.f32.mrb[0].mxu0
  %442 = vmatprep.mubr.bf16.mxu0 0
  %443 = vmatmul.mubr.bf16.gmra.mrb[0].mxu0 %v235
  %v444 = vpop.f32.mrb[0].mxu0
  %v445 = vadd.f32 0.0, %v444
  %v446 = vpop.f32.mrb[0].mxu0
  %v447 = vpop.f32.mrb[0].mxu0
  %v448 = vadd.f32 0.0, %v447
  %v449 = vpop.f32.mrb[0].mxu0
  %450 = vmatprep.mubr.bf16.mxu0 0
  %451 = vmatmul.mubr.bf16.gmra.mrb[0].mxu0 %v236
  %v452 = vpop.f32.mrb[0].mxu0
  %v453 = vadd.f32 0.0, %v452
  %v454 = vpop.f32.mrb[0].mxu0
  %v455 = vpop.f32.mrb[0].mxu0
  %v456 = vadd.f32 0.0, %v455
  %v457 = vpop.f32.mrb[0].mxu0
  %458 = vmatprep.mubr.bf16.mxu0 0
  %459 = vmatmul.mubr.bf16.gmra.mrb[0].mxu0 %v237
  %v460 = vpop.f32.mrb[0].mxu0
  %v461 = vadd.f32 0.0, %v460
  %v462 = vpop.f32.mrb[0].mxu0
  %v463 = vpop.f32.mrb[0].mxu0
  %v464 = vadd.f32 0.0, %v463
  %v465 = vpop.f32.mrb[0].mxu0
  %466 = vmatprep.mubr.bf16.mxu0 0
  %467 = vmatmul.mubr.bf16.gmra.mrb[0].mxu0 %v238
  %v468 = vpop.f32.mrb[0].mxu0
  %v469 = vadd.f32 0.0, %v468
  %v470 = vpop.f32.mrb[0].mxu0
  %v471 = vpop.f32.mrb[0].mxu0
  %v472 = vadd.f32 0.0, %v471
  %v473 = vpop.f32.mrb[0].mxu0
  %474 = vmatprep.mubr.bf16.mxu0 0
  %475 = vmatmul.mubr.bf16.gmra.mrb[0].mxu0 %v239
  %v476 = vpop.f32.mrb[0].mxu0
  %v477 = vadd.f32 0.0, %v476
  %v478 = vpop.f32.mrb[0].mxu0
  %v479 = vpop.f32.mrb[0].mxu0
  %v480 = vadd.f32 0.0, %v479
  %v481 = vpop.f32.mrb[0].mxu0
  %482 = vmatprep.mubr.bf16.mxu0 0
  %483 = vmatmul.mubr.bf16.gmra.mrb[0].mxu0 %v240
  %v484 = vpop.f32.mrb[0].mxu0
  %v485 = vadd.f32 0.0, %v484
  %v486 = vpop.f32.mrb[0].mxu0
  %v487 = vpop.f32.mrb[0].mxu0
  %v488 = vadd.f32 0.0, %v487
  %v489 = vpop.f32.mrb[0].mxu0
  %490 = vmatprep.mubr.bf16.mxu0 0
  %491 = vmatmul.mubr.bf16.gmra.mrb[0].mxu0 %v241
  %v492 = vpop.f32.mrb[0].mxu0
  %v493 = vadd.f32 0.0, %v492
  %v494 = vpop.f32.mrb[0].mxu0
  %v495 = vpop.f32.mrb[0].mxu0
  %v496 = vadd.f32 0.0, %v495
  %v497 = vpop.f32.mrb[0].mxu0
  %498 = vmatprep.mubr.bf16.mxu0 0
  %499 = vmatmul.mubr.bf16.gmra.mrb[0].mxu0 %v242
  %v500 = vpop.f32.mrb[0].mxu0
  %v501 = vadd.f32 0.0, %v500
  %v502 = vpop.f32.mrb[0].mxu0
  %v503 = vpop.f32.mrb[0].mxu0
  %v504 = vadd.f32 0.0, %v503
  %v505 = vpop.f32.mrb[0].mxu0
  %506 = vmatprep.mubr.bf16.mxu0 0
  %507 = vmatmul.mubr.bf16.gmra.mrb[0].mxu0 %v243
  %v508 = vpop.f32.mrb[0].mxu0
  %v509 = vadd.f32 0.0, %v508
  %v510 = vpop.f32.mrb[0].mxu0
  %v511 = vpop.f32.mrb[0].mxu0
  %v512 = vadd.f32 0.0, %v511
  %v513 = vpop.f32.mrb[0].mxu0
  %514 = vmatprep.mubr.bf16.mxu0 0
  %515 = vmatmul.mubr.bf16.gmra.mrb[0].mxu0 %v244
  %v516 = vpop.f32.mrb[0].mxu0
  %v517 = vadd.f32 0.0, %v516
  %v518 = vpop.f32.mrb[0].mxu0
  %v519 = vpop.f32.mrb[0].mxu0
  %v520 = vadd.f32 0.0, %v519
  %v521 = vpop.f32.mrb[0].mxu0
  %522 = vmatprep.mubr.bf16.mxu0 0
  %523 = vmatmul.mubr.bf16.gmra.mrb[0].mxu0 %v245
  %v524 = vpop.f32.mrb[0].mxu0
  %v525 = vadd.f32 0.0, %v524
  %v526 = vpop.f32.mrb[0].mxu0
  %v527 = vpop.f32.mrb[0].mxu0
  %v528 = vadd.f32 0.0, %v527
  %v529 = vpop.f32.mrb[0].mxu0
  %530 = vmatprep.mubr.bf16.mxu0 0
  %531 = vmatmul.mubr.bf16.gmra.mrb[0].mxu0 %v246
  %v532 = vpop.f32.mrb[0].mxu0
  %v533 = vadd.f32 0.0, %v532
  %v534 = vpop.f32.mrb[0].mxu0
  %v535 = vpop.f32.mrb[0].mxu0
  %v536 = vadd.f32 0.0, %v535
  %v537 = vpop.f32.mrb[0].mxu0
  %538 = vmatprep.mubr.bf16.mxu0 0
  %539 = vmatmul.mubr.bf16.gmra.mrb[0].mxu0 %v247
  %v540 = vpop.f32.mrb[0].mxu0
  %v541 = vadd.f32 0.0, %v540
  %v542 = vpop.f32.mrb[0].mxu0
  %v543 = vpop.f32.mrb[0].mxu0
  %v544 = vadd.f32 0.0, %v543
  %v545 = vpop.f32.mrb[0].mxu0
  %546 = vmatprep.mubr.bf16.mxu0 0
  %547 = vmatmul.mubr.bf16.gmra.mrb[0].mxu0 %v248
  %v548 = vpop.f32.mrb[0].mxu0
  %v549 = vadd.f32 0.0, %v548
  %v550 = vpop.f32.mrb[0].mxu0
  %v551 = vpop.f32.mrb[0].mxu0
  %v552 = vadd.f32 0.0, %v551
  %v553 = vpop.f32.mrb[0].mxu0
  %554 = vmatprep.mubr.bf16.mxu0 0
  %555 = vmatmul.mubr.bf16.gmra.mrb[0].mxu0 %v249
  %v556 = vpop.f32.mrb[0].mxu0
  %v557 = vadd.f32 0.0, %v556
  %v558 = vpop.f32.mrb[0].mxu0
  %v559 = vpop.f32.mrb[0].mxu0
  %v560 = vadd.f32 0.0, %v559
  %v561 = vpop.f32.mrb[0].mxu0
  %562 = vmatprep.mubr.bf16.mxu0 0
  %563 = vmatmul.mubr.bf16.gmra.mrb[0].mxu0 %v250
  %v564 = vpop.f32.mrb[0].mxu0
  %v565 = vadd.f32 0.0, %v564
  %v566 = vpop.f32.mrb[0].mxu0
  %v567 = vpop.f32.mrb[0].mxu0
  %v568 = vadd.f32 0.0, %v567
  %v569 = vpop.f32.mrb[0].mxu0
  %570 = vmatprep.mubr.bf16.mxu0 0
  %571 = vmatmul.mubr.bf16.gmra.mrb[0].mxu0 %v251
  %v572 = vpop.f32.mrb[0].mxu0
  %v573 = vadd.f32 0.0, %v572
  %v574 = vpop.f32.mrb[0].mxu0
  %v575 = vpop.f32.mrb[0].mxu0
  %v576 = vadd.f32 0.0, %v575
  %v577 = vpop.f32.mrb[0].mxu0
  %578 = vmatprep.mubr.bf16.mxu0 0
  %579 = vmatmul.mubr.bf16.gmra.mrb[0].mxu0 %v252
  %v580 = vpop.f32.mrb[0].mxu0
  %v581 = vadd.f32 0.0, %v580
  %v582 = vpop.f32.mrb[0].mxu0
  %v583 = vpop.f32.mrb[0].mxu0
  %v584 = vadd.f32 0.0, %v583
  %v585 = vpop.f32.mrb[0].mxu0
  %586 = vmatprep.mubr.bf16.mxu0 0
  %587 = vmatmul.mubr.bf16.gmra.mrb[0].mxu0 %v253
  %v588 = vpop.f32.mrb[0].mxu0
  %v589 = vadd.f32 0.0, %v588
  %v590 = vpop.f32.mrb[0].mxu0
  %v591 = vpop.f32.mrb[0].mxu0
  %v592 = vadd.f32 0.0, %v591
  %v593 = vpop.f32.mrb[0].mxu0
  %594 = vmatprep.mubr.bf16.mxu0 0
  %595 = vmatmul.mubr.bf16.gmra.mrb[0].mxu0 %v254
  %v596 = vpop.f32.mrb[0].mxu0
  %v597 = vadd.f32 0.0, %v596
  %v598 = vpop.f32.mrb[0].mxu0
  %v599 = vpop.f32.mrb[0].mxu0
  %v600 = vadd.f32 0.0, %v599
  %v601 = vpop.f32.mrb[0].mxu0
  %602 = vmatprep.mubr.bf16.mxu0 0
  %603 = vmatmul.mubr.bf16.gmra.mrb[0].mxu0 %v255
  %v604 = vpop.f32.mrb[0].mxu0
  %v605 = vadd.f32 0.0, %v604
  %v606 = vpop.f32.mrb[0].mxu0
  %v607 = vpop.f32.mrb[0].mxu0
  %v608 = vadd.f32 0.0, %v607
  %v609 = vpop.f32.mrb[0].mxu0
  %610 = vmatprep.mubr.bf16.mxu0 0
  %611 = vmatmul.mubr.bf16.gmra.mrb[0].mxu0 %v256
  %v612 = vpop.f32.mrb[0].mxu0
  %v613 = vadd.f32 0.0, %v612
  %v614 = vpop.f32.mrb[0].mxu0
  %v615 = vpop.f32.mrb[0].mxu0
  %v616 = vadd.f32 0.0, %v615
  %v617 = vpop.f32.mrb[0].mxu0
  %618 = vmatprep.mubr.bf16.mxu0 0
  %619 = vmatmul.mubr.bf16.gmra.mrb[0].mxu0 %v257
  %v620 = vpop.f32.mrb[0].mxu0
  %v621 = vadd.f32 0.0, %v620
  %v622 = vpop.f32.mrb[0].mxu0
  %v623 = vpop.f32.mrb[0].mxu0
  %v624 = vadd.f32 0.0, %v623
  %v625 = vpop.f32.mrb[0].mxu0
  %626 = vdwg.mxu0
  %s627 = scalar_lea.vmem %s0, 256
  %v628 = vld [vmem:[%s627] sm:$0xf]
  %v629 = vld [vmem:[%s627 + $0x4] sm:$0xf]
  %v630 = vld [vmem:[%s627 + $0x8] sm:$0xf]
  %v631 = vld [vmem:[%s627 + $0xc] sm:$0xf]
  %v632 = vld [vmem:[%s627 + $0x10] sm:$0xf]
  %v633 = vld [vmem:[%s627 + $0x14] sm:$0xf]
  %v634 = vld [vmem:[%s627 + $0x18] sm:$0xf]
  %v635 = vld [vmem:[%s627 + $0x1c] sm:$0xf]
  %v636 = vld [vmem:[%s627 + $0x20] sm:$0xf]
  %v637 = vld [vmem:[%s627 + $0x24] sm:$0xf]
  %v638 = vld [vmem:[%s627 + $0x28] sm:$0xf]
  %v639 = vld [vmem:[%s627 + $0x2c] sm:$0xf]
  %v640 = vld [vmem:[%s627 + $0x30] sm:$0xf]
  %v641 = vld [vmem:[%s627 + $0x34] sm:$0xf]
  %v642 = vld [vmem:[%s627 + $0x38] sm:$0xf]
  %v643 = vld [vmem:[%s627 + $0x3c] sm:$0xf]
  %v644 = vld [vmem:[%s627 + $0x40] sm:$0xf]
  %v645 = vld [vmem:[%s627 + $0x44] sm:$0xf]
  %v646 = vld [vmem:[%s627 + $0x48] sm:$0xf]
  %v647 = vld [vmem:[%s627 + $0x4c] sm:$0xf]
  %v648 = vld [vmem:[%s627 + $0x50] sm:$0xf]
  %v649 = vld [vmem:[%s627 + $0x54] sm:$0xf]
  %v650 = vld [vmem:[%s627 + $0x58] sm:$0xf]
  %v651 = vld [vmem:[%s627 + $0x5c] sm:$0xf]
  %v652 = vld [vmem:[%s627 + $0x60] sm:$0xf]
  %v653 = vld [vmem:[%s627 + $0x64] sm:$0xf]
  %v654 = vld [vmem:[%s627 + $0x68] sm:$0xf]
  %v655 = vld [vmem:[%s627 + $0x6c] sm:$0xf]
  %v656 = vld [vmem:[%s627 + $0x70] sm:$0xf]
  %v657 = vld [vmem:[%s627 + $0x74] sm:$0xf]
  %v658 = vld [vmem:[%s627 + $0x78] sm:$0xf]
  %v659 = vld [vmem:[%s627 + $0x7c] sm:$0xf]
  %v660 = vld [vmem:[%s627 + $0x80] sm:$0xf]
  %v661 = vld [vmem:[%s627 + $0x84] sm:$0xf]
  %v662 = vld [vmem:[%s627 + $0x88] sm:$0xf]
  %v663 = vld [vmem:[%s627 + $0x8c] sm:$0xf]
  %v664 = vld [vmem:[%s627 + $0x90] sm:$0xf]
  %v665 = vld [vmem:[%s627 + $0x94] sm:$0xf]
  %v666 = vld [vmem:[%s627 + $0x98] sm:$0xf]
  %v667 = vld [vmem:[%s627 + $0x9c] sm:$0xf]
  %v668 = vld [vmem:[%s627 + $0xa0] sm:$0xf]
  %v669 = vld [vmem:[%s627 + $0xa4] sm:$0xf]
  %v670 = vld [vmem:[%s627 + $0xa8] sm:$0xf]
  %v671 = vld [vmem:[%s627 + $0xac] sm:$0xf]
  %v672 = vld [vmem:[%s627 + $0xb0] sm:$0xf]
  %v673 = vld [vmem:[%s627 + $0xb4] sm:$0xf]
  %v674 = vld [vmem:[%s627 + $0xb8] sm:$0xf]
  %v675 = vld [vmem:[%s627 + $0xbc] sm:$0xf]
  %v676 = vld [vmem:[%s627 + $0xc0] sm:$0xf]
  %v677 = vld [vmem:[%s627 + $0xc4] sm:$0xf]
  %v678 = vld [vmem:[%s627 + $0xc8] sm:$0xf]
  %v679 = vld [vmem:[%s627 + $0xcc] sm:$0xf]
  %v680 = vld [vmem:[%s627 + $0xd0] sm:$0xf]
  %v681 = vld [vmem:[%s627 + $0xd4] sm:$0xf]
  %v682 = vld [vmem:[%s627 + $0xd8] sm:$0xf]
  %v683 = vld [vmem:[%s627 + $0xdc] sm:$0xf]
  %v684 = vld [vmem:[%s627 + $0xe0] sm:$0xf]
  %v685 = vld [vmem:[%s627 + $0xe4] sm:$0xf]
  %v686 = vld [vmem:[%s627 + $0xe8] sm:$0xf]
  %v687 = vld [vmem:[%s627 + $0xec] sm:$0xf]
  %v688 = vld [vmem:[%s627 + $0xf0] sm:$0xf]
  %v689 = vld [vmem:[%s627 + $0xf4] sm:$0xf]
  %v690 = vld [vmem:[%s627 + $0xf8] sm:$0xf]
  %v691 = vld [vmem:[%s627 + $0xfc] sm:$0xf]
  %v756 = vunpack.c.l.b16 %v628
  %v757 = vunpack.c.l.b16 %v629
  %v758 = vunpack.c.l.b16 %v630
  %v759 = vunpack.c.l.b16 %v631
  %v760 = vunpack.c.l.b16 %v632
  %v761 = vunpack.c.l.b16 %v633
  %v762 = vunpack.c.l.b16 %v634
  %v763 = vunpack.c.l.b16 %v635
  %v764 = vunpack.c.l.b16 %v636
  %v765 = vunpack.c.l.b16 %v637
  %v766 = vunpack.c.l.b16 %v638
  %v767 = vunpack.c.l.b16 %v639
  %v768 = vunpack.c.l.b16 %v640
  %v769 = vunpack.c.l.b16 %v641
  %v770 = vunpack.c.l.b16 %v642
  %v771 = vunpack.c.l.b16 %v643
  %v772 = vunpack.c.l.b16 %v644
  %v773 = vunpack.c.l.b16 %v645
  %v774 = vunpack.c.l.b16 %v646
  %v775 = vunpack.c.l.b16 %v647
  %v776 = vunpack.c.l.b16 %v648
  %v777 = vunpack.c.l.b16 %v649
  %v778 = vunpack.c.l.b16 %v650
  %v779 = vunpack.c.l.b16 %v651
  %v780 = vunpack.c.l.b16 %v652
  %v781 = vunpack.c.l.b16 %v653
  %v782 = vunpack.c.l.b16 %v654
  %v783 = vunpack.c.l.b16 %v655
  %v784 = vunpack.c.l.b16 %v656
  %v785 = vunpack.c.l.b16 %v657
  %v786 = vunpack.c.l.b16 %v658
  %v787 = vunpack.c.l.b16 %v659
  %v788 = vunpack.c.l.b16 %v660
  %v789 = vunpack.c.l.b16 %v661
  %v790 = vunpack.c.l.b16 %v662
  %v791 = vunpack.c.l.b16 %v663
  %v792 = vunpack.c.l.b16 %v664
  %v793 = vunpack.c.l.b16 %v665
  %v794 = vunpack.c.l.b16 %v666
  %v795 = vunpack.c.l.b16 %v667
  %v796 = vunpack.c.l.b16 %v668
  %v797 = vunpack.c.l.b16 %v669
  %v798 = vunpack.c.l.b16 %v670
  %v799 = vunpack.c.l.b16 %v671
  %v800 = vunpack.c.l.b16 %v672
  %v801 = vunpack.c.l.b16 %v673
  %v802 = vunpack.c.l.b16 %v674
  %v803 = vunpack.c.l.b16 %v675
  %v804 = vunpack.c.l.b16 %v676
  %v805 = vunpack.c.l.b16 %v677
  %v806 = vunpack.c.l.b16 %v678
  %v807 = vunpack.c.l.b16 %v679
  %v808 = vunpack.c.l.b16 %v680
  %v809 = vunpack.c.l.b16 %v681
  %v810 = vunpack.c.l.b16 %v682
  %v811 = vunpack.c.l.b16 %v683
  %v812 = vunpack.c.l.b16 %v684
  %v813 = vunpack.c.l.b16 %v685
  %v814 = vunpack.c.l.b16 %v686
  %v815 = vunpack.c.l.b16 %v687
  %v816 = vunpack.c.l.b16 %v688
  %v817 = vunpack.c.l.b16 %v689
  %v818 = vunpack.c.l.b16 %v690
  %v819 = vunpack.c.l.b16 %v691
  %v820 = vpack.c.b16 %v757, %v756
  %v821 = vpack.c.b16 %v759, %v758
  %v822 = vpack.c.b16 %v761, %v760
  %v823 = vpack.c.b16 %v763, %v762
  %v824 = vpack.c.b16 %v765, %v764
  %v825 = vpack.c.b16 %v767, %v766
  %v826 = vpack.c.b16 %v769, %v768
  %v827 = vpack.c.b16 %v771, %v770
  %v828 = vpack.c.b16 %v773, %v772
  %v829 = vpack.c.b16 %v775, %v774
  %v830 = vpack.c.b16 %v777, %v776
  %v831 = vpack.c.b16 %v779, %v778
  %v832 = vpack.c.b16 %v781, %v780
  %v833 = vpack.c.b16 %v783, %v782
  %v834 = vpack.c.b16 %v785, %v784
  %v835 = vpack.c.b16 %v787, %v786
  %v836 = vpack.c.b16 %v789, %v788
  %v837 = vpack.c.b16 %v791, %v790
  %v838 = vpack.c.b16 %v793, %v792
  %v839 = vpack.c.b16 %v795, %v794
  %v840 = vpack.c.b16 %v797, %v796
  %v841 = vpack.c.b16 %v799, %v798
  %v842 = vpack.c.b16 %v801, %v800
  %v843 = vpack.c.b16 %v803, %v802
  %v844 = vpack.c.b16 %v805, %v804
  %v845 = vpack.c.b16 %v807, %v806
  %v846 = vpack.c.b16 %v809, %v808
  %v847 = vpack.c.b16 %v811, %v810
  %v848 = vpack.c.b16 %v813, %v812
  %v849 = vpack.c.b16 %v815, %v814
  %v850 = vpack.c.b16 %v817, %v816
  %v851 = vpack.c.b16 %v819, %v818
  %884 = vmatprep.subr.bf16.mxu0 0
  %885 = vmatpush1.bf16.msra.mxu0 %v322
  %886 = vmatprep.subr.bf16.mxu0 0
  %887 = vmatpush1.bf16.msra.mxu0 %v323
  %888 = vmatprep.subr.bf16.mxu0 0
  %889 = vmatpush1.bf16.msra.mxu0 %v324
  %890 = vmatprep.subr.bf16.mxu0 0
  %891 = vmatpush1.bf16.msra.mxu0 %v325
  %892 = vmatprep.subr.bf16.mxu0 0
  %893 = vmatpush1.bf16.msra.mxu0 %v326
  %894 = vmatprep.subr.bf16.mxu0 0
  %895 = vmatpush1.bf16.msra.mxu0 %v327
  %896 = vmatprep.subr.bf16.mxu0 0
  %897 = vmatpush1.bf16.msra.mxu0 %v328
  %898 = vmatprep.subr.bf16.mxu0 0
  %899 = vmatpush1.bf16.msra.mxu0 %v329
  %900 = vmatprep.subr.bf16.mxu0 0
  %901 = vmatpush1.bf16.msra.mxu0 0
  %902 = vmatprep.subr.bf16.mxu0 0
  %903 = vmatpush1.bf16.msra.mxu0 0
  %904 = vmatprep.subr.bf16.mxu0 0
  %905 = vmatpush1.bf16.msra.mxu0 0
  %906 = vmatprep.subr.bf16.mxu0 0
  %907 = vmatpush1.bf16.msra.mxu0 0
  %908 = vmatprep.subr.bf16.mxu0 0
  %909 = vmatpush1.bf16.msra.mxu0 0
  %910 = vmatprep.subr.bf16.mxu0 0
  %911 = vmatpush1.bf16.msra.mxu0 0
  %912 = vmatprep.subr.bf16.mxu0 0
  %913 = vmatpush1.bf16.msra.mxu0 0
  %914 = vmatprep.subr.bf16.mxu0 0
  %915 = vmatpush1.bf16.msra.mxu0 0
  %916 = vmatprep.mubr.bf16.mxu0 0
  %917 = vmatmul.mubr.bf16.gmra.mrb[0].mxu0 %v820
  %v918 = vpop.f32.mrb[0].mxu0
  %v919 = vadd.f32 0.0, %v918
  %v920 = vpop.f32.mrb[0].mxu0
  %v921 = vpop.f32.mrb[0].mxu0
  %v922 = vadd.f32 0.0, %v921
  %v923 = vpop.f32.mrb[0].mxu0
  %924 = vmatprep.mubr.bf16.mxu0 0
  %925 = vmatmul.mubr.bf16.gmra.mrb[0].mxu0 %v821
  %v926 = vpop.f32.mrb[0].mxu0
  %v927 = vadd.f32 0.0, %v926
  %v928 = vpop.f32.mrb[0].mxu0
  %v929 = vpop.f32.mrb[0].mxu0
  %v930 = vadd.f32 0.0, %v929
  %v931 = vpop.f32.mrb[0].mxu0
  %932 = vmatprep.mubr.bf16.mxu0 0
  %933 = vmatmul.mubr.bf16.gmra.mrb[0].mxu0 %v822
  %v934 = vpop.f32.mrb[0].mxu0
  %v935 = vadd.f32 0.0, %v934
  %v936 = vpop.f32.mrb[0].mxu0
  %v937 = vpop.f32.mrb[0].mxu0
  %v938 = vadd.f32 0.0, %v937
  %v939 = vpop.f32.mrb[0].mxu0
  %940 = vmatprep.mubr.bf16.mxu0 0
  %941 = vmatmul.mubr.bf16.gmra.mrb[0].mxu0 %v823
  %v942 = vpop.f32.mrb[0].mxu0
  %v943 = vadd.f32 0.0, %v942
  %v944 = vpop.f32.mrb[0].mxu0
  %v945 = vpop.f32.mrb[0].mxu0
  %v946 = vadd.f32 0.0, %v945
  %v947 = vpop.f32.mrb[0].mxu0
  %948 = vmatprep.mubr.bf16.mxu0 0
  %949 = vmatmul.mubr.bf16.gmra.mrb[0].mxu0 %v824
  %v950 = vpop.f32.mrb[0].mxu0
  %v951 = vadd.f32 0.0, %v950
  %v952 = vpop.f32.mrb[0].mxu0
  %v953 = vpop.f32.mrb[0].mxu0
  %v954 = vadd.f32 0.0, %v953
  %v955 = vpop.f32.mrb[0].mxu0
  %956 = vmatprep.mubr.bf16.mxu0 0
  %957 = vmatmul.mubr.bf16.gmra.mrb[0].mxu0 %v825
  %v958 = vpop.f32.mrb[0].mxu0
  %v959 = vadd.f32 0.0, %v958
  %v960 = vpop.f32.mrb[0].mxu0
  %v961 = vpop.f32.mrb[0].mxu0
  %v962 = vadd.f32 0.0, %v961
  %v963 = vpop.f32.mrb[0].mxu0
  %964 = vmatprep.mubr.bf16.mxu0 0
  %965 = vmatmul.mubr.bf16.gmra.mrb[0].mxu0 %v826
  %v966 = vpop.f32.mrb[0].mxu0
  %v967 = vadd.f32 0.0, %v966
  %v968 = vpop.f32.mrb[0].mxu0
  %v969 = vpop.f32.mrb[0].mxu0
  %v970 = vadd.f32 0.0, %v969
  %v971 = vpop.f32.mrb[0].mxu0
  %972 = vmatprep.mubr.bf16.mxu0 0
  %973 = vmatmul.mubr.bf16.gmra.mrb[0].mxu0 %v827
  %v974 = vpop.f32.mrb[0].mxu0
  %v975 = vadd.f32 0.0, %v974
  %v976 = vpop.f32.mrb[0].mxu0
  %v977 = vpop.f32.mrb[0].mxu0
  %v978 = vadd.f32 0.0, %v977
  %v979 = vpop.f32.mrb[0].mxu0
  %980 = vmatprep.mubr.bf16.mxu0 0
  %981 = vmatmul.mubr.bf16.gmra.mrb[0].mxu0 %v828
  %v982 = vpop.f32.mrb[0].mxu0
  %v983 = vadd.f32 0.0, %v982
  %v984 = vpop.f32.mrb[0].mxu0
  %v985 = vpop.f32.mrb[0].mxu0
  %v986 = vadd.f32 0.0, %v985
  %v987 = vpop.f32.mrb[0].mxu0
  %988 = vmatprep.mubr.bf16.mxu0 0
  %989 = vmatmul.mubr.bf16.gmra.mrb[0].mxu0 %v829
  %v990 = vpop.f32.mrb[0].mxu0
  %v991 = vadd.f32 0.0, %v990
  %v992 = vpop.f32.mrb[0].mxu0
  %v993 = vpop.f32.mrb[0].mxu0
  %v994 = vadd.f32 0.0, %v993
  %v995 = vpop.f32.mrb[0].mxu0
  %996 = vmatprep.mubr.bf16.mxu0 0
  %997 = vmatmul.mubr.bf16.gmra.mrb[0].mxu0 %v830
  %v998 = vpop.f32.mrb[0].mxu0
  %v999 = vadd.f32 0.0, %v998
  %v1000 = vpop.f32.mrb[0].mxu0
  %v1001 = vpop.f32.mrb[0].mxu0
  %v1002 = vadd.f32 0.0, %v1001
  %v1003 = vpop.f32.mrb[0].mxu0
  %1004 = vmatprep.mubr.bf16.mxu0 0
  %1005 = vmatmul.mubr.bf16.gmra.mrb[0].mxu0 %v831
  %v1006 = vpop.f32.mrb[0].mxu0
  %v1007 = vadd.f32 0.0, %v1006
  %v1008 = vpop.f32.mrb[0].mxu0
  %v1009 = vpop.f32.mrb[0].mxu0
  %v1010 = vadd.f32 0.0, %v1009
  %v1011 = vpop.f32.mrb[0].mxu0
  %1012 = vmatprep.mubr.bf16.mxu0 0
  %1013 = vmatmul.mubr.bf16.gmra.mrb[0].mxu0 %v832
  %v1014 = vpop.f32.mrb[0].mxu0
  %v1015 = vadd.f32 0.0, %v1014
  %v1016 = vpop.f32.mrb[0].mxu0
  %v1017 = vpop.f32.mrb[0].mxu0
  %v1018 = vadd.f32 0.0, %v1017
  %v1019 = vpop.f32.mrb[0].mxu0
  %1020 = vmatprep.mubr.bf16.mxu0 0
  %1021 = vmatmul.mubr.bf16.gmra.mrb[0].mxu0 %v833
  %v1022 = vpop.f32.mrb[0].mxu0
  %v1023 = vadd.f32 0.0, %v1022
  %v1024 = vpop.f32.mrb[0].mxu0
  %v1025 = vpop.f32.mrb[0].mxu0
  %v1026 = vadd.f32 0.0, %v1025
  %v1027 = vpop.f32.mrb[0].mxu0
  %1028 = vmatprep.mubr.bf16.mxu0 0
  %1029 = vmatmul.mubr.bf16.gmra.mrb[0].mxu0 %v834
  %v1030 = vpop.f32.mrb[0].mxu0
  %v1031 = vadd.f32 0.0, %v1030
  %v1032 = vpop.f32.mrb[0].mxu0
  %v1033 = vpop.f32.mrb[0].mxu0
  %v1034 = vadd.f32 0.0, %v1033
  %v1035 = vpop.f32.mrb[0].mxu0
  %1036 = vmatprep.mubr.bf16.mxu0 0
  %1037 = vmatmul.mubr.bf16.gmra.mrb[0].mxu0 %v835
  %v1038 = vpop.f32.mrb[0].mxu0
  %v1039 = vadd.f32 0.0, %v1038
  %v1040 = vpop.f32.mrb[0].mxu0
  %v1041 = vpop.f32.mrb[0].mxu0
  %v1042 = vadd.f32 0.0, %v1041
  %v1043 = vpop.f32.mrb[0].mxu0
  %1044 = vmatprep.mubr.bf16.mxu0 0
  %1045 = vmatmul.mubr.bf16.gmra.mrb[0].mxu0 %v836
  %v1046 = vpop.f32.mrb[0].mxu0
  %v1047 = vadd.f32 0.0, %v1046
  %v1048 = vpop.f32.mrb[0].mxu0
  %v1049 = vpop.f32.mrb[0].mxu0
  %v1050 = vadd.f32 0.0, %v1049
  %v1051 = vpop.f32.mrb[0].mxu0
  %1052 = vmatprep.mubr.bf16.mxu0 0
  %1053 = vmatmul.mubr.bf16.gmra.mrb[0].mxu0 %v837
  %v1054 = vpop.f32.mrb[0].mxu0
  %v1055 = vadd.f32 0.0, %v1054
  %v1056 = vpop.f32.mrb[0].mxu0
  %v1057 = vpop.f32.mrb[0].mxu0
  %v1058 = vadd.f32 0.0, %v1057
  %v1059 = vpop.f32.mrb[0].mxu0
  %1060 = vmatprep.mubr.bf16.mxu0 0
  %1061 = vmatmul.mubr.bf16.gmra.mrb[0].mxu0 %v838
  %v1062 = vpop.f32.mrb[0].mxu0
  %v1063 = vadd.f32 0.0, %v1062
  %v1064 = vpop.f32.mrb[0].mxu0
  %v1065 = vpop.f32.mrb[0].mxu0
  %v1066 = vadd.f32 0.0, %v1065
  %v1067 = vpop.f32.mrb[0].mxu0
  %1068 = vmatprep.mubr.bf16.mxu0 0
  %1069 = vmatmul.mubr.bf16.gmra.mrb[0].mxu0 %v839
  %v1070 = vpop.f32.mrb[0].mxu0
  %v1071 = vadd.f32 0.0, %v1070
  %v1072 = vpop.f32.mrb[0].mxu0
  %v1073 = vpop.f32.mrb[0].mxu0
  %v1074 = vadd.f32 0.0, %v1073
  %v1075 = vpop.f32.mrb[0].mxu0
  %1076 = vmatprep.mubr.bf16.mxu0 0
  %1077 = vmatmul.mubr.bf16.gmra.mrb[0].mxu0 %v840
  %v1078 = vpop.f32.mrb[0].mxu0
  %v1079 = vadd.f32 0.0, %v1078
  %v1080 = vpop.f32.mrb[0].mxu0
  %v1081 = vpop.f32.mrb[0].mxu0
  %v1082 = vadd.f32 0.0, %v1081
  %v1083 = vpop.f32.mrb[0].mxu0
  %1084 = vmatprep.mubr.bf16.mxu0 0
  %1085 = vmatmul.mubr.bf16.gmra.mrb[0].mxu0 %v841
  %v1086 = vpop.f32.mrb[0].mxu0
  %v1087 = vadd.f32 0.0, %v1086
  %v1088 = vpop.f32.mrb[0].mxu0
  %v1089 = vpop.f32.mrb[0].mxu0
  %v1090 = vadd.f32 0.0, %v1089
  %v1091 = vpop.f32.mrb[0].mxu0
  %1092 = vmatprep.mubr.bf16.mxu0 0
  %1093 = vmatmul.mubr.bf16.gmra.mrb[0].mxu0 %v842
  %v1094 = vpop.f32.mrb[0].mxu0
  %v1095 = vadd.f32 0.0, %v1094
  %v1096 = vpop.f32.mrb[0].mxu0
  %v1097 = vpop.f32.mrb[0].mxu0
  %v1098 = vadd.f32 0.0, %v1097
  %v1099 = vpop.f32.mrb[0].mxu0
  %1100 = vmatprep.mubr.bf16.mxu0 0
  %1101 = vmatmul.mubr.bf16.gmra.mrb[0].mxu0 %v843
  %v1102 = vpop.f32.mrb[0].mxu0
  %v1103 = vadd.f32 0.0, %v1102
  %v1104 = vpop.f32.mrb[0].mxu0
  %v1105 = vpop.f32.mrb[0].mxu0
  %v1106 = vadd.f32 0.0, %v1105
  %v1107 = vpop.f32.mrb[0].mxu0
  %1108 = vmatprep.mubr.bf16.mxu0 0
  %1109 = vmatmul.mubr.bf16.gmra.mrb[0].mxu0 %v844
  %v1110 = vpop.f32.mrb[0].mxu0
  %v1111 = vadd.f32 0.0, %v1110
  %v1112 = vpop.f32.mrb[0].mxu0
  %v1113 = vpop.f32.mrb[0].mxu0
  %v1114 = vadd.f32 0.0, %v1113
  %v1115 = vpop.f32.mrb[0].mxu0
  %1116 = vmatprep.mubr.bf16.mxu0 0
  %1117 = vmatmul.mubr.bf16.gmra.mrb[0].mxu0 %v845
  %v1118 = vpop.f32.mrb[0].mxu0
  %v1119 = vadd.f32 0.0, %v1118
  %v1120 = vpop.f32.mrb[0].mxu0
  %v1121 = vpop.f32.mrb[0].mxu0
  %v1122 = vadd.f32 0.0, %v1121
  %v1123 = vpop.f32.mrb[0].mxu0
  %1124 = vmatprep.mubr.bf16.mxu0 0
  %1125 = vmatmul.mubr.bf16.gmra.mrb[0].mxu0 %v846
  %v1126 = vpop.f32.mrb[0].mxu0
  %v1127 = vadd.f32 0.0, %v1126
  %v1128 = vpop.f32.mrb[0].mxu0
  %v1129 = vpop.f32.mrb[0].mxu0
  %v1130 = vadd.f32 0.0, %v1129
  %v1131 = vpop.f32.mrb[0].mxu0
  %1132 = vmatprep.mubr.bf16.mxu0 0
  %1133 = vmatmul.mubr.bf16.gmra.mrb[0].mxu0 %v847
  %v1134 = vpop.f32.mrb[0].mxu0
  %v1135 = vadd.f32 0.0, %v1134
  %v1136 = vpop.f32.mrb[0].mxu0
  %v1137 = vpop.f32.mrb[0].mxu0
  %v1138 = vadd.f32 0.0, %v1137
  %v1139 = vpop.f32.mrb[0].mxu0
  %1140 = vmatprep.mubr.bf16.mxu0 0
  %1141 = vmatmul.mubr.bf16.gmra.mrb[0].mxu0 %v848
  %v1142 = vpop.f32.mrb[0].mxu0
  %v1143 = vadd.f32 0.0, %v1142
  %v1144 = vpop.f32.mrb[0].mxu0
  %v1145 = vpop.f32.mrb[0].mxu0
  %v1146 = vadd.f32 0.0, %v1145
  %v1147 = vpop.f32.mrb[0].mxu0
  %1148 = vmatprep.mubr.bf16.mxu0 0
  %1149 = vmatmul.mubr.bf16.gmra.mrb[0].mxu0 %v849
  %v1150 = vpop.f32.mrb[0].mxu0
  %v1151 = vadd.f32 0.0, %v1150
  %v1152 = vpop.f32.mrb[0].mxu0
  %v1153 = vpop.f32.mrb[0].mxu0
  %v1154 = vadd.f32 0.0, %v1153
  %v1155 = vpop.f32.mrb[0].mxu0
  %1156 = vmatprep.mubr.bf16.mxu0 0
  %1157 = vmatmul.mubr.bf16.gmra.mrb[0].mxu0 %v850
  %v1158 = vpop.f32.mrb[0].mxu0
  %v1159 = vadd.f32 0.0, %v1158
  %v1160 = vpop.f32.mrb[0].mxu0
  %v1161 = vpop.f32.mrb[0].mxu0
  %v1162 = vadd.f32 0.0, %v1161
  %v1163 = vpop.f32.mrb[0].mxu0
  %1164 = vmatprep.mubr.bf16.mxu0 0
  %1165 = vmatmul.mubr.bf16.gmra.mrb[0].mxu0 %v851
  %v1166 = vpop.f32.mrb[0].mxu0
  %v1167 = vadd.f32 0.0, %v1166
  %v1168 = vpop.f32.mrb[0].mxu0
  %v1169 = vpop.f32.mrb[0].mxu0
  %v1170 = vadd.f32 0.0, %v1169
  %v1171 = vpop.f32.mrb[0].mxu0
  %1172 = vdwg.mxu0
  %s1173 = scalar_lea.vmem %s0, 512
  %v1174 = vld [vmem:[%s1173] sm:$0xf]
  %v1175 = vld [vmem:[%s1173 + $0x4] sm:$0xf]
  %v1176 = vld [vmem:[%s1173 + $0x8] sm:$0xf]
  %v1177 = vld [vmem:[%s1173 + $0xc] sm:$0xf]
  %v1178 = vld [vmem:[%s1173 + $0x10] sm:$0xf]
  %v1179 = vld [vmem:[%s1173 + $0x14] sm:$0xf]
  %v1180 = vld [vmem:[%s1173 + $0x18] sm:$0xf]
  %v1181 = vld [vmem:[%s1173 + $0x1c] sm:$0xf]
  %v1182 = vld [vmem:[%s1173 + $0x20] sm:$0xf]
  %v1183 = vld [vmem:[%s1173 + $0x24] sm:$0xf]
  %v1184 = vld [vmem:[%s1173 + $0x28] sm:$0xf]
  %v1185 = vld [vmem:[%s1173 + $0x2c] sm:$0xf]
  %v1186 = vld [vmem:[%s1173 + $0x30] sm:$0xf]
  %v1187 = vld [vmem:[%s1173 + $0x34] sm:$0xf]
  %v1188 = vld [vmem:[%s1173 + $0x38] sm:$0xf]
  %v1189 = vld [vmem:[%s1173 + $0x3c] sm:$0xf]
  %v1190 = vld [vmem:[%s1173 + $0x40] sm:$0xf]
  %v1191 = vld [vmem:[%s1173 + $0x44] sm:$0xf]
  %v1192 = vld [vmem:[%s1173 + $0x48] sm:$0xf]
  %v1193 = vld [vmem:[%s1173 + $0x4c] sm:$0xf]
  %v1194 = vld [vmem:[%s1173 + $0x50] sm:$0xf]
  %v1195 = vld [vmem:[%s1173 + $0x54] sm:$0xf]
  %v1196 = vld [vmem:[%s1173 + $0x58] sm:$0xf]
  %v1197 = vld [vmem:[%s1173 + $0x5c] sm:$0xf]
  %v1198 = vld [vmem:[%s1173 + $0x60] sm:$0xf]
  %v1199 = vld [vmem:[%s1173 + $0x64] sm:$0xf]
  %v1200 = vld [vmem:[%s1173 + $0x68] sm:$0xf]
  %v1201 = vld [vmem:[%s1173 + $0x6c] sm:$0xf]
  %v1202 = vld [vmem:[%s1173 + $0x70] sm:$0xf]
  %v1203 = vld [vmem:[%s1173 + $0x74] sm:$0xf]
  %v1204 = vld [vmem:[%s1173 + $0x78] sm:$0xf]
  %v1205 = vld [vmem:[%s1173 + $0x7c] sm:$0xf]
  %v1206 = vld [vmem:[%s1173 + $0x80] sm:$0xf]
  %v1207 = vld [vmem:[%s1173 + $0x84] sm:$0xf]
  %v1208 = vld [vmem:[%s1173 + $0x88] sm:$0xf]
  %v1209 = vld [vmem:[%s1173 + $0x8c] sm:$0xf]
  %v1210 = vld [vmem:[%s1173 + $0x90] sm:$0xf]
  %v1211 = vld [vmem:[%s1173 + $0x94] sm:$0xf]
  %v1212 = vld [vmem:[%s1173 + $0x98] sm:$0xf]
  %v1213 = vld [vmem:[%s1173 + $0x9c] sm:$0xf]
  %v1214 = vld [vmem:[%s1173 + $0xa0] sm:$0xf]
  %v1215 = vld [vmem:[%s1173 + $0xa4] sm:$0xf]
  %v1216 = vld [vmem:[%s1173 + $0xa8] sm:$0xf]
  %v1217 = vld [vmem:[%s1173 + $0xac] sm:$0xf]
  %v1218 = vld [vmem:[%s1173 + $0xb0] sm:$0xf]
  %v1219 = vld [vmem:[%s1173 + $0xb4] sm:$0xf]
  %v1220 = vld [vmem:[%s1173 + $0xb8] sm:$0xf]
  %v1221 = vld [vmem:[%s1173 + $0xbc] sm:$0xf]
  %v1222 = vld [vmem:[%s1173 + $0xc0] sm:$0xf]
  %v1223 = vld [vmem:[%s1173 + $0xc4] sm:$0xf]
  %v1224 = vld [vmem:[%s1173 + $0xc8] sm:$0xf]
  %v1225 = vld [vmem:[%s1173 + $0xcc] sm:$0xf]
  %v1226 = vld [vmem:[%s1173 + $0xd0] sm:$0xf]
  %v1227 = vld [vmem:[%s1173 + $0xd4] sm:$0xf]
  %v1228 = vld [vmem:[%s1173 + $0xd8] sm:$0xf]
  %v1229 = vld [vmem:[%s1173 + $0xdc] sm:$0xf]
  %v1230 = vld [vmem:[%s1173 + $0xe0] sm:$0xf]
  %v1231 = vld [vmem:[%s1173 + $0xe4] sm:$0xf]
  %v1232 = vld [vmem:[%s1173 + $0xe8] sm:$0xf]
  %v1233 = vld [vmem:[%s1173 + $0xec] sm:$0xf]
  %v1234 = vld [vmem:[%s1173 + $0xf0] sm:$0xf]
  %v1235 = vld [vmem:[%s1173 + $0xf4] sm:$0xf]
  %v1236 = vld [vmem:[%s1173 + $0xf8] sm:$0xf]
  %v1237 = vld [vmem:[%s1173 + $0xfc] sm:$0xf]
  %v1302 = vunpack.c.l.b16 %v1174
  %v1303 = vunpack.c.l.b16 %v1175
  %v1304 = vunpack.c.l.b16 %v1176
  %v1305 = vunpack.c.l.b16 %v1177
  %v1306 = vunpack.c.l.b16 %v1178
  %v1307 = vunpack.c.l.b16 %v1179
  %v1308 = vunpack.c.l.b16 %v1180
  %v1309 = vunpack.c.l.b16 %v1181
  %v1310 = vunpack.c.l.b16 %v1182
  %v1311 = vunpack.c.l.b16 %v1183
  %v1312 = vunpack.c.l.b16 %v1184
  %v1313 = vunpack.c.l.b16 %v1185
  %v1314 = vunpack.c.l.b16 %v1186
  %v1315 = vunpack.c.l.b16 %v1187
  %v1316 = vunpack.c.l.b16 %v1188
  %v1317 = vunpack.c.l.b16 %v1189
  %v1318 = vunpack.c.l.b16 %v1190
  %v1319 = vunpack.c.l.b16 %v1191
  %v1320 = vunpack.c.l.b16 %v1192
  %v1321 = vunpack.c.l.b16 %v1193
  %v1322 = vunpack.c.l.b16 %v1194
  %v1323 = vunpack.c.l.b16 %v1195
  %v1324 = vunpack.c.l.b16 %v1196
  %v1325 = vunpack.c.l.b16 %v1197
  %v1326 = vunpack.c.l.b16 %v1198
  %v1327 = vunpack.c.l.b16 %v1199
  %v1328 = vunpack.c.l.b16 %v1200
  %v1329 = vunpack.c.l.b16 %v1201
  %v1330 = vunpack.c.l.b16 %v1202
  %v1331 = vunpack.c.l.b16 %v1203
  %v1332 = vunpack.c.l.b16 %v1204
  %v1333 = vunpack.c.l.b16 %v1205
  %v1334 = vunpack.c.l.b16 %v1206
  %v1335 = vunpack.c.l.b16 %v1207
  %v1336 = vunpack.c.l.b16 %v1208
  %v1337 = vunpack.c.l.b16 %v1209
  %v1338 = vunpack.c.l.b16 %v1210
  %v1339 = vunpack.c.l.b16 %v1211
  %v1340 = vunpack.c.l.b16 %v1212
  %v1341 = vunpack.c.l.b16 %v1213
  %v1342 = vunpack.c.l.b16 %v1214
  %v1343 = vunpack.c.l.b16 %v1215
  %v1344 = vunpack.c.l.b16 %v1216
  %v1345 = vunpack.c.l.b16 %v1217
  %v1346 = vunpack.c.l.b16 %v1218
  %v1347 = vunpack.c.l.b16 %v1219
  %v1348 = vunpack.c.l.b16 %v1220
  %v1349 = vunpack.c.l.b16 %v1221
  %v1350 = vunpack.c.l.b16 %v1222
  %v1351 = vunpack.c.l.b16 %v1223
  %v1352 = vunpack.c.l.b16 %v1224
  %v1353 = vunpack.c.l.b16 %v1225
  %v1354 = vunpack.c.l.b16 %v1226
  %v1355 = vunpack.c.l.b16 %v1227
  %v1356 = vunpack.c.l.b16 %v1228
  %v1357 = vunpack.c.l.b16 %v1229
  %v1358 = vunpack.c.l.b16 %v1230
  %v1359 = vunpack.c.l.b16 %v1231
  %v1360 = vunpack.c.l.b16 %v1232
  %v1361 = vunpack.c.l.b16 %v1233
  %v1362 = vunpack.c.l.b16 %v1234
  %v1363 = vunpack.c.l.b16 %v1235
  %v1364 = vunpack.c.l.b16 %v1236
  %v1365 = vunpack.c.l.b16 %v1237
  %v1366 = vpack.c.b16 %v1303, %v1302
  %v1367 = vpack.c.b16 %v1305, %v1304
  %v1368 = vpack.c.b16 %v1307, %v1306
  %v1369 = vpack.c.b16 %v1309, %v1308
  %v1370 = vpack.c.b16 %v1311, %v1310
  %v1371 = vpack.c.b16 %v1313, %v1312
  %v1372 = vpack.c.b16 %v1315, %v1314
  %v1373 = vpack.c.b16 %v1317, %v1316
  %v1374 = vpack.c.b16 %v1319, %v1318
  %v1375 = vpack.c.b16 %v1321, %v1320
  %v1376 = vpack.c.b16 %v1323, %v1322
  %v1377 = vpack.c.b16 %v1325, %v1324
  %v1378 = vpack.c.b16 %v1327, %v1326
  %v1379 = vpack.c.b16 %v1329, %v1328
  %v1380 = vpack.c.b16 %v1331, %v1330
  %v1381 = vpack.c.b16 %v1333, %v1332
  %v1382 = vpack.c.b16 %v1335, %v1334
  %v1383 = vpack.c.b16 %v1337, %v1336
  %v1384 = vpack.c.b16 %v1339, %v1338
  %v1385 = vpack.c.b16 %v1341, %v1340
  %v1386 = vpack.c.b16 %v1343, %v1342
  %v1387 = vpack.c.b16 %v1345, %v1344
  %v1388 = vpack.c.b16 %v1347, %v1346
  %v1389 = vpack.c.b16 %v1349, %v1348
  %v1390 = vpack.c.b16 %v1351, %v1350
  %v1391 = vpack.c.b16 %v1353, %v1352
  %v1392 = vpack.c.b16 %v1355, %v1354
  %v1393 = vpack.c.b16 %v1357, %v1356
  %v1394 = vpack.c.b16 %v1359, %v1358
  %v1395 = vpack.c.b16 %v1361, %v1360
  %v1396 = vpack.c.b16 %v1363, %v1362
  %v1397 = vpack.c.b16 %v1365, %v1364
  %1430 = vmatprep.subr.bf16.mxu0 0
  %1431 = vmatpush1.bf16.msra.mxu0 %v322
  %1432 = vmatprep.subr.bf16.mxu0 0
  %1433 = vmatpush1.bf16.msra.mxu0 %v323
  %1434 = vmatprep.subr.bf16.mxu0 0
  %1435 = vmatpush1.bf16.msra.mxu0 %v324
  %1436 = vmatprep.subr.bf16.mxu0 0
  %1437 = vmatpush1.bf16.msra.mxu0 %v325
  %1438 = vmatprep.subr.bf16.mxu0 0
  %1439 = vmatpush1.bf16.msra.mxu0 %v326
  %1440 = vmatprep.subr.bf16.mxu0 0
  %1441 = vmatpush1.bf16.msra.mxu0 %v327
  %1442 = vmatprep.subr.bf16.mxu0 0
  %1443 = vmatpush1.bf16.msra.mxu0 %v328
  %1444 = vmatprep.subr.bf16.mxu0 0
  %1445 = vmatpush1.bf16.msra.mxu0 %v329
  %1446 = vmatprep.subr.bf16.mxu0 0
  %1447 = vmatpush1.bf16.msra.mxu0 0
  %1448 = vmatprep.subr.bf16.mxu0 0
  %1449 = vmatpush1.bf16.msra.mxu0 0
  %1450 = vmatprep.subr.bf16.mxu0 0
  %1451 = vmatpush1.bf16.msra.mxu0 0
  %1452 = vmatprep.subr.bf16.mxu0 0
  %1453 = vmatpush1.bf16.msra.mxu0 0
  %1454 = vmatprep.subr.bf16.mxu0 0
  %1455 = vmatpush1.bf16.msra.mxu0 0
  %1456 = vmatprep.subr.bf16.mxu0 0
  %1457 = vmatpush1.bf16.msra.mxu0 0
  %1458 = vmatprep.subr.bf16.mxu0 0
  %1459 = vmatpush1.bf16.msra.mxu0 0
  %1460 = vmatprep.subr.bf16.mxu0 0
  %1461 = vmatpush1.bf16.msra.mxu0 0
  %1462 = vmatprep.mubr.bf16.mxu0 0
  %1463 = vmatmul.mubr.bf16.gmra.mrb[0].mxu0 %v1366
  %v1464 = vpop.f32.mrb[0].mxu0
  %v1465 = vadd.f32 0.0, %v1464
  %v1466 = vpop.f32.mrb[0].mxu0
  %v1467 = vpop.f32.mrb[0].mxu0
  %v1468 = vadd.f32 0.0, %v1467
  %v1469 = vpop.f32.mrb[0].mxu0
  %1470 = vmatprep.mubr.bf16.mxu0 0
  %1471 = vmatmul.mubr.bf16.gmra.mrb[0].mxu0 %v1367
  %v1472 = vpop.f32.mrb[0].mxu0
  %v1473 = vadd.f32 0.0, %v1472
  %v1474 = vpop.f32.mrb[0].mxu0
  %v1475 = vpop.f32.mrb[0].mxu0
  %v1476 = vadd.f32 0.0, %v1475
  %v1477 = vpop.f32.mrb[0].mxu0
  %1478 = vmatprep.mubr.bf16.mxu0 0
  %1479 = vmatmul.mubr.bf16.gmra.mrb[0].mxu0 %v1368
  %v1480 = vpop.f32.mrb[0].mxu0
  %v1481 = vadd.f32 0.0, %v1480
  %v1482 = vpop.f32.mrb[0].mxu0
  %v1483 = vpop.f32.mrb[0].mxu0
  %v1484 = vadd.f32 0.0, %v1483
  %v1485 = vpop.f32.mrb[0].mxu0
  %1486 = vmatprep.mubr.bf16.mxu0 0
  %1487 = vmatmul.mubr.bf16.gmra.mrb[0].mxu0 %v1369
  %v1488 = vpop.f32.mrb[0].mxu0
  %v1489 = vadd.f32 0.0, %v1488
  %v1490 = vpop.f32.mrb[0].mxu0
  %v1491 = vpop.f32.mrb[0].mxu0
  %v1492 = vadd.f32 0.0, %v1491
  %v1493 = vpop.f32.mrb[0].mxu0
  %1494 = vmatprep.mubr.bf16.mxu0 0
  %1495 = vmatmul.mubr.bf16.gmra.mrb[0].mxu0 %v1370
  %v1496 = vpop.f32.mrb[0].mxu0
  %v1497 = vadd.f32 0.0, %v1496
  %v1498 = vpop.f32.mrb[0].mxu0
  %v1499 = vpop.f32.mrb[0].mxu0
  %v1500 = vadd.f32 0.0, %v1499
  %v1501 = vpop.f32.mrb[0].mxu0
  %1502 = vmatprep.mubr.bf16.mxu0 0
  %1503 = vmatmul.mubr.bf16.gmra.mrb[0].mxu0 %v1371
  %v1504 = vpop.f32.mrb[0].mxu0
  %v1505 = vadd.f32 0.0, %v1504
  %v1506 = vpop.f32.mrb[0].mxu0
  %v1507 = vpop.f32.mrb[0].mxu0
  %v1508 = vadd.f32 0.0, %v1507
  %v1509 = vpop.f32.mrb[0].mxu0
  %1510 = vmatprep.mubr.bf16.mxu0 0
  %1511 = vmatmul.mubr.bf16.gmra.mrb[0].mxu0 %v1372
  %v1512 = vpop.f32.mrb[0].mxu0
  %v1513 = vadd.f32 0.0, %v1512
  %v1514 = vpop.f32.mrb[0].mxu0
  %v1515 = vpop.f32.mrb[0].mxu0
  %v1516 = vadd.f32 0.0, %v1515
  %v1517 = vpop.f32.mrb[0].mxu0
  %1518 = vmatprep.mubr.bf16.mxu0 0
  %1519 = vmatmul.mubr.bf16.gmra.mrb[0].mxu0 %v1373
  %v1520 = vpop.f32.mrb[0].mxu0
  %v1521 = vadd.f32 0.0, %v1520
  %v1522 = vpop.f32.mrb[0].mxu0
  %v1523 = vpop.f32.mrb[0].mxu0
  %v1524 = vadd.f32 0.0, %v1523
  %v1525 = vpop.f32.mrb[0].mxu0
  %1526 = vmatprep.mubr.bf16.mxu0 0
  %1527 = vmatmul.mubr.bf16.gmra.mrb[0].mxu0 %v1374
  %v1528 = vpop.f32.mrb[0].mxu0
  %v1529 = vadd.f32 0.0, %v1528
  %v1530 = vpop.f32.mrb[0].mxu0
  %v1531 = vpop.f32.mrb[0].mxu0
  %v1532 = vadd.f32 0.0, %v1531
  %v1533 = vpop.f32.mrb[0].mxu0
  %1534 = vmatprep.mubr.bf16.mxu0 0
  %1535 = vmatmul.mubr.bf16.gmra.mrb[0].mxu0 %v1375
  %v1536 = vpop.f32.mrb[0].mxu0
  %v1537 = vadd.f32 0.0, %v1536
  %v1538 = vpop.f32.mrb[0].mxu0
  %v1539 = vpop.f32.mrb[0].mxu0
  %v1540 = vadd.f32 0.0, %v1539
  %v1541 = vpop.f32.mrb[0].mxu0
  %1542 = vmatprep.mubr.bf16.mxu0 0
  %1543 = vmatmul.mubr.bf16.gmra.mrb[0].mxu0 %v1376
  %v1544 = vpop.f32.mrb[0].mxu0
  %v1545 = vadd.f32 0.0, %v1544
  %v1546 = vpop.f32.mrb[0].mxu0
  %v1547 = vpop.f32.mrb[0].mxu0
  %v1548 = vadd.f32 0.0, %v1547
  %v1549 = vpop.f32.mrb[0].mxu0
  %1550 = vmatprep.mubr.bf16.mxu0 0
  %1551 = vmatmul.mubr.bf16.gmra.mrb[0].mxu0 %v1377
  %v1552 = vpop.f32.mrb[0].mxu0
  %v1553 = vadd.f32 0.0, %v1552
  %v1554 = vpop.f32.mrb[0].mxu0
  %v1555 = vpop.f32.mrb[0].mxu0
  %v1556 = vadd.f32 0.0, %v1555
  %v1557 = vpop.f32.mrb[0].mxu0
  %1558 = vmatprep.mubr.bf16.mxu0 0
  %1559 = vmatmul.mubr.bf16.gmra.mrb[0].mxu0 %v1378
  %v1560 = vpop.f32.mrb[0].mxu0
  %v1561 = vadd.f32 0.0, %v1560
  %v1562 = vpop.f32.mrb[0].mxu0
  %v1563 = vpop.f32.mrb[0].mxu0
  %v1564 = vadd.f32 0.0, %v1563
  %v1565 = vpop.f32.mrb[0].mxu0
  %1566 = vmatprep.mubr.bf16.mxu0 0
  %1567 = vmatmul.mubr.bf16.gmra.mrb[0].mxu0 %v1379
  %v1568 = vpop.f32.mrb[0].mxu0
  %v1569 = vadd.f32 0.0, %v1568
  %v1570 = vpop.f32.mrb[0].mxu0
  %v1571 = vpop.f32.mrb[0].mxu0
  %v1572 = vadd.f32 0.0, %v1571
  %v1573 = vpop.f32.mrb[0].mxu0
  %1574 = vmatprep.mubr.bf16.mxu0 0
  %1575 = vmatmul.mubr.bf16.gmra.mrb[0].mxu0 %v1380
  %v1576 = vpop.f32.mrb[0].mxu0
  %v1577 = vadd.f32 0.0, %v1576
  %v1578 = vpop.f32.mrb[0].mxu0
  %v1579 = vpop.f32.mrb[0].mxu0
  %v1580 = vadd.f32 0.0, %v1579
  %v1581 = vpop.f32.mrb[0].mxu0
  %1582 = vmatprep.mubr.bf16.mxu0 0
  %1583 = vmatmul.mubr.bf16.gmra.mrb[0].mxu0 %v1381
  %v1584 = vpop.f32.mrb[0].mxu0
  %v1585 = vadd.f32 0.0, %v1584
  %v1586 = vpop.f32.mrb[0].mxu0
  %v1587 = vpop.f32.mrb[0].mxu0
  %v1588 = vadd.f32 0.0, %v1587
  %v1589 = vpop.f32.mrb[0].mxu0
  %1590 = vmatprep.mubr.bf16.mxu0 0
  %1591 = vmatmul.mubr.bf16.gmra.mrb[0].mxu0 %v1382
  %v1592 = vpop.f32.mrb[0].mxu0
  %v1593 = vadd.f32 0.0, %v1592
  %v1594 = vpop.f32.mrb[0].mxu0
  %v1595 = vpop.f32.mrb[0].mxu0
  %v1596 = vadd.f32 0.0, %v1595
  %v1597 = vpop.f32.mrb[0].mxu0
  %1598 = vmatprep.mubr.bf16.mxu0 0
  %1599 = vmatmul.mubr.bf16.gmra.mrb[0].mxu0 %v1383
  %v1600 = vpop.f32.mrb[0].mxu0
  %v1601 = vadd.f32 0.0, %v1600
  %v1602 = vpop.f32.mrb[0].mxu0
  %v1603 = vpop.f32.mrb[0].mxu0
  %v1604 = vadd.f32 0.0, %v1603
  %v1605 = vpop.f32.mrb[0].mxu0
  %1606 = vmatprep.mubr.bf16.mxu0 0
  %1607 = vmatmul.mubr.bf16.gmra.mrb[0].mxu0 %v1384
  %v1608 = vpop.f32.mrb[0].mxu0
  %v1609 = vadd.f32 0.0, %v1608
  %v1610 = vpop.f32.mrb[0].mxu0
  %v1611 = vpop.f32.mrb[0].mxu0
  %v1612 = vadd.f32 0.0, %v1611
  %v1613 = vpop.f32.mrb[0].mxu0
  %1614 = vmatprep.mubr.bf16.mxu0 0
  %1615 = vmatmul.mubr.bf16.gmra.mrb[0].mxu0 %v1385
  %v1616 = vpop.f32.mrb[0].mxu0
  %v1617 = vadd.f32 0.0, %v1616
  %v1618 = vpop.f32.mrb[0].mxu0
  %v1619 = vpop.f32.mrb[0].mxu0
  %v1620 = vadd.f32 0.0, %v1619
  %v1621 = vpop.f32.mrb[0].mxu0
  %1622 = vmatprep.mubr.bf16.mxu0 0
  %1623 = vmatmul.mubr.bf16.gmra.mrb[0].mxu0 %v1386
  %v1624 = vpop.f32.mrb[0].mxu0
  %v1625 = vadd.f32 0.0, %v1624
  %v1626 = vpop.f32.mrb[0].mxu0
  %v1627 = vpop.f32.mrb[0].mxu0
  %v1628 = vadd.f32 0.0, %v1627
  %v1629 = vpop.f32.mrb[0].mxu0
  %1630 = vmatprep.mubr.bf16.mxu0 0
  %1631 = vmatmul.mubr.bf16.gmra.mrb[0].mxu0 %v1387
  %v1632 = vpop.f32.mrb[0].mxu0
  %v1633 = vadd.f32 0.0, %v1632
  %v1634 = vpop.f32.mrb[0].mxu0
  %v1635 = vpop.f32.mrb[0].mxu0
  %v1636 = vadd.f32 0.0, %v1635
  %v1637 = vpop.f32.mrb[0].mxu0
  %1638 = vmatprep.mubr.bf16.mxu0 0
  %1639 = vmatmul.mubr.bf16.gmra.mrb[0].mxu0 %v1388
  %v1640 = vpop.f32.mrb[0].mxu0
  %v1641 = vadd.f32 0.0, %v1640
  %v1642 = vpop.f32.mrb[0].mxu0
  %v1643 = vpop.f32.mrb[0].mxu0
  %v1644 = vadd.f32 0.0, %v1643
  %v1645 = vpop.f32.mrb[0].mxu0
  %1646 = vmatprep.mubr.bf16.mxu0 0
  %1647 = vmatmul.mubr.bf16.gmra.mrb[0].mxu0 %v1389
  %v1648 = vpop.f32.mrb[0].mxu0
  %v1649 = vadd.f32 0.0, %v1648
  %v1650 = vpop.f32.mrb[0].mxu0
  %v1651 = vpop.f32.mrb[0].mxu0
  %v1652 = vadd.f32 0.0, %v1651
  %v1653 = vpop.f32.mrb[0].mxu0
  %1654 = vmatprep.mubr.bf16.mxu0 0
  %1655 = vmatmul.mubr.bf16.gmra.mrb[0].mxu0 %v1390
  %v1656 = vpop.f32.mrb[0].mxu0
  %v1657 = vadd.f32 0.0, %v1656
  %v1658 = vpop.f32.mrb[0].mxu0
  %v1659 = vpop.f32.mrb[0].mxu0
  %v1660 = vadd.f32 0.0, %v1659
  %v1661 = vpop.f32.mrb[0].mxu0
  %1662 = vmatprep.mubr.bf16.mxu0 0
  %1663 = vmatmul.mubr.bf16.gmra.mrb[0].mxu0 %v1391
  %v1664 = vpop.f32.mrb[0].mxu0
  %v1665 = vadd.f32 0.0, %v1664
  %v1666 = vpop.f32.mrb[0].mxu0
  %v1667 = vpop.f32.mrb[0].mxu0
  %v1668 = vadd.f32 0.0, %v1667
  %v1669 = vpop.f32.mrb[0].mxu0
  %1670 = vmatprep.mubr.bf16.mxu0 0
  %1671 = vmatmul.mubr.bf16.gmra.mrb[0].mxu0 %v1392
  %v1672 = vpop.f32.mrb[0].mxu0
  %v1673 = vadd.f32 0.0, %v1672
  %v1674 = vpop.f32.mrb[0].mxu0
  %v1675 = vpop.f32.mrb[0].mxu0
  %v1676 = vadd.f32 0.0, %v1675
  %v1677 = vpop.f32.mrb[0].mxu0
  %1678 = vmatprep.mubr.bf16.mxu0 0
  %1679 = vmatmul.mubr.bf16.gmra.mrb[0].mxu0 %v1393
  %v1680 = vpop.f32.mrb[0].mxu0
  %v1681 = vadd.f32 0.0, %v1680
  %v1682 = vpop.f32.mrb[0].mxu0
  %v1683 = vpop.f32.mrb[0].mxu0
  %v1684 = vadd.f32 0.0, %v1683
  %v1685 = vpop.f32.mrb[0].mxu0
  %1686 = vmatprep.mubr.bf16.mxu0 0
  %1687 = vmatmul.mubr.bf16.gmra.mrb[0].mxu0 %v1394
  %v1688 = vpop.f32.mrb[0].mxu0
  %v1689 = vadd.f32 0.0, %v1688
  %v1690 = vpop.f32.mrb[0].mxu0
  %v1691 = vpop.f32.mrb[0].mxu0
  %v1692 = vadd.f32 0.0, %v1691
  %v1693 = vpop.f32.mrb[0].mxu0
  %1694 = vmatprep.mubr.bf16.mxu0 0
  %1695 = vmatmul.mubr.bf16.gmra.mrb[0].mxu0 %v1395
  %v1696 = vpop.f32.mrb[0].mxu0
  %v1697 = vadd.f32 0.0, %v1696
  %v1698 = vpop.f32.mrb[0].mxu0
  %v1699 = vpop.f32.mrb[0].mxu0
  %v1700 = vadd.f32 0.0, %v1699
  %v1701 = vpop.f32.mrb[0].mxu0
  %1702 = vmatprep.mubr.bf16.mxu0 0
  %1703 = vmatmul.mubr.bf16.gmra.mrb[0].mxu0 %v1396
  %v1704 = vpop.f32.mrb[0].mxu0
  %v1705 = vadd.f32 0.0, %v1704
  %v1706 = vpop.f32.mrb[0].mxu0
  %v1707 = vpop.f32.mrb[0].mxu0
  %v1708 = vadd.f32 0.0, %v1707
  %v1709 = vpop.f32.mrb[0].mxu0
  %1710 = vmatprep.mubr.bf16.mxu0 0
  %1711 = vmatmul.mubr.bf16.gmra.mrb[0].mxu0 %v1397
  %v1712 = vpop.f32.mrb[0].mxu0
  %v1713 = vadd.f32 0.0, %v1712
  %v1714 = vpop.f32.mrb[0].mxu0
  %v1715 = vpop.f32.mrb[0].mxu0
  %v1716 = vadd.f32 0.0, %v1715
  %v1717 = vpop.f32.mrb[0].mxu0
  %1718 = vdwg.mxu0
  %s1719 = scalar_lea.vmem %s0, 768
  %v1720 = vld [vmem:[%s1719] sm:$0xf]
  %v1721 = vld [vmem:[%s1719 + $0x4] sm:$0xf]
  %v1722 = vld [vmem:[%s1719 + $0x8] sm:$0xf]
  %v1723 = vld [vmem:[%s1719 + $0xc] sm:$0xf]
  %v1724 = vld [vmem:[%s1719 + $0x10] sm:$0xf]
  %v1725 = vld [vmem:[%s1719 + $0x14] sm:$0xf]
  %v1726 = vld [vmem:[%s1719 + $0x18] sm:$0xf]
  %v1727 = vld [vmem:[%s1719 + $0x1c] sm:$0xf]
  %v1728 = vld [vmem:[%s1719 + $0x20] sm:$0xf]
  %v1729 = vld [vmem:[%s1719 + $0x24] sm:$0xf]
  %v1730 = vld [vmem:[%s1719 + $0x28] sm:$0xf]
  %v1731 = vld [vmem:[%s1719 + $0x2c] sm:$0xf]
  %v1732 = vld [vmem:[%s1719 + $0x30] sm:$0xf]
  %v1733 = vld [vmem:[%s1719 + $0x34] sm:$0xf]
  %v1734 = vld [vmem:[%s1719 + $0x38] sm:$0xf]
  %v1735 = vld [vmem:[%s1719 + $0x3c] sm:$0xf]
  %v1736 = vld [vmem:[%s1719 + $0x40] sm:$0xf]
  %v1737 = vld [vmem:[%s1719 + $0x44] sm:$0xf]
  %v1738 = vld [vmem:[%s1719 + $0x48] sm:$0xf]
  %v1739 = vld [vmem:[%s1719 + $0x4c] sm:$0xf]
  %v1740 = vld [vmem:[%s1719 + $0x50] sm:$0xf]
  %v1741 = vld [vmem:[%s1719 + $0x54] sm:$0xf]
  %v1742 = vld [vmem:[%s1719 + $0x58] sm:$0xf]
  %v1743 = vld [vmem:[%s1719 + $0x5c] sm:$0xf]
  %v1744 = vld [vmem:[%s1719 + $0x60] sm:$0xf]
  %v1745 = vld [vmem:[%s1719 + $0x64] sm:$0xf]
  %v1746 = vld [vmem:[%s1719 + $0x68] sm:$0xf]
  %v1747 = vld [vmem:[%s1719 + $0x6c] sm:$0xf]
  %v1748 = vld [vmem:[%s1719 + $0x70] sm:$0xf]
  %v1749 = vld [vmem:[%s1719 + $0x74] sm:$0xf]
  %v1750 = vld [vmem:[%s1719 + $0x78] sm:$0xf]
  %v1751 = vld [vmem:[%s1719 + $0x7c] sm:$0xf]
  %v1752 = vld [vmem:[%s1719 + $0x80] sm:$0xf]
  %v1753 = vld [vmem:[%s1719 + $0x84] sm:$0xf]
  %v1754 = vld [vmem:[%s1719 + $0x88] sm:$0xf]
  %v1755 = vld [vmem:[%s1719 + $0x8c] sm:$0xf]
  %v1756 = vld [vmem:[%s1719 + $0x90] sm:$0xf]
  %v1757 = vld [vmem:[%s1719 + $0x94] sm:$0xf]
  %v1758 = vld [vmem:[%s1719 + $0x98] sm:$0xf]
  %v1759 = vld [vmem:[%s1719 + $0x9c] sm:$0xf]
  %v1760 = vld [vmem:[%s1719 + $0xa0] sm:$0xf]
  %v1761 = vld [vmem:[%s1719 + $0xa4] sm:$0xf]
  %v1762 = vld [vmem:[%s1719 + $0xa8] sm:$0xf]
  %v1763 = vld [vmem:[%s1719 + $0xac] sm:$0xf]
  %v1764 = vld [vmem:[%s1719 + $0xb0] sm:$0xf]
  %v1765 = vld [vmem:[%s1719 + $0xb4] sm:$0xf]
  %v1766 = vld [vmem:[%s1719 + $0xb8] sm:$0xf]
  %v1767 = vld [vmem:[%s1719 + $0xbc] sm:$0xf]
  %v1768 = vld [vmem:[%s1719 + $0xc0] sm:$0xf]
  %v1769 = vld [vmem:[%s1719 + $0xc4] sm:$0xf]
  %v1770 = vld [vmem:[%s1719 + $0xc8] sm:$0xf]
  %v1771 = vld [vmem:[%s1719 + $0xcc] sm:$0xf]
  %v1772 = vld [vmem:[%s1719 + $0xd0] sm:$0xf]
  %v1773 = vld [vmem:[%s1719 + $0xd4] sm:$0xf]
  %v1774 = vld [vmem:[%s1719 + $0xd8] sm:$0xf]
  %v1775 = vld [vmem:[%s1719 + $0xdc] sm:$0xf]
  %v1776 = vld [vmem:[%s1719 + $0xe0] sm:$0xf]
  %v1777 = vld [vmem:[%s1719 + $0xe4] sm:$0xf]
  %v1778 = vld [vmem:[%s1719 + $0xe8] sm:$0xf]
  %v1779 = vld [vmem:[%s1719 + $0xec] sm:$0xf]
  %v1780 = vld [vmem:[%s1719 + $0xf0] sm:$0xf]
  %v1781 = vld [vmem:[%s1719 + $0xf4] sm:$0xf]
  %v1782 = vld [vmem:[%s1719 + $0xf8] sm:$0xf]
  %v1783 = vld [vmem:[%s1719 + $0xfc] sm:$0xf]
  %v1848 = vunpack.c.l.b16 %v1720
  %v1849 = vunpack.c.l.b16 %v1721
  %v1850 = vunpack.c.l.b16 %v1722
  %v1851 = vunpack.c.l.b16 %v1723
  %v1852 = vunpack.c.l.b16 %v1724
  %v1853 = vunpack.c.l.b16 %v1725
  %v1854 = vunpack.c.l.b16 %v1726
  %v1855 = vunpack.c.l.b16 %v1727
  %v1856 = vunpack.c.l.b16 %v1728
  %v1857 = vunpack.c.l.b16 %v1729
  %v1858 = vunpack.c.l.b16 %v1730
  %v1859 = vunpack.c.l.b16 %v1731
  %v1860 = vunpack.c.l.b16 %v1732
  %v1861 = vunpack.c.l.b16 %v1733
  %v1862 = vunpack.c.l.b16 %v1734
  %v1863 = vunpack.c.l.b16 %v1735
  %v1864 = vunpack.c.l.b16 %v1736
  %v1865 = vunpack.c.l.b16 %v1737
  %v1866 = vunpack.c.l.b16 %v1738
  %v1867 = vunpack.c.l.b16 %v1739
  %v1868 = vunpack.c.l.b16 %v1740
  %v1869 = vunpack.c.l.b16 %v1741
  %v1870 = vunpack.c.l.b16 %v1742
  %v1871 = vunpack.c.l.b16 %v1743
  %v1872 = vunpack.c.l.b16 %v1744
  %v1873 = vunpack.c.l.b16 %v1745
  %v1874 = vunpack.c.l.b16 %v1746
  %v1875 = vunpack.c.l.b16 %v1747
  %v1876 = vunpack.c.l.b16 %v1748
  %v1877 = vunpack.c.l.b16 %v1749
  %v1878 = vunpack.c.l.b16 %v1750
  %v1879 = vunpack.c.l.b16 %v1751
  %v1880 = vunpack.c.l.b16 %v1752
  %v1881 = vunpack.c.l.b16 %v1753
  %v1882 = vunpack.c.l.b16 %v1754
  %v1883 = vunpack.c.l.b16 %v1755
  %v1884 = vunpack.c.l.b16 %v1756
  %v1885 = vunpack.c.l.b16 %v1757
  %v1886 = vunpack.c.l.b16 %v1758
  %v1887 = vunpack.c.l.b16 %v1759
  %v1888 = vunpack.c.l.b16 %v1760
  %v1889 = vunpack.c.l.b16 %v1761
  %v1890 = vunpack.c.l.b16 %v1762
  %v1891 = vunpack.c.l.b16 %v1763
  %v1892 = vunpack.c.l.b16 %v1764
  %v1893 = vunpack.c.l.b16 %v1765
  %v1894 = vunpack.c.l.b16 %v1766
  %v1895 = vunpack.c.l.b16 %v1767
  %v1896 = vunpack.c.l.b16 %v1768
  %v1897 = vunpack.c.l.b16 %v1769
  %v1898 = vunpack.c.l.b16 %v1770
  %v1899 = vunpack.c.l.b16 %v1771
  %v1900 = vunpack.c.l.b16 %v1772
  %v1901 = vunpack.c.l.b16 %v1773
  %v1902 = vunpack.c.l.b16 %v1774
  %v1903 = vunpack.c.l.b16 %v1775
  %v1904 = vunpack.c.l.b16 %v1776
  %v1905 = vunpack.c.l.b16 %v1777
  %v1906 = vunpack.c.l.b16 %v1778
  %v1907 = vunpack.c.l.b16 %v1779
  %v1908 = vunpack.c.l.b16 %v1780
  %v1909 = vunpack.c.l.b16 %v1781
  %v1910 = vunpack.c.l.b16 %v1782
  %v1911 = vunpack.c.l.b16 %v1783
  %v1912 = vpack.c.b16 %v1849, %v1848
  %v1913 = vpack.c.b16 %v1851, %v1850
  %v1914 = vpack.c.b16 %v1853, %v1852
  %v1915 = vpack.c.b16 %v1855, %v1854
  %v1916 = vpack.c.b16 %v1857, %v1856
  %v1917 = vpack.c.b16 %v1859, %v1858
  %v1918 = vpack.c.b16 %v1861, %v1860
  %v1919 = vpack.c.b16 %v1863, %v1862
  %v1920 = vpack.c.b16 %v1865, %v1864
  %v1921 = vpack.c.b16 %v1867, %v1866
  %v1922 = vpack.c.b16 %v1869, %v1868
  %v1923 = vpack.c.b16 %v1871, %v1870
  %v1924 = vpack.c.b16 %v1873, %v1872
  %v1925 = vpack.c.b16 %v1875, %v1874
  %v1926 = vpack.c.b16 %v1877, %v1876
  %v1927 = vpack.c.b16 %v1879, %v1878
  %v1928 = vpack.c.b16 %v1881, %v1880
  %v1929 = vpack.c.b16 %v1883, %v1882
  %v1930 = vpack.c.b16 %v1885, %v1884
  %v1931 = vpack.c.b16 %v1887, %v1886
  %v1932 = vpack.c.b16 %v1889, %v1888
  %v1933 = vpack.c.b16 %v1891, %v1890
  %v1934 = vpack.c.b16 %v1893, %v1892
  %v1935 = vpack.c.b16 %v1895, %v1894
  %v1936 = vpack.c.b16 %v1897, %v1896
  %v1937 = vpack.c.b16 %v1899, %v1898
  %v1938 = vpack.c.b16 %v1901, %v1900
  %v1939 = vpack.c.b16 %v1903, %v1902
  %v1940 = vpack.c.b16 %v1905, %v1904
  %v1941 = vpack.c.b16 %v1907, %v1906
  %v1942 = vpack.c.b16 %v1909, %v1908
  %v1943 = vpack.c.b16 %v1911, %v1910
  %1976 = vmatprep.subr.bf16.mxu0 0
  %1977 = vmatpush1.bf16.msra.mxu0 %v322
  %1978 = vmatprep.subr.bf16.mxu0 0
  %1979 = vmatpush1.bf16.msra.mxu0 %v323
  %1980 = vmatprep.subr.bf16.mxu0 0
  %1981 = vmatpush1.bf16.msra.mxu0 %v324
  %1982 = vmatprep.subr.bf16.mxu0 0
  %1983 = vmatpush1.bf16.msra.mxu0 %v325
  %1984 = vmatprep.subr.bf16.mxu0 0
  %1985 = vmatpush1.bf16.msra.mxu0 %v326
  %1986 = vmatprep.subr.bf16.mxu0 0
  %1987 = vmatpush1.bf16.msra.mxu0 %v327
  %1988 = vmatprep.subr.bf16.mxu0 0
  %1989 = vmatpush1.bf16.msra.mxu0 %v328
  %1990 = vmatprep.subr.bf16.mxu0 0
  %1991 = vmatpush1.bf16.msra.mxu0 %v329
  %1992 = vmatprep.subr.bf16.mxu0 0
  %1993 = vmatpush1.bf16.msra.mxu0 0
  %1994 = vmatprep.subr.bf16.mxu0 0
  %1995 = vmatpush1.bf16.msra.mxu0 0
  %1996 = vmatprep.subr.bf16.mxu0 0
  %1997 = vmatpush1.bf16.msra.mxu0 0
  %1998 = vmatprep.subr.bf16.mxu0 0
  %1999 = vmatpush1.bf16.msra.mxu0 0
  %2000 = vmatprep.subr.bf16.mxu0 0
  %2001 = vmatpush1.bf16.msra.mxu0 0
  %2002 = vmatprep.subr.bf16.mxu0 0
  %2003 = vmatpush1.bf16.msra.mxu0 0
  %2004 = vmatprep.subr.bf16.mxu0 0
  %2005 = vmatpush1.bf16.msra.mxu0 0
  %2006 = vmatprep.subr.bf16.mxu0 0
  %2007 = vmatpush1.bf16.msra.mxu0 0
  %2008 = vmatprep.mubr.bf16.mxu0 0
  %2009 = vmatmul.mubr.bf16.gmra.mrb[0].mxu0 %v1912
  %v2010 = vpop.f32.mrb[0].mxu0
  %v2011 = vadd.f32 0.0, %v2010
  %v2012 = vpop.f32.mrb[0].mxu0
  %v2013 = vpop.f32.mrb[0].mxu0
  %v2014 = vadd.f32 0.0, %v2013
  %v2015 = vpop.f32.mrb[0].mxu0
  %2016 = vmatprep.mubr.bf16.mxu0 0
  %2017 = vmatmul.mubr.bf16.gmra.mrb[0].mxu0 %v1913
  %v2018 = vpop.f32.mrb[0].mxu0
  %v2019 = vadd.f32 0.0, %v2018
  %v2020 = vpop.f32.mrb[0].mxu0
  %v2021 = vpop.f32.mrb[0].mxu0
  %v2022 = vadd.f32 0.0, %v2021
  %v2023 = vpop.f32.mrb[0].mxu0
  %2024 = vmatprep.mubr.bf16.mxu0 0
  %2025 = vmatmul.mubr.bf16.gmra.mrb[0].mxu0 %v1914
  %v2026 = vpop.f32.mrb[0].mxu0
  %v2027 = vadd.f32 0.0, %v2026
  %v2028 = vpop.f32.mrb[0].mxu0
  %v2029 = vpop.f32.mrb[0].mxu0
  %v2030 = vadd.f32 0.0, %v2029
  %v2031 = vpop.f32.mrb[0].mxu0
  %2032 = vmatprep.mubr.bf16.mxu0 0
  %2033 = vmatmul.mubr.bf16.gmra.mrb[0].mxu0 %v1915
  %v2034 = vpop.f32.mrb[0].mxu0
  %v2035 = vadd.f32 0.0, %v2034
  %v2036 = vpop.f32.mrb[0].mxu0
  %v2037 = vpop.f32.mrb[0].mxu0
  %v2038 = vadd.f32 0.0, %v2037
  %v2039 = vpop.f32.mrb[0].mxu0
  %2040 = vmatprep.mubr.bf16.mxu0 0
  %2041 = vmatmul.mubr.bf16.gmra.mrb[0].mxu0 %v1916
  %v2042 = vpop.f32.mrb[0].mxu0
  %v2043 = vadd.f32 0.0, %v2042
  %v2044 = vpop.f32.mrb[0].mxu0
  %v2045 = vpop.f32.mrb[0].mxu0
  %v2046 = vadd.f32 0.0, %v2045
  %v2047 = vpop.f32.mrb[0].mxu0
  %2048 = vmatprep.mubr.bf16.mxu0 0
  %2049 = vmatmul.mubr.bf16.gmra.mrb[0].mxu0 %v1917
  %v2050 = vpop.f32.mrb[0].mxu0
  %v2051 = vadd.f32 0.0, %v2050
  %v2052 = vpop.f32.mrb[0].mxu0
  %v2053 = vpop.f32.mrb[0].mxu0
  %v2054 = vadd.f32 0.0, %v2053
  %v2055 = vpop.f32.mrb[0].mxu0
  %2056 = vmatprep.mubr.bf16.mxu0 0
  %2057 = vmatmul.mubr.bf16.gmra.mrb[0].mxu0 %v1918
  %v2058 = vpop.f32.mrb[0].mxu0
  %v2059 = vadd.f32 0.0, %v2058
  %v2060 = vpop.f32.mrb[0].mxu0
  %v2061 = vpop.f32.mrb[0].mxu0
  %v2062 = vadd.f32 0.0, %v2061
  %v2063 = vpop.f32.mrb[0].mxu0
  %2064 = vmatprep.mubr.bf16.mxu0 0
  %2065 = vmatmul.mubr.bf16.gmra.mrb[0].mxu0 %v1919
  %v2066 = vpop.f32.mrb[0].mxu0
  %v2067 = vadd.f32 0.0, %v2066
  %v2068 = vpop.f32.mrb[0].mxu0
  %v2069 = vpop.f32.mrb[0].mxu0
  %v2070 = vadd.f32 0.0, %v2069
  %v2071 = vpop.f32.mrb[0].mxu0
  %2072 = vmatprep.mubr.bf16.mxu0 0
  %2073 = vmatmul.mubr.bf16.gmra.mrb[0].mxu0 %v1920
  %v2074 = vpop.f32.mrb[0].mxu0
  %v2075 = vadd.f32 0.0, %v2074
  %v2076 = vpop.f32.mrb[0].mxu0
  %v2077 = vpop.f32.mrb[0].mxu0
  %v2078 = vadd.f32 0.0, %v2077
  %v2079 = vpop.f32.mrb[0].mxu0
  %2080 = vmatprep.mubr.bf16.mxu0 0
  %2081 = vmatmul.mubr.bf16.gmra.mrb[0].mxu0 %v1921
  %v2082 = vpop.f32.mrb[0].mxu0
  %v2083 = vadd.f32 0.0, %v2082
  %v2084 = vpop.f32.mrb[0].mxu0
  %v2085 = vpop.f32.mrb[0].mxu0
  %v2086 = vadd.f32 0.0, %v2085
  %v2087 = vpop.f32.mrb[0].mxu0
  %2088 = vmatprep.mubr.bf16.mxu0 0
  %2089 = vmatmul.mubr.bf16.gmra.mrb[0].mxu0 %v1922
  %v2090 = vpop.f32.mrb[0].mxu0
  %v2091 = vadd.f32 0.0, %v2090
  %v2092 = vpop.f32.mrb[0].mxu0
  %v2093 = vpop.f32.mrb[0].mxu0
  %v2094 = vadd.f32 0.0, %v2093
  %v2095 = vpop.f32.mrb[0].mxu0
  %2096 = vmatprep.mubr.bf16.mxu0 0
  %2097 = vmatmul.mubr.bf16.gmra.mrb[0].mxu0 %v1923
  %v2098 = vpop.f32.mrb[0].mxu0
  %v2099 = vadd.f32 0.0, %v2098
  %v2100 = vpop.f32.mrb[0].mxu0
  %v2101 = vpop.f32.mrb[0].mxu0
  %v2102 = vadd.f32 0.0, %v2101
  %v2103 = vpop.f32.mrb[0].mxu0
  %2104 = vmatprep.mubr.bf16.mxu0 0
  %2105 = vmatmul.mubr.bf16.gmra.mrb[0].mxu0 %v1924
  %v2106 = vpop.f32.mrb[0].mxu0
  %v2107 = vadd.f32 0.0, %v2106
  %v2108 = vpop.f32.mrb[0].mxu0
  %v2109 = vpop.f32.mrb[0].mxu0
  %v2110 = vadd.f32 0.0, %v2109
  %v2111 = vpop.f32.mrb[0].mxu0
  %2112 = vmatprep.mubr.bf16.mxu0 0
  %2113 = vmatmul.mubr.bf16.gmra.mrb[0].mxu0 %v1925
  %v2114 = vpop.f32.mrb[0].mxu0
  %v2115 = vadd.f32 0.0, %v2114
  %v2116 = vpop.f32.mrb[0].mxu0
  %v2117 = vpop.f32.mrb[0].mxu0
  %v2118 = vadd.f32 0.0, %v2117
  %v2119 = vpop.f32.mrb[0].mxu0
  %2120 = vmatprep.mubr.bf16.mxu0 0
  %2121 = vmatmul.mubr.bf16.gmra.mrb[0].mxu0 %v1926
  %v2122 = vpop.f32.mrb[0].mxu0
  %v2123 = vadd.f32 0.0, %v2122
  %v2124 = vpop.f32.mrb[0].mxu0
  %v2125 = vpop.f32.mrb[0].mxu0
  %v2126 = vadd.f32 0.0, %v2125
  %v2127 = vpop.f32.mrb[0].mxu0
  %2128 = vmatprep.mubr.bf16.mxu0 0
  %2129 = vmatmul.mubr.bf16.gmra.mrb[0].mxu0 %v1927
  %v2130 = vpop.f32.mrb[0].mxu0
  %v2131 = vadd.f32 0.0, %v2130
  %v2132 = vpop.f32.mrb[0].mxu0
  %v2133 = vpop.f32.mrb[0].mxu0
  %v2134 = vadd.f32 0.0, %v2133
  %v2135 = vpop.f32.mrb[0].mxu0
  %2136 = vmatprep.mubr.bf16.mxu0 0
  %2137 = vmatmul.mubr.bf16.gmra.mrb[0].mxu0 %v1928
  %v2138 = vpop.f32.mrb[0].mxu0
  %v2139 = vadd.f32 0.0, %v2138
  %v2140 = vpop.f32.mrb[0].mxu0
  %v2141 = vpop.f32.mrb[0].mxu0
  %v2142 = vadd.f32 0.0, %v2141
  %v2143 = vpop.f32.mrb[0].mxu0
  %2144 = vmatprep.mubr.bf16.mxu0 0
  %2145 = vmatmul.mubr.bf16.gmra.mrb[0].mxu0 %v1929
  %v2146 = vpop.f32.mrb[0].mxu0
  %v2147 = vadd.f32 0.0, %v2146
  %v2148 = vpop.f32.mrb[0].mxu0
  %v2149 = vpop.f32.mrb[0].mxu0
  %v2150 = vadd.f32 0.0, %v2149
  %v2151 = vpop.f32.mrb[0].mxu0
  %2152 = vmatprep.mubr.bf16.mxu0 0
  %2153 = vmatmul.mubr.bf16.gmra.mrb[0].mxu0 %v1930
  %v2154 = vpop.f32.mrb[0].mxu0
  %v2155 = vadd.f32 0.0, %v2154
  %v2156 = vpop.f32.mrb[0].mxu0
  %v2157 = vpop.f32.mrb[0].mxu0
  %v2158 = vadd.f32 0.0, %v2157
  %v2159 = vpop.f32.mrb[0].mxu0
  %2160 = vmatprep.mubr.bf16.mxu0 0
  %2161 = vmatmul.mubr.bf16.gmra.mrb[0].mxu0 %v1931
  %v2162 = vpop.f32.mrb[0].mxu0
  %v2163 = vadd.f32 0.0, %v2162
  %v2164 = vpop.f32.mrb[0].mxu0
  %v2165 = vpop.f32.mrb[0].mxu0
  %v2166 = vadd.f32 0.0, %v2165
  %v2167 = vpop.f32.mrb[0].mxu0
  %2168 = vmatprep.mubr.bf16.mxu0 0
  %2169 = vmatmul.mubr.bf16.gmra.mrb[0].mxu0 %v1932
  %v2170 = vpop.f32.mrb[0].mxu0
  %v2171 = vadd.f32 0.0, %v2170
  %v2172 = vpop.f32.mrb[0].mxu0
  %v2173 = vpop.f32.mrb[0].mxu0
  %v2174 = vadd.f32 0.0, %v2173
  %v2175 = vpop.f32.mrb[0].mxu0
  %2176 = vmatprep.mubr.bf16.mxu0 0
  %2177 = vmatmul.mubr.bf16.gmra.mrb[0].mxu0 %v1933
  %v2178 = vpop.f32.mrb[0].mxu0
  %v2179 = vadd.f32 0.0, %v2178
  %v2180 = vpop.f32.mrb[0].mxu0
  %v2181 = vpop.f32.mrb[0].mxu0
  %v2182 = vadd.f32 0.0, %v2181
  %v2183 = vpop.f32.mrb[0].mxu0
  %2184 = vmatprep.mubr.bf16.mxu0 0
  %2185 = vmatmul.mubr.bf16.gmra.mrb[0].mxu0 %v1934
  %v2186 = vpop.f32.mrb[0].mxu0
  %v2187 = vadd.f32 0.0, %v2186
  %v2188 = vpop.f32.mrb[0].mxu0
  %v2189 = vpop.f32.mrb[0].mxu0
  %v2190 = vadd.f32 0.0, %v2189
  %v2191 = vpop.f32.mrb[0].mxu0
  %2192 = vmatprep.mubr.bf16.mxu0 0
  %2193 = vmatmul.mubr.bf16.gmra.mrb[0].mxu0 %v1935
  %v2194 = vpop.f32.mrb[0].mxu0
  %v2195 = vadd.f32 0.0, %v2194
  %v2196 = vpop.f32.mrb[0].mxu0
  %v2197 = vpop.f32.mrb[0].mxu0
  %v2198 = vadd.f32 0.0, %v2197
  %v2199 = vpop.f32.mrb[0].mxu0
  %2200 = vmatprep.mubr.bf16.mxu0 0
  %2201 = vmatmul.mubr.bf16.gmra.mrb[0].mxu0 %v1936
  %v2202 = vpop.f32.mrb[0].mxu0
  %v2203 = vadd.f32 0.0, %v2202
  %v2204 = vpop.f32.mrb[0].mxu0
  %v2205 = vpop.f32.mrb[0].mxu0
  %v2206 = vadd.f32 0.0, %v2205
  %v2207 = vpop.f32.mrb[0].mxu0
  %2208 = vmatprep.mubr.bf16.mxu0 0
  %2209 = vmatmul.mubr.bf16.gmra.mrb[0].mxu0 %v1937
  %v2210 = vpop.f32.mrb[0].mxu0
  %v2211 = vadd.f32 0.0, %v2210
  %v2212 = vpop.f32.mrb[0].mxu0
  %v2213 = vpop.f32.mrb[0].mxu0
  %v2214 = vadd.f32 0.0, %v2213
  %v2215 = vpop.f32.mrb[0].mxu0
  %2216 = vmatprep.mubr.bf16.mxu0 0
  %2217 = vmatmul.mubr.bf16.gmra.mrb[0].mxu0 %v1938
  %v2218 = vpop.f32.mrb[0].mxu0
  %v2219 = vadd.f32 0.0, %v2218
  %v2220 = vpop.f32.mrb[0].mxu0
  %v2221 = vpop.f32.mrb[0].mxu0
  %v2222 = vadd.f32 0.0, %v2221
  %v2223 = vpop.f32.mrb[0].mxu0
  %2224 = vmatprep.mubr.bf16.mxu0 0
  %2225 = vmatmul.mubr.bf16.gmra.mrb[0].mxu0 %v1939
  %v2226 = vpop.f32.mrb[0].mxu0
  %v2227 = vadd.f32 0.0, %v2226
  %v2228 = vpop.f32.mrb[0].mxu0
  %v2229 = vpop.f32.mrb[0].mxu0
  %v2230 = vadd.f32 0.0, %v2229
  %v2231 = vpop.f32.mrb[0].mxu0
  %2232 = vmatprep.mubr.bf16.mxu0 0
  %2233 = vmatmul.mubr.bf16.gmra.mrb[0].mxu0 %v1940
  %v2234 = vpop.f32.mrb[0].mxu0
  %v2235 = vadd.f32 0.0, %v2234
  %v2236 = vpop.f32.mrb[0].mxu0
  %v2237 = vpop.f32.mrb[0].mxu0
  %v2238 = vadd.f32 0.0, %v2237
  %v2239 = vpop.f32.mrb[0].mxu0
  %2240 = vmatprep.mubr.bf16.mxu0 0
  %2241 = vmatmul.mubr.bf16.gmra.mrb[0].mxu0 %v1941
  %v2242 = vpop.f32.mrb[0].mxu0
  %v2243 = vadd.f32 0.0, %v2242
  %v2244 = vpop.f32.mrb[0].mxu0
  %v2245 = vpop.f32.mrb[0].mxu0
  %v2246 = vadd.f32 0.0, %v2245
  %v2247 = vpop.f32.mrb[0].mxu0
  %2248 = vmatprep.mubr.bf16.mxu0 0
  %2249 = vmatmul.mubr.bf16.gmra.mrb[0].mxu0 %v1942
  %v2250 = vpop.f32.mrb[0].mxu0
  %v2251 = vadd.f32 0.0, %v2250
  %v2252 = vpop.f32.mrb[0].mxu0
  %v2253 = vpop.f32.mrb[0].mxu0
  %v2254 = vadd.f32 0.0, %v2253
  %v2255 = vpop.f32.mrb[0].mxu0
  %2256 = vmatprep.mubr.bf16.mxu0 0
  %2257 = vmatmul.mubr.bf16.gmra.mrb[0].mxu0 %v1943
  %v2258 = vpop.f32.mrb[0].mxu0
  %v2259 = vadd.f32 0.0, %v2258
  %v2260 = vpop.f32.mrb[0].mxu0
  %v2261 = vpop.f32.mrb[0].mxu0
  %v2262 = vadd.f32 0.0, %v2261
  %v2263 = vpop.f32.mrb[0].mxu0
  %2264 = vdwg.mxu0
  %vm2265 = vcmask 130048
  %v2266 = vsel %vm2265, %v373, 0.0
  %v2267 = vsel %vm2265, %v376, 0.0
  %v2268 = vadd.f32 %v2266, %v2267
  %v2269 = vsel %vm2265, %v381, 0.0
  %v2270 = vadd.f32 %v2268, %v2269
  %v2271 = vsel %vm2265, %v384, 0.0
  %v2272 = vadd.f32 %v2270, %v2271
  %v2273 = vsel %vm2265, %v389, 0.0
  %v2274 = vadd.f32 %v2272, %v2273
  %v2275 = vsel %vm2265, %v392, 0.0
  %v2276 = vadd.f32 %v2274, %v2275
  %v2277 = vsel %vm2265, %v397, 0.0
  %v2278 = vadd.f32 %v2276, %v2277
  %v2279 = vsel %vm2265, %v400, 0.0
  %v2280 = vadd.f32 %v2278, %v2279
  %v2281 = vsel %vm2265, %v405, 0.0
  %v2282 = vadd.f32 %v2280, %v2281
  %v2283 = vsel %vm2265, %v408, 0.0
  %v2284 = vadd.f32 %v2282, %v2283
  %v2285 = vsel %vm2265, %v413, 0.0
  %v2286 = vadd.f32 %v2284, %v2285
  %v2287 = vsel %vm2265, %v416, 0.0
  %v2288 = vadd.f32 %v2286, %v2287
  %v2289 = vsel %vm2265, %v421, 0.0
  %v2290 = vadd.f32 %v2288, %v2289
  %v2291 = vsel %vm2265, %v424, 0.0
  %v2292 = vadd.f32 %v2290, %v2291
  %v2293 = vsel %vm2265, %v429, 0.0
  %v2294 = vadd.f32 %v2292, %v2293
  %v2295 = vsel %vm2265, %v432, 0.0
  %v2296 = vadd.f32 %v2294, %v2295
  %v2297 = vsel %vm2265, %v437, 0.0
  %v2298 = vadd.f32 %v2296, %v2297
  %v2299 = vsel %vm2265, %v440, 0.0
  %v2300 = vadd.f32 %v2298, %v2299
  %v2301 = vsel %vm2265, %v445, 0.0
  %v2302 = vadd.f32 %v2300, %v2301
  %v2303 = vsel %vm2265, %v448, 0.0
  %v2304 = vadd.f32 %v2302, %v2303
  %v2305 = vsel %vm2265, %v453, 0.0
  %v2306 = vadd.f32 %v2304, %v2305
  %v2307 = vsel %vm2265, %v456, 0.0
  %v2308 = vadd.f32 %v2306, %v2307
  %v2309 = vsel %vm2265, %v461, 0.0
  %v2310 = vadd.f32 %v2308, %v2309
  %v2311 = vsel %vm2265, %v464, 0.0
  %v2312 = vadd.f32 %v2310, %v2311
  %v2313 = vsel %vm2265, %v469, 0.0
  %v2314 = vadd.f32 %v2312, %v2313
  %v2315 = vsel %vm2265, %v472, 0.0
  %v2316 = vadd.f32 %v2314, %v2315
  %v2317 = vsel %vm2265, %v477, 0.0
  %v2318 = vadd.f32 %v2316, %v2317
  %v2319 = vsel %vm2265, %v480, 0.0
  %v2320 = vadd.f32 %v2318, %v2319
  %v2321 = vsel %vm2265, %v485, 0.0
  %v2322 = vadd.f32 %v2320, %v2321
  %v2323 = vsel %vm2265, %v488, 0.0
  %v2324 = vadd.f32 %v2322, %v2323
  %v2325 = vsel %vm2265, %v493, 0.0
  %v2326 = vadd.f32 %v2324, %v2325
  %v2327 = vsel %vm2265, %v496, 0.0
  %v2328 = vadd.f32 %v2326, %v2327
  %v2329 = vsel %vm2265, %v501, 0.0
  %v2330 = vadd.f32 %v2328, %v2329
  %v2331 = vsel %vm2265, %v504, 0.0
  %v2332 = vadd.f32 %v2330, %v2331
  %v2333 = vsel %vm2265, %v509, 0.0
  %v2334 = vadd.f32 %v2332, %v2333
  %v2335 = vsel %vm2265, %v512, 0.0
  %v2336 = vadd.f32 %v2334, %v2335
  %v2337 = vsel %vm2265, %v517, 0.0
  %v2338 = vadd.f32 %v2336, %v2337
  %v2339 = vsel %vm2265, %v520, 0.0
  %v2340 = vadd.f32 %v2338, %v2339
  %v2341 = vsel %vm2265, %v525, 0.0
  %v2342 = vadd.f32 %v2340, %v2341
  %v2343 = vsel %vm2265, %v528, 0.0
  %v2344 = vadd.f32 %v2342, %v2343
  %v2345 = vsel %vm2265, %v533, 0.0
  %v2346 = vadd.f32 %v2344, %v2345
  %v2347 = vsel %vm2265, %v536, 0.0
  %v2348 = vadd.f32 %v2346, %v2347
  %v2349 = vsel %vm2265, %v541, 0.0
  %v2350 = vadd.f32 %v2348, %v2349
  %v2351 = vsel %vm2265, %v544, 0.0
  %v2352 = vadd.f32 %v2350, %v2351
  %v2353 = vsel %vm2265, %v549, 0.0
  %v2354 = vadd.f32 %v2352, %v2353
  %v2355 = vsel %vm2265, %v552, 0.0
  %v2356 = vadd.f32 %v2354, %v2355
  %v2357 = vsel %vm2265, %v557, 0.0
  %v2358 = vadd.f32 %v2356, %v2357
  %v2359 = vsel %vm2265, %v560, 0.0
  %v2360 = vadd.f32 %v2358, %v2359
  %v2361 = vsel %vm2265, %v565, 0.0
  %v2362 = vadd.f32 %v2360, %v2361
  %v2363 = vsel %vm2265, %v568, 0.0
  %v2364 = vadd.f32 %v2362, %v2363
  %v2365 = vsel %vm2265, %v573, 0.0
  %v2366 = vadd.f32 %v2364, %v2365
  %v2367 = vsel %vm2265, %v576, 0.0
  %v2368 = vadd.f32 %v2366, %v2367
  %v2369 = vsel %vm2265, %v581, 0.0
  %v2370 = vadd.f32 %v2368, %v2369
  %v2371 = vsel %vm2265, %v584, 0.0
  %v2372 = vadd.f32 %v2370, %v2371
  %v2373 = vsel %vm2265, %v589, 0.0
  %v2374 = vadd.f32 %v2372, %v2373
  %v2375 = vsel %vm2265, %v592, 0.0
  %v2376 = vadd.f32 %v2374, %v2375
  %v2377 = vsel %vm2265, %v597, 0.0
  %v2378 = vadd.f32 %v2376, %v2377
  %v2379 = vsel %vm2265, %v600, 0.0
  %v2380 = vadd.f32 %v2378, %v2379
  %v2381 = vsel %vm2265, %v605, 0.0
  %v2382 = vadd.f32 %v2380, %v2381
  %v2383 = vsel %vm2265, %v608, 0.0
  %v2384 = vadd.f32 %v2382, %v2383
  %v2385 = vsel %vm2265, %v613, 0.0
  %v2386 = vadd.f32 %v2384, %v2385
  %v2387 = vsel %vm2265, %v616, 0.0
  %v2388 = vadd.f32 %v2386, %v2387
  %v2389 = vsel %vm2265, %v621, 0.0
  %v2390 = vadd.f32 %v2388, %v2389
  %v2391 = vsel %vm2265, %v624, 0.0
  %v2392 = vadd.f32 %v2390, %v2391
  %v2393 = vrot.slane %v2392, 4
  %v2394 = vadd.f32 %v2392, %v2393
  %v2395 = vrot.slane %v2394, 2
  %v2396 = vadd.f32 %v2394, %v2395
  %v2397 = vrot.slane %v2396, 1
  %v2398 = vadd.f32 %v2396, %v2397
  %v2399 = vsel %vm2265, %v919, 0.0
  %v2400 = vsel %vm2265, %v922, 0.0
  %v2401 = vadd.f32 %v2399, %v2400
  %v2402 = vsel %vm2265, %v927, 0.0
  %v2403 = vadd.f32 %v2401, %v2402
  %v2404 = vsel %vm2265, %v930, 0.0
  %v2405 = vadd.f32 %v2403, %v2404
  %v2406 = vsel %vm2265, %v935, 0.0
  %v2407 = vadd.f32 %v2405, %v2406
  %v2408 = vsel %vm2265, %v938, 0.0
  %v2409 = vadd.f32 %v2407, %v2408
  %v2410 = vsel %vm2265, %v943, 0.0
  %v2411 = vadd.f32 %v2409, %v2410
  %v2412 = vsel %vm2265, %v946, 0.0
  %v2413 = vadd.f32 %v2411, %v2412
  %v2414 = vsel %vm2265, %v951, 0.0
  %v2415 = vadd.f32 %v2413, %v2414
  %v2416 = vsel %vm2265, %v954, 0.0
  %v2417 = vadd.f32 %v2415, %v2416
  %v2418 = vsel %vm2265, %v959, 0.0
  %v2419 = vadd.f32 %v2417, %v2418
  %v2420 = vsel %vm2265, %v962, 0.0
  %v2421 = vadd.f32 %v2419, %v2420
  %v2422 = vsel %vm2265, %v967, 0.0
  %v2423 = vadd.f32 %v2421, %v2422
  %v2424 = vsel %vm2265, %v970, 0.0
  %v2425 = vadd.f32 %v2423, %v2424
  %v2426 = vsel %vm2265, %v975, 0.0
  %v2427 = vadd.f32 %v2425, %v2426
  %v2428 = vsel %vm2265, %v978, 0.0
  %v2429 = vadd.f32 %v2427, %v2428
  %v2430 = vsel %vm2265, %v983, 0.0
  %v2431 = vadd.f32 %v2429, %v2430
  %v2432 = vsel %vm2265, %v986, 0.0
  %v2433 = vadd.f32 %v2431, %v2432
  %v2434 = vsel %vm2265, %v991, 0.0
  %v2435 = vadd.f32 %v2433, %v2434
  %v2436 = vsel %vm2265, %v994, 0.0
  %v2437 = vadd.f32 %v2435, %v2436
  %v2438 = vsel %vm2265, %v999, 0.0
  %v2439 = vadd.f32 %v2437, %v2438
  %v2440 = vsel %vm2265, %v1002, 0.0
  %v2441 = vadd.f32 %v2439, %v2440
  %v2442 = vsel %vm2265, %v1007, 0.0
  %v2443 = vadd.f32 %v2441, %v2442
  %v2444 = vsel %vm2265, %v1010, 0.0
  %v2445 = vadd.f32 %v2443, %v2444
  %v2446 = vsel %vm2265, %v1015, 0.0
  %v2447 = vadd.f32 %v2445, %v2446
  %v2448 = vsel %vm2265, %v1018, 0.0
  %v2449 = vadd.f32 %v2447, %v2448
  %v2450 = vsel %vm2265, %v1023, 0.0
  %v2451 = vadd.f32 %v2449, %v2450
  %v2452 = vsel %vm2265, %v1026, 0.0
  %v2453 = vadd.f32 %v2451, %v2452
  %v2454 = vsel %vm2265, %v1031, 0.0
  %v2455 = vadd.f32 %v2453, %v2454
  %v2456 = vsel %vm2265, %v1034, 0.0
  %v2457 = vadd.f32 %v2455, %v2456
  %v2458 = vsel %vm2265, %v1039, 0.0
  %v2459 = vadd.f32 %v2457, %v2458
  %v2460 = vsel %vm2265, %v1042, 0.0
  %v2461 = vadd.f32 %v2459, %v2460
  %v2462 = vsel %vm2265, %v1047, 0.0
  %v2463 = vadd.f32 %v2461, %v2462
  %v2464 = vsel %vm2265, %v1050, 0.0
  %v2465 = vadd.f32 %v2463, %v2464
  %v2466 = vsel %vm2265, %v1055, 0.0
  %v2467 = vadd.f32 %v2465, %v2466
  %v2468 = vsel %vm2265, %v1058, 0.0
  %v2469 = vadd.f32 %v2467, %v2468
  %v2470 = vsel %vm2265, %v1063, 0.0
  %v2471 = vadd.f32 %v2469, %v2470
  %v2472 = vsel %vm2265, %v1066, 0.0
  %v2473 = vadd.f32 %v2471, %v2472
  %v2474 = vsel %vm2265, %v1071, 0.0
  %v2475 = vadd.f32 %v2473, %v2474
  %v2476 = vsel %vm2265, %v1074, 0.0
  %v2477 = vadd.f32 %v2475, %v2476
  %v2478 = vsel %vm2265, %v1079, 0.0
  %v2479 = vadd.f32 %v2477, %v2478
  %v2480 = vsel %vm2265, %v1082, 0.0
  %v2481 = vadd.f32 %v2479, %v2480
  %v2482 = vsel %vm2265, %v1087, 0.0
  %v2483 = vadd.f32 %v2481, %v2482
  %v2484 = vsel %vm2265, %v1090, 0.0
  %v2485 = vadd.f32 %v2483, %v2484
  %v2486 = vsel %vm2265, %v1095, 0.0
  %v2487 = vadd.f32 %v2485, %v2486
  %v2488 = vsel %vm2265, %v1098, 0.0
  %v2489 = vadd.f32 %v2487, %v2488
  %v2490 = vsel %vm2265, %v1103, 0.0
  %v2491 = vadd.f32 %v2489, %v2490
  %v2492 = vsel %vm2265, %v1106, 0.0
  %v2493 = vadd.f32 %v2491, %v2492
  %v2494 = vsel %vm2265, %v1111, 0.0
  %v2495 = vadd.f32 %v2493, %v2494
  %v2496 = vsel %vm2265, %v1114, 0.0
  %v2497 = vadd.f32 %v2495, %v2496
  %v2498 = vsel %vm2265, %v1119, 0.0
  %v2499 = vadd.f32 %v2497, %v2498
  %v2500 = vsel %vm2265, %v1122, 0.0
  %v2501 = vadd.f32 %v2499, %v2500
  %v2502 = vsel %vm2265, %v1127, 0.0
  %v2503 = vadd.f32 %v2501, %v2502
  %v2504 = vsel %vm2265, %v1130, 0.0
  %v2505 = vadd.f32 %v2503, %v2504
  %v2506 = vsel %vm2265, %v1135, 0.0
  %v2507 = vadd.f32 %v2505, %v2506
  %v2508 = vsel %vm2265, %v1138, 0.0
  %v2509 = vadd.f32 %v2507, %v2508
  %v2510 = vsel %vm2265, %v1143, 0.0
  %v2511 = vadd.f32 %v2509, %v2510
  %v2512 = vsel %vm2265, %v1146, 0.0
  %v2513 = vadd.f32 %v2511, %v2512
  %v2514 = vsel %vm2265, %v1151, 0.0
  %v2515 = vadd.f32 %v2513, %v2514
  %v2516 = vsel %vm2265, %v1154, 0.0
  %v2517 = vadd.f32 %v2515, %v2516
  %v2518 = vsel %vm2265, %v1159, 0.0
  %v2519 = vadd.f32 %v2517, %v2518
  %v2520 = vsel %vm2265, %v1162, 0.0
  %v2521 = vadd.f32 %v2519, %v2520
  %v2522 = vsel %vm2265, %v1167, 0.0
  %v2523 = vadd.f32 %v2521, %v2522
  %v2524 = vsel %vm2265, %v1170, 0.0
  %v2525 = vadd.f32 %v2523, %v2524
  %v2526 = vrot.slane %v2525, 4
  %v2527 = vadd.f32 %v2525, %v2526
  %v2528 = vrot.slane %v2527, 2
  %v2529 = vadd.f32 %v2527, %v2528
  %v2530 = vrot.slane %v2529, 1
  %v2531 = vadd.f32 %v2529, %v2530
  %v2532 = vadd.f32 %v2398, %v2531
  %v2533 = vsel %vm2265, %v1465, 0.0
  %v2534 = vsel %vm2265, %v1468, 0.0
  %v2535 = vadd.f32 %v2533, %v2534
  %v2536 = vsel %vm2265, %v1473, 0.0
  %v2537 = vadd.f32 %v2535, %v2536
  %v2538 = vsel %vm2265, %v1476, 0.0
  %v2539 = vadd.f32 %v2537, %v2538
  %v2540 = vsel %vm2265, %v1481, 0.0
  %v2541 = vadd.f32 %v2539, %v2540
  %v2542 = vsel %vm2265, %v1484, 0.0
  %v2543 = vadd.f32 %v2541, %v2542
  %v2544 = vsel %vm2265, %v1489, 0.0
  %v2545 = vadd.f32 %v2543, %v2544
  %v2546 = vsel %vm2265, %v1492, 0.0
  %v2547 = vadd.f32 %v2545, %v2546
  %v2548 = vsel %vm2265, %v1497, 0.0
  %v2549 = vadd.f32 %v2547, %v2548
  %v2550 = vsel %vm2265, %v1500, 0.0
  %v2551 = vadd.f32 %v2549, %v2550
  %v2552 = vsel %vm2265, %v1505, 0.0
  %v2553 = vadd.f32 %v2551, %v2552
  %v2554 = vsel %vm2265, %v1508, 0.0
  %v2555 = vadd.f32 %v2553, %v2554
  %v2556 = vsel %vm2265, %v1513, 0.0
  %v2557 = vadd.f32 %v2555, %v2556
  %v2558 = vsel %vm2265, %v1516, 0.0
  %v2559 = vadd.f32 %v2557, %v2558
  %v2560 = vsel %vm2265, %v1521, 0.0
  %v2561 = vadd.f32 %v2559, %v2560
  %v2562 = vsel %vm2265, %v1524, 0.0
  %v2563 = vadd.f32 %v2561, %v2562
  %v2564 = vsel %vm2265, %v1529, 0.0
  %v2565 = vadd.f32 %v2563, %v2564
  %v2566 = vsel %vm2265, %v1532, 0.0
  %v2567 = vadd.f32 %v2565, %v2566
  %v2568 = vsel %vm2265, %v1537, 0.0
  %v2569 = vadd.f32 %v2567, %v2568
  %v2570 = vsel %vm2265, %v1540, 0.0
  %v2571 = vadd.f32 %v2569, %v2570
  %v2572 = vsel %vm2265, %v1545, 0.0
  %v2573 = vadd.f32 %v2571, %v2572
  %v2574 = vsel %vm2265, %v1548, 0.0
  %v2575 = vadd.f32 %v2573, %v2574
  %v2576 = vsel %vm2265, %v1553, 0.0
  %v2577 = vadd.f32 %v2575, %v2576
  %v2578 = vsel %vm2265, %v1556, 0.0
  %v2579 = vadd.f32 %v2577, %v2578
  %v2580 = vsel %vm2265, %v1561, 0.0
  %v2581 = vadd.f32 %v2579, %v2580
  %v2582 = vsel %vm2265, %v1564, 0.0
  %v2583 = vadd.f32 %v2581, %v2582
  %v2584 = vsel %vm2265, %v1569, 0.0
  %v2585 = vadd.f32 %v2583, %v2584
  %v2586 = vsel %vm2265, %v1572, 0.0
  %v2587 = vadd.f32 %v2585, %v2586
  %v2588 = vsel %vm2265, %v1577, 0.0
  %v2589 = vadd.f32 %v2587, %v2588
  %v2590 = vsel %vm2265, %v1580, 0.0
  %v2591 = vadd.f32 %v2589, %v2590
  %v2592 = vsel %vm2265, %v1585, 0.0
  %v2593 = vadd.f32 %v2591, %v2592
  %v2594 = vsel %vm2265, %v1588, 0.0
  %v2595 = vadd.f32 %v2593, %v2594
  %v2596 = vsel %vm2265, %v1593, 0.0
  %v2597 = vadd.f32 %v2595, %v2596
  %v2598 = vsel %vm2265, %v1596, 0.0
  %v2599 = vadd.f32 %v2597, %v2598
  %v2600 = vsel %vm2265, %v1601, 0.0
  %v2601 = vadd.f32 %v2599, %v2600
  %v2602 = vsel %vm2265, %v1604, 0.0
  %v2603 = vadd.f32 %v2601, %v2602
  %v2604 = vsel %vm2265, %v1609, 0.0
  %v2605 = vadd.f32 %v2603, %v2604
  %v2606 = vsel %vm2265, %v1612, 0.0
  %v2607 = vadd.f32 %v2605, %v2606
  %v2608 = vsel %vm2265, %v1617, 0.0
  %v2609 = vadd.f32 %v2607, %v2608
  %v2610 = vsel %vm2265, %v1620, 0.0
  %v2611 = vadd.f32 %v2609, %v2610
  %v2612 = vsel %vm2265, %v1625, 0.0
  %v2613 = vadd.f32 %v2611, %v2612
  %v2614 = vsel %vm2265, %v1628, 0.0
  %v2615 = vadd.f32 %v2613, %v2614
  %v2616 = vsel %vm2265, %v1633, 0.0
  %v2617 = vadd.f32 %v2615, %v2616
  %v2618 = vsel %vm2265, %v1636, 0.0
  %v2619 = vadd.f32 %v2617, %v2618
  %v2620 = vsel %vm2265, %v1641, 0.0
  %v2621 = vadd.f32 %v2619, %v2620
  %v2622 = vsel %vm2265, %v1644, 0.0
  %v2623 = vadd.f32 %v2621, %v2622
  %v2624 = vsel %vm2265, %v1649, 0.0
  %v2625 = vadd.f32 %v2623, %v2624
  %v2626 = vsel %vm2265, %v1652, 0.0
  %v2627 = vadd.f32 %v2625, %v2626
  %v2628 = vsel %vm2265, %v1657, 0.0
  %v2629 = vadd.f32 %v2627, %v2628
  %v2630 = vsel %vm2265, %v1660, 0.0
  %v2631 = vadd.f32 %v2629, %v2630
  %v2632 = vsel %vm2265, %v1665, 0.0
  %v2633 = vadd.f32 %v2631, %v2632
  %v2634 = vsel %vm2265, %v1668, 0.0
  %v2635 = vadd.f32 %v2633, %v2634
  %v2636 = vsel %vm2265, %v1673, 0.0
  %v2637 = vadd.f32 %v2635, %v2636
  %v2638 = vsel %vm2265, %v1676, 0.0
  %v2639 = vadd.f32 %v2637, %v2638
  %v2640 = vsel %vm2265, %v1681, 0.0
  %v2641 = vadd.f32 %v2639, %v2640
  %v2642 = vsel %vm2265, %v1684, 0.0
  %v2643 = vadd.f32 %v2641, %v2642
  %v2644 = vsel %vm2265, %v1689, 0.0
  %v2645 = vadd.f32 %v2643, %v2644
  %v2646 = vsel %vm2265, %v1692, 0.0
  %v2647 = vadd.f32 %v2645, %v2646
  %v2648 = vsel %vm2265, %v1697, 0.0
  %v2649 = vadd.f32 %v2647, %v2648
  %v2650 = vsel %vm2265, %v1700, 0.0
  %v2651 = vadd.f32 %v2649, %v2650
  %v2652 = vsel %vm2265, %v1705, 0.0
  %v2653 = vadd.f32 %v2651, %v2652
  %v2654 = vsel %vm2265, %v1708, 0.0
  %v2655 = vadd.f32 %v2653, %v2654
  %v2656 = vsel %vm2265, %v1713, 0.0
  %v2657 = vadd.f32 %v2655, %v2656
  %v2658 = vsel %vm2265, %v1716, 0.0
  %v2659 = vadd.f32 %v2657, %v2658
  %v2660 = vrot.slane %v2659, 4
  %v2661 = vadd.f32 %v2659, %v2660
  %v2662 = vrot.slane %v2661, 2
  %v2663 = vadd.f32 %v2661, %v2662
  %v2664 = vrot.slane %v2663, 1
  %v2665 = vadd.f32 %v2663, %v2664
  %v2666 = vadd.f32 %v2532, %v2665
  %v2667 = vsel %vm2265, %v2011, 0.0
  %v2668 = vsel %vm2265, %v2014, 0.0
  %v2669 = vadd.f32 %v2667, %v2668
  %v2670 = vsel %vm2265, %v2019, 0.0
  %v2671 = vadd.f32 %v2669, %v2670
  %v2672 = vsel %vm2265, %v2022, 0.0
  %v2673 = vadd.f32 %v2671, %v2672
  %v2674 = vsel %vm2265, %v2027, 0.0
  %v2675 = vadd.f32 %v2673, %v2674
  %v2676 = vsel %vm2265, %v2030, 0.0
  %v2677 = vadd.f32 %v2675, %v2676
  %v2678 = vsel %vm2265, %v2035, 0.0
  %v2679 = vadd.f32 %v2677, %v2678
  %v2680 = vsel %vm2265, %v2038, 0.0
  %v2681 = vadd.f32 %v2679, %v2680
  %v2682 = vsel %vm2265, %v2043, 0.0
  %v2683 = vadd.f32 %v2681, %v2682
  %v2684 = vsel %vm2265, %v2046, 0.0
  %v2685 = vadd.f32 %v2683, %v2684
  %v2686 = vsel %vm2265, %v2051, 0.0
  %v2687 = vadd.f32 %v2685, %v2686
  %v2688 = vsel %vm2265, %v2054, 0.0
  %v2689 = vadd.f32 %v2687, %v2688
  %v2690 = vsel %vm2265, %v2059, 0.0
  %v2691 = vadd.f32 %v2689, %v2690
  %v2692 = vsel %vm2265, %v2062, 0.0
  %v2693 = vadd.f32 %v2691, %v2692
  %v2694 = vsel %vm2265, %v2067, 0.0
  %v2695 = vadd.f32 %v2693, %v2694
  %v2696 = vsel %vm2265, %v2070, 0.0
  %v2697 = vadd.f32 %v2695, %v2696
  %v2698 = vsel %vm2265, %v2075, 0.0
  %v2699 = vadd.f32 %v2697, %v2698
  %v2700 = vsel %vm2265, %v2078, 0.0
  %v2701 = vadd.f32 %v2699, %v2700
  %v2702 = vsel %vm2265, %v2083, 0.0
  %v2703 = vadd.f32 %v2701, %v2702
  %v2704 = vsel %vm2265, %v2086, 0.0
  %v2705 = vadd.f32 %v2703, %v2704
  %v2706 = vsel %vm2265, %v2091, 0.0
  %v2707 = vadd.f32 %v2705, %v2706
  %v2708 = vsel %vm2265, %v2094, 0.0
  %v2709 = vadd.f32 %v2707, %v2708
  %v2710 = vsel %vm2265, %v2099, 0.0
  %v2711 = vadd.f32 %v2709, %v2710
  %v2712 = vsel %vm2265, %v2102, 0.0
  %v2713 = vadd.f32 %v2711, %v2712
  %v2714 = vsel %vm2265, %v2107, 0.0
  %v2715 = vadd.f32 %v2713, %v2714
  %v2716 = vsel %vm2265, %v2110, 0.0
  %v2717 = vadd.f32 %v2715, %v2716
  %v2718 = vsel %vm2265, %v2115, 0.0
  %v2719 = vadd.f32 %v2717, %v2718
  %v2720 = vsel %vm2265, %v2118, 0.0
  %v2721 = vadd.f32 %v2719, %v2720
  %v2722 = vsel %vm2265, %v2123, 0.0
  %v2723 = vadd.f32 %v2721, %v2722
  %v2724 = vsel %vm2265, %v2126, 0.0
  %v2725 = vadd.f32 %v2723, %v2724
  %v2726 = vsel %vm2265, %v2131, 0.0
  %v2727 = vadd.f32 %v2725, %v2726
  %v2728 = vsel %vm2265, %v2134, 0.0
  %v2729 = vadd.f32 %v2727, %v2728
  %v2730 = vsel %vm2265, %v2139, 0.0
  %v2731 = vadd.f32 %v2729, %v2730
  %v2732 = vsel %vm2265, %v2142, 0.0
  %v2733 = vadd.f32 %v2731, %v2732
  %v2734 = vsel %vm2265, %v2147, 0.0
  %v2735 = vadd.f32 %v2733, %v2734
  %v2736 = vsel %vm2265, %v2150, 0.0
  %v2737 = vadd.f32 %v2735, %v2736
  %v2738 = vsel %vm2265, %v2155, 0.0
  %v2739 = vadd.f32 %v2737, %v2738
  %v2740 = vsel %vm2265, %v2158, 0.0
  %v2741 = vadd.f32 %v2739, %v2740
  %v2742 = vsel %vm2265, %v2163, 0.0
  %v2743 = vadd.f32 %v2741, %v2742
  %v2744 = vsel %vm2265, %v2166, 0.0
  %v2745 = vadd.f32 %v2743, %v2744
  %v2746 = vsel %vm2265, %v2171, 0.0
  %v2747 = vadd.f32 %v2745, %v2746
  %v2748 = vsel %vm2265, %v2174, 0.0
  %v2749 = vadd.f32 %v2747, %v2748
  %v2750 = vsel %vm2265, %v2179, 0.0
  %v2751 = vadd.f32 %v2749, %v2750
  %v2752 = vsel %vm2265, %v2182, 0.0
  %v2753 = vadd.f32 %v2751, %v2752
  %v2754 = vsel %vm2265, %v2187, 0.0
  %v2755 = vadd.f32 %v2753, %v2754
  %v2756 = vsel %vm2265, %v2190, 0.0
  %v2757 = vadd.f32 %v2755, %v2756
  %v2758 = vsel %vm2265, %v2195, 0.0
  %v2759 = vadd.f32 %v2757, %v2758
  %v2760 = vsel %vm2265, %v2198, 0.0
  %v2761 = vadd.f32 %v2759, %v2760
  %v2762 = vsel %vm2265, %v2203, 0.0
  %v2763 = vadd.f32 %v2761, %v2762
  %v2764 = vsel %vm2265, %v2206, 0.0
  %v2765 = vadd.f32 %v2763, %v2764
  %v2766 = vsel %vm2265, %v2211, 0.0
  %v2767 = vadd.f32 %v2765, %v2766
  %v2768 = vsel %vm2265, %v2214, 0.0
  %v2769 = vadd.f32 %v2767, %v2768
  %v2770 = vsel %vm2265, %v2219, 0.0
  %v2771 = vadd.f32 %v2769, %v2770
  %v2772 = vsel %vm2265, %v2222, 0.0
  %v2773 = vadd.f32 %v2771, %v2772
  %v2774 = vsel %vm2265, %v2227, 0.0
  %v2775 = vadd.f32 %v2773, %v2774
  %v2776 = vsel %vm2265, %v2230, 0.0
  %v2777 = vadd.f32 %v2775, %v2776
  %v2778 = vsel %vm2265, %v2235, 0.0
  %v2779 = vadd.f32 %v2777, %v2778
  %v2780 = vsel %vm2265, %v2238, 0.0
  %v2781 = vadd.f32 %v2779, %v2780
  %v2782 = vsel %vm2265, %v2243, 0.0
  %v2783 = vadd.f32 %v2781, %v2782
  %v2784 = vsel %vm2265, %v2246, 0.0
  %v2785 = vadd.f32 %v2783, %v2784
  %v2786 = vsel %vm2265, %v2251, 0.0
  %v2787 = vadd.f32 %v2785, %v2786
  %v2788 = vsel %vm2265, %v2254, 0.0
  %v2789 = vadd.f32 %v2787, %v2788
  %v2790 = vsel %vm2265, %v2259, 0.0
  %v2791 = vadd.f32 %v2789, %v2790
  %v2792 = vsel %vm2265, %v2262, 0.0
  %v2793 = vadd.f32 %v2791, %v2792
  %v2794 = vrot.slane %v2793, 4
  %v2795 = vadd.f32 %v2793, %v2794
  %v2796 = vrot.slane %v2795, 2
  %v2797 = vadd.f32 %v2795, %v2796
  %v2798 = vrot.slane %v2797, 1
  %v2799 = vadd.f32 %v2797, %v2798
  %v2800 = vadd.f32 %v2666, %v2799
  %v2801 = vmul.f32 %v373, %v373
  %v2802 = vmul.f32 %v376, %v376
  %v2803 = vmul.f32 %v381, %v381
  %v2804 = vmul.f32 %v384, %v384
  %v2805 = vmul.f32 %v389, %v389
  %v2806 = vmul.f32 %v392, %v392
  %v2807 = vmul.f32 %v397, %v397
  %v2808 = vmul.f32 %v400, %v400
  %v2809 = vmul.f32 %v405, %v405
  %v2810 = vmul.f32 %v408, %v408
  %v2811 = vmul.f32 %v413, %v413
  %v2812 = vmul.f32 %v416, %v416
  %v2813 = vmul.f32 %v421, %v421
  %v2814 = vmul.f32 %v424, %v424
  %v2815 = vmul.f32 %v429, %v429
  %v2816 = vmul.f32 %v432, %v432
  %v2817 = vmul.f32 %v437, %v437
  %v2818 = vmul.f32 %v440, %v440
  %v2819 = vmul.f32 %v445, %v445
  %v2820 = vmul.f32 %v448, %v448
  %v2821 = vmul.f32 %v453, %v453
  %v2822 = vmul.f32 %v456, %v456
  %v2823 = vmul.f32 %v461, %v461
  %v2824 = vmul.f32 %v464, %v464
  %v2825 = vmul.f32 %v469, %v469
  %v2826 = vmul.f32 %v472, %v472
  %v2827 = vmul.f32 %v477, %v477
  %v2828 = vmul.f32 %v480, %v480
  %v2829 = vmul.f32 %v485, %v485
  %v2830 = vmul.f32 %v488, %v488
  %v2831 = vmul.f32 %v493, %v493
  %v2832 = vmul.f32 %v496, %v496
  %v2833 = vmul.f32 %v501, %v501
  %v2834 = vmul.f32 %v504, %v504
  %v2835 = vmul.f32 %v509, %v509
  %v2836 = vmul.f32 %v512, %v512
  %v2837 = vmul.f32 %v517, %v517
  %v2838 = vmul.f32 %v520, %v520
  %v2839 = vmul.f32 %v525, %v525
  %v2840 = vmul.f32 %v528, %v528
  %v2841 = vmul.f32 %v533, %v533
  %v2842 = vmul.f32 %v536, %v536
  %v2843 = vmul.f32 %v541, %v541
  %v2844 = vmul.f32 %v544, %v544
  %v2845 = vmul.f32 %v549, %v549
  %v2846 = vmul.f32 %v552, %v552
  %v2847 = vmul.f32 %v557, %v557
  %v2848 = vmul.f32 %v560, %v560
  %v2849 = vmul.f32 %v565, %v565
  %v2850 = vmul.f32 %v568, %v568
  %v2851 = vmul.f32 %v573, %v573
  %v2852 = vmul.f32 %v576, %v576
  %v2853 = vmul.f32 %v581, %v581
  %v2854 = vmul.f32 %v584, %v584
  %v2855 = vmul.f32 %v589, %v589
  %v2856 = vmul.f32 %v592, %v592
  %v2857 = vmul.f32 %v597, %v597
  %v2858 = vmul.f32 %v600, %v600
  %v2859 = vmul.f32 %v605, %v605
  %v2860 = vmul.f32 %v608, %v608
  %v2861 = vmul.f32 %v613, %v613
  %v2862 = vmul.f32 %v616, %v616
  %v2863 = vmul.f32 %v621, %v621
  %v2864 = vmul.f32 %v624, %v624
  %v2865 = vsel %vm2265, %v2801, 0.0
  %v2866 = vsel %vm2265, %v2802, 0.0
  %v2867 = vadd.f32 %v2865, %v2866
  %v2868 = vsel %vm2265, %v2803, 0.0
  %v2869 = vadd.f32 %v2867, %v2868
  %v2870 = vsel %vm2265, %v2804, 0.0
  %v2871 = vadd.f32 %v2869, %v2870
  %v2872 = vsel %vm2265, %v2805, 0.0
  %v2873 = vadd.f32 %v2871, %v2872
  %v2874 = vsel %vm2265, %v2806, 0.0
  %v2875 = vadd.f32 %v2873, %v2874
  %v2876 = vsel %vm2265, %v2807, 0.0
  %v2877 = vadd.f32 %v2875, %v2876
  %v2878 = vsel %vm2265, %v2808, 0.0
  %v2879 = vadd.f32 %v2877, %v2878
  %v2880 = vsel %vm2265, %v2809, 0.0
  %v2881 = vadd.f32 %v2879, %v2880
  %v2882 = vsel %vm2265, %v2810, 0.0
  %v2883 = vadd.f32 %v2881, %v2882
  %v2884 = vsel %vm2265, %v2811, 0.0
  %v2885 = vadd.f32 %v2883, %v2884
  %v2886 = vsel %vm2265, %v2812, 0.0
  %v2887 = vadd.f32 %v2885, %v2886
  %v2888 = vsel %vm2265, %v2813, 0.0
  %v2889 = vadd.f32 %v2887, %v2888
  %v2890 = vsel %vm2265, %v2814, 0.0
  %v2891 = vadd.f32 %v2889, %v2890
  %v2892 = vsel %vm2265, %v2815, 0.0
  %v2893 = vadd.f32 %v2891, %v2892
  %v2894 = vsel %vm2265, %v2816, 0.0
  %v2895 = vadd.f32 %v2893, %v2894
  %v2896 = vsel %vm2265, %v2817, 0.0
  %v2897 = vadd.f32 %v2895, %v2896
  %v2898 = vsel %vm2265, %v2818, 0.0
  %v2899 = vadd.f32 %v2897, %v2898
  %v2900 = vsel %vm2265, %v2819, 0.0
  %v2901 = vadd.f32 %v2899, %v2900
  %v2902 = vsel %vm2265, %v2820, 0.0
  %v2903 = vadd.f32 %v2901, %v2902
  %v2904 = vsel %vm2265, %v2821, 0.0
  %v2905 = vadd.f32 %v2903, %v2904
  %v2906 = vsel %vm2265, %v2822, 0.0
  %v2907 = vadd.f32 %v2905, %v2906
  %v2908 = vsel %vm2265, %v2823, 0.0
  %v2909 = vadd.f32 %v2907, %v2908
  %v2910 = vsel %vm2265, %v2824, 0.0
  %v2911 = vadd.f32 %v2909, %v2910
  %v2912 = vsel %vm2265, %v2825, 0.0
  %v2913 = vadd.f32 %v2911, %v2912
  %v2914 = vsel %vm2265, %v2826, 0.0
  %v2915 = vadd.f32 %v2913, %v2914
  %v2916 = vsel %vm2265, %v2827, 0.0
  %v2917 = vadd.f32 %v2915, %v2916
  %v2918 = vsel %vm2265, %v2828, 0.0
  %v2919 = vadd.f32 %v2917, %v2918
  %v2920 = vsel %vm2265, %v2829, 0.0
  %v2921 = vadd.f32 %v2919, %v2920
  %v2922 = vsel %vm2265, %v2830, 0.0
  %v2923 = vadd.f32 %v2921, %v2922
  %v2924 = vsel %vm2265, %v2831, 0.0
  %v2925 = vadd.f32 %v2923, %v2924
  %v2926 = vsel %vm2265, %v2832, 0.0
  %v2927 = vadd.f32 %v2925, %v2926
  %v2928 = vsel %vm2265, %v2833, 0.0
  %v2929 = vadd.f32 %v2927, %v2928
  %v2930 = vsel %vm2265, %v2834, 0.0
  %v2931 = vadd.f32 %v2929, %v2930
  %v2932 = vsel %vm2265, %v2835, 0.0
  %v2933 = vadd.f32 %v2931, %v2932
  %v2934 = vsel %vm2265, %v2836, 0.0
  %v2935 = vadd.f32 %v2933, %v2934
  %v2936 = vsel %vm2265, %v2837, 0.0
  %v2937 = vadd.f32 %v2935, %v2936
  %v2938 = vsel %vm2265, %v2838, 0.0
  %v2939 = vadd.f32 %v2937, %v2938
  %v2940 = vsel %vm2265, %v2839, 0.0
  %v2941 = vadd.f32 %v2939, %v2940
  %v2942 = vsel %vm2265, %v2840, 0.0
  %v2943 = vadd.f32 %v2941, %v2942
  %v2944 = vsel %vm2265, %v2841, 0.0
  %v2945 = vadd.f32 %v2943, %v2944
  %v2946 = vsel %vm2265, %v2842, 0.0
  %v2947 = vadd.f32 %v2945, %v2946
  %v2948 = vsel %vm2265, %v2843, 0.0
  %v2949 = vadd.f32 %v2947, %v2948
  %v2950 = vsel %vm2265, %v2844, 0.0
  %v2951 = vadd.f32 %v2949, %v2950
  %v2952 = vsel %vm2265, %v2845, 0.0
  %v2953 = vadd.f32 %v2951, %v2952
  %v2954 = vsel %vm2265, %v2846, 0.0
  %v2955 = vadd.f32 %v2953, %v2954
  %v2956 = vsel %vm2265, %v2847, 0.0
  %v2957 = vadd.f32 %v2955, %v2956
  %v2958 = vsel %vm2265, %v2848, 0.0
  %v2959 = vadd.f32 %v2957, %v2958
  %v2960 = vsel %vm2265, %v2849, 0.0
  %v2961 = vadd.f32 %v2959, %v2960
  %v2962 = vsel %vm2265, %v2850, 0.0
  %v2963 = vadd.f32 %v2961, %v2962
  %v2964 = vsel %vm2265, %v2851, 0.0
  %v2965 = vadd.f32 %v2963, %v2964
  %v2966 = vsel %vm2265, %v2852, 0.0
  %v2967 = vadd.f32 %v2965, %v2966
  %v2968 = vsel %vm2265, %v2853, 0.0
  %v2969 = vadd.f32 %v2967, %v2968
  %v2970 = vsel %vm2265, %v2854, 0.0
  %v2971 = vadd.f32 %v2969, %v2970
  %v2972 = vsel %vm2265, %v2855, 0.0
  %v2973 = vadd.f32 %v2971, %v2972
  %v2974 = vsel %vm2265, %v2856, 0.0
  %v2975 = vadd.f32 %v2973, %v2974
  %v2976 = vsel %vm2265, %v2857, 0.0
  %v2977 = vadd.f32 %v2975, %v2976
  %v2978 = vsel %vm2265, %v2858, 0.0
  %v2979 = vadd.f32 %v2977, %v2978
  %v2980 = vsel %vm2265, %v2859, 0.0
  %v2981 = vadd.f32 %v2979, %v2980
  %v2982 = vsel %vm2265, %v2860, 0.0
  %v2983 = vadd.f32 %v2981, %v2982
  %v2984 = vsel %vm2265, %v2861, 0.0
  %v2985 = vadd.f32 %v2983, %v2984
  %v2986 = vsel %vm2265, %v2862, 0.0
  %v2987 = vadd.f32 %v2985, %v2986
  %v2988 = vsel %vm2265, %v2863, 0.0
  %v2989 = vadd.f32 %v2987, %v2988
  %v2990 = vsel %vm2265, %v2864, 0.0
  %v2991 = vadd.f32 %v2989, %v2990
  %v2992 = vrot.slane %v2991, 4
  %v2993 = vadd.f32 %v2991, %v2992
  %v2994 = vrot.slane %v2993, 2
  %v2995 = vadd.f32 %v2993, %v2994
  %v2996 = vrot.slane %v2995, 1
  %v2997 = vadd.f32 %v2995, %v2996
  %v2998 = vmul.f32 %v919, %v919
  %v2999 = vmul.f32 %v922, %v922
  %v3000 = vmul.f32 %v927, %v927
  %v3001 = vmul.f32 %v930, %v930
  %v3002 = vmul.f32 %v935, %v935
  %v3003 = vmul.f32 %v938, %v938
  %v3004 = vmul.f32 %v943, %v943
  %v3005 = vmul.f32 %v946, %v946
  %v3006 = vmul.f32 %v951, %v951
  %v3007 = vmul.f32 %v954, %v954
  %v3008 = vmul.f32 %v959, %v959
  %v3009 = vmul.f32 %v962, %v962
  %v3010 = vmul.f32 %v967, %v967
  %v3011 = vmul.f32 %v970, %v970
  %v3012 = vmul.f32 %v975, %v975
  %v3013 = vmul.f32 %v978, %v978
  %v3014 = vmul.f32 %v983, %v983
  %v3015 = vmul.f32 %v986, %v986
  %v3016 = vmul.f32 %v991, %v991
  %v3017 = vmul.f32 %v994, %v994
  %v3018 = vmul.f32 %v999, %v999
  %v3019 = vmul.f32 %v1002, %v1002
  %v3020 = vmul.f32 %v1007, %v1007
  %v3021 = vmul.f32 %v1010, %v1010
  %v3022 = vmul.f32 %v1015, %v1015
  %v3023 = vmul.f32 %v1018, %v1018
  %v3024 = vmul.f32 %v1023, %v1023
  %v3025 = vmul.f32 %v1026, %v1026
  %v3026 = vmul.f32 %v1031, %v1031
  %v3027 = vmul.f32 %v1034, %v1034
  %v3028 = vmul.f32 %v1039, %v1039
  %v3029 = vmul.f32 %v1042, %v1042
  %v3030 = vmul.f32 %v1047, %v1047
  %v3031 = vmul.f32 %v1050, %v1050
  %v3032 = vmul.f32 %v1055, %v1055
  %v3033 = vmul.f32 %v1058, %v1058
  %v3034 = vmul.f32 %v1063, %v1063
  %v3035 = vmul.f32 %v1066, %v1066
  %v3036 = vmul.f32 %v1071, %v1071
  %v3037 = vmul.f32 %v1074, %v1074
  %v3038 = vmul.f32 %v1079, %v1079
  %v3039 = vmul.f32 %v1082, %v1082
  %v3040 = vmul.f32 %v1087, %v1087
  %v3041 = vmul.f32 %v1090, %v1090
  %v3042 = vmul.f32 %v1095, %v1095
  %v3043 = vmul.f32 %v1098, %v1098
  %v3044 = vmul.f32 %v1103, %v1103
  %v3045 = vmul.f32 %v1106, %v1106
  %v3046 = vmul.f32 %v1111, %v1111
  %v3047 = vmul.f32 %v1114, %v1114
  %v3048 = vmul.f32 %v1119, %v1119
  %v3049 = vmul.f32 %v1122, %v1122
  %v3050 = vmul.f32 %v1127, %v1127
  %v3051 = vmul.f32 %v1130, %v1130
  %v3052 = vmul.f32 %v1135, %v1135
  %v3053 = vmul.f32 %v1138, %v1138
  %v3054 = vmul.f32 %v1143, %v1143
  %v3055 = vmul.f32 %v1146, %v1146
  %v3056 = vmul.f32 %v1151, %v1151
  %v3057 = vmul.f32 %v1154, %v1154
  %v3058 = vmul.f32 %v1159, %v1159
  %v3059 = vmul.f32 %v1162, %v1162
  %v3060 = vmul.f32 %v1167, %v1167
  %v3061 = vmul.f32 %v1170, %v1170
  %v3062 = vsel %vm2265, %v2998, 0.0
  %v3063 = vsel %vm2265, %v2999, 0.0
  %v3064 = vadd.f32 %v3062, %v3063
  %v3065 = vsel %vm2265, %v3000, 0.0
  %v3066 = vadd.f32 %v3064, %v3065
  %v3067 = vsel %vm2265, %v3001, 0.0
  %v3068 = vadd.f32 %v3066, %v3067
  %v3069 = vsel %vm2265, %v3002, 0.0
  %v3070 = vadd.f32 %v3068, %v3069
  %v3071 = vsel %vm2265, %v3003, 0.0
  %v3072 = vadd.f32 %v3070, %v3071
  %v3073 = vsel %vm2265, %v3004, 0.0
  %v3074 = vadd.f32 %v3072, %v3073
  %v3075 = vsel %vm2265, %v3005, 0.0
  %v3076 = vadd.f32 %v3074, %v3075
  %v3077 = vsel %vm2265, %v3006, 0.0
  %v3078 = vadd.f32 %v3076, %v3077
  %v3079 = vsel %vm2265, %v3007, 0.0
  %v3080 = vadd.f32 %v3078, %v3079
  %v3081 = vsel %vm2265, %v3008, 0.0
  %v3082 = vadd.f32 %v3080, %v3081
  %v3083 = vsel %vm2265, %v3009, 0.0
  %v3084 = vadd.f32 %v3082, %v3083
  %v3085 = vsel %vm2265, %v3010, 0.0
  %v3086 = vadd.f32 %v3084, %v3085
  %v3087 = vsel %vm2265, %v3011, 0.0
  %v3088 = vadd.f32 %v3086, %v3087
  %v3089 = vsel %vm2265, %v3012, 0.0
  %v3090 = vadd.f32 %v3088, %v3089
  %v3091 = vsel %vm2265, %v3013, 0.0
  %v3092 = vadd.f32 %v3090, %v3091
  %v3093 = vsel %vm2265, %v3014, 0.0
  %v3094 = vadd.f32 %v3092, %v3093
  %v3095 = vsel %vm2265, %v3015, 0.0
  %v3096 = vadd.f32 %v3094, %v3095
  %v3097 = vsel %vm2265, %v3016, 0.0
  %v3098 = vadd.f32 %v3096, %v3097
  %v3099 = vsel %vm2265, %v3017, 0.0
  %v3100 = vadd.f32 %v3098, %v3099
  %v3101 = vsel %vm2265, %v3018, 0.0
  %v3102 = vadd.f32 %v3100, %v3101
  %v3103 = vsel %vm2265, %v3019, 0.0
  %v3104 = vadd.f32 %v3102, %v3103
  %v3105 = vsel %vm2265, %v3020, 0.0
  %v3106 = vadd.f32 %v3104, %v3105
  %v3107 = vsel %vm2265, %v3021, 0.0
  %v3108 = vadd.f32 %v3106, %v3107
  %v3109 = vsel %vm2265, %v3022, 0.0
  %v3110 = vadd.f32 %v3108, %v3109
  %v3111 = vsel %vm2265, %v3023, 0.0
  %v3112 = vadd.f32 %v3110, %v3111
  %v3113 = vsel %vm2265, %v3024, 0.0
  %v3114 = vadd.f32 %v3112, %v3113
  %v3115 = vsel %vm2265, %v3025, 0.0
  %v3116 = vadd.f32 %v3114, %v3115
  %v3117 = vsel %vm2265, %v3026, 0.0
  %v3118 = vadd.f32 %v3116, %v3117
  %v3119 = vsel %vm2265, %v3027, 0.0
  %v3120 = vadd.f32 %v3118, %v3119
  %v3121 = vsel %vm2265, %v3028, 0.0
  %v3122 = vadd.f32 %v3120, %v3121
  %v3123 = vsel %vm2265, %v3029, 0.0
  %v3124 = vadd.f32 %v3122, %v3123
  %v3125 = vsel %vm2265, %v3030, 0.0
  %v3126 = vadd.f32 %v3124, %v3125
  %v3127 = vsel %vm2265, %v3031, 0.0
  %v3128 = vadd.f32 %v3126, %v3127
  %v3129 = vsel %vm2265, %v3032, 0.0
  %v3130 = vadd.f32 %v3128, %v3129
  %v3131 = vsel %vm2265, %v3033, 0.0
  %v3132 = vadd.f32 %v3130, %v3131
  %v3133 = vsel %vm2265, %v3034, 0.0
  %v3134 = vadd.f32 %v3132, %v3133
  %v3135 = vsel %vm2265, %v3035, 0.0
  %v3136 = vadd.f32 %v3134, %v3135
  %v3137 = vsel %vm2265, %v3036, 0.0
  %v3138 = vadd.f32 %v3136, %v3137
  %v3139 = vsel %vm2265, %v3037, 0.0
  %v3140 = vadd.f32 %v3138, %v3139
  %v3141 = vsel %vm2265, %v3038, 0.0
  %v3142 = vadd.f32 %v3140, %v3141
  %v3143 = vsel %vm2265, %v3039, 0.0
  %v3144 = vadd.f32 %v3142, %v3143
  %v3145 = vsel %vm2265, %v3040, 0.0
  %v3146 = vadd.f32 %v3144, %v3145
  %v3147 = vsel %vm2265, %v3041, 0.0
  %v3148 = vadd.f32 %v3146, %v3147
  %v3149 = vsel %vm2265, %v3042, 0.0
  %v3150 = vadd.f32 %v3148, %v3149
  %v3151 = vsel %vm2265, %v3043, 0.0
  %v3152 = vadd.f32 %v3150, %v3151
  %v3153 = vsel %vm2265, %v3044, 0.0
  %v3154 = vadd.f32 %v3152, %v3153
  %v3155 = vsel %vm2265, %v3045, 0.0
  %v3156 = vadd.f32 %v3154, %v3155
  %v3157 = vsel %vm2265, %v3046, 0.0
  %v3158 = vadd.f32 %v3156, %v3157
  %v3159 = vsel %vm2265, %v3047, 0.0
  %v3160 = vadd.f32 %v3158, %v3159
  %v3161 = vsel %vm2265, %v3048, 0.0
  %v3162 = vadd.f32 %v3160, %v3161
  %v3163 = vsel %vm2265, %v3049, 0.0
  %v3164 = vadd.f32 %v3162, %v3163
  %v3165 = vsel %vm2265, %v3050, 0.0
  %v3166 = vadd.f32 %v3164, %v3165
  %v3167 = vsel %vm2265, %v3051, 0.0
  %v3168 = vadd.f32 %v3166, %v3167
  %v3169 = vsel %vm2265, %v3052, 0.0
  %v3170 = vadd.f32 %v3168, %v3169
  %v3171 = vsel %vm2265, %v3053, 0.0
  %v3172 = vadd.f32 %v3170, %v3171
  %v3173 = vsel %vm2265, %v3054, 0.0
  %v3174 = vadd.f32 %v3172, %v3173
  %v3175 = vsel %vm2265, %v3055, 0.0
  %v3176 = vadd.f32 %v3174, %v3175
  %v3177 = vsel %vm2265, %v3056, 0.0
  %v3178 = vadd.f32 %v3176, %v3177
  %v3179 = vsel %vm2265, %v3057, 0.0
  %v3180 = vadd.f32 %v3178, %v3179
  %v3181 = vsel %vm2265, %v3058, 0.0
  %v3182 = vadd.f32 %v3180, %v3181
  %v3183 = vsel %vm2265, %v3059, 0.0
  %v3184 = vadd.f32 %v3182, %v3183
  %v3185 = vsel %vm2265, %v3060, 0.0
  %v3186 = vadd.f32 %v3184, %v3185
  %v3187 = vsel %vm2265, %v3061, 0.0
  %v3188 = vadd.f32 %v3186, %v3187
  %v3189 = vrot.slane %v3188, 4
  %v3190 = vadd.f32 %v3188, %v3189
  %v3191 = vrot.slane %v3190, 2
  %v3192 = vadd.f32 %v3190, %v3191
  %v3193 = vrot.slane %v3192, 1
  %v3194 = vadd.f32 %v3192, %v3193
  %v3195 = vadd.f32 %v2997, %v3194
  %v3196 = vmul.f32 %v1465, %v1465
  %v3197 = vmul.f32 %v1468, %v1468
  %v3198 = vmul.f32 %v1473, %v1473
  %v3199 = vmul.f32 %v1476, %v1476
  %v3200 = vmul.f32 %v1481, %v1481
  %v3201 = vmul.f32 %v1484, %v1484
  %v3202 = vmul.f32 %v1489, %v1489
  %v3203 = vmul.f32 %v1492, %v1492
  %v3204 = vmul.f32 %v1497, %v1497
  %v3205 = vmul.f32 %v1500, %v1500
  %v3206 = vmul.f32 %v1505, %v1505
  %v3207 = vmul.f32 %v1508, %v1508
  %v3208 = vmul.f32 %v1513, %v1513
  %v3209 = vmul.f32 %v1516, %v1516
  %v3210 = vmul.f32 %v1521, %v1521
  %v3211 = vmul.f32 %v1524, %v1524
  %v3212 = vmul.f32 %v1529, %v1529
  %v3213 = vmul.f32 %v1532, %v1532
  %v3214 = vmul.f32 %v1537, %v1537
  %v3215 = vmul.f32 %v1540, %v1540
  %v3216 = vmul.f32 %v1545, %v1545
  %v3217 = vmul.f32 %v1548, %v1548
  %v3218 = vmul.f32 %v1553, %v1553
  %v3219 = vmul.f32 %v1556, %v1556
  %v3220 = vmul.f32 %v1561, %v1561
  %v3221 = vmul.f32 %v1564, %v1564
  %v3222 = vmul.f32 %v1569, %v1569
  %v3223 = vmul.f32 %v1572, %v1572
  %v3224 = vmul.f32 %v1577, %v1577
  %v3225 = vmul.f32 %v1580, %v1580
  %v3226 = vmul.f32 %v1585, %v1585
  %v3227 = vmul.f32 %v1588, %v1588
  %v3228 = vmul.f32 %v1593, %v1593
  %v3229 = vmul.f32 %v1596, %v1596
  %v3230 = vmul.f32 %v1601, %v1601
  %v3231 = vmul.f32 %v1604, %v1604
  %v3232 = vmul.f32 %v1609, %v1609
  %v3233 = vmul.f32 %v1612, %v1612
  %v3234 = vmul.f32 %v1617, %v1617
  %v3235 = vmul.f32 %v1620, %v1620
  %v3236 = vmul.f32 %v1625, %v1625
  %v3237 = vmul.f32 %v1628, %v1628
  %v3238 = vmul.f32 %v1633, %v1633
  %v3239 = vmul.f32 %v1636, %v1636
  %v3240 = vmul.f32 %v1641, %v1641
  %v3241 = vmul.f32 %v1644, %v1644
  %v3242 = vmul.f32 %v1649, %v1649
  %v3243 = vmul.f32 %v1652, %v1652
  %v3244 = vmul.f32 %v1657, %v1657
  %v3245 = vmul.f32 %v1660, %v1660
  %v3246 = vmul.f32 %v1665, %v1665
  %v3247 = vmul.f32 %v1668, %v1668
  %v3248 = vmul.f32 %v1673, %v1673
  %v3249 = vmul.f32 %v1676, %v1676
  %v3250 = vmul.f32 %v1681, %v1681
  %v3251 = vmul.f32 %v1684, %v1684
  %v3252 = vmul.f32 %v1689, %v1689
  %v3253 = vmul.f32 %v1692, %v1692
  %v3254 = vmul.f32 %v1697, %v1697
  %v3255 = vmul.f32 %v1700, %v1700
  %v3256 = vmul.f32 %v1705, %v1705
  %v3257 = vmul.f32 %v1708, %v1708
  %v3258 = vmul.f32 %v1713, %v1713
  %v3259 = vmul.f32 %v1716, %v1716
  %v3260 = vsel %vm2265, %v3196, 0.0
  %v3261 = vsel %vm2265, %v3197, 0.0
  %v3262 = vadd.f32 %v3260, %v3261
  %v3263 = vsel %vm2265, %v3198, 0.0
  %v3264 = vadd.f32 %v3262, %v3263
  %v3265 = vsel %vm2265, %v3199, 0.0
  %v3266 = vadd.f32 %v3264, %v3265
  %v3267 = vsel %vm2265, %v3200, 0.0
  %v3268 = vadd.f32 %v3266, %v3267
  %v3269 = vsel %vm2265, %v3201, 0.0
  %v3270 = vadd.f32 %v3268, %v3269
  %v3271 = vsel %vm2265, %v3202, 0.0
  %v3272 = vadd.f32 %v3270, %v3271
  %v3273 = vsel %vm2265, %v3203, 0.0
  %v3274 = vadd.f32 %v3272, %v3273
  %v3275 = vsel %vm2265, %v3204, 0.0
  %v3276 = vadd.f32 %v3274, %v3275
  %v3277 = vsel %vm2265, %v3205, 0.0
  %v3278 = vadd.f32 %v3276, %v3277
  %v3279 = vsel %vm2265, %v3206, 0.0
  %v3280 = vadd.f32 %v3278, %v3279
  %v3281 = vsel %vm2265, %v3207, 0.0
  %v3282 = vadd.f32 %v3280, %v3281
  %v3283 = vsel %vm2265, %v3208, 0.0
  %v3284 = vadd.f32 %v3282, %v3283
  %v3285 = vsel %vm2265, %v3209, 0.0
  %v3286 = vadd.f32 %v3284, %v3285
  %v3287 = vsel %vm2265, %v3210, 0.0
  %v3288 = vadd.f32 %v3286, %v3287
  %v3289 = vsel %vm2265, %v3211, 0.0
  %v3290 = vadd.f32 %v3288, %v3289
  %v3291 = vsel %vm2265, %v3212, 0.0
  %v3292 = vadd.f32 %v3290, %v3291
  %v3293 = vsel %vm2265, %v3213, 0.0
  %v3294 = vadd.f32 %v3292, %v3293
  %v3295 = vsel %vm2265, %v3214, 0.0
  %v3296 = vadd.f32 %v3294, %v3295
  %v3297 = vsel %vm2265, %v3215, 0.0
  %v3298 = vadd.f32 %v3296, %v3297
  %v3299 = vsel %vm2265, %v3216, 0.0
  %v3300 = vadd.f32 %v3298, %v3299
  %v3301 = vsel %vm2265, %v3217, 0.0
  %v3302 = vadd.f32 %v3300, %v3301
  %v3303 = vsel %vm2265, %v3218, 0.0
  %v3304 = vadd.f32 %v3302, %v3303
  %v3305 = vsel %vm2265, %v3219, 0.0
  %v3306 = vadd.f32 %v3304, %v3305
  %v3307 = vsel %vm2265, %v3220, 0.0
  %v3308 = vadd.f32 %v3306, %v3307
  %v3309 = vsel %vm2265, %v3221, 0.0
  %v3310 = vadd.f32 %v3308, %v3309
  %v3311 = vsel %vm2265, %v3222, 0.0
  %v3312 = vadd.f32 %v3310, %v3311
  %v3313 = vsel %vm2265, %v3223, 0.0
  %v3314 = vadd.f32 %v3312, %v3313
  %v3315 = vsel %vm2265, %v3224, 0.0
  %v3316 = vadd.f32 %v3314, %v3315
  %v3317 = vsel %vm2265, %v3225, 0.0
  %v3318 = vadd.f32 %v3316, %v3317
  %v3319 = vsel %vm2265, %v3226, 0.0
  %v3320 = vadd.f32 %v3318, %v3319
  %v3321 = vsel %vm2265, %v3227, 0.0
  %v3322 = vadd.f32 %v3320, %v3321
  %v3323 = vsel %vm2265, %v3228, 0.0
  %v3324 = vadd.f32 %v3322, %v3323
  %v3325 = vsel %vm2265, %v3229, 0.0
  %v3326 = vadd.f32 %v3324, %v3325
  %v3327 = vsel %vm2265, %v3230, 0.0
  %v3328 = vadd.f32 %v3326, %v3327
  %v3329 = vsel %vm2265, %v3231, 0.0
  %v3330 = vadd.f32 %v3328, %v3329
  %v3331 = vsel %vm2265, %v3232, 0.0
  %v3332 = vadd.f32 %v3330, %v3331
  %v3333 = vsel %vm2265, %v3233, 0.0
  %v3334 = vadd.f32 %v3332, %v3333
  %v3335 = vsel %vm2265, %v3234, 0.0
  %v3336 = vadd.f32 %v3334, %v3335
  %v3337 = vsel %vm2265, %v3235, 0.0
  %v3338 = vadd.f32 %v3336, %v3337
  %v3339 = vsel %vm2265, %v3236, 0.0
  %v3340 = vadd.f32 %v3338, %v3339
  %v3341 = vsel %vm2265, %v3237, 0.0
  %v3342 = vadd.f32 %v3340, %v3341
  %v3343 = vsel %vm2265, %v3238, 0.0
  %v3344 = vadd.f32 %v3342, %v3343
  %v3345 = vsel %vm2265, %v3239, 0.0
  %v3346 = vadd.f32 %v3344, %v3345
  %v3347 = vsel %vm2265, %v3240, 0.0
  %v3348 = vadd.f32 %v3346, %v3347
  %v3349 = vsel %vm2265, %v3241, 0.0
  %v3350 = vadd.f32 %v3348, %v3349
  %v3351 = vsel %vm2265, %v3242, 0.0
  %v3352 = vadd.f32 %v3350, %v3351
  %v3353 = vsel %vm2265, %v3243, 0.0
  %v3354 = vadd.f32 %v3352, %v3353
  %v3355 = vsel %vm2265, %v3244, 0.0
  %v3356 = vadd.f32 %v3354, %v3355
  %v3357 = vsel %vm2265, %v3245, 0.0
  %v3358 = vadd.f32 %v3356, %v3357
  %v3359 = vsel %vm2265, %v3246, 0.0
  %v3360 = vadd.f32 %v3358, %v3359
  %v3361 = vsel %vm2265, %v3247, 0.0
  %v3362 = vadd.f32 %v3360, %v3361
  %v3363 = vsel %vm2265, %v3248, 0.0
  %v3364 = vadd.f32 %v3362, %v3363
  %v3365 = vsel %vm2265, %v3249, 0.0
  %v3366 = vadd.f32 %v3364, %v3365
  %v3367 = vsel %vm2265, %v3250, 0.0
  %v3368 = vadd.f32 %v3366, %v3367
  %v3369 = vsel %vm2265, %v3251, 0.0
  %v3370 = vadd.f32 %v3368, %v3369
  %v3371 = vsel %vm2265, %v3252, 0.0
  %v3372 = vadd.f32 %v3370, %v3371
  %v3373 = vsel %vm2265, %v3253, 0.0
  %v3374 = vadd.f32 %v3372, %v3373
  %v3375 = vsel %vm2265, %v3254, 0.0
  %v3376 = vadd.f32 %v3374, %v3375
  %v3377 = vsel %vm2265, %v3255, 0.0
  %v3378 = vadd.f32 %v3376, %v3377
  %v3379 = vsel %vm2265, %v3256, 0.0
  %v3380 = vadd.f32 %v3378, %v3379
  %v3381 = vsel %vm2265, %v3257, 0.0
  %v3382 = vadd.f32 %v3380, %v3381
  %v3383 = vsel %vm2265, %v3258, 0.0
  %v3384 = vadd.f32 %v3382, %v3383
  %v3385 = vsel %vm2265, %v3259, 0.0
  %v3386 = vadd.f32 %v3384, %v3385
  %v3387 = vrot.slane %v3386, 4
  %v3388 = vadd.f32 %v3386, %v3387
  %v3389 = vrot.slane %v3388, 2
  %v3390 = vadd.f32 %v3388, %v3389
  %v3391 = vrot.slane %v3390, 1
  %v3392 = vadd.f32 %v3390, %v3391
  %v3393 = vadd.f32 %v3195, %v3392
  %v3394 = vmul.f32 %v2011, %v2011
  %v3395 = vmul.f32 %v2014, %v2014
  %v3396 = vmul.f32 %v2019, %v2019
  %v3397 = vmul.f32 %v2022, %v2022
  %v3398 = vmul.f32 %v2027, %v2027
  %v3399 = vmul.f32 %v2030, %v2030
  %v3400 = vmul.f32 %v2035, %v2035
  %v3401 = vmul.f32 %v2038, %v2038
  %v3402 = vmul.f32 %v2043, %v2043
  %v3403 = vmul.f32 %v2046, %v2046
  %v3404 = vmul.f32 %v2051, %v2051
  %v3405 = vmul.f32 %v2054, %v2054
  %v3406 = vmul.f32 %v2059, %v2059
  %v3407 = vmul.f32 %v2062, %v2062
  %v3408 = vmul.f32 %v2067, %v2067
  %v3409 = vmul.f32 %v2070, %v2070
  %v3410 = vmul.f32 %v2075, %v2075
  %v3411 = vmul.f32 %v2078, %v2078
  %v3412 = vmul.f32 %v2083, %v2083
  %v3413 = vmul.f32 %v2086, %v2086
  %v3414 = vmul.f32 %v2091, %v2091
  %v3415 = vmul.f32 %v2094, %v2094
  %v3416 = vmul.f32 %v2099, %v2099
  %v3417 = vmul.f32 %v2102, %v2102
  %v3418 = vmul.f32 %v2107, %v2107
  %v3419 = vmul.f32 %v2110, %v2110
  %v3420 = vmul.f32 %v2115, %v2115
  %v3421 = vmul.f32 %v2118, %v2118
  %v3422 = vmul.f32 %v2123, %v2123
  %v3423 = vmul.f32 %v2126, %v2126
  %v3424 = vmul.f32 %v2131, %v2131
  %v3425 = vmul.f32 %v2134, %v2134
  %v3426 = vmul.f32 %v2139, %v2139
  %v3427 = vmul.f32 %v2142, %v2142
  %v3428 = vmul.f32 %v2147, %v2147
  %v3429 = vmul.f32 %v2150, %v2150
  %v3430 = vmul.f32 %v2155, %v2155
  %v3431 = vmul.f32 %v2158, %v2158
  %v3432 = vmul.f32 %v2163, %v2163
  %v3433 = vmul.f32 %v2166, %v2166
  %v3434 = vmul.f32 %v2171, %v2171
  %v3435 = vmul.f32 %v2174, %v2174
  %v3436 = vmul.f32 %v2179, %v2179
  %v3437 = vmul.f32 %v2182, %v2182
  %v3438 = vmul.f32 %v2187, %v2187
  %v3439 = vmul.f32 %v2190, %v2190
  %v3440 = vmul.f32 %v2195, %v2195
  %v3441 = vmul.f32 %v2198, %v2198
  %v3442 = vmul.f32 %v2203, %v2203
  %v3443 = vmul.f32 %v2206, %v2206
  %v3444 = vmul.f32 %v2211, %v2211
  %v3445 = vmul.f32 %v2214, %v2214
  %v3446 = vmul.f32 %v2219, %v2219
  %v3447 = vmul.f32 %v2222, %v2222
  %v3448 = vmul.f32 %v2227, %v2227
  %v3449 = vmul.f32 %v2230, %v2230
  %v3450 = vmul.f32 %v2235, %v2235
  %v3451 = vmul.f32 %v2238, %v2238
  %v3452 = vmul.f32 %v2243, %v2243
  %v3453 = vmul.f32 %v2246, %v2246
  %v3454 = vmul.f32 %v2251, %v2251
  %v3455 = vmul.f32 %v2254, %v2254
  %v3456 = vmul.f32 %v2259, %v2259
  %v3457 = vmul.f32 %v2262, %v2262
  %v3458 = vsel %vm2265, %v3394, 0.0
  %v3459 = vsel %vm2265, %v3395, 0.0
  %v3460 = vadd.f32 %v3458, %v3459
  %v3461 = vsel %vm2265, %v3396, 0.0
  %v3462 = vadd.f32 %v3460, %v3461
  %v3463 = vsel %vm2265, %v3397, 0.0
  %v3464 = vadd.f32 %v3462, %v3463
  %v3465 = vsel %vm2265, %v3398, 0.0
  %v3466 = vadd.f32 %v3464, %v3465
  %v3467 = vsel %vm2265, %v3399, 0.0
  %v3468 = vadd.f32 %v3466, %v3467
  %v3469 = vsel %vm2265, %v3400, 0.0
  %v3470 = vadd.f32 %v3468, %v3469
  %v3471 = vsel %vm2265, %v3401, 0.0
  %v3472 = vadd.f32 %v3470, %v3471
  %v3473 = vsel %vm2265, %v3402, 0.0
  %v3474 = vadd.f32 %v3472, %v3473
  %v3475 = vsel %vm2265, %v3403, 0.0
  %v3476 = vadd.f32 %v3474, %v3475
  %v3477 = vsel %vm2265, %v3404, 0.0
  %v3478 = vadd.f32 %v3476, %v3477
  %v3479 = vsel %vm2265, %v3405, 0.0
  %v3480 = vadd.f32 %v3478, %v3479
  %v3481 = vsel %vm2265, %v3406, 0.0
  %v3482 = vadd.f32 %v3480, %v3481
  %v3483 = vsel %vm2265, %v3407, 0.0
  %v3484 = vadd.f32 %v3482, %v3483
  %v3485 = vsel %vm2265, %v3408, 0.0
  %v3486 = vadd.f32 %v3484, %v3485
  %v3487 = vsel %vm2265, %v3409, 0.0
  %v3488 = vadd.f32 %v3486, %v3487
  %v3489 = vsel %vm2265, %v3410, 0.0
  %v3490 = vadd.f32 %v3488, %v3489
  %v3491 = vsel %vm2265, %v3411, 0.0
  %v3492 = vadd.f32 %v3490, %v3491
  %v3493 = vsel %vm2265, %v3412, 0.0
  %v3494 = vadd.f32 %v3492, %v3493
  %v3495 = vsel %vm2265, %v3413, 0.0
  %v3496 = vadd.f32 %v3494, %v3495
  %v3497 = vsel %vm2265, %v3414, 0.0
  %v3498 = vadd.f32 %v3496, %v3497
  %v3499 = vsel %vm2265, %v3415, 0.0
  %v3500 = vadd.f32 %v3498, %v3499
  %v3501 = vsel %vm2265, %v3416, 0.0
  %v3502 = vadd.f32 %v3500, %v3501
  %v3503 = vsel %vm2265, %v3417, 0.0
  %v3504 = vadd.f32 %v3502, %v3503
  %v3505 = vsel %vm2265, %v3418, 0.0
  %v3506 = vadd.f32 %v3504, %v3505
  %v3507 = vsel %vm2265, %v3419, 0.0
  %v3508 = vadd.f32 %v3506, %v3507
  %v3509 = vsel %vm2265, %v3420, 0.0
  %v3510 = vadd.f32 %v3508, %v3509
  %v3511 = vsel %vm2265, %v3421, 0.0
  %v3512 = vadd.f32 %v3510, %v3511
  %v3513 = vsel %vm2265, %v3422, 0.0
  %v3514 = vadd.f32 %v3512, %v3513
  %v3515 = vsel %vm2265, %v3423, 0.0
  %v3516 = vadd.f32 %v3514, %v3515
  %v3517 = vsel %vm2265, %v3424, 0.0
  %v3518 = vadd.f32 %v3516, %v3517
  %v3519 = vsel %vm2265, %v3425, 0.0
  %v3520 = vadd.f32 %v3518, %v3519
  %v3521 = vsel %vm2265, %v3426, 0.0
  %v3522 = vadd.f32 %v3520, %v3521
  %v3523 = vsel %vm2265, %v3427, 0.0
  %v3524 = vadd.f32 %v3522, %v3523
  %v3525 = vsel %vm2265, %v3428, 0.0
  %v3526 = vadd.f32 %v3524, %v3525
  %v3527 = vsel %vm2265, %v3429, 0.0
  %v3528 = vadd.f32 %v3526, %v3527
  %v3529 = vsel %vm2265, %v3430, 0.0
  %v3530 = vadd.f32 %v3528, %v3529
  %v3531 = vsel %vm2265, %v3431, 0.0
  %v3532 = vadd.f32 %v3530, %v3531
  %v3533 = vsel %vm2265, %v3432, 0.0
  %v3534 = vadd.f32 %v3532, %v3533
  %v3535 = vsel %vm2265, %v3433, 0.0
  %v3536 = vadd.f32 %v3534, %v3535
  %v3537 = vsel %vm2265, %v3434, 0.0
  %v3538 = vadd.f32 %v3536, %v3537
  %v3539 = vsel %vm2265, %v3435, 0.0
  %v3540 = vadd.f32 %v3538, %v3539
  %v3541 = vsel %vm2265, %v3436, 0.0
  %v3542 = vadd.f32 %v3540, %v3541
  %v3543 = vsel %vm2265, %v3437, 0.0
  %v3544 = vadd.f32 %v3542, %v3543
  %v3545 = vsel %vm2265, %v3438, 0.0
  %v3546 = vadd.f32 %v3544, %v3545
  %v3547 = vsel %vm2265, %v3439, 0.0
  %v3548 = vadd.f32 %v3546, %v3547
  %v3549 = vsel %vm2265, %v3440, 0.0
  %v3550 = vadd.f32 %v3548, %v3549
  %v3551 = vsel %vm2265, %v3441, 0.0
  %v3552 = vadd.f32 %v3550, %v3551
  %v3553 = vsel %vm2265, %v3442, 0.0
  %v3554 = vadd.f32 %v3552, %v3553
  %v3555 = vsel %vm2265, %v3443, 0.0
  %v3556 = vadd.f32 %v3554, %v3555
  %v3557 = vsel %vm2265, %v3444, 0.0
  %v3558 = vadd.f32 %v3556, %v3557
  %v3559 = vsel %vm2265, %v3445, 0.0
  %v3560 = vadd.f32 %v3558, %v3559
  %v3561 = vsel %vm2265, %v3446, 0.0
  %v3562 = vadd.f32 %v3560, %v3561
  %v3563 = vsel %vm2265, %v3447, 0.0
  %v3564 = vadd.f32 %v3562, %v3563
  %v3565 = vsel %vm2265, %v3448, 0.0
  %v3566 = vadd.f32 %v3564, %v3565
  %v3567 = vsel %vm2265, %v3449, 0.0
  %v3568 = vadd.f32 %v3566, %v3567
  %v3569 = vsel %vm2265, %v3450, 0.0
  %v3570 = vadd.f32 %v3568, %v3569
  %v3571 = vsel %vm2265, %v3451, 0.0
  %v3572 = vadd.f32 %v3570, %v3571
  %v3573 = vsel %vm2265, %v3452, 0.0
  %v3574 = vadd.f32 %v3572, %v3573
  %v3575 = vsel %vm2265, %v3453, 0.0
  %v3576 = vadd.f32 %v3574, %v3575
  %v3577 = vsel %vm2265, %v3454, 0.0
  %v3578 = vadd.f32 %v3576, %v3577
  %v3579 = vsel %vm2265, %v3455, 0.0
  %v3580 = vadd.f32 %v3578, %v3579
  %v3581 = vsel %vm2265, %v3456, 0.0
  %v3582 = vadd.f32 %v3580, %v3581
  %v3583 = vsel %vm2265, %v3457, 0.0
  %v3584 = vadd.f32 %v3582, %v3583
  %v3585 = vrot.slane %v3584, 4
  %v3586 = vadd.f32 %v3584, %v3585
  %v3587 = vrot.slane %v3586, 2
  %v3588 = vadd.f32 %v3586, %v3587
  %v3589 = vrot.slane %v3588, 1
  %v3590 = vadd.f32 %v3588, %v3589
  %v3591 = vadd.f32 %v3393, %v3590
  %v3592 = vrcp.pop 2048.0
  %v3593 = vmul.f32 %v2800, %v3592
  %v3594 = vmul.f32 %v3591, %v3592
  %v3595 = vmul.f32 %v3593, %v3593
  %v3596 = vsub.f32 %v3594, %v3595
  %v3597 = vld [vmem:[%s2] sm:$0x1]
  %v3598 = vadd.f32 %v3596, 1e-05
  %v3599 = vrsqrt.pop %v3598
  %v3600 = vmul.f32 %v3597, %v3599
  %v3601 = vld [vmem:[%s3] sm:$0x1]
  %v3602 = vmul.f32 %v3593, %v3600
  %v3603 = vsub.f32 %v3601, %v3602
  %v3605 = vlaneseq
  %v3606 = vshrl.u32 %v3605, 7
  %v3607 = vsub.s32 0, %v3606
  %v3608 = vrot.slane %v3600, %v3607
  %v3610 = vmul.f32 %v373, %v3608
  %v3611 = vmul.f32 %v376, %v3608
  %v3612 = vmul.f32 %v381, %v3608
  %v3613 = vmul.f32 %v384, %v3608
  %v3614 = vmul.f32 %v389, %v3608
  %v3615 = vmul.f32 %v392, %v3608
  %v3616 = vmul.f32 %v397, %v3608
  %v3617 = vmul.f32 %v400, %v3608
  %v3618 = vmul.f32 %v405, %v3608
  %v3619 = vmul.f32 %v408, %v3608
  %v3620 = vmul.f32 %v413, %v3608
  %v3621 = vmul.f32 %v416, %v3608
  %v3622 = vmul.f32 %v421, %v3608
  %v3623 = vmul.f32 %v424, %v3608
  %v3624 = vmul.f32 %v429, %v3608
  %v3625 = vmul.f32 %v432, %v3608
  %v3626 = vmul.f32 %v437, %v3608
  %v3627 = vmul.f32 %v440, %v3608
  %v3628 = vmul.f32 %v445, %v3608
  %v3629 = vmul.f32 %v448, %v3608
  %v3630 = vmul.f32 %v453, %v3608
  %v3631 = vmul.f32 %v456, %v3608
  %v3632 = vmul.f32 %v461, %v3608
  %v3633 = vmul.f32 %v464, %v3608
  %v3634 = vmul.f32 %v469, %v3608
  %v3635 = vmul.f32 %v472, %v3608
  %v3636 = vmul.f32 %v477, %v3608
  %v3637 = vmul.f32 %v480, %v3608
  %v3638 = vmul.f32 %v485, %v3608
  %v3639 = vmul.f32 %v488, %v3608
  %v3640 = vmul.f32 %v493, %v3608
  %v3641 = vmul.f32 %v496, %v3608
  %v3642 = vmul.f32 %v501, %v3608
  %v3643 = vmul.f32 %v504, %v3608
  %v3644 = vmul.f32 %v509, %v3608
  %v3645 = vmul.f32 %v512, %v3608
  %v3646 = vmul.f32 %v517, %v3608
  %v3647 = vmul.f32 %v520, %v3608
  %v3648 = vmul.f32 %v525, %v3608
  %v3649 = vmul.f32 %v528, %v3608
  %v3650 = vmul.f32 %v533, %v3608
  %v3651 = vmul.f32 %v536, %v3608
  %v3652 = vmul.f32 %v541, %v3608
  %v3653 = vmul.f32 %v544, %v3608
  %v3654 = vmul.f32 %v549, %v3608
  %v3655 = vmul.f32 %v552, %v3608
  %v3656 = vmul.f32 %v557, %v3608
  %v3657 = vmul.f32 %v560, %v3608
  %v3658 = vmul.f32 %v565, %v3608
  %v3659 = vmul.f32 %v568, %v3608
  %v3660 = vmul.f32 %v573, %v3608
  %v3661 = vmul.f32 %v576, %v3608
  %v3662 = vmul.f32 %v581, %v3608
  %v3663 = vmul.f32 %v584, %v3608
  %v3664 = vmul.f32 %v589, %v3608
  %v3665 = vmul.f32 %v592, %v3608
  %v3666 = vmul.f32 %v597, %v3608
  %v3667 = vmul.f32 %v600, %v3608
  %v3668 = vmul.f32 %v605, %v3608
  %v3669 = vmul.f32 %v608, %v3608
  %v3670 = vmul.f32 %v613, %v3608
  %v3671 = vmul.f32 %v616, %v3608
  %v3672 = vmul.f32 %v621, %v3608
  %v3673 = vmul.f32 %v624, %v3608
  %v3675 = vlaneseq
  %v3676 = vshrl.u32 %v3675, 7
  %v3677 = vsub.s32 0, %v3676
  %v3678 = vrot.slane %v3603, %v3677
  %v3680 = vadd.f32 %v3610, %v3678
  %v3681 = vadd.f32 %v3611, %v3678
  %v3682 = vadd.f32 %v3612, %v3678
  %v3683 = vadd.f32 %v3613, %v3678
  %v3684 = vadd.f32 %v3614, %v3678
  %v3685 = vadd.f32 %v3615, %v3678
  %v3686 = vadd.f32 %v3616, %v3678
  %v3687 = vadd.f32 %v3617, %v3678
  %v3688 = vadd.f32 %v3618, %v3678
  %v3689 = vadd.f32 %v3619, %v3678
  %v3690 = vadd.f32 %v3620, %v3678
  %v3691 = vadd.f32 %v3621, %v3678
  %v3692 = vadd.f32 %v3622, %v3678
  %v3693 = vadd.f32 %v3623, %v3678
  %v3694 = vadd.f32 %v3624, %v3678
  %v3695 = vadd.f32 %v3625, %v3678
  %v3696 = vadd.f32 %v3626, %v3678
  %v3697 = vadd.f32 %v3627, %v3678
  %v3698 = vadd.f32 %v3628, %v3678
  %v3699 = vadd.f32 %v3629, %v3678
  %v3700 = vadd.f32 %v3630, %v3678
  %v3701 = vadd.f32 %v3631, %v3678
  %v3702 = vadd.f32 %v3632, %v3678
  %v3703 = vadd.f32 %v3633, %v3678
  %v3704 = vadd.f32 %v3634, %v3678
  %v3705 = vadd.f32 %v3635, %v3678
  %v3706 = vadd.f32 %v3636, %v3678
  %v3707 = vadd.f32 %v3637, %v3678
  %v3708 = vadd.f32 %v3638, %v3678
  %v3709 = vadd.f32 %v3639, %v3678
  %v3710 = vadd.f32 %v3640, %v3678
  %v3711 = vadd.f32 %v3641, %v3678
  %v3712 = vadd.f32 %v3642, %v3678
  %v3713 = vadd.f32 %v3643, %v3678
  %v3714 = vadd.f32 %v3644, %v3678
  %v3715 = vadd.f32 %v3645, %v3678
  %v3716 = vadd.f32 %v3646, %v3678
  %v3717 = vadd.f32 %v3647, %v3678
  %v3718 = vadd.f32 %v3648, %v3678
  %v3719 = vadd.f32 %v3649, %v3678
  %v3720 = vadd.f32 %v3650, %v3678
  %v3721 = vadd.f32 %v3651, %v3678
  %v3722 = vadd.f32 %v3652, %v3678
  %v3723 = vadd.f32 %v3653, %v3678
  %v3724 = vadd.f32 %v3654, %v3678
  %v3725 = vadd.f32 %v3655, %v3678
  %v3726 = vadd.f32 %v3656, %v3678
  %v3727 = vadd.f32 %v3657, %v3678
  %v3728 = vadd.f32 %v3658, %v3678
  %v3729 = vadd.f32 %v3659, %v3678
  %v3730 = vadd.f32 %v3660, %v3678
  %v3731 = vadd.f32 %v3661, %v3678
  %v3732 = vadd.f32 %v3662, %v3678
  %v3733 = vadd.f32 %v3663, %v3678
  %v3734 = vadd.f32 %v3664, %v3678
  %v3735 = vadd.f32 %v3665, %v3678
  %v3736 = vadd.f32 %v3666, %v3678
  %v3737 = vadd.f32 %v3667, %v3678
  %v3738 = vadd.f32 %v3668, %v3678
  %v3739 = vadd.f32 %v3669, %v3678
  %v3740 = vadd.f32 %v3670, %v3678
  %v3741 = vadd.f32 %v3671, %v3678
  %v3742 = vadd.f32 %v3672, %v3678
  %v3743 = vadd.f32 %v3673, %v3678
  %v3744 = vmax.f32 %v3680, 0.0
  %v3745 = vmax.f32 %v3681, 0.0
  %v3746 = vmax.f32 %v3682, 0.0
  %v3747 = vmax.f32 %v3683, 0.0
  %v3748 = vmax.f32 %v3684, 0.0
  %v3749 = vmax.f32 %v3685, 0.0
  %v3750 = vmax.f32 %v3686, 0.0
  %v3751 = vmax.f32 %v3687, 0.0
  %v3752 = vmax.f32 %v3688, 0.0
  %v3753 = vmax.f32 %v3689, 0.0
  %v3754 = vmax.f32 %v3690, 0.0
  %v3755 = vmax.f32 %v3691, 0.0
  %v3756 = vmax.f32 %v3692, 0.0
  %v3757 = vmax.f32 %v3693, 0.0
  %v3758 = vmax.f32 %v3694, 0.0
  %v3759 = vmax.f32 %v3695, 0.0
  %v3760 = vmax.f32 %v3696, 0.0
  %v3761 = vmax.f32 %v3697, 0.0
  %v3762 = vmax.f32 %v3698, 0.0
  %v3763 = vmax.f32 %v3699, 0.0
  %v3764 = vmax.f32 %v3700, 0.0
  %v3765 = vmax.f32 %v3701, 0.0
  %v3766 = vmax.f32 %v3702, 0.0
  %v3767 = vmax.f32 %v3703, 0.0
  %v3768 = vmax.f32 %v3704, 0.0
  %v3769 = vmax.f32 %v3705, 0.0
  %v3770 = vmax.f32 %v3706, 0.0
  %v3771 = vmax.f32 %v3707, 0.0
  %v3772 = vmax.f32 %v3708, 0.0
  %v3773 = vmax.f32 %v3709, 0.0
  %v3774 = vmax.f32 %v3710, 0.0
  %v3775 = vmax.f32 %v3711, 0.0
  %v3776 = vmax.f32 %v3712, 0.0
  %v3777 = vmax.f32 %v3713, 0.0
  %v3778 = vmax.f32 %v3714, 0.0
  %v3779 = vmax.f32 %v3715, 0.0
  %v3780 = vmax.f32 %v3716, 0.0
  %v3781 = vmax.f32 %v3717, 0.0
  %v3782 = vmax.f32 %v3718, 0.0
  %v3783 = vmax.f32 %v3719, 0.0
  %v3784 = vmax.f32 %v3720, 0.0
  %v3785 = vmax.f32 %v3721, 0.0
  %v3786 = vmax.f32 %v3722, 0.0
  %v3787 = vmax.f32 %v3723, 0.0
  %v3788 = vmax.f32 %v3724, 0.0
  %v3789 = vmax.f32 %v3725, 0.0
  %v3790 = vmax.f32 %v3726, 0.0
  %v3791 = vmax.f32 %v3727, 0.0
  %v3792 = vmax.f32 %v3728, 0.0
  %v3793 = vmax.f32 %v3729, 0.0
  %v3794 = vmax.f32 %v3730, 0.0
  %v3795 = vmax.f32 %v3731, 0.0
  %v3796 = vmax.f32 %v3732, 0.0
  %v3797 = vmax.f32 %v3733, 0.0
  %v3798 = vmax.f32 %v3734, 0.0
  %v3799 = vmax.f32 %v3735, 0.0
  %v3800 = vmax.f32 %v3736, 0.0
  %v3801 = vmax.f32 %v3737, 0.0
  %v3802 = vmax.f32 %v3738, 0.0
  %v3803 = vmax.f32 %v3739, 0.0
  %v3804 = vmax.f32 %v3740, 0.0
  %v3805 = vmax.f32 %v3741, 0.0
  %v3806 = vmax.f32 %v3742, 0.0
  %v3807 = vmax.f32 %v3743, 0.0
  %v3808 = vmul.f32 %v919, %v3608
  %v3809 = vmul.f32 %v922, %v3608
  %v3810 = vmul.f32 %v927, %v3608
  %v3811 = vmul.f32 %v930, %v3608
  %v3812 = vmul.f32 %v935, %v3608
  %v3813 = vmul.f32 %v938, %v3608
  %v3814 = vmul.f32 %v943, %v3608
  %v3815 = vmul.f32 %v946, %v3608
  %v3816 = vmul.f32 %v951, %v3608
  %v3817 = vmul.f32 %v954, %v3608
  %v3818 = vmul.f32 %v959, %v3608
  %v3819 = vmul.f32 %v962, %v3608
  %v3820 = vmul.f32 %v967, %v3608
  %v3821 = vmul.f32 %v970, %v3608
  %v3822 = vmul.f32 %v975, %v3608
  %v3823 = vmul.f32 %v978, %v3608
  %v3824 = vmul.f32 %v983, %v3608
  %v3825 = vmul.f32 %v986, %v3608
  %v3826 = vmul.f32 %v991, %v3608
  %v3827 = vmul.f32 %v994, %v3608
  %v3828 = vmul.f32 %v999, %v3608
  %v3829 = vmul.f32 %v1002, %v3608
  %v3830 = vmul.f32 %v1007, %v3608
  %v3831 = vmul.f32 %v1010, %v3608
  %v3832 = vmul.f32 %v1015, %v3608
  %v3833 = vmul.f32 %v1018, %v3608
  %v3834 = vmul.f32 %v1023, %v3608
  %v3835 = vmul.f32 %v1026, %v3608
  %v3836 = vmul.f32 %v1031, %v3608
  %v3837 = vmul.f32 %v1034, %v3608
  %v3838 = vmul.f32 %v1039, %v3608
  %v3839 = vmul.f32 %v1042, %v3608
  %v3840 = vmul.f32 %v1047, %v3608
  %v3841 = vmul.f32 %v1050, %v3608
  %v3842 = vmul.f32 %v1055, %v3608
  %v3843 = vmul.f32 %v1058, %v3608
  %v3844 = vmul.f32 %v1063, %v3608
  %v3845 = vmul.f32 %v1066, %v3608
  %v3846 = vmul.f32 %v1071, %v3608
  %v3847 = vmul.f32 %v1074, %v3608
  %v3848 = vmul.f32 %v1079, %v3608
  %v3849 = vmul.f32 %v1082, %v3608
  %v3850 = vmul.f32 %v1087, %v3608
  %v3851 = vmul.f32 %v1090, %v3608
  %v3852 = vmul.f32 %v1095, %v3608
  %v3853 = vmul.f32 %v1098, %v3608
  %v3854 = vmul.f32 %v1103, %v3608
  %v3855 = vmul.f32 %v1106, %v3608
  %v3856 = vmul.f32 %v1111, %v3608
  %v3857 = vmul.f32 %v1114, %v3608
  %v3858 = vmul.f32 %v1119, %v3608
  %v3859 = vmul.f32 %v1122, %v3608
  %v3860 = vmul.f32 %v1127, %v3608
  %v3861 = vmul.f32 %v1130, %v3608
  %v3862 = vmul.f32 %v1135, %v3608
  %v3863 = vmul.f32 %v1138, %v3608
  %v3864 = vmul.f32 %v1143, %v3608
  %v3865 = vmul.f32 %v1146, %v3608
  %v3866 = vmul.f32 %v1151, %v3608
  %v3867 = vmul.f32 %v1154, %v3608
  %v3868 = vmul.f32 %v1159, %v3608
  %v3869 = vmul.f32 %v1162, %v3608
  %v3870 = vmul.f32 %v1167, %v3608
  %v3871 = vmul.f32 %v1170, %v3608
  %v3872 = vadd.f32 %v3808, %v3678
  %v3873 = vadd.f32 %v3809, %v3678
  %v3874 = vadd.f32 %v3810, %v3678
  %v3875 = vadd.f32 %v3811, %v3678
  %v3876 = vadd.f32 %v3812, %v3678
  %v3877 = vadd.f32 %v3813, %v3678
  %v3878 = vadd.f32 %v3814, %v3678
  %v3879 = vadd.f32 %v3815, %v3678
  %v3880 = vadd.f32 %v3816, %v3678
  %v3881 = vadd.f32 %v3817, %v3678
  %v3882 = vadd.f32 %v3818, %v3678
  %v3883 = vadd.f32 %v3819, %v3678
  %v3884 = vadd.f32 %v3820, %v3678
  %v3885 = vadd.f32 %v3821, %v3678
  %v3886 = vadd.f32 %v3822, %v3678
  %v3887 = vadd.f32 %v3823, %v3678
  %v3888 = vadd.f32 %v3824, %v3678
  %v3889 = vadd.f32 %v3825, %v3678
  %v3890 = vadd.f32 %v3826, %v3678
  %v3891 = vadd.f32 %v3827, %v3678
  %v3892 = vadd.f32 %v3828, %v3678
  %v3893 = vadd.f32 %v3829, %v3678
  %v3894 = vadd.f32 %v3830, %v3678
  %v3895 = vadd.f32 %v3831, %v3678
  %v3896 = vadd.f32 %v3832, %v3678
  %v3897 = vadd.f32 %v3833, %v3678
  %v3898 = vadd.f32 %v3834, %v3678
  %v3899 = vadd.f32 %v3835, %v3678
  %v3900 = vadd.f32 %v3836, %v3678
  %v3901 = vadd.f32 %v3837, %v3678
  %v3902 = vadd.f32 %v3838, %v3678
  %v3903 = vadd.f32 %v3839, %v3678
  %v3904 = vadd.f32 %v3840, %v3678
  %v3905 = vadd.f32 %v3841, %v3678
  %v3906 = vadd.f32 %v3842, %v3678
  %v3907 = vadd.f32 %v3843, %v3678
  %v3908 = vadd.f32 %v3844, %v3678
  %v3909 = vadd.f32 %v3845, %v3678
  %v3910 = vadd.f32 %v3846, %v3678
  %v3911 = vadd.f32 %v3847, %v3678
  %v3912 = vadd.f32 %v3848, %v3678
  %v3913 = vadd.f32 %v3849, %v3678
  %v3914 = vadd.f32 %v3850, %v3678
  %v3915 = vadd.f32 %v3851, %v3678
  %v3916 = vadd.f32 %v3852, %v3678
  %v3917 = vadd.f32 %v3853, %v3678
  %v3918 = vadd.f32 %v3854, %v3678
  %v3919 = vadd.f32 %v3855, %v3678
  %v3920 = vadd.f32 %v3856, %v3678
  %v3921 = vadd.f32 %v3857, %v3678
  %v3922 = vadd.f32 %v3858, %v3678
  %v3923 = vadd.f32 %v3859, %v3678
  %v3924 = vadd.f32 %v3860, %v3678
  %v3925 = vadd.f32 %v3861, %v3678
  %v3926 = vadd.f32 %v3862, %v3678
  %v3927 = vadd.f32 %v3863, %v3678
  %v3928 = vadd.f32 %v3864, %v3678
  %v3929 = vadd.f32 %v3865, %v3678
  %v3930 = vadd.f32 %v3866, %v3678
  %v3931 = vadd.f32 %v3867, %v3678
  %v3932 = vadd.f32 %v3868, %v3678
  %v3933 = vadd.f32 %v3869, %v3678
  %v3934 = vadd.f32 %v3870, %v3678
  %v3935 = vadd.f32 %v3871, %v3678
  %v3936 = vmax.f32 %v3872, 0.0
  %v3937 = vmax.f32 %v3873, 0.0
  %v3938 = vmax.f32 %v3874, 0.0
  %v3939 = vmax.f32 %v3875, 0.0
  %v3940 = vmax.f32 %v3876, 0.0
  %v3941 = vmax.f32 %v3877, 0.0
  %v3942 = vmax.f32 %v3878, 0.0
  %v3943 = vmax.f32 %v3879, 0.0
  %v3944 = vmax.f32 %v3880, 0.0
  %v3945 = vmax.f32 %v3881, 0.0
  %v3946 = vmax.f32 %v3882, 0.0
  %v3947 = vmax.f32 %v3883, 0.0
  %v3948 = vmax.f32 %v3884, 0.0
  %v3949 = vmax.f32 %v3885, 0.0
  %v3950 = vmax.f32 %v3886, 0.0
  %v3951 = vmax.f32 %v3887, 0.0
  %v3952 = vmax.f32 %v3888, 0.0
  %v3953 = vmax.f32 %v3889, 0.0
  %v3954 = vmax.f32 %v3890, 0.0
  %v3955 = vmax.f32 %v3891, 0.0
  %v3956 = vmax.f32 %v3892, 0.0
  %v3957 = vmax.f32 %v3893, 0.0
  %v3958 = vmax.f32 %v3894, 0.0
  %v3959 = vmax.f32 %v3895, 0.0
  %v3960 = vmax.f32 %v3896, 0.0
  %v3961 = vmax.f32 %v3897, 0.0
  %v3962 = vmax.f32 %v3898, 0.0
  %v3963 = vmax.f32 %v3899, 0.0
  %v3964 = vmax.f32 %v3900, 0.0
  %v3965 = vmax.f32 %v3901, 0.0
  %v3966 = vmax.f32 %v3902, 0.0
  %v3967 = vmax.f32 %v3903, 0.0
  %v3968 = vmax.f32 %v3904, 0.0
  %v3969 = vmax.f32 %v3905, 0.0
  %v3970 = vmax.f32 %v3906, 0.0
  %v3971 = vmax.f32 %v3907, 0.0
  %v3972 = vmax.f32 %v3908, 0.0
  %v3973 = vmax.f32 %v3909, 0.0
  %v3974 = vmax.f32 %v3910, 0.0
  %v3975 = vmax.f32 %v3911, 0.0
  %v3976 = vmax.f32 %v3912, 0.0
  %v3977 = vmax.f32 %v3913, 0.0
  %v3978 = vmax.f32 %v3914, 0.0
  %v3979 = vmax.f32 %v3915, 0.0
  %v3980 = vmax.f32 %v3916, 0.0
  %v3981 = vmax.f32 %v3917, 0.0
  %v3982 = vmax.f32 %v3918, 0.0
  %v3983 = vmax.f32 %v3919, 0.0
  %v3984 = vmax.f32 %v3920, 0.0
  %v3985 = vmax.f32 %v3921, 0.0
  %v3986 = vmax.f32 %v3922, 0.0
  %v3987 = vmax.f32 %v3923, 0.0
  %v3988 = vmax.f32 %v3924, 0.0
  %v3989 = vmax.f32 %v3925, 0.0
  %v3990 = vmax.f32 %v3926, 0.0
  %v3991 = vmax.f32 %v3927, 0.0
  %v3992 = vmax.f32 %v3928, 0.0
  %v3993 = vmax.f32 %v3929, 0.0
  %v3994 = vmax.f32 %v3930, 0.0
  %v3995 = vmax.f32 %v3931, 0.0
  %v3996 = vmax.f32 %v3932, 0.0
  %v3997 = vmax.f32 %v3933, 0.0
  %v3998 = vmax.f32 %v3934, 0.0
  %v3999 = vmax.f32 %v3935, 0.0
  %v4000 = vmul.f32 %v1465, %v3608
  %v4001 = vmul.f32 %v1468, %v3608
  %v4002 = vmul.f32 %v1473, %v3608
  %v4003 = vmul.f32 %v1476, %v3608
  %v4004 = vmul.f32 %v1481, %v3608
  %v4005 = vmul.f32 %v1484, %v3608
  %v4006 = vmul.f32 %v1489, %v3608
  %v4007 = vmul.f32 %v1492, %v3608
  %v4008 = vmul.f32 %v1497, %v3608
  %v4009 = vmul.f32 %v1500, %v3608
  %v4010 = vmul.f32 %v1505, %v3608
  %v4011 = vmul.f32 %v1508, %v3608
  %v4012 = vmul.f32 %v1513, %v3608
  %v4013 = vmul.f32 %v1516, %v3608
  %v4014 = vmul.f32 %v1521, %v3608
  %v4015 = vmul.f32 %v1524, %v3608
  %v4016 = vmul.f32 %v1529, %v3608
  %v4017 = vmul.f32 %v1532, %v3608
  %v4018 = vmul.f32 %v1537, %v3608
  %v4019 = vmul.f32 %v1540, %v3608
  %v4020 = vmul.f32 %v1545, %v3608
  %v4021 = vmul.f32 %v1548, %v3608
  %v4022 = vmul.f32 %v1553, %v3608
  %v4023 = vmul.f32 %v1556, %v3608
  %v4024 = vmul.f32 %v1561, %v3608
  %v4025 = vmul.f32 %v1564, %v3608
  %v4026 = vmul.f32 %v1569, %v3608
  %v4027 = vmul.f32 %v1572, %v3608
  %v4028 = vmul.f32 %v1577, %v3608
  %v4029 = vmul.f32 %v1580, %v3608
  %v4030 = vmul.f32 %v1585, %v3608
  %v4031 = vmul.f32 %v1588, %v3608
  %v4032 = vmul.f32 %v1593, %v3608
  %v4033 = vmul.f32 %v1596, %v3608
  %v4034 = vmul.f32 %v1601, %v3608
  %v4035 = vmul.f32 %v1604, %v3608
  %v4036 = vmul.f32 %v1609, %v3608
  %v4037 = vmul.f32 %v1612, %v3608
  %v4038 = vmul.f32 %v1617, %v3608
  %v4039 = vmul.f32 %v1620, %v3608
  %v4040 = vmul.f32 %v1625, %v3608
  %v4041 = vmul.f32 %v1628, %v3608
  %v4042 = vmul.f32 %v1633, %v3608
  %v4043 = vmul.f32 %v1636, %v3608
  %v4044 = vmul.f32 %v1641, %v3608
  %v4045 = vmul.f32 %v1644, %v3608
  %v4046 = vmul.f32 %v1649, %v3608
  %v4047 = vmul.f32 %v1652, %v3608
  %v4048 = vmul.f32 %v1657, %v3608
  %v4049 = vmul.f32 %v1660, %v3608
  %v4050 = vmul.f32 %v1665, %v3608
  %v4051 = vmul.f32 %v1668, %v3608
  %v4052 = vmul.f32 %v1673, %v3608
  %v4053 = vmul.f32 %v1676, %v3608
  %v4054 = vmul.f32 %v1681, %v3608
  %v4055 = vmul.f32 %v1684, %v3608
  %v4056 = vmul.f32 %v1689, %v3608
  %v4057 = vmul.f32 %v1692, %v3608
  %v4058 = vmul.f32 %v1697, %v3608
  %v4059 = vmul.f32 %v1700, %v3608
  %v4060 = vmul.f32 %v1705, %v3608
  %v4061 = vmul.f32 %v1708, %v3608
  %v4062 = vmul.f32 %v1713, %v3608
  %v4063 = vmul.f32 %v1716, %v3608
  %v4064 = vadd.f32 %v4000, %v3678
  %v4065 = vadd.f32 %v4001, %v3678
  %v4066 = vadd.f32 %v4002, %v3678
  %v4067 = vadd.f32 %v4003, %v3678
  %v4068 = vadd.f32 %v4004, %v3678
  %v4069 = vadd.f32 %v4005, %v3678
  %v4070 = vadd.f32 %v4006, %v3678
  %v4071 = vadd.f32 %v4007, %v3678
  %v4072 = vadd.f32 %v4008, %v3678
  %v4073 = vadd.f32 %v4009, %v3678
  %v4074 = vadd.f32 %v4010, %v3678
  %v4075 = vadd.f32 %v4011, %v3678
  %v4076 = vadd.f32 %v4012, %v3678
  %v4077 = vadd.f32 %v4013, %v3678
  %v4078 = vadd.f32 %v4014, %v3678
  %v4079 = vadd.f32 %v4015, %v3678
  %v4080 = vadd.f32 %v4016, %v3678
  %v4081 = vadd.f32 %v4017, %v3678
  %v4082 = vadd.f32 %v4018, %v3678
  %v4083 = vadd.f32 %v4019, %v3678
  %v4084 = vadd.f32 %v4020, %v3678
  %v4085 = vadd.f32 %v4021, %v3678
  %v4086 = vadd.f32 %v4022, %v3678
  %v4087 = vadd.f32 %v4023, %v3678
  %v4088 = vadd.f32 %v4024, %v3678
  %v4089 = vadd.f32 %v4025, %v3678
  %v4090 = vadd.f32 %v4026, %v3678
  %v4091 = vadd.f32 %v4027, %v3678
  %v4092 = vadd.f32 %v4028, %v3678
  %v4093 = vadd.f32 %v4029, %v3678
  %v4094 = vadd.f32 %v4030, %v3678
  %v4095 = vadd.f32 %v4031, %v3678
  %v4096 = vadd.f32 %v4032, %v3678
  %v4097 = vadd.f32 %v4033, %v3678
  %v4098 = vadd.f32 %v4034, %v3678
  %v4099 = vadd.f32 %v4035, %v3678
  %v4100 = vadd.f32 %v4036, %v3678
  %v4101 = vadd.f32 %v4037, %v3678
  %v4102 = vadd.f32 %v4038, %v3678
  %v4103 = vadd.f32 %v4039, %v3678
  %v4104 = vadd.f32 %v4040, %v3678
  %v4105 = vadd.f32 %v4041, %v3678
  %v4106 = vadd.f32 %v4042, %v3678
  %v4107 = vadd.f32 %v4043, %v3678
  %v4108 = vadd.f32 %v4044, %v3678
  %v4109 = vadd.f32 %v4045, %v3678
  %v4110 = vadd.f32 %v4046, %v3678
  %v4111 = vadd.f32 %v4047, %v3678
  %v4112 = vadd.f32 %v4048, %v3678
  %v4113 = vadd.f32 %v4049, %v3678
  %v4114 = vadd.f32 %v4050, %v3678
  %v4115 = vadd.f32 %v4051, %v3678
  %v4116 = vadd.f32 %v4052, %v3678
  %v4117 = vadd.f32 %v4053, %v3678
  %v4118 = vadd.f32 %v4054, %v3678
  %v4119 = vadd.f32 %v4055, %v3678
  %v4120 = vadd.f32 %v4056, %v3678
  %v4121 = vadd.f32 %v4057, %v3678
  %v4122 = vadd.f32 %v4058, %v3678
  %v4123 = vadd.f32 %v4059, %v3678
  %v4124 = vadd.f32 %v4060, %v3678
  %v4125 = vadd.f32 %v4061, %v3678
  %v4126 = vadd.f32 %v4062, %v3678
  %v4127 = vadd.f32 %v4063, %v3678
  %v4128 = vmax.f32 %v4064, 0.0
  %v4129 = vmax.f32 %v4065, 0.0
  %v4130 = vmax.f32 %v4066, 0.0
  %v4131 = vmax.f32 %v4067, 0.0
  %v4132 = vmax.f32 %v4068, 0.0
  %v4133 = vmax.f32 %v4069, 0.0
  %v4134 = vmax.f32 %v4070, 0.0
  %v4135 = vmax.f32 %v4071, 0.0
  %v4136 = vmax.f32 %v4072, 0.0
  %v4137 = vmax.f32 %v4073, 0.0
  %v4138 = vmax.f32 %v4074, 0.0
  %v4139 = vmax.f32 %v4075, 0.0
  %v4140 = vmax.f32 %v4076, 0.0
  %v4141 = vmax.f32 %v4077, 0.0
  %v4142 = vmax.f32 %v4078, 0.0
  %v4143 = vmax.f32 %v4079, 0.0
  %v4144 = vmax.f32 %v4080, 0.0
  %v4145 = vmax.f32 %v4081, 0.0
  %v4146 = vmax.f32 %v4082, 0.0
  %v4147 = vmax.f32 %v4083, 0.0
  %v4148 = vmax.f32 %v4084, 0.0
  %v4149 = vmax.f32 %v4085, 0.0
  %v4150 = vmax.f32 %v4086, 0.0
  %v4151 = vmax.f32 %v4087, 0.0
  %v4152 = vmax.f32 %v4088, 0.0
  %v4153 = vmax.f32 %v4089, 0.0
  %v4154 = vmax.f32 %v4090, 0.0
  %v4155 = vmax.f32 %v4091, 0.0
  %v4156 = vmax.f32 %v4092, 0.0
  %v4157 = vmax.f32 %v4093, 0.0
  %v4158 = vmax.f32 %v4094, 0.0
  %v4159 = vmax.f32 %v4095, 0.0
  %v4160 = vmax.f32 %v4096, 0.0
  %v4161 = vmax.f32 %v4097, 0.0
  %v4162 = vmax.f32 %v4098, 0.0
  %v4163 = vmax.f32 %v4099, 0.0
  %v4164 = vmax.f32 %v4100, 0.0
  %v4165 = vmax.f32 %v4101, 0.0
  %v4166 = vmax.f32 %v4102, 0.0
  %v4167 = vmax.f32 %v4103, 0.0
  %v4168 = vmax.f32 %v4104, 0.0
  %v4169 = vmax.f32 %v4105, 0.0
  %v4170 = vmax.f32 %v4106, 0.0
  %v4171 = vmax.f32 %v4107, 0.0
  %v4172 = vmax.f32 %v4108, 0.0
  %v4173 = vmax.f32 %v4109, 0.0
  %v4174 = vmax.f32 %v4110, 0.0
  %v4175 = vmax.f32 %v4111, 0.0
  %v4176 = vmax.f32 %v4112, 0.0
  %v4177 = vmax.f32 %v4113, 0.0
  %v4178 = vmax.f32 %v4114, 0.0
  %v4179 = vmax.f32 %v4115, 0.0
  %v4180 = vmax.f32 %v4116, 0.0
  %v4181 = vmax.f32 %v4117, 0.0
  %v4182 = vmax.f32 %v4118, 0.0
  %v4183 = vmax.f32 %v4119, 0.0
  %v4184 = vmax.f32 %v4120, 0.0
  %v4185 = vmax.f32 %v4121, 0.0
  %v4186 = vmax.f32 %v4122, 0.0
  %v4187 = vmax.f32 %v4123, 0.0
  %v4188 = vmax.f32 %v4124, 0.0
  %v4189 = vmax.f32 %v4125, 0.0
  %v4190 = vmax.f32 %v4126, 0.0
  %v4191 = vmax.f32 %v4127, 0.0
  %v4192 = vmul.f32 %v2011, %v3608
  %v4193 = vmul.f32 %v2014, %v3608
  %v4194 = vmul.f32 %v2019, %v3608
  %v4195 = vmul.f32 %v2022, %v3608
  %v4196 = vmul.f32 %v2027, %v3608
  %v4197 = vmul.f32 %v2030, %v3608
  %v4198 = vmul.f32 %v2035, %v3608
  %v4199 = vmul.f32 %v2038, %v3608
  %v4200 = vmul.f32 %v2043, %v3608
  %v4201 = vmul.f32 %v2046, %v3608
  %v4202 = vmul.f32 %v2051, %v3608
  %v4203 = vmul.f32 %v2054, %v3608
  %v4204 = vmul.f32 %v2059, %v3608
  %v4205 = vmul.f32 %v2062, %v3608
  %v4206 = vmul.f32 %v2067, %v3608
  %v4207 = vmul.f32 %v2070, %v3608
  %v4208 = vmul.f32 %v2075, %v3608
  %v4209 = vmul.f32 %v2078, %v3608
  %v4210 = vmul.f32 %v2083, %v3608
  %v4211 = vmul.f32 %v2086, %v3608
  %v4212 = vmul.f32 %v2091, %v3608
  %v4213 = vmul.f32 %v2094, %v3608
  %v4214 = vmul.f32 %v2099, %v3608
  %v4215 = vmul.f32 %v2102, %v3608
  %v4216 = vmul.f32 %v2107, %v3608
  %v4217 = vmul.f32 %v2110, %v3608
  %v4218 = vmul.f32 %v2115, %v3608
  %v4219 = vmul.f32 %v2118, %v3608
  %v4220 = vmul.f32 %v2123, %v3608
  %v4221 = vmul.f32 %v2126, %v3608
  %v4222 = vmul.f32 %v2131, %v3608
  %v4223 = vmul.f32 %v2134, %v3608
  %v4224 = vmul.f32 %v2139, %v3608
  %v4225 = vmul.f32 %v2142, %v3608
  %v4226 = vmul.f32 %v2147, %v3608
  %v4227 = vmul.f32 %v2150, %v3608
  %v4228 = vmul.f32 %v2155, %v3608
  %v4229 = vmul.f32 %v2158, %v3608
  %v4230 = vmul.f32 %v2163, %v3608
  %v4231 = vmul.f32 %v2166, %v3608
  %v4232 = vmul.f32 %v2171, %v3608
  %v4233 = vmul.f32 %v2174, %v3608
  %v4234 = vmul.f32 %v2179, %v3608
  %v4235 = vmul.f32 %v2182, %v3608
  %v4236 = vmul.f32 %v2187, %v3608
  %v4237 = vmul.f32 %v2190, %v3608
  %v4238 = vmul.f32 %v2195, %v3608
  %v4239 = vmul.f32 %v2198, %v3608
  %v4240 = vmul.f32 %v2203, %v3608
  %v4241 = vmul.f32 %v2206, %v3608
  %v4242 = vmul.f32 %v2211, %v3608
  %v4243 = vmul.f32 %v2214, %v3608
  %v4244 = vmul.f32 %v2219, %v3608
  %v4245 = vmul.f32 %v2222, %v3608
  %v4246 = vmul.f32 %v2227, %v3608
  %v4247 = vmul.f32 %v2230, %v3608
  %v4248 = vmul.f32 %v2235, %v3608
  %v4249 = vmul.f32 %v2238, %v3608
  %v4250 = vmul.f32 %v2243, %v3608
  %v4251 = vmul.f32 %v2246, %v3608
  %v4252 = vmul.f32 %v2251, %v3608
  %v4253 = vmul.f32 %v2254, %v3608
  %v4254 = vmul.f32 %v2259, %v3608
  %v4255 = vmul.f32 %v2262, %v3608
  %v4256 = vadd.f32 %v4192, %v3678
  %v4257 = vadd.f32 %v4193, %v3678
  %v4258 = vadd.f32 %v4194, %v3678
  %v4259 = vadd.f32 %v4195, %v3678
  %v4260 = vadd.f32 %v4196, %v3678
  %v4261 = vadd.f32 %v4197, %v3678
  %v4262 = vadd.f32 %v4198, %v3678
  %v4263 = vadd.f32 %v4199, %v3678
  %v4264 = vadd.f32 %v4200, %v3678
  %v4265 = vadd.f32 %v4201, %v3678
  %v4266 = vadd.f32 %v4202, %v3678
  %v4267 = vadd.f32 %v4203, %v3678
  %v4268 = vadd.f32 %v4204, %v3678
  %v4269 = vadd.f32 %v4205, %v3678
  %v4270 = vadd.f32 %v4206, %v3678
  %v4271 = vadd.f32 %v4207, %v3678
  %v4272 = vadd.f32 %v4208, %v3678
  %v4273 = vadd.f32 %v4209, %v3678
  %v4274 = vadd.f32 %v4210, %v3678
  %v4275 = vadd.f32 %v4211, %v3678
  %v4276 = vadd.f32 %v4212, %v3678
  %v4277 = vadd.f32 %v4213, %v3678
  %v4278 = vadd.f32 %v4214, %v3678
  %v4279 = vadd.f32 %v4215, %v3678
  %v4280 = vadd.f32 %v4216, %v3678
  %v4281 = vadd.f32 %v4217, %v3678
  %v4282 = vadd.f32 %v4218, %v3678
  %v4283 = vadd.f32 %v4219, %v3678
  %v4284 = vadd.f32 %v4220, %v3678
  %v4285 = vadd.f32 %v4221, %v3678
  %v4286 = vadd.f32 %v4222, %v3678
  %v4287 = vadd.f32 %v4223, %v3678
  %v4288 = vadd.f32 %v4224, %v3678
  %v4289 = vadd.f32 %v4225, %v3678
  %v4290 = vadd.f32 %v4226, %v3678
  %v4291 = vadd.f32 %v4227, %v3678
  %v4292 = vadd.f32 %v4228, %v3678
  %v4293 = vadd.f32 %v4229, %v3678
  %v4294 = vadd.f32 %v4230, %v3678
  %v4295 = vadd.f32 %v4231, %v3678
  %v4296 = vadd.f32 %v4232, %v3678
  %v4297 = vadd.f32 %v4233, %v3678
  %v4298 = vadd.f32 %v4234, %v3678
  %v4299 = vadd.f32 %v4235, %v3678
  %v4300 = vadd.f32 %v4236, %v3678
  %v4301 = vadd.f32 %v4237, %v3678
  %v4302 = vadd.f32 %v4238, %v3678
  %v4303 = vadd.f32 %v4239, %v3678
  %v4304 = vadd.f32 %v4240, %v3678
  %v4305 = vadd.f32 %v4241, %v3678
  %v4306 = vadd.f32 %v4242, %v3678
  %v4307 = vadd.f32 %v4243, %v3678
  %v4308 = vadd.f32 %v4244, %v3678
  %v4309 = vadd.f32 %v4245, %v3678
  %v4310 = vadd.f32 %v4246, %v3678
  %v4311 = vadd.f32 %v4247, %v3678
  %v4312 = vadd.f32 %v4248, %v3678
  %v4313 = vadd.f32 %v4249, %v3678
  %v4314 = vadd.f32 %v4250, %v3678
  %v4315 = vadd.f32 %v4251, %v3678
  %v4316 = vadd.f32 %v4252, %v3678
  %v4317 = vadd.f32 %v4253, %v3678
  %v4318 = vadd.f32 %v4254, %v3678
  %v4319 = vadd.f32 %v4255, %v3678
  %v4320 = vmax.f32 %v4256, 0.0
  %v4321 = vmax.f32 %v4257, 0.0
  %v4322 = vmax.f32 %v4258, 0.0
  %v4323 = vmax.f32 %v4259, 0.0
  %v4324 = vmax.f32 %v4260, 0.0
  %v4325 = vmax.f32 %v4261, 0.0
  %v4326 = vmax.f32 %v4262, 0.0
  %v4327 = vmax.f32 %v4263, 0.0
  %v4328 = vmax.f32 %v4264, 0.0
  %v4329 = vmax.f32 %v4265, 0.0
  %v4330 = vmax.f32 %v4266, 0.0
  %v4331 = vmax.f32 %v4267, 0.0
  %v4332 = vmax.f32 %v4268, 0.0
  %v4333 = vmax.f32 %v4269, 0.0
  %v4334 = vmax.f32 %v4270, 0.0
  %v4335 = vmax.f32 %v4271, 0.0
  %v4336 = vmax.f32 %v4272, 0.0
  %v4337 = vmax.f32 %v4273, 0.0
  %v4338 = vmax.f32 %v4274, 0.0
  %v4339 = vmax.f32 %v4275, 0.0
  %v4340 = vmax.f32 %v4276, 0.0
  %v4341 = vmax.f32 %v4277, 0.0
  %v4342 = vmax.f32 %v4278, 0.0
  %v4343 = vmax.f32 %v4279, 0.0
  %v4344 = vmax.f32 %v4280, 0.0
  %v4345 = vmax.f32 %v4281, 0.0
  %v4346 = vmax.f32 %v4282, 0.0
  %v4347 = vmax.f32 %v4283, 0.0
  %v4348 = vmax.f32 %v4284, 0.0
  %v4349 = vmax.f32 %v4285, 0.0
  %v4350 = vmax.f32 %v4286, 0.0
  %v4351 = vmax.f32 %v4287, 0.0
  %v4352 = vmax.f32 %v4288, 0.0
  %v4353 = vmax.f32 %v4289, 0.0
  %v4354 = vmax.f32 %v4290, 0.0
  %v4355 = vmax.f32 %v4291, 0.0
  %v4356 = vmax.f32 %v4292, 0.0
  %v4357 = vmax.f32 %v4293, 0.0
  %v4358 = vmax.f32 %v4294, 0.0
  %v4359 = vmax.f32 %v4295, 0.0
  %v4360 = vmax.f32 %v4296, 0.0
  %v4361 = vmax.f32 %v4297, 0.0
  %v4362 = vmax.f32 %v4298, 0.0
  %v4363 = vmax.f32 %v4299, 0.0
  %v4364 = vmax.f32 %v4300, 0.0
  %v4365 = vmax.f32 %v4301, 0.0
  %v4366 = vmax.f32 %v4302, 0.0
  %v4367 = vmax.f32 %v4303, 0.0
  %v4368 = vmax.f32 %v4304, 0.0
  %v4369 = vmax.f32 %v4305, 0.0
  %v4370 = vmax.f32 %v4306, 0.0
  %v4371 = vmax.f32 %v4307, 0.0
  %v4372 = vmax.f32 %v4308, 0.0
  %v4373 = vmax.f32 %v4309, 0.0
  %v4374 = vmax.f32 %v4310, 0.0
  %v4375 = vmax.f32 %v4311, 0.0
  %v4376 = vmax.f32 %v4312, 0.0
  %v4377 = vmax.f32 %v4313, 0.0
  %v4378 = vmax.f32 %v4314, 0.0
  %v4379 = vmax.f32 %v4315, 0.0
  %v4380 = vmax.f32 %v4316, 0.0
  %v4381 = vmax.f32 %v4317, 0.0
  %v4382 = vmax.f32 %v4318, 0.0
  %v4383 = vmax.f32 %v4319, 0.0
  %v4384 = vmax.f32 %v3744, %v3936
  %v4385 = vmax.f32 %v3745, %v3937
  %v4386 = vmax.f32 %v3746, %v3938
  %v4387 = vmax.f32 %v3747, %v3939
  %v4388 = vmax.f32 %v3748, %v3940
  %v4389 = vmax.f32 %v3749, %v3941
  %v4390 = vmax.f32 %v3750, %v3942
  %v4391 = vmax.f32 %v3751, %v3943
  %v4392 = vmax.f32 %v3752, %v3944
  %v4393 = vmax.f32 %v3753, %v3945
  %v4394 = vmax.f32 %v3754, %v3946
  %v4395 = vmax.f32 %v3755, %v3947
  %v4396 = vmax.f32 %v3756, %v3948
  %v4397 = vmax.f32 %v3757, %v3949
  %v4398 = vmax.f32 %v3758, %v3950
  %v4399 = vmax.f32 %v3759, %v3951
  %v4400 = vmax.f32 %v3760, %v3952
  %v4401 = vmax.f32 %v3761, %v3953
  %v4402 = vmax.f32 %v3762, %v3954
  %v4403 = vmax.f32 %v3763, %v3955
  %v4404 = vmax.f32 %v3764, %v3956
  %v4405 = vmax.f32 %v3765, %v3957
  %v4406 = vmax.f32 %v3766, %v3958
  %v4407 = vmax.f32 %v3767, %v3959
  %v4408 = vmax.f32 %v3768, %v3960
  %v4409 = vmax.f32 %v3769, %v3961
  %v4410 = vmax.f32 %v3770, %v3962
  %v4411 = vmax.f32 %v3771, %v3963
  %v4412 = vmax.f32 %v3772, %v3964
  %v4413 = vmax.f32 %v3773, %v3965
  %v4414 = vmax.f32 %v3774, %v3966
  %v4415 = vmax.f32 %v3775, %v3967
  %v4416 = vmax.f32 %v3776, %v3968
  %v4417 = vmax.f32 %v3777, %v3969
  %v4418 = vmax.f32 %v3778, %v3970
  %v4419 = vmax.f32 %v3779, %v3971
  %v4420 = vmax.f32 %v3780, %v3972
  %v4421 = vmax.f32 %v3781, %v3973
  %v4422 = vmax.f32 %v3782, %v3974
  %v4423 = vmax.f32 %v3783, %v3975
  %v4424 = vmax.f32 %v3784, %v3976
  %v4425 = vmax.f32 %v3785, %v3977
  %v4426 = vmax.f32 %v3786, %v3978
  %v4427 = vmax.f32 %v3787, %v3979
  %v4428 = vmax.f32 %v3788, %v3980
  %v4429 = vmax.f32 %v3789, %v3981
  %v4430 = vmax.f32 %v3790, %v3982
  %v4431 = vmax.f32 %v3791, %v3983
  %v4432 = vmax.f32 %v3792, %v3984
  %v4433 = vmax.f32 %v3793, %v3985
  %v4434 = vmax.f32 %v3794, %v3986
  %v4435 = vmax.f32 %v3795, %v3987
  %v4436 = vmax.f32 %v3796, %v3988
  %v4437 = vmax.f32 %v3797, %v3989
  %v4438 = vmax.f32 %v3798, %v3990
  %v4439 = vmax.f32 %v3799, %v3991
  %v4440 = vmax.f32 %v3800, %v3992
  %v4441 = vmax.f32 %v3801, %v3993
  %v4442 = vmax.f32 %v3802, %v3994
  %v4443 = vmax.f32 %v3803, %v3995
  %v4444 = vmax.f32 %v3804, %v3996
  %v4445 = vmax.f32 %v3805, %v3997
  %v4446 = vmax.f32 %v3806, %v3998
  %v4447 = vmax.f32 %v3807, %v3999
  %v4448 = vmax.f32 %v4128, %v4320
  %v4449 = vmax.f32 %v4129, %v4321
  %v4450 = vmax.f32 %v4130, %v4322
  %v4451 = vmax.f32 %v4131, %v4323
  %v4452 = vmax.f32 %v4132, %v4324
  %v4453 = vmax.f32 %v4133, %v4325
  %v4454 = vmax.f32 %v4134, %v4326
  %v4455 = vmax.f32 %v4135, %v4327
  %v4456 = vmax.f32 %v4136, %v4328
  %v4457 = vmax.f32 %v4137, %v4329
  %v4458 = vmax.f32 %v4138, %v4330
  %v4459 = vmax.f32 %v4139, %v4331
  %v4460 = vmax.f32 %v4140, %v4332
  %v4461 = vmax.f32 %v4141, %v4333
  %v4462 = vmax.f32 %v4142, %v4334
  %v4463 = vmax.f32 %v4143, %v4335
  %v4464 = vmax.f32 %v4144, %v4336
  %v4465 = vmax.f32 %v4145, %v4337
  %v4466 = vmax.f32 %v4146, %v4338
  %v4467 = vmax.f32 %v4147, %v4339
  %v4468 = vmax.f32 %v4148, %v4340
  %v4469 = vmax.f32 %v4149, %v4341
  %v4470 = vmax.f32 %v4150, %v4342
  %v4471 = vmax.f32 %v4151, %v4343
  %v4472 = vmax.f32 %v4152, %v4344
  %v4473 = vmax.f32 %v4153, %v4345
  %v4474 = vmax.f32 %v4154, %v4346
  %v4475 = vmax.f32 %v4155, %v4347
  %v4476 = vmax.f32 %v4156, %v4348
  %v4477 = vmax.f32 %v4157, %v4349
  %v4478 = vmax.f32 %v4158, %v4350
  %v4479 = vmax.f32 %v4159, %v4351
  %v4480 = vmax.f32 %v4160, %v4352
  %v4481 = vmax.f32 %v4161, %v4353
  %v4482 = vmax.f32 %v4162, %v4354
  %v4483 = vmax.f32 %v4163, %v4355
  %v4484 = vmax.f32 %v4164, %v4356
  %v4485 = vmax.f32 %v4165, %v4357
  %v4486 = vmax.f32 %v4166, %v4358
  %v4487 = vmax.f32 %v4167, %v4359
  %v4488 = vmax.f32 %v4168, %v4360
  %v4489 = vmax.f32 %v4169, %v4361
  %v4490 = vmax.f32 %v4170, %v4362
  %v4491 = vmax.f32 %v4171, %v4363
  %v4492 = vmax.f32 %v4172, %v4364
  %v4493 = vmax.f32 %v4173, %v4365
  %v4494 = vmax.f32 %v4174, %v4366
  %v4495 = vmax.f32 %v4175, %v4367
  %v4496 = vmax.f32 %v4176, %v4368
  %v4497 = vmax.f32 %v4177, %v4369
  %v4498 = vmax.f32 %v4178, %v4370
  %v4499 = vmax.f32 %v4179, %v4371
  %v4500 = vmax.f32 %v4180, %v4372
  %v4501 = vmax.f32 %v4181, %v4373
  %v4502 = vmax.f32 %v4182, %v4374
  %v4503 = vmax.f32 %v4183, %v4375
  %v4504 = vmax.f32 %v4184, %v4376
  %v4505 = vmax.f32 %v4185, %v4377
  %v4506 = vmax.f32 %v4186, %v4378
  %v4507 = vmax.f32 %v4187, %v4379
  %v4508 = vmax.f32 %v4188, %v4380
  %v4509 = vmax.f32 %v4189, %v4381
  %v4510 = vmax.f32 %v4190, %v4382
  %v4511 = vmax.f32 %v4191, %v4383
  %v4512 = vmax.f32 %v4384, %v4448
  %v4513 = vmax.f32 %v4385, %v4449
  %v4514 = vmax.f32 %v4386, %v4450
  %v4515 = vmax.f32 %v4387, %v4451
  %v4516 = vmax.f32 %v4388, %v4452
  %v4517 = vmax.f32 %v4389, %v4453
  %v4518 = vmax.f32 %v4390, %v4454
  %v4519 = vmax.f32 %v4391, %v4455
  %v4520 = vmax.f32 %v4392, %v4456
  %v4521 = vmax.f32 %v4393, %v4457
  %v4522 = vmax.f32 %v4394, %v4458
  %v4523 = vmax.f32 %v4395, %v4459
  %v4524 = vmax.f32 %v4396, %v4460
  %v4525 = vmax.f32 %v4397, %v4461
  %v4526 = vmax.f32 %v4398, %v4462
  %v4527 = vmax.f32 %v4399, %v4463
  %v4528 = vmax.f32 %v4400, %v4464
  %v4529 = vmax.f32 %v4401, %v4465
  %v4530 = vmax.f32 %v4402, %v4466
  %v4531 = vmax.f32 %v4403, %v4467
  %v4532 = vmax.f32 %v4404, %v4468
  %v4533 = vmax.f32 %v4405, %v4469
  %v4534 = vmax.f32 %v4406, %v4470
  %v4535 = vmax.f32 %v4407, %v4471
  %v4536 = vmax.f32 %v4408, %v4472
  %v4537 = vmax.f32 %v4409, %v4473
  %v4538 = vmax.f32 %v4410, %v4474
  %v4539 = vmax.f32 %v4411, %v4475
  %v4540 = vmax.f32 %v4412, %v4476
  %v4541 = vmax.f32 %v4413, %v4477
  %v4542 = vmax.f32 %v4414, %v4478
  %v4543 = vmax.f32 %v4415, %v4479
  %v4544 = vmax.f32 %v4416, %v4480
  %v4545 = vmax.f32 %v4417, %v4481
  %v4546 = vmax.f32 %v4418, %v4482
  %v4547 = vmax.f32 %v4419, %v4483
  %v4548 = vmax.f32 %v4420, %v4484
  %v4549 = vmax.f32 %v4421, %v4485
  %v4550 = vmax.f32 %v4422, %v4486
  %v4551 = vmax.f32 %v4423, %v4487
  %v4552 = vmax.f32 %v4424, %v4488
  %v4553 = vmax.f32 %v4425, %v4489
  %v4554 = vmax.f32 %v4426, %v4490
  %v4555 = vmax.f32 %v4427, %v4491
  %v4556 = vmax.f32 %v4428, %v4492
  %v4557 = vmax.f32 %v4429, %v4493
  %v4558 = vmax.f32 %v4430, %v4494
  %v4559 = vmax.f32 %v4431, %v4495
  %v4560 = vmax.f32 %v4432, %v4496
  %v4561 = vmax.f32 %v4433, %v4497
  %v4562 = vmax.f32 %v4434, %v4498
  %v4563 = vmax.f32 %v4435, %v4499
  %v4564 = vmax.f32 %v4436, %v4500
  %v4565 = vmax.f32 %v4437, %v4501
  %v4566 = vmax.f32 %v4438, %v4502
  %v4567 = vmax.f32 %v4439, %v4503
  %v4568 = vmax.f32 %v4440, %v4504
  %v4569 = vmax.f32 %v4441, %v4505
  %v4570 = vmax.f32 %v4442, %v4506
  %v4571 = vmax.f32 %v4443, %v4507
  %v4572 = vmax.f32 %v4444, %v4508
  %v4573 = vmax.f32 %v4445, %v4509
  %v4574 = vmax.f32 %v4446, %v4510
  %v4575 = vmax.f32 %v4447, %v4511
  %4576 = vst.msk [vmem:[%s4] sm:$0xff] %vm2265, %v4512
  %4577 = vst.msk [vmem:[%s4 + $0x8] sm:$0xff] %vm2265, %v4513
  %4578 = vst.msk [vmem:[%s4 + $0x10] sm:$0xff] %vm2265, %v4514
  %4579 = vst.msk [vmem:[%s4 + $0x18] sm:$0xff] %vm2265, %v4515
  %4580 = vst.msk [vmem:[%s4 + $0x20] sm:$0xff] %vm2265, %v4516
  %4581 = vst.msk [vmem:[%s4 + $0x28] sm:$0xff] %vm2265, %v4517
  %4582 = vst.msk [vmem:[%s4 + $0x30] sm:$0xff] %vm2265, %v4518
  %4583 = vst.msk [vmem:[%s4 + $0x38] sm:$0xff] %vm2265, %v4519
  %4584 = vst.msk [vmem:[%s4 + $0x40] sm:$0xff] %vm2265, %v4520
  %4585 = vst.msk [vmem:[%s4 + $0x48] sm:$0xff] %vm2265, %v4521
  %4586 = vst.msk [vmem:[%s4 + $0x50] sm:$0xff] %vm2265, %v4522
  %4587 = vst.msk [vmem:[%s4 + $0x58] sm:$0xff] %vm2265, %v4523
  %4588 = vst.msk [vmem:[%s4 + $0x60] sm:$0xff] %vm2265, %v4524
  %4589 = vst.msk [vmem:[%s4 + $0x68] sm:$0xff] %vm2265, %v4525
  %4590 = vst.msk [vmem:[%s4 + $0x70] sm:$0xff] %vm2265, %v4526
  %4591 = vst.msk [vmem:[%s4 + $0x78] sm:$0xff] %vm2265, %v4527
  %4592 = vst.msk [vmem:[%s4 + $0x80] sm:$0xff] %vm2265, %v4528
  %4593 = vst.msk [vmem:[%s4 + $0x88] sm:$0xff] %vm2265, %v4529
  %4594 = vst.msk [vmem:[%s4 + $0x90] sm:$0xff] %vm2265, %v4530
  %4595 = vst.msk [vmem:[%s4 + $0x98] sm:$0xff] %vm2265, %v4531
  %4596 = vst.msk [vmem:[%s4 + $0xa0] sm:$0xff] %vm2265, %v4532
  %4597 = vst.msk [vmem:[%s4 + $0xa8] sm:$0xff] %vm2265, %v4533
  %4598 = vst.msk [vmem:[%s4 + $0xb0] sm:$0xff] %vm2265, %v4534
  %4599 = vst.msk [vmem:[%s4 + $0xb8] sm:$0xff] %vm2265, %v4535
  %4600 = vst.msk [vmem:[%s4 + $0xc0] sm:$0xff] %vm2265, %v4536
  %4601 = vst.msk [vmem:[%s4 + $0xc8] sm:$0xff] %vm2265, %v4537
  %4602 = vst.msk [vmem:[%s4 + $0xd0] sm:$0xff] %vm2265, %v4538
  %4603 = vst.msk [vmem:[%s4 + $0xd8] sm:$0xff] %vm2265, %v4539
  %4604 = vst.msk [vmem:[%s4 + $0xe0] sm:$0xff] %vm2265, %v4540
  %4605 = vst.msk [vmem:[%s4 + $0xe8] sm:$0xff] %vm2265, %v4541
  %4606 = vst.msk [vmem:[%s4 + $0xf0] sm:$0xff] %vm2265, %v4542
  %4607 = vst.msk [vmem:[%s4 + $0xf8] sm:$0xff] %vm2265, %v4543
  %4608 = vst.msk [vmem:[%s4 + $0x100] sm:$0xff] %vm2265, %v4544
  %4609 = vst.msk [vmem:[%s4 + $0x108] sm:$0xff] %vm2265, %v4545
  %4610 = vst.msk [vmem:[%s4 + $0x110] sm:$0xff] %vm2265, %v4546
  %4611 = vst.msk [vmem:[%s4 + $0x118] sm:$0xff] %vm2265, %v4547
  %4612 = vst.msk [vmem:[%s4 + $0x120] sm:$0xff] %vm2265, %v4548
  %4613 = vst.msk [vmem:[%s4 + $0x128] sm:$0xff] %vm2265, %v4549
  %4614 = vst.msk [vmem:[%s4 + $0x130] sm:$0xff] %vm2265, %v4550
  %4615 = vst.msk [vmem:[%s4 + $0x138] sm:$0xff] %vm2265, %v4551
  %4616 = vst.msk [vmem:[%s4 + $0x140] sm:$0xff] %vm2265, %v4552
  %4617 = vst.msk [vmem:[%s4 + $0x148] sm:$0xff] %vm2265, %v4553
  %4618 = vst.msk [vmem:[%s4 + $0x150] sm:$0xff] %vm2265, %v4554
  %4619 = vst.msk [vmem:[%s4 + $0x158] sm:$0xff] %vm2265, %v4555
  %4620 = vst.msk [vmem:[%s4 + $0x160] sm:$0xff] %vm2265, %v4556
  %4621 = vst.msk [vmem:[%s4 + $0x168] sm:$0xff] %vm2265, %v4557
  %4622 = vst.msk [vmem:[%s4 + $0x170] sm:$0xff] %vm2265, %v4558
  %4623 = vst.msk [vmem:[%s4 + $0x178] sm:$0xff] %vm2265, %v4559
  %4624 = vst.msk [vmem:[%s4 + $0x180] sm:$0xff] %vm2265, %v4560
  %4625 = vst.msk [vmem:[%s4 + $0x188] sm:$0xff] %vm2265, %v4561
  %4626 = vst.msk [vmem:[%s4 + $0x190] sm:$0xff] %vm2265, %v4562
  %4627 = vst.msk [vmem:[%s4 + $0x198] sm:$0xff] %vm2265, %v4563
  %4628 = vst.msk [vmem:[%s4 + $0x1a0] sm:$0xff] %vm2265, %v4564
  %4629 = vst.msk [vmem:[%s4 + $0x1a8] sm:$0xff] %vm2265, %v4565
  %4630 = vst.msk [vmem:[%s4 + $0x1b0] sm:$0xff] %vm2265, %v4566
  %4631 = vst.msk [vmem:[%s4 + $0x1b8] sm:$0xff] %vm2265, %v4567
  %4632 = vst.msk [vmem:[%s4 + $0x1c0] sm:$0xff] %vm2265, %v4568
  %4633 = vst.msk [vmem:[%s4 + $0x1c8] sm:$0xff] %vm2265, %v4569
  %4634 = vst.msk [vmem:[%s4 + $0x1d0] sm:$0xff] %vm2265, %v4570
  %4635 = vst.msk [vmem:[%s4 + $0x1d8] sm:$0xff] %vm2265, %v4571
  %4636 = vst.msk [vmem:[%s4 + $0x1e0] sm:$0xff] %vm2265, %v4572
  %4637 = vst.msk [vmem:[%s4 + $0x1e8] sm:$0xff] %vm2265, %v4573
  %4638 = vst.msk [vmem:[%s4 + $0x1f0] sm:$0xff] %vm2265, %v4574
  %4639 = vst.msk [vmem:[%s4 + $0x1f8] sm:$0xff] %vm2265, %v4575
  // Predicated region
  $region18: #{cnn_forward.3} parent=0 // pred_check
    _
  $region19: #{cnn_forward.3} parent=0 // pred_check_branch
    %4641 = sbr.rel (0) target = $region21
  $region20: #{cnn_forward.3} parent=0 // pred_region
    _
  $region21: #{cnn_forward.3} parent=0 // pred_fallthru
    _
  // Predicated region
  $region22: #{cnn_forward.3} parent=0 // pred_check
    _
  $region23: #{cnn_forward.3} parent=0 // pred_check_branch
    %4643 = sbr.rel (0) target = $region25
  $region24: #{cnn_forward.3} parent=0 // pred_region
    _
  $region25: #{cnn_forward.3} parent=0 // pred_fallthru
    _

// kernel: cnn_forward.4
$region0: #{cnn_forward.4}
  #allocation0 [shape = 'u32[]', space=smem, size = 0x4, offset = 0x4, fixed_abs, tag = 'smem constant byte address 0x4 - core index']
  #allocation1 [shape = 'u32[144,128]{1,0:T(1,128)}', space=vmem, size = 0x12000, scoped, tag = 'internal scratch']
  %s0 = inlined_call_operand.vmem [shape: bf16[4,128,512], index: 0, kind: input, shape index: {}]
  %s1 = inlined_call_operand.vmem [shape: bf16[512,32], index: 1, kind: input, shape index: {}]
  %s2 = inlined_call_operand.vmem [shape: f32[1,32], index: 2, kind: input, shape index: {}]
  %s3 = inlined_call_operand.vmem [shape: f32[1,32], index: 3, kind: input, shape index: {}]
  %s4 = inlined_call_operand.vmem [shape: f32[128,32], index: 4, kind: output, shape index: {}]
  %s5 = sld [smem:[#allocation0]]
  $region26: #{cnn_forward.4} parent=0
    _
  %s7 = ssub.s32 1, %s5
  %s8 = scalar_select 0, %s7, %s5
  // Predicated region
  $region2: #{cnn_forward.4} parent=0 // pred_check
    _
  $region3: #{cnn_forward.4} parent=0 // pred_check_branch
    %10 = sbr.rel (0) target = $region5
  $region4: #{cnn_forward.4} parent=0 // pred_region
    _
  $region5: #{cnn_forward.4} parent=0 // pred_fallthru
    _
  // Predicated region
  $region6: #{cnn_forward.4} parent=0 // pred_check
    _
  $region7: #{cnn_forward.4} parent=0 // pred_check_branch
    %12 = sbr.rel (0) target = $region9
  $region8: #{cnn_forward.4} parent=0 // pred_region
    _
  $region9: #{cnn_forward.4} parent=0 // pred_fallthru
    _
  // Predicated region
  $region10: #{cnn_forward.4} parent=0 // pred_check
    _
  $region11: #{cnn_forward.4} parent=0 // pred_check_branch
    %14 = sbr.rel (0) target = $region13
  $region12: #{cnn_forward.4} parent=0 // pred_region
    _
  $region13: #{cnn_forward.4} parent=0 // pred_fallthru
    _
  // Predicated region
  $region14: #{cnn_forward.4} parent=0 // pred_check
    _
  $region15: #{cnn_forward.4} parent=0 // pred_check_branch
    %16 = sbr.rel (0) target = $region17
  $region16: #{cnn_forward.4} parent=0 // pred_region
    _
  $region17: #{cnn_forward.4} parent=0 // pred_fallthru
    _
  %v18 = vld [vmem:[%s1] sm:$0xf]
  %v19 = vld [vmem:[%s1 + $0x4] sm:$0xf]
  %v20 = vld [vmem:[%s1 + $0x8] sm:$0xf]
  %v21 = vld [vmem:[%s1 + $0xc] sm:$0xf]
  %v22 = vld [vmem:[%s1 + $0x10] sm:$0xf]
  %v23 = vld [vmem:[%s1 + $0x14] sm:$0xf]
  %v24 = vld [vmem:[%s1 + $0x18] sm:$0xf]
  %v25 = vld [vmem:[%s1 + $0x1c] sm:$0xf]
  %v26 = vld [vmem:[%s1 + $0x20] sm:$0xf]
  %v27 = vld [vmem:[%s1 + $0x24] sm:$0xf]
  %v28 = vld [vmem:[%s1 + $0x28] sm:$0xf]
  %v29 = vld [vmem:[%s1 + $0x2c] sm:$0xf]
  %v30 = vld [vmem:[%s1 + $0x30] sm:$0xf]
  %v31 = vld [vmem:[%s1 + $0x34] sm:$0xf]
  %v32 = vld [vmem:[%s1 + $0x38] sm:$0xf]
  %v33 = vld [vmem:[%s1 + $0x3c] sm:$0xf]
  %v34 = vld [vmem:[%s1 + $0x40] sm:$0xf]
  %v35 = vld [vmem:[%s1 + $0x44] sm:$0xf]
  %v36 = vld [vmem:[%s1 + $0x48] sm:$0xf]
  %v37 = vld [vmem:[%s1 + $0x4c] sm:$0xf]
  %v38 = vld [vmem:[%s1 + $0x50] sm:$0xf]
  %v39 = vld [vmem:[%s1 + $0x54] sm:$0xf]
  %v40 = vld [vmem:[%s1 + $0x58] sm:$0xf]
  %v41 = vld [vmem:[%s1 + $0x5c] sm:$0xf]
  %v42 = vld [vmem:[%s1 + $0x60] sm:$0xf]
  %v43 = vld [vmem:[%s1 + $0x64] sm:$0xf]
  %v44 = vld [vmem:[%s1 + $0x68] sm:$0xf]
  %v45 = vld [vmem:[%s1 + $0x6c] sm:$0xf]
  %v46 = vld [vmem:[%s1 + $0x70] sm:$0xf]
  %v47 = vld [vmem:[%s1 + $0x74] sm:$0xf]
  %v48 = vld [vmem:[%s1 + $0x78] sm:$0xf]
  %v49 = vld [vmem:[%s1 + $0x7c] sm:$0xf]
  %v50 = vld [vmem:[%s1 + $0x80] sm:$0xf]
  %v51 = vld [vmem:[%s1 + $0x84] sm:$0xf]
  %v52 = vld [vmem:[%s1 + $0x88] sm:$0xf]
  %v53 = vld [vmem:[%s1 + $0x8c] sm:$0xf]
  %v54 = vld [vmem:[%s1 + $0x90] sm:$0xf]
  %v55 = vld [vmem:[%s1 + $0x94] sm:$0xf]
  %v56 = vld [vmem:[%s1 + $0x98] sm:$0xf]
  %v57 = vld [vmem:[%s1 + $0x9c] sm:$0xf]
  %v58 = vld [vmem:[%s1 + $0xa0] sm:$0xf]
  %v59 = vld [vmem:[%s1 + $0xa4] sm:$0xf]
  %v60 = vld [vmem:[%s1 + $0xa8] sm:$0xf]
  %v61 = vld [vmem:[%s1 + $0xac] sm:$0xf]
  %v62 = vld [vmem:[%s1 + $0xb0] sm:$0xf]
  %v63 = vld [vmem:[%s1 + $0xb4] sm:$0xf]
  %v64 = vld [vmem:[%s1 + $0xb8] sm:$0xf]
  %v65 = vld [vmem:[%s1 + $0xbc] sm:$0xf]
  %v66 = vld [vmem:[%s1 + $0xc0] sm:$0xf]
  %v67 = vld [vmem:[%s1 + $0xc4] sm:$0xf]
  %v68 = vld [vmem:[%s1 + $0xc8] sm:$0xf]
  %v69 = vld [vmem:[%s1 + $0xcc] sm:$0xf]
  %v70 = vld [vmem:[%s1 + $0xd0] sm:$0xf]
  %v71 = vld [vmem:[%s1 + $0xd4] sm:$0xf]
  %v72 = vld [vmem:[%s1 + $0xd8] sm:$0xf]
  %v73 = vld [vmem:[%s1 + $0xdc] sm:$0xf]
  %v74 = vld [vmem:[%s1 + $0xe0] sm:$0xf]
  %v75 = vld [vmem:[%s1 + $0xe4] sm:$0xf]
  %v76 = vld [vmem:[%s1 + $0xe8] sm:$0xf]
  %v77 = vld [vmem:[%s1 + $0xec] sm:$0xf]
  %v78 = vld [vmem:[%s1 + $0xf0] sm:$0xf]
  %v79 = vld [vmem:[%s1 + $0xf4] sm:$0xf]
  %v80 = vld [vmem:[%s1 + $0xf8] sm:$0xf]
  %v81 = vld [vmem:[%s1 + $0xfc] sm:$0xf]
  %v82 = vld [vmem:[%s0] sm:$0xff]
  %v83 = vld [vmem:[%s0 + $0x8] sm:$0xff]
  %v84 = vld [vmem:[%s0 + $0x10] sm:$0xff]
  %v85 = vld [vmem:[%s0 + $0x18] sm:$0xff]
  %v86 = vld [vmem:[%s0 + $0x20] sm:$0xff]
  %v87 = vld [vmem:[%s0 + $0x28] sm:$0xff]
  %v88 = vld [vmem:[%s0 + $0x30] sm:$0xff]
  %v89 = vld [vmem:[%s0 + $0x38] sm:$0xff]
  %v90 = vld [vmem:[%s0 + $0x40] sm:$0xff]
  %v91 = vld [vmem:[%s0 + $0x48] sm:$0xff]
  %v92 = vld [vmem:[%s0 + $0x50] sm:$0xff]
  %v93 = vld [vmem:[%s0 + $0x58] sm:$0xff]
  %v94 = vld [vmem:[%s0 + $0x60] sm:$0xff]
  %v95 = vld [vmem:[%s0 + $0x68] sm:$0xff]
  %v96 = vld [vmem:[%s0 + $0x70] sm:$0xff]
  %v97 = vld [vmem:[%s0 + $0x78] sm:$0xff]
  %v98 = vld [vmem:[%s0 + $0x80] sm:$0xff]
  %v99 = vld [vmem:[%s0 + $0x88] sm:$0xff]
  %v100 = vld [vmem:[%s0 + $0x90] sm:$0xff]
  %v101 = vld [vmem:[%s0 + $0x98] sm:$0xff]
  %v102 = vld [vmem:[%s0 + $0xa0] sm:$0xff]
  %v103 = vld [vmem:[%s0 + $0xa8] sm:$0xff]
  %v104 = vld [vmem:[%s0 + $0xb0] sm:$0xff]
  %v105 = vld [vmem:[%s0 + $0xb8] sm:$0xff]
  %v106 = vld [vmem:[%s0 + $0xc0] sm:$0xff]
  %v107 = vld [vmem:[%s0 + $0xc8] sm:$0xff]
  %v108 = vld [vmem:[%s0 + $0xd0] sm:$0xff]
  %v109 = vld [vmem:[%s0 + $0xd8] sm:$0xff]
  %v110 = vld [vmem:[%s0 + $0xe0] sm:$0xff]
  %v111 = vld [vmem:[%s0 + $0xe8] sm:$0xff]
  %v112 = vld [vmem:[%s0 + $0xf0] sm:$0xff]
  %v113 = vld [vmem:[%s0 + $0xf8] sm:$0xff]
  %v146 = vunpack.c.l.b16 %v82
  %v147 = vunpack.c.h.b16 %v82
  %v148 = vunpack.c.l.b16 %v83
  %v149 = vunpack.c.h.b16 %v83
  %v150 = vunpack.c.l.b16 %v84
  %v151 = vunpack.c.h.b16 %v84
  %v152 = vunpack.c.l.b16 %v85
  %v153 = vunpack.c.h.b16 %v85
  %v154 = vunpack.c.l.b16 %v86
  %v155 = vunpack.c.h.b16 %v86
  %v156 = vunpack.c.l.b16 %v87
  %v157 = vunpack.c.h.b16 %v87
  %v158 = vunpack.c.l.b16 %v88
  %v159 = vunpack.c.h.b16 %v88
  %v160 = vunpack.c.l.b16 %v89
  %v161 = vunpack.c.h.b16 %v89
  %v162 = vunpack.c.l.b16 %v90
  %v163 = vunpack.c.h.b16 %v90
  %v164 = vunpack.c.l.b16 %v91
  %v165 = vunpack.c.h.b16 %v91
  %v166 = vunpack.c.l.b16 %v92
  %v167 = vunpack.c.h.b16 %v92
  %v168 = vunpack.c.l.b16 %v93
  %v169 = vunpack.c.h.b16 %v93
  %v170 = vunpack.c.l.b16 %v94
  %v171 = vunpack.c.h.b16 %v94
  %v172 = vunpack.c.l.b16 %v95
  %v173 = vunpack.c.h.b16 %v95
  %v174 = vunpack.c.l.b16 %v96
  %v175 = vunpack.c.h.b16 %v96
  %v176 = vunpack.c.l.b16 %v97
  %v177 = vunpack.c.h.b16 %v97
  %v178 = vunpack.c.l.b16 %v98
  %v179 = vunpack.c.h.b16 %v98
  %v180 = vunpack.c.l.b16 %v99
  %v181 = vunpack.c.h.b16 %v99
  %v182 = vunpack.c.l.b16 %v100
  %v183 = vunpack.c.h.b16 %v100
  %v184 = vunpack.c.l.b16 %v101
  %v185 = vunpack.c.h.b16 %v101
  %v186 = vunpack.c.l.b16 %v102
  %v187 = vunpack.c.h.b16 %v102
  %v188 = vunpack.c.l.b16 %v103
  %v189 = vunpack.c.h.b16 %v103
  %v190 = vunpack.c.l.b16 %v104
  %v191 = vunpack.c.h.b16 %v104
  %v192 = vunpack.c.l.b16 %v105
  %v193 = vunpack.c.h.b16 %v105
  %v194 = vunpack.c.l.b16 %v106
  %v195 = vunpack.c.h.b16 %v106
  %v196 = vunpack.c.l.b16 %v107
  %v197 = vunpack.c.h.b16 %v107
  %v198 = vunpack.c.l.b16 %v108
  %v199 = vunpack.c.h.b16 %v108
  %v200 = vunpack.c.l.b16 %v109
  %v201 = vunpack.c.h.b16 %v109
  %v202 = vunpack.c.l.b16 %v110
  %v203 = vunpack.c.h.b16 %v110
  %v204 = vunpack.c.l.b16 %v111
  %v205 = vunpack.c.h.b16 %v111
  %v206 = vunpack.c.l.b16 %v112
  %v207 = vunpack.c.h.b16 %v112
  %v208 = vunpack.c.l.b16 %v113
  %v209 = vunpack.c.h.b16 %v113
  %v210 = vpack.c.b16 %v150, %v146
  %v211 = vpack.c.b16 %v151, %v147
  %v212 = vpack.c.b16 %v152, %v148
  %v213 = vpack.c.b16 %v153, %v149
  %v214 = vpack.c.b16 %v158, %v154
  %v215 = vpack.c.b16 %v159, %v155
  %v216 = vpack.c.b16 %v160, %v156
  %v217 = vpack.c.b16 %v161, %v157
  %v218 = vpack.c.b16 %v166, %v162
  %v219 = vpack.c.b16 %v167, %v163
  %v220 = vpack.c.b16 %v168, %v164
  %v221 = vpack.c.b16 %v169, %v165
  %v222 = vpack.c.b16 %v174, %v170
  %v223 = vpack.c.b16 %v175, %v171
  %v224 = vpack.c.b16 %v176, %v172
  %v225 = vpack.c.b16 %v177, %v173
  %v226 = vpack.c.b16 %v182, %v178
  %v227 = vpack.c.b16 %v183, %v179
  %v228 = vpack.c.b16 %v184, %v180
  %v229 = vpack.c.b16 %v185, %v181
  %v230 = vpack.c.b16 %v190, %v186
  %v231 = vpack.c.b16 %v191, %v187
  %v232 = vpack.c.b16 %v192, %v188
  %v233 = vpack.c.b16 %v193, %v189
  %v234 = vpack.c.b16 %v198, %v194
  %v235 = vpack.c.b16 %v199, %v195
  %v236 = vpack.c.b16 %v200, %v196
  %v237 = vpack.c.b16 %v201, %v197
  %v238 = vpack.c.b16 %v206, %v202
  %v239 = vpack.c.b16 %v207, %v203
  %v240 = vpack.c.b16 %v208, %v204
  %v241 = vpack.c.b16 %v209, %v205
  %v338 = vunpack.c.l.b16 %v18
  %v339 = vunpack.c.l.b16 %v19
  %v340 = vunpack.c.l.b16 %v20
  %v341 = vunpack.c.l.b16 %v21
  %v342 = vunpack.c.l.b16 %v22
  %v343 = vunpack.c.l.b16 %v23
  %v344 = vunpack.c.l.b16 %v24
  %v345 = vunpack.c.l.b16 %v25
  %v346 = vunpack.c.l.b16 %v26
  %v347 = vunpack.c.l.b16 %v27
  %v348 = vunpack.c.l.b16 %v28
  %v349 = vunpack.c.l.b16 %v29
  %v350 = vunpack.c.l.b16 %v30
  %v351 = vunpack.c.l.b16 %v31
  %v352 = vunpack.c.l.b16 %v32
  %v353 = vunpack.c.l.b16 %v33
  %v354 = vunpack.c.l.b16 %v34
  %v355 = vunpack.c.l.b16 %v35
  %v356 = vunpack.c.l.b16 %v36
  %v357 = vunpack.c.l.b16 %v37
  %v358 = vunpack.c.l.b16 %v38
  %v359 = vunpack.c.l.b16 %v39
  %v360 = vunpack.c.l.b16 %v40
  %v361 = vunpack.c.l.b16 %v41
  %v362 = vunpack.c.l.b16 %v42
  %v363 = vunpack.c.l.b16 %v43
  %v364 = vunpack.c.l.b16 %v44
  %v365 = vunpack.c.l.b16 %v45
  %v366 = vunpack.c.l.b16 %v46
  %v367 = vunpack.c.l.b16 %v47
  %v368 = vunpack.c.l.b16 %v48
  %v369 = vunpack.c.l.b16 %v49
  %v370 = vunpack.c.l.b16 %v50
  %v371 = vunpack.c.l.b16 %v51
  %v372 = vunpack.c.l.b16 %v52
  %v373 = vunpack.c.l.b16 %v53
  %v374 = vunpack.c.l.b16 %v54
  %v375 = vunpack.c.l.b16 %v55
  %v376 = vunpack.c.l.b16 %v56
  %v377 = vunpack.c.l.b16 %v57
  %v378 = vunpack.c.l.b16 %v58
  %v379 = vunpack.c.l.b16 %v59
  %v380 = vunpack.c.l.b16 %v60
  %v381 = vunpack.c.l.b16 %v61
  %v382 = vunpack.c.l.b16 %v62
  %v383 = vunpack.c.l.b16 %v63
  %v384 = vunpack.c.l.b16 %v64
  %v385 = vunpack.c.l.b16 %v65
  %v386 = vunpack.c.l.b16 %v66
  %v387 = vunpack.c.l.b16 %v67
  %v388 = vunpack.c.l.b16 %v68
  %v389 = vunpack.c.l.b16 %v69
  %v390 = vunpack.c.l.b16 %v70
  %v391 = vunpack.c.l.b16 %v71
  %v392 = vunpack.c.l.b16 %v72
  %v393 = vunpack.c.l.b16 %v73
  %v394 = vunpack.c.l.b16 %v74
  %v395 = vunpack.c.l.b16 %v75
  %v396 = vunpack.c.l.b16 %v76
  %v397 = vunpack.c.l.b16 %v77
  %v398 = vunpack.c.l.b16 %v78
  %v399 = vunpack.c.l.b16 %v79
  %v400 = vunpack.c.l.b16 %v80
  %v401 = vunpack.c.l.b16 %v81
  %v402 = vpack.c.b16 %v339, %v338
  %v403 = vpack.c.b16 %v341, %v340
  %v404 = vpack.c.b16 %v343, %v342
  %v405 = vpack.c.b16 %v345, %v344
  %v406 = vpack.c.b16 %v347, %v346
  %v407 = vpack.c.b16 %v349, %v348
  %v408 = vpack.c.b16 %v351, %v350
  %v409 = vpack.c.b16 %v353, %v352
  %v410 = vpack.c.b16 %v355, %v354
  %v411 = vpack.c.b16 %v357, %v356
  %v412 = vpack.c.b16 %v359, %v358
  %v413 = vpack.c.b16 %v361, %v360
  %v414 = vpack.c.b16 %v363, %v362
  %v415 = vpack.c.b16 %v365, %v364
  %v416 = vpack.c.b16 %v367, %v366
  %v417 = vpack.c.b16 %v369, %v368
  %v418 = vpack.c.b16 %v371, %v370
  %v419 = vpack.c.b16 %v373, %v372
  %v420 = vpack.c.b16 %v375, %v374
  %v421 = vpack.c.b16 %v377, %v376
  %v422 = vpack.c.b16 %v379, %v378
  %v423 = vpack.c.b16 %v381, %v380
  %v424 = vpack.c.b16 %v383, %v382
  %v425 = vpack.c.b16 %v385, %v384
  %v426 = vpack.c.b16 %v387, %v386
  %v427 = vpack.c.b16 %v389, %v388
  %v428 = vpack.c.b16 %v391, %v390
  %v429 = vpack.c.b16 %v393, %v392
  %v430 = vpack.c.b16 %v395, %v394
  %v431 = vpack.c.b16 %v397, %v396
  %v432 = vpack.c.b16 %v399, %v398
  %v433 = vpack.c.b16 %v401, %v400
  %466 = vmatprep.subr.bf16.mxu0 0
  %467 = vmatpush1.bf16.msra.mxu0 %v402
  %468 = vmatprep.subr.bf16.mxu0 0
  %469 = vmatpush1.bf16.msra.mxu0 %v403
  %470 = vmatprep.subr.bf16.mxu0 0
  %471 = vmatpush1.bf16.msra.mxu0 %v404
  %472 = vmatprep.subr.bf16.mxu0 0
  %473 = vmatpush1.bf16.msra.mxu0 %v405
  %474 = vmatprep.subr.bf16.mxu0 0
  %475 = vmatpush1.bf16.msra.mxu0 %v406
  %476 = vmatprep.subr.bf16.mxu0 0
  %477 = vmatpush1.bf16.msra.mxu0 %v407
  %478 = vmatprep.subr.bf16.mxu0 0
  %479 = vmatpush1.bf16.msra.mxu0 %v408
  %480 = vmatprep.subr.bf16.mxu0 0
  %481 = vmatpush1.bf16.msra.mxu0 %v409
  %482 = vmatprep.subr.bf16.mxu0 0
  %483 = vmatpush1.bf16.msra.mxu0 %v410
  %484 = vmatprep.subr.bf16.mxu0 0
  %485 = vmatpush1.bf16.msra.mxu0 %v411
  %486 = vmatprep.subr.bf16.mxu0 0
  %487 = vmatpush1.bf16.msra.mxu0 %v412
  %488 = vmatprep.subr.bf16.mxu0 0
  %489 = vmatpush1.bf16.msra.mxu0 %v413
  %490 = vmatprep.subr.bf16.mxu0 0
  %491 = vmatpush1.bf16.msra.mxu0 %v414
  %492 = vmatprep.subr.bf16.mxu0 0
  %493 = vmatpush1.bf16.msra.mxu0 %v415
  %494 = vmatprep.subr.bf16.mxu0 0
  %495 = vmatpush1.bf16.msra.mxu0 %v416
  %496 = vmatprep.subr.bf16.mxu0 0
  %497 = vmatpush1.bf16.msra.mxu0 %v417
  %498 = vmatprep.mubr.bf16.mxu0 %v211
  %499 = vmatmul.mubr.bf16.gmra.mrb[0].mxu0 %v210
  %v500 = vpop.f32.mrb[0].mxu0
  %v501 = vadd.f32 0.0, %v500
  %v502 = vpop.f32.mrb[0].mxu0
  %v503 = vpop.f32.mrb[0].mxu0
  %v504 = vadd.f32 0.0, %v503
  %v505 = vpop.f32.mrb[0].mxu0
  %506 = vmatprep.mubr.bf16.mxu0 %v215
  %507 = vmatmul.mubr.bf16.gmra.mrb[0].mxu0 %v214
  %v508 = vpop.f32.mrb[0].mxu0
  %v509 = vadd.f32 0.0, %v508
  %v510 = vpop.f32.mrb[0].mxu0
  %v511 = vpop.f32.mrb[0].mxu0
  %v512 = vadd.f32 0.0, %v511
  %v513 = vpop.f32.mrb[0].mxu0
  %514 = vmatprep.mubr.bf16.mxu0 %v219
  %515 = vmatmul.mubr.bf16.gmra.mrb[0].mxu0 %v218
  %v516 = vpop.f32.mrb[0].mxu0
  %v517 = vadd.f32 0.0, %v516
  %v518 = vpop.f32.mrb[0].mxu0
  %v519 = vpop.f32.mrb[0].mxu0
  %v520 = vadd.f32 0.0, %v519
  %v521 = vpop.f32.mrb[0].mxu0
  %522 = vmatprep.mubr.bf16.mxu0 %v223
  %523 = vmatmul.mubr.bf16.gmra.mrb[0].mxu0 %v222
  %v524 = vpop.f32.mrb[0].mxu0
  %v525 = vadd.f32 0.0, %v524
  %v526 = vpop.f32.mrb[0].mxu0
  %v527 = vpop.f32.mrb[0].mxu0
  %v528 = vadd.f32 0.0, %v527
  %v529 = vpop.f32.mrb[0].mxu0
  %530 = vmatprep.mubr.bf16.mxu0 %v227
  %531 = vmatmul.mubr.bf16.gmra.mrb[0].mxu0 %v226
  %v532 = vpop.f32.mrb[0].mxu0
  %v533 = vadd.f32 0.0, %v532
  %v534 = vpop.f32.mrb[0].mxu0
  %v535 = vpop.f32.mrb[0].mxu0
  %v536 = vadd.f32 0.0, %v535
  %v537 = vpop.f32.mrb[0].mxu0
  %538 = vmatprep.mubr.bf16.mxu0 %v231
  %539 = vmatmul.mubr.bf16.gmra.mrb[0].mxu0 %v230
  %v540 = vpop.f32.mrb[0].mxu0
  %v541 = vadd.f32 0.0, %v540
  %v542 = vpop.f32.mrb[0].mxu0
  %v543 = vpop.f32.mrb[0].mxu0
  %v544 = vadd.f32 0.0, %v543
  %v545 = vpop.f32.mrb[0].mxu0
  %546 = vmatprep.mubr.bf16.mxu0 %v235
  %547 = vmatmul.mubr.bf16.gmra.mrb[0].mxu0 %v234
  %v548 = vpop.f32.mrb[0].mxu0
  %v549 = vadd.f32 0.0, %v548
  %v550 = vpop.f32.mrb[0].mxu0
  %v551 = vpop.f32.mrb[0].mxu0
  %v552 = vadd.f32 0.0, %v551
  %v553 = vpop.f32.mrb[0].mxu0
  %554 = vmatprep.mubr.bf16.mxu0 %v239
  %555 = vmatmul.mubr.bf16.gmra.mrb[0].mxu0 %v238
  %v556 = vpop.f32.mrb[0].mxu0
  %v557 = vadd.f32 0.0, %v556
  %v558 = vpop.f32.mrb[0].mxu0
  %v559 = vpop.f32.mrb[0].mxu0
  %v560 = vadd.f32 0.0, %v559
  %v561 = vpop.f32.mrb[0].mxu0
  %562 = vdwg.mxu0
  %563 = vmatprep.subr.bf16.mxu0 0
  %564 = vmatpush1.bf16.msra.mxu0 %v418
  %565 = vmatprep.subr.bf16.mxu0 0
  %566 = vmatpush1.bf16.msra.mxu0 %v419
  %567 = vmatprep.subr.bf16.mxu0 0
  %568 = vmatpush1.bf16.msra.mxu0 %v420
  %569 = vmatprep.subr.bf16.mxu0 0
  %570 = vmatpush1.bf16.msra.mxu0 %v421
  %571 = vmatprep.subr.bf16.mxu0 0
  %572 = vmatpush1.bf16.msra.mxu0 %v422
  %573 = vmatprep.subr.bf16.mxu0 0
  %574 = vmatpush1.bf16.msra.mxu0 %v423
  %575 = vmatprep.subr.bf16.mxu0 0
  %576 = vmatpush1.bf16.msra.mxu0 %v424
  %577 = vmatprep.subr.bf16.mxu0 0
  %578 = vmatpush1.bf16.msra.mxu0 %v425
  %579 = vmatprep.subr.bf16.mxu0 0
  %580 = vmatpush1.bf16.msra.mxu0 %v426
  %581 = vmatprep.subr.bf16.mxu0 0
  %582 = vmatpush1.bf16.msra.mxu0 %v427
  %583 = vmatprep.subr.bf16.mxu0 0
  %584 = vmatpush1.bf16.msra.mxu0 %v428
  %585 = vmatprep.subr.bf16.mxu0 0
  %586 = vmatpush1.bf16.msra.mxu0 %v429
  %587 = vmatprep.subr.bf16.mxu0 0
  %588 = vmatpush1.bf16.msra.mxu0 %v430
  %589 = vmatprep.subr.bf16.mxu0 0
  %590 = vmatpush1.bf16.msra.mxu0 %v431
  %591 = vmatprep.subr.bf16.mxu0 0
  %592 = vmatpush1.bf16.msra.mxu0 %v432
  %593 = vmatprep.subr.bf16.mxu0 0
  %594 = vmatpush1.bf16.msra.mxu0 %v433
  %595 = vmatprep.mubr.bf16.mxu0 %v213
  %596 = vmatmul.mubr.bf16.gmra.mrb[0].mxu0 %v212
  %v597 = vpop.f32.mrb[0].mxu0
  %v598 = vadd.f32 %v501, %v597
  %v599 = vpop.f32.mrb[0].mxu0
  %v600 = vpop.f32.mrb[0].mxu0
  %v601 = vadd.f32 %v504, %v600
  %v602 = vpop.f32.mrb[0].mxu0
  %603 = vmatprep.mubr.bf16.mxu0 %v217
  %604 = vmatmul.mubr.bf16.gmra.mrb[0].mxu0 %v216
  %v605 = vpop.f32.mrb[0].mxu0
  %v606 = vadd.f32 %v509, %v605
  %v607 = vpop.f32.mrb[0].mxu0
  %v608 = vpop.f32.mrb[0].mxu0
  %v609 = vadd.f32 %v512, %v608
  %v610 = vpop.f32.mrb[0].mxu0
  %611 = vmatprep.mubr.bf16.mxu0 %v221
  %612 = vmatmul.mubr.bf16.gmra.mrb[0].mxu0 %v220
  %v613 = vpop.f32.mrb[0].mxu0
  %v614 = vadd.f32 %v517, %v613
  %v615 = vpop.f32.mrb[0].mxu0
  %v616 = vpop.f32.mrb[0].mxu0
  %v617 = vadd.f32 %v520, %v616
  %v618 = vpop.f32.mrb[0].mxu0
  %619 = vmatprep.mubr.bf16.mxu0 %v225
  %620 = vmatmul.mubr.bf16.gmra.mrb[0].mxu0 %v224
  %v621 = vpop.f32.mrb[0].mxu0
  %v622 = vadd.f32 %v525, %v621
  %v623 = vpop.f32.mrb[0].mxu0
  %v624 = vpop.f32.mrb[0].mxu0
  %v625 = vadd.f32 %v528, %v624
  %v626 = vpop.f32.mrb[0].mxu0
  %627 = vmatprep.mubr.bf16.mxu0 %v229
  %628 = vmatmul.mubr.bf16.gmra.mrb[0].mxu0 %v228
  %v629 = vpop.f32.mrb[0].mxu0
  %v630 = vadd.f32 %v533, %v629
  %v631 = vpop.f32.mrb[0].mxu0
  %v632 = vpop.f32.mrb[0].mxu0
  %v633 = vadd.f32 %v536, %v632
  %v634 = vpop.f32.mrb[0].mxu0
  %635 = vmatprep.mubr.bf16.mxu0 %v233
  %636 = vmatmul.mubr.bf16.gmra.mrb[0].mxu0 %v232
  %v637 = vpop.f32.mrb[0].mxu0
  %v638 = vadd.f32 %v541, %v637
  %v639 = vpop.f32.mrb[0].mxu0
  %v640 = vpop.f32.mrb[0].mxu0
  %v641 = vadd.f32 %v544, %v640
  %v642 = vpop.f32.mrb[0].mxu0
  %643 = vmatprep.mubr.bf16.mxu0 %v237
  %644 = vmatmul.mubr.bf16.gmra.mrb[0].mxu0 %v236
  %v645 = vpop.f32.mrb[0].mxu0
  %v646 = vadd.f32 %v549, %v645
  %v647 = vpop.f32.mrb[0].mxu0
  %v648 = vpop.f32.mrb[0].mxu0
  %v649 = vadd.f32 %v552, %v648
  %v650 = vpop.f32.mrb[0].mxu0
  %651 = vmatprep.mubr.bf16.mxu0 %v241
  %652 = vmatmul.mubr.bf16.gmra.mrb[0].mxu0 %v240
  %v653 = vpop.f32.mrb[0].mxu0
  %v654 = vadd.f32 %v557, %v653
  %v655 = vpop.f32.mrb[0].mxu0
  %v656 = vpop.f32.mrb[0].mxu0
  %v657 = vadd.f32 %v560, %v656
  %v658 = vpop.f32.mrb[0].mxu0
  %659 = vdwg.mxu0
  %s660 = scalar_lea.vmem %s0, 256
  %v661 = vld [vmem:[%s660] sm:$0xff]
  %v662 = vld [vmem:[%s660 + $0x8] sm:$0xff]
  %v663 = vld [vmem:[%s660 + $0x10] sm:$0xff]
  %v664 = vld [vmem:[%s660 + $0x18] sm:$0xff]
  %v665 = vld [vmem:[%s660 + $0x20] sm:$0xff]
  %v666 = vld [vmem:[%s660 + $0x28] sm:$0xff]
  %v667 = vld [vmem:[%s660 + $0x30] sm:$0xff]
  %v668 = vld [vmem:[%s660 + $0x38] sm:$0xff]
  %v669 = vld [vmem:[%s660 + $0x40] sm:$0xff]
  %v670 = vld [vmem:[%s660 + $0x48] sm:$0xff]
  %v671 = vld [vmem:[%s660 + $0x50] sm:$0xff]
  %v672 = vld [vmem:[%s660 + $0x58] sm:$0xff]
  %v673 = vld [vmem:[%s660 + $0x60] sm:$0xff]
  %v674 = vld [vmem:[%s660 + $0x68] sm:$0xff]
  %v675 = vld [vmem:[%s660 + $0x70] sm:$0xff]
  %v676 = vld [vmem:[%s660 + $0x78] sm:$0xff]
  %v677 = vld [vmem:[%s660 + $0x80] sm:$0xff]
  %v678 = vld [vmem:[%s660 + $0x88] sm:$0xff]
  %v679 = vld [vmem:[%s660 + $0x90] sm:$0xff]
  %v680 = vld [vmem:[%s660 + $0x98] sm:$0xff]
  %v681 = vld [vmem:[%s660 + $0xa0] sm:$0xff]
  %v682 = vld [vmem:[%s660 + $0xa8] sm:$0xff]
  %v683 = vld [vmem:[%s660 + $0xb0] sm:$0xff]
  %v684 = vld [vmem:[%s660 + $0xb8] sm:$0xff]
  %v685 = vld [vmem:[%s660 + $0xc0] sm:$0xff]
  %v686 = vld [vmem:[%s660 + $0xc8] sm:$0xff]
  %v687 = vld [vmem:[%s660 + $0xd0] sm:$0xff]
  %v688 = vld [vmem:[%s660 + $0xd8] sm:$0xff]
  %v689 = vld [vmem:[%s660 + $0xe0] sm:$0xff]
  %v690 = vld [vmem:[%s660 + $0xe8] sm:$0xff]
  %v691 = vld [vmem:[%s660 + $0xf0] sm:$0xff]
  %v692 = vld [vmem:[%s660 + $0xf8] sm:$0xff]
  %v725 = vunpack.c.l.b16 %v661
  %v726 = vunpack.c.h.b16 %v661
  %v727 = vunpack.c.l.b16 %v662
  %v728 = vunpack.c.h.b16 %v662
  %v729 = vunpack.c.l.b16 %v663
  %v730 = vunpack.c.h.b16 %v663
  %v731 = vunpack.c.l.b16 %v664
  %v732 = vunpack.c.h.b16 %v664
  %v733 = vunpack.c.l.b16 %v665
  %v734 = vunpack.c.h.b16 %v665
  %v735 = vunpack.c.l.b16 %v666
  %v736 = vunpack.c.h.b16 %v666
  %v737 = vunpack.c.l.b16 %v667
  %v738 = vunpack.c.h.b16 %v667
  %v739 = vunpack.c.l.b16 %v668
  %v740 = vunpack.c.h.b16 %v668
  %v741 = vunpack.c.l.b16 %v669
  %v742 = vunpack.c.h.b16 %v669
  %v743 = vunpack.c.l.b16 %v670
  %v744 = vunpack.c.h.b16 %v670
  %v745 = vunpack.c.l.b16 %v671
  %v746 = vunpack.c.h.b16 %v671
  %v747 = vunpack.c.l.b16 %v672
  %v748 = vunpack.c.h.b16 %v672
  %v749 = vunpack.c.l.b16 %v673
  %v750 = vunpack.c.h.b16 %v673
  %v751 = vunpack.c.l.b16 %v674
  %v752 = vunpack.c.h.b16 %v674
  %v753 = vunpack.c.l.b16 %v675
  %v754 = vunpack.c.h.b16 %v675
  %v755 = vunpack.c.l.b16 %v676
  %v756 = vunpack.c.h.b16 %v676
  %v757 = vunpack.c.l.b16 %v677
  %v758 = vunpack.c.h.b16 %v677
  %v759 = vunpack.c.l.b16 %v678
  %v760 = vunpack.c.h.b16 %v678
  %v761 = vunpack.c.l.b16 %v679
  %v762 = vunpack.c.h.b16 %v679
  %v763 = vunpack.c.l.b16 %v680
  %v764 = vunpack.c.h.b16 %v680
  %v765 = vunpack.c.l.b16 %v681
  %v766 = vunpack.c.h.b16 %v681
  %v767 = vunpack.c.l.b16 %v682
  %v768 = vunpack.c.h.b16 %v682
  %v769 = vunpack.c.l.b16 %v683
  %v770 = vunpack.c.h.b16 %v683
  %v771 = vunpack.c.l.b16 %v684
  %v772 = vunpack.c.h.b16 %v684
  %v773 = vunpack.c.l.b16 %v685
  %v774 = vunpack.c.h.b16 %v685
  %v775 = vunpack.c.l.b16 %v686
  %v776 = vunpack.c.h.b16 %v686
  %v777 = vunpack.c.l.b16 %v687
  %v778 = vunpack.c.h.b16 %v687
  %v779 = vunpack.c.l.b16 %v688
  %v780 = vunpack.c.h.b16 %v688
  %v781 = vunpack.c.l.b16 %v689
  %v782 = vunpack.c.h.b16 %v689
  %v783 = vunpack.c.l.b16 %v690
  %v784 = vunpack.c.h.b16 %v690
  %v785 = vunpack.c.l.b16 %v691
  %v786 = vunpack.c.h.b16 %v691
  %v787 = vunpack.c.l.b16 %v692
  %v788 = vunpack.c.h.b16 %v692
  %v789 = vpack.c.b16 %v729, %v725
  %v790 = vpack.c.b16 %v730, %v726
  %v791 = vpack.c.b16 %v731, %v727
  %v792 = vpack.c.b16 %v732, %v728
  %v793 = vpack.c.b16 %v737, %v733
  %v794 = vpack.c.b16 %v738, %v734
  %v795 = vpack.c.b16 %v739, %v735
  %v796 = vpack.c.b16 %v740, %v736
  %v797 = vpack.c.b16 %v745, %v741
  %v798 = vpack.c.b16 %v746, %v742
  %v799 = vpack.c.b16 %v747, %v743
  %v800 = vpack.c.b16 %v748, %v744
  %v801 = vpack.c.b16 %v753, %v749
  %v802 = vpack.c.b16 %v754, %v750
  %v803 = vpack.c.b16 %v755, %v751
  %v804 = vpack.c.b16 %v756, %v752
  %v805 = vpack.c.b16 %v761, %v757
  %v806 = vpack.c.b16 %v762, %v758
  %v807 = vpack.c.b16 %v763, %v759
  %v808 = vpack.c.b16 %v764, %v760
  %v809 = vpack.c.b16 %v769, %v765
  %v810 = vpack.c.b16 %v770, %v766
  %v811 = vpack.c.b16 %v771, %v767
  %v812 = vpack.c.b16 %v772, %v768
  %v813 = vpack.c.b16 %v777, %v773
  %v814 = vpack.c.b16 %v778, %v774
  %v815 = vpack.c.b16 %v779, %v775
  %v816 = vpack.c.b16 %v780, %v776
  %v817 = vpack.c.b16 %v785, %v781
  %v818 = vpack.c.b16 %v786, %v782
  %v819 = vpack.c.b16 %v787, %v783
  %v820 = vpack.c.b16 %v788, %v784
  %853 = vmatprep.subr.bf16.mxu0 0
  %854 = vmatpush1.bf16.msra.mxu0 %v402
  %855 = vmatprep.subr.bf16.mxu0 0
  %856 = vmatpush1.bf16.msra.mxu0 %v403
  %857 = vmatprep.subr.bf16.mxu0 0
  %858 = vmatpush1.bf16.msra.mxu0 %v404
  %859 = vmatprep.subr.bf16.mxu0 0
  %860 = vmatpush1.bf16.msra.mxu0 %v405
  %861 = vmatprep.subr.bf16.mxu0 0
  %862 = vmatpush1.bf16.msra.mxu0 %v406
  %863 = vmatprep.subr.bf16.mxu0 0
  %864 = vmatpush1.bf16.msra.mxu0 %v407
  %865 = vmatprep.subr.bf16.mxu0 0
  %866 = vmatpush1.bf16.msra.mxu0 %v408
  %867 = vmatprep.subr.bf16.mxu0 0
  %868 = vmatpush1.bf16.msra.mxu0 %v409
  %869 = vmatprep.subr.bf16.mxu0 0
  %870 = vmatpush1.bf16.msra.mxu0 %v410
  %871 = vmatprep.subr.bf16.mxu0 0
  %872 = vmatpush1.bf16.msra.mxu0 %v411
  %873 = vmatprep.subr.bf16.mxu0 0
  %874 = vmatpush1.bf16.msra.mxu0 %v412
  %875 = vmatprep.subr.bf16.mxu0 0
  %876 = vmatpush1.bf16.msra.mxu0 %v413
  %877 = vmatprep.subr.bf16.mxu0 0
  %878 = vmatpush1.bf16.msra.mxu0 %v414
  %879 = vmatprep.subr.bf16.mxu0 0
  %880 = vmatpush1.bf16.msra.mxu0 %v415
  %881 = vmatprep.subr.bf16.mxu0 0
  %882 = vmatpush1.bf16.msra.mxu0 %v416
  %883 = vmatprep.subr.bf16.mxu0 0
  %884 = vmatpush1.bf16.msra.mxu0 %v417
  %885 = vmatprep.mubr.bf16.mxu0 %v790
  %886 = vmatmul.mubr.bf16.gmra.mrb[0].mxu0 %v789
  %v887 = vpop.f32.mrb[0].mxu0
  %v888 = vadd.f32 0.0, %v887
  %v889 = vpop.f32.mrb[0].mxu0
  %v890 = vpop.f32.mrb[0].mxu0
  %v891 = vadd.f32 0.0, %v890
  %v892 = vpop.f32.mrb[0].mxu0
  %893 = vmatprep.mubr.bf16.mxu0 %v794
  %894 = vmatmul.mubr.bf16.gmra.mrb[0].mxu0 %v793
  %v895 = vpop.f32.mrb[0].mxu0
  %v896 = vadd.f32 0.0, %v895
  %v897 = vpop.f32.mrb[0].mxu0
  %v898 = vpop.f32.mrb[0].mxu0
  %v899 = vadd.f32 0.0, %v898
  %v900 = vpop.f32.mrb[0].mxu0
  %901 = vmatprep.mubr.bf16.mxu0 %v798
  %902 = vmatmul.mubr.bf16.gmra.mrb[0].mxu0 %v797
  %v903 = vpop.f32.mrb[0].mxu0
  %v904 = vadd.f32 0.0, %v903
  %v905 = vpop.f32.mrb[0].mxu0
  %v906 = vpop.f32.mrb[0].mxu0
  %v907 = vadd.f32 0.0, %v906
  %v908 = vpop.f32.mrb[0].mxu0
  %909 = vmatprep.mubr.bf16.mxu0 %v802
  %910 = vmatmul.mubr.bf16.gmra.mrb[0].mxu0 %v801
  %v911 = vpop.f32.mrb[0].mxu0
  %v912 = vadd.f32 0.0, %v911
  %v913 = vpop.f32.mrb[0].mxu0
  %v914 = vpop.f32.mrb[0].mxu0
  %v915 = vadd.f32 0.0, %v914
  %v916 = vpop.f32.mrb[0].mxu0
  %917 = vmatprep.mubr.bf16.mxu0 %v806
  %918 = vmatmul.mubr.bf16.gmra.mrb[0].mxu0 %v805
  %v919 = vpop.f32.mrb[0].mxu0
  %v920 = vadd.f32 0.0, %v919
  %v921 = vpop.f32.mrb[0].mxu0
  %v922 = vpop.f32.mrb[0].mxu0
  %v923 = vadd.f32 0.0, %v922
  %v924 = vpop.f32.mrb[0].mxu0
  %925 = vmatprep.mubr.bf16.mxu0 %v810
  %926 = vmatmul.mubr.bf16.gmra.mrb[0].mxu0 %v809
  %v927 = vpop.f32.mrb[0].mxu0
  %v928 = vadd.f32 0.0, %v927
  %v929 = vpop.f32.mrb[0].mxu0
  %v930 = vpop.f32.mrb[0].mxu0
  %v931 = vadd.f32 0.0, %v930
  %v932 = vpop.f32.mrb[0].mxu0
  %933 = vmatprep.mubr.bf16.mxu0 %v814
  %934 = vmatmul.mubr.bf16.gmra.mrb[0].mxu0 %v813
  %v935 = vpop.f32.mrb[0].mxu0
  %v936 = vadd.f32 0.0, %v935
  %v937 = vpop.f32.mrb[0].mxu0
  %v938 = vpop.f32.mrb[0].mxu0
  %v939 = vadd.f32 0.0, %v938
  %v940 = vpop.f32.mrb[0].mxu0
  %941 = vmatprep.mubr.bf16.mxu0 %v818
  %942 = vmatmul.mubr.bf16.gmra.mrb[0].mxu0 %v817
  %v943 = vpop.f32.mrb[0].mxu0
  %v944 = vadd.f32 0.0, %v943
  %v945 = vpop.f32.mrb[0].mxu0
  %v946 = vpop.f32.mrb[0].mxu0
  %v947 = vadd.f32 0.0, %v946
  %v948 = vpop.f32.mrb[0].mxu0
  %949 = vdwg.mxu0
  %950 = vmatprep.subr.bf16.mxu0 0
  %951 = vmatpush1.bf16.msra.mxu0 %v418
  %952 = vmatprep.subr.bf16.mxu0 0
  %953 = vmatpush1.bf16.msra.mxu0 %v419
  %954 = vmatprep.subr.bf16.mxu0 0
  %955 = vmatpush1.bf16.msra.mxu0 %v420
  %956 = vmatprep.subr.bf16.mxu0 0
  %957 = vmatpush1.bf16.msra.mxu0 %v421
  %958 = vmatprep.subr.bf16.mxu0 0
  %959 = vmatpush1.bf16.msra.mxu0 %v422
  %960 = vmatprep.subr.bf16.mxu0 0
  %961 = vmatpush1.bf16.msra.mxu0 %v423
  %962 = vmatprep.subr.bf16.mxu0 0
  %963 = vmatpush1.bf16.msra.mxu0 %v424
  %964 = vmatprep.subr.bf16.mxu0 0
  %965 = vmatpush1.bf16.msra.mxu0 %v425
  %966 = vmatprep.subr.bf16.mxu0 0
  %967 = vmatpush1.bf16.msra.mxu0 %v426
  %968 = vmatprep.subr.bf16.mxu0 0
  %969 = vmatpush1.bf16.msra.mxu0 %v427
  %970 = vmatprep.subr.bf16.mxu0 0
  %971 = vmatpush1.bf16.msra.mxu0 %v428
  %972 = vmatprep.subr.bf16.mxu0 0
  %973 = vmatpush1.bf16.msra.mxu0 %v429
  %974 = vmatprep.subr.bf16.mxu0 0
  %975 = vmatpush1.bf16.msra.mxu0 %v430
  %976 = vmatprep.subr.bf16.mxu0 0
  %977 = vmatpush1.bf16.msra.mxu0 %v431
  %978 = vmatprep.subr.bf16.mxu0 0
  %979 = vmatpush1.bf16.msra.mxu0 %v432
  %980 = vmatprep.subr.bf16.mxu0 0
  %981 = vmatpush1.bf16.msra.mxu0 %v433
  %982 = vmatprep.mubr.bf16.mxu0 %v792
  %983 = vmatmul.mubr.bf16.gmra.mrb[0].mxu0 %v791
  %v984 = vpop.f32.mrb[0].mxu0
  %v985 = vadd.f32 %v888, %v984
  %v986 = vpop.f32.mrb[0].mxu0
  %v987 = vpop.f32.mrb[0].mxu0
  %v988 = vadd.f32 %v891, %v987
  %v989 = vpop.f32.mrb[0].mxu0
  %990 = vmatprep.mubr.bf16.mxu0 %v796
  %991 = vmatmul.mubr.bf16.gmra.mrb[0].mxu0 %v795
  %v992 = vpop.f32.mrb[0].mxu0
  %v993 = vadd.f32 %v896, %v992
  %v994 = vpop.f32.mrb[0].mxu0
  %v995 = vpop.f32.mrb[0].mxu0
  %v996 = vadd.f32 %v899, %v995
  %v997 = vpop.f32.mrb[0].mxu0
  %998 = vmatprep.mubr.bf16.mxu0 %v800
  %999 = vmatmul.mubr.bf16.gmra.mrb[0].mxu0 %v799
  %v1000 = vpop.f32.mrb[0].mxu0
  %v1001 = vadd.f32 %v904, %v1000
  %v1002 = vpop.f32.mrb[0].mxu0
  %v1003 = vpop.f32.mrb[0].mxu0
  %v1004 = vadd.f32 %v907, %v1003
  %v1005 = vpop.f32.mrb[0].mxu0
  %1006 = vmatprep.mubr.bf16.mxu0 %v804
  %1007 = vmatmul.mubr.bf16.gmra.mrb[0].mxu0 %v803
  %v1008 = vpop.f32.mrb[0].mxu0
  %v1009 = vadd.f32 %v912, %v1008
  %v1010 = vpop.f32.mrb[0].mxu0
  %v1011 = vpop.f32.mrb[0].mxu0
  %v1012 = vadd.f32 %v915, %v1011
  %v1013 = vpop.f32.mrb[0].mxu0
  %1014 = vmatprep.mubr.bf16.mxu0 %v808
  %1015 = vmatmul.mubr.bf16.gmra.mrb[0].mxu0 %v807
  %v1016 = vpop.f32.mrb[0].mxu0
  %v1017 = vadd.f32 %v920, %v1016
  %v1018 = vpop.f32.mrb[0].mxu0
  %v1019 = vpop.f32.mrb[0].mxu0
  %v1020 = vadd.f32 %v923, %v1019
  %v1021 = vpop.f32.mrb[0].mxu0
  %1022 = vmatprep.mubr.bf16.mxu0 %v812
  %1023 = vmatmul.mubr.bf16.gmra.mrb[0].mxu0 %v811
  %v1024 = vpop.f32.mrb[0].mxu0
  %v1025 = vadd.f32 %v928, %v1024
  %v1026 = vpop.f32.mrb[0].mxu0
  %v1027 = vpop.f32.mrb[0].mxu0
  %v1028 = vadd.f32 %v931, %v1027
  %v1029 = vpop.f32.mrb[0].mxu0
  %1030 = vmatprep.mubr.bf16.mxu0 %v816
  %1031 = vmatmul.mubr.bf16.gmra.mrb[0].mxu0 %v815
  %v1032 = vpop.f32.mrb[0].mxu0
  %v1033 = vadd.f32 %v936, %v1032
  %v1034 = vpop.f32.mrb[0].mxu0
  %v1035 = vpop.f32.mrb[0].mxu0
  %v1036 = vadd.f32 %v939, %v1035
  %v1037 = vpop.f32.mrb[0].mxu0
  %1038 = vmatprep.mubr.bf16.mxu0 %v820
  %1039 = vmatmul.mubr.bf16.gmra.mrb[0].mxu0 %v819
  %v1040 = vpop.f32.mrb[0].mxu0
  %v1041 = vadd.f32 %v944, %v1040
  %v1042 = vpop.f32.mrb[0].mxu0
  %v1043 = vpop.f32.mrb[0].mxu0
  %v1044 = vadd.f32 %v947, %v1043
  %v1045 = vpop.f32.mrb[0].mxu0
  %1046 = vdwg.mxu0
  %s1047 = scalar_lea.vmem %s0, 512
  %v1048 = vld [vmem:[%s1047] sm:$0xff]
  %v1049 = vld [vmem:[%s1047 + $0x8] sm:$0xff]
  %v1050 = vld [vmem:[%s1047 + $0x10] sm:$0xff]
  %v1051 = vld [vmem:[%s1047 + $0x18] sm:$0xff]
  %v1052 = vld [vmem:[%s1047 + $0x20] sm:$0xff]
  %v1053 = vld [vmem:[%s1047 + $0x28] sm:$0xff]
  %v1054 = vld [vmem:[%s1047 + $0x30] sm:$0xff]
  %v1055 = vld [vmem:[%s1047 + $0x38] sm:$0xff]
  %v1056 = vld [vmem:[%s1047 + $0x40] sm:$0xff]
  %v1057 = vld [vmem:[%s1047 + $0x48] sm:$0xff]
  %v1058 = vld [vmem:[%s1047 + $0x50] sm:$0xff]
  %v1059 = vld [vmem:[%s1047 + $0x58] sm:$0xff]
  %v1060 = vld [vmem:[%s1047 + $0x60] sm:$0xff]
  %v1061 = vld [vmem:[%s1047 + $0x68] sm:$0xff]
  %v1062 = vld [vmem:[%s1047 + $0x70] sm:$0xff]
  %v1063 = vld [vmem:[%s1047 + $0x78] sm:$0xff]
  %v1064 = vld [vmem:[%s1047 + $0x80] sm:$0xff]
  %v1065 = vld [vmem:[%s1047 + $0x88] sm:$0xff]
  %v1066 = vld [vmem:[%s1047 + $0x90] sm:$0xff]
  %v1067 = vld [vmem:[%s1047 + $0x98] sm:$0xff]
  %v1068 = vld [vmem:[%s1047 + $0xa0] sm:$0xff]
  %v1069 = vld [vmem:[%s1047 + $0xa8] sm:$0xff]
  %v1070 = vld [vmem:[%s1047 + $0xb0] sm:$0xff]
  %v1071 = vld [vmem:[%s1047 + $0xb8] sm:$0xff]
  %v1072 = vld [vmem:[%s1047 + $0xc0] sm:$0xff]
  %v1073 = vld [vmem:[%s1047 + $0xc8] sm:$0xff]
  %v1074 = vld [vmem:[%s1047 + $0xd0] sm:$0xff]
  %v1075 = vld [vmem:[%s1047 + $0xd8] sm:$0xff]
  %v1076 = vld [vmem:[%s1047 + $0xe0] sm:$0xff]
  %v1077 = vld [vmem:[%s1047 + $0xe8] sm:$0xff]
  %v1078 = vld [vmem:[%s1047 + $0xf0] sm:$0xff]
  %v1079 = vld [vmem:[%s1047 + $0xf8] sm:$0xff]
  %v1112 = vunpack.c.l.b16 %v1048
  %v1113 = vunpack.c.h.b16 %v1048
  %v1114 = vunpack.c.l.b16 %v1049
  %v1115 = vunpack.c.h.b16 %v1049
  %v1116 = vunpack.c.l.b16 %v1050
  %v1117 = vunpack.c.h.b16 %v1050
  %v1118 = vunpack.c.l.b16 %v1051
  %v1119 = vunpack.c.h.b16 %v1051
  %v1120 = vunpack.c.l.b16 %v1052
  %v1121 = vunpack.c.h.b16 %v1052
  %v1122 = vunpack.c.l.b16 %v1053
  %v1123 = vunpack.c.h.b16 %v1053
  %v1124 = vunpack.c.l.b16 %v1054
  %v1125 = vunpack.c.h.b16 %v1054
  %v1126 = vunpack.c.l.b16 %v1055
  %v1127 = vunpack.c.h.b16 %v1055
  %v1128 = vunpack.c.l.b16 %v1056
  %v1129 = vunpack.c.h.b16 %v1056
  %v1130 = vunpack.c.l.b16 %v1057
  %v1131 = vunpack.c.h.b16 %v1057
  %v1132 = vunpack.c.l.b16 %v1058
  %v1133 = vunpack.c.h.b16 %v1058
  %v1134 = vunpack.c.l.b16 %v1059
  %v1135 = vunpack.c.h.b16 %v1059
  %v1136 = vunpack.c.l.b16 %v1060
  %v1137 = vunpack.c.h.b16 %v1060
  %v1138 = vunpack.c.l.b16 %v1061
  %v1139 = vunpack.c.h.b16 %v1061
  %v1140 = vunpack.c.l.b16 %v1062
  %v1141 = vunpack.c.h.b16 %v1062
  %v1142 = vunpack.c.l.b16 %v1063
  %v1143 = vunpack.c.h.b16 %v1063
  %v1144 = vunpack.c.l.b16 %v1064
  %v1145 = vunpack.c.h.b16 %v1064
  %v1146 = vunpack.c.l.b16 %v1065
  %v1147 = vunpack.c.h.b16 %v1065
  %v1148 = vunpack.c.l.b16 %v1066
  %v1149 = vunpack.c.h.b16 %v1066
  %v1150 = vunpack.c.l.b16 %v1067
  %v1151 = vunpack.c.h.b16 %v1067
  %v1152 = vunpack.c.l.b16 %v1068
  %v1153 = vunpack.c.h.b16 %v1068
  %v1154 = vunpack.c.l.b16 %v1069
  %v1155 = vunpack.c.h.b16 %v1069
  %v1156 = vunpack.c.l.b16 %v1070
  %v1157 = vunpack.c.h.b16 %v1070
  %v1158 = vunpack.c.l.b16 %v1071
  %v1159 = vunpack.c.h.b16 %v1071
  %v1160 = vunpack.c.l.b16 %v1072
  %v1161 = vunpack.c.h.b16 %v1072
  %v1162 = vunpack.c.l.b16 %v1073
  %v1163 = vunpack.c.h.b16 %v1073
  %v1164 = vunpack.c.l.b16 %v1074
  %v1165 = vunpack.c.h.b16 %v1074
  %v1166 = vunpack.c.l.b16 %v1075
  %v1167 = vunpack.c.h.b16 %v1075
  %v1168 = vunpack.c.l.b16 %v1076
  %v1169 = vunpack.c.h.b16 %v1076
  %v1170 = vunpack.c.l.b16 %v1077
  %v1171 = vunpack.c.h.b16 %v1077
  %v1172 = vunpack.c.l.b16 %v1078
  %v1173 = vunpack.c.h.b16 %v1078
  %v1174 = vunpack.c.l.b16 %v1079
  %v1175 = vunpack.c.h.b16 %v1079
  %v1176 = vpack.c.b16 %v1116, %v1112
  %v1177 = vpack.c.b16 %v1117, %v1113
  %v1178 = vpack.c.b16 %v1118, %v1114
  %v1179 = vpack.c.b16 %v1119, %v1115
  %v1180 = vpack.c.b16 %v1124, %v1120
  %v1181 = vpack.c.b16 %v1125, %v1121
  %v1182 = vpack.c.b16 %v1126, %v1122
  %v1183 = vpack.c.b16 %v1127, %v1123
  %v1184 = vpack.c.b16 %v1132, %v1128
  %v1185 = vpack.c.b16 %v1133, %v1129
  %v1186 = vpack.c.b16 %v1134, %v1130
  %v1187 = vpack.c.b16 %v1135, %v1131
  %v1188 = vpack.c.b16 %v1140, %v1136
  %v1189 = vpack.c.b16 %v1141, %v1137
  %v1190 = vpack.c.b16 %v1142, %v1138
  %v1191 = vpack.c.b16 %v1143, %v1139
  %v1192 = vpack.c.b16 %v1148, %v1144
  %v1193 = vpack.c.b16 %v1149, %v1145
  %v1194 = vpack.c.b16 %v1150, %v1146
  %v1195 = vpack.c.b16 %v1151, %v1147
  %v1196 = vpack.c.b16 %v1156, %v1152
  %v1197 = vpack.c.b16 %v1157, %v1153
  %v1198 = vpack.c.b16 %v1158, %v1154
  %v1199 = vpack.c.b16 %v1159, %v1155
  %v1200 = vpack.c.b16 %v1164, %v1160
  %v1201 = vpack.c.b16 %v1165, %v1161
  %v1202 = vpack.c.b16 %v1166, %v1162
  %v1203 = vpack.c.b16 %v1167, %v1163
  %v1204 = vpack.c.b16 %v1172, %v1168
  %v1205 = vpack.c.b16 %v1173, %v1169
  %v1206 = vpack.c.b16 %v1174, %v1170
  %v1207 = vpack.c.b16 %v1175, %v1171
  %1240 = vmatprep.subr.bf16.mxu0 0
  %1241 = vmatpush1.bf16.msra.mxu0 %v402
  %1242 = vmatprep.subr.bf16.mxu0 0
  %1243 = vmatpush1.bf16.msra.mxu0 %v403
  %1244 = vmatprep.subr.bf16.mxu0 0
  %1245 = vmatpush1.bf16.msra.mxu0 %v404
  %1246 = vmatprep.subr.bf16.mxu0 0
  %1247 = vmatpush1.bf16.msra.mxu0 %v405
  %1248 = vmatprep.subr.bf16.mxu0 0
  %1249 = vmatpush1.bf16.msra.mxu0 %v406
  %1250 = vmatprep.subr.bf16.mxu0 0
  %1251 = vmatpush1.bf16.msra.mxu0 %v407
  %1252 = vmatprep.subr.bf16.mxu0 0
  %1253 = vmatpush1.bf16.msra.mxu0 %v408
  %1254 = vmatprep.subr.bf16.mxu0 0
  %1255 = vmatpush1.bf16.msra.mxu0 %v409
  %1256 = vmatprep.subr.bf16.mxu0 0
  %1257 = vmatpush1.bf16.msra.mxu0 %v410
  %1258 = vmatprep.subr.bf16.mxu0 0
  %1259 = vmatpush1.bf16.msra.mxu0 %v411
  %1260 = vmatprep.subr.bf16.mxu0 0
  %1261 = vmatpush1.bf16.msra.mxu0 %v412
  %1262 = vmatprep.subr.bf16.mxu0 0
  %1263 = vmatpush1.bf16.msra.mxu0 %v413
  %1264 = vmatprep.subr.bf16.mxu0 0
  %1265 = vmatpush1.bf16.msra.mxu0 %v414
  %1266 = vmatprep.subr.bf16.mxu0 0
  %1267 = vmatpush1.bf16.msra.mxu0 %v415
  %1268 = vmatprep.subr.bf16.mxu0 0
  %1269 = vmatpush1.bf16.msra.mxu0 %v416
  %1270 = vmatprep.subr.bf16.mxu0 0
  %1271 = vmatpush1.bf16.msra.mxu0 %v417
  %1272 = vmatprep.mubr.bf16.mxu0 %v1177
  %1273 = vmatmul.mubr.bf16.gmra.mrb[0].mxu0 %v1176
  %v1274 = vpop.f32.mrb[0].mxu0
  %v1275 = vadd.f32 0.0, %v1274
  %v1276 = vpop.f32.mrb[0].mxu0
  %v1277 = vpop.f32.mrb[0].mxu0
  %v1278 = vadd.f32 0.0, %v1277
  %v1279 = vpop.f32.mrb[0].mxu0
  %1280 = vmatprep.mubr.bf16.mxu0 %v1181
  %1281 = vmatmul.mubr.bf16.gmra.mrb[0].mxu0 %v1180
  %v1282 = vpop.f32.mrb[0].mxu0
  %v1283 = vadd.f32 0.0, %v1282
  %v1284 = vpop.f32.mrb[0].mxu0
  %v1285 = vpop.f32.mrb[0].mxu0
  %v1286 = vadd.f32 0.0, %v1285
  %v1287 = vpop.f32.mrb[0].mxu0
  %1288 = vmatprep.mubr.bf16.mxu0 %v1185
  %1289 = vmatmul.mubr.bf16.gmra.mrb[0].mxu0 %v1184
  %v1290 = vpop.f32.mrb[0].mxu0
  %v1291 = vadd.f32 0.0, %v1290
  %v1292 = vpop.f32.mrb[0].mxu0
  %v1293 = vpop.f32.mrb[0].mxu0
  %v1294 = vadd.f32 0.0, %v1293
  %v1295 = vpop.f32.mrb[0].mxu0
  %1296 = vmatprep.mubr.bf16.mxu0 %v1189
  %1297 = vmatmul.mubr.bf16.gmra.mrb[0].mxu0 %v1188
  %v1298 = vpop.f32.mrb[0].mxu0
  %v1299 = vadd.f32 0.0, %v1298
  %v1300 = vpop.f32.mrb[0].mxu0
  %v1301 = vpop.f32.mrb[0].mxu0
  %v1302 = vadd.f32 0.0, %v1301
  %v1303 = vpop.f32.mrb[0].mxu0
  %1304 = vmatprep.mubr.bf16.mxu0 %v1193
  %1305 = vmatmul.mubr.bf16.gmra.mrb[0].mxu0 %v1192
  %v1306 = vpop.f32.mrb[0].mxu0
  %v1307 = vadd.f32 0.0, %v1306
  %v1308 = vpop.f32.mrb[0].mxu0
  %v1309 = vpop.f32.mrb[0].mxu0
  %v1310 = vadd.f32 0.0, %v1309
  %v1311 = vpop.f32.mrb[0].mxu0
  %1312 = vmatprep.mubr.bf16.mxu0 %v1197
  %1313 = vmatmul.mubr.bf16.gmra.mrb[0].mxu0 %v1196
  %v1314 = vpop.f32.mrb[0].mxu0
  %v1315 = vadd.f32 0.0, %v1314
  %v1316 = vpop.f32.mrb[0].mxu0
  %v1317 = vpop.f32.mrb[0].mxu0
  %v1318 = vadd.f32 0.0, %v1317
  %v1319 = vpop.f32.mrb[0].mxu0
  %1320 = vmatprep.mubr.bf16.mxu0 %v1201
  %1321 = vmatmul.mubr.bf16.gmra.mrb[0].mxu0 %v1200
  %v1322 = vpop.f32.mrb[0].mxu0
  %v1323 = vadd.f32 0.0, %v1322
  %v1324 = vpop.f32.mrb[0].mxu0
  %v1325 = vpop.f32.mrb[0].mxu0
  %v1326 = vadd.f32 0.0, %v1325
  %v1327 = vpop.f32.mrb[0].mxu0
  %1328 = vmatprep.mubr.bf16.mxu0 %v1205
  %1329 = vmatmul.mubr.bf16.gmra.mrb[0].mxu0 %v1204
  %v1330 = vpop.f32.mrb[0].mxu0
  %v1331 = vadd.f32 0.0, %v1330
  %v1332 = vpop.f32.mrb[0].mxu0
  %v1333 = vpop.f32.mrb[0].mxu0
  %v1334 = vadd.f32 0.0, %v1333
  %v1335 = vpop.f32.mrb[0].mxu0
  %1336 = vdwg.mxu0
  %1337 = vmatprep.subr.bf16.mxu0 0
  %1338 = vmatpush1.bf16.msra.mxu0 %v418
  %1339 = vmatprep.subr.bf16.mxu0 0
  %1340 = vmatpush1.bf16.msra.mxu0 %v419
  %1341 = vmatprep.subr.bf16.mxu0 0
  %1342 = vmatpush1.bf16.msra.mxu0 %v420
  %1343 = vmatprep.subr.bf16.mxu0 0
  %1344 = vmatpush1.bf16.msra.mxu0 %v421
  %1345 = vmatprep.subr.bf16.mxu0 0
  %1346 = vmatpush1.bf16.msra.mxu0 %v422
  %1347 = vmatprep.subr.bf16.mxu0 0
  %1348 = vmatpush1.bf16.msra.mxu0 %v423
  %1349 = vmatprep.subr.bf16.mxu0 0
  %1350 = vmatpush1.bf16.msra.mxu0 %v424
  %1351 = vmatprep.subr.bf16.mxu0 0
  %1352 = vmatpush1.bf16.msra.mxu0 %v425
  %1353 = vmatprep.subr.bf16.mxu0 0
  %1354 = vmatpush1.bf16.msra.mxu0 %v426
  %1355 = vmatprep.subr.bf16.mxu0 0
  %1356 = vmatpush1.bf16.msra.mxu0 %v427
  %1357 = vmatprep.subr.bf16.mxu0 0
  %1358 = vmatpush1.bf16.msra.mxu0 %v428
  %1359 = vmatprep.subr.bf16.mxu0 0
  %1360 = vmatpush1.bf16.msra.mxu0 %v429
  %1361 = vmatprep.subr.bf16.mxu0 0
  %1362 = vmatpush1.bf16.msra.mxu0 %v430
  %1363 = vmatprep.subr.bf16.mxu0 0
  %1364 = vmatpush1.bf16.msra.mxu0 %v431
  %1365 = vmatprep.subr.bf16.mxu0 0
  %1366 = vmatpush1.bf16.msra.mxu0 %v432
  %1367 = vmatprep.subr.bf16.mxu0 0
  %1368 = vmatpush1.bf16.msra.mxu0 %v433
  %1369 = vmatprep.mubr.bf16.mxu0 %v1179
  %1370 = vmatmul.mubr.bf16.gmra.mrb[0].mxu0 %v1178
  %v1371 = vpop.f32.mrb[0].mxu0
  %v1372 = vadd.f32 %v1275, %v1371
  %v1373 = vpop.f32.mrb[0].mxu0
  %v1374 = vpop.f32.mrb[0].mxu0
  %v1375 = vadd.f32 %v1278, %v1374
  %v1376 = vpop.f32.mrb[0].mxu0
  %1377 = vmatprep.mubr.bf16.mxu0 %v1183
  %1378 = vmatmul.mubr.bf16.gmra.mrb[0].mxu0 %v1182
  %v1379 = vpop.f32.mrb[0].mxu0
  %v1380 = vadd.f32 %v1283, %v1379
  %v1381 = vpop.f32.mrb[0].mxu0
  %v1382 = vpop.f32.mrb[0].mxu0
  %v1383 = vadd.f32 %v1286, %v1382
  %v1384 = vpop.f32.mrb[0].mxu0
  %1385 = vmatprep.mubr.bf16.mxu0 %v1187
  %1386 = vmatmul.mubr.bf16.gmra.mrb[0].mxu0 %v1186
  %v1387 = vpop.f32.mrb[0].mxu0
  %v1388 = vadd.f32 %v1291, %v1387
  %v1389 = vpop.f32.mrb[0].mxu0
  %v1390 = vpop.f32.mrb[0].mxu0
  %v1391 = vadd.f32 %v1294, %v1390
  %v1392 = vpop.f32.mrb[0].mxu0
  %1393 = vmatprep.mubr.bf16.mxu0 %v1191
  %1394 = vmatmul.mubr.bf16.gmra.mrb[0].mxu0 %v1190
  %v1395 = vpop.f32.mrb[0].mxu0
  %v1396 = vadd.f32 %v1299, %v1395
  %v1397 = vpop.f32.mrb[0].mxu0
  %v1398 = vpop.f32.mrb[0].mxu0
  %v1399 = vadd.f32 %v1302, %v1398
  %v1400 = vpop.f32.mrb[0].mxu0
  %1401 = vmatprep.mubr.bf16.mxu0 %v1195
  %1402 = vmatmul.mubr.bf16.gmra.mrb[0].mxu0 %v1194
  %v1403 = vpop.f32.mrb[0].mxu0
  %v1404 = vadd.f32 %v1307, %v1403
  %v1405 = vpop.f32.mrb[0].mxu0
  %v1406 = vpop.f32.mrb[0].mxu0
  %v1407 = vadd.f32 %v1310, %v1406
  %v1408 = vpop.f32.mrb[0].mxu0
  %1409 = vmatprep.mubr.bf16.mxu0 %v1199
  %1410 = vmatmul.mubr.bf16.gmra.mrb[0].mxu0 %v1198
  %v1411 = vpop.f32.mrb[0].mxu0
  %v1412 = vadd.f32 %v1315, %v1411
  %v1413 = vpop.f32.mrb[0].mxu0
  %v1414 = vpop.f32.mrb[0].mxu0
  %v1415 = vadd.f32 %v1318, %v1414
  %v1416 = vpop.f32.mrb[0].mxu0
  %1417 = vmatprep.mubr.bf16.mxu0 %v1203
  %1418 = vmatmul.mubr.bf16.gmra.mrb[0].mxu0 %v1202
  %v1419 = vpop.f32.mrb[0].mxu0
  %v1420 = vadd.f32 %v1323, %v1419
  %v1421 = vpop.f32.mrb[0].mxu0
  %v1422 = vpop.f32.mrb[0].mxu0
  %v1423 = vadd.f32 %v1326, %v1422
  %v1424 = vpop.f32.mrb[0].mxu0
  %1425 = vmatprep.mubr.bf16.mxu0 %v1207
  %1426 = vmatmul.mubr.bf16.gmra.mrb[0].mxu0 %v1206
  %v1427 = vpop.f32.mrb[0].mxu0
  %v1428 = vadd.f32 %v1331, %v1427
  %v1429 = vpop.f32.mrb[0].mxu0
  %v1430 = vpop.f32.mrb[0].mxu0
  %v1431 = vadd.f32 %v1334, %v1430
  %v1432 = vpop.f32.mrb[0].mxu0
  %1433 = vdwg.mxu0
  %s1434 = scalar_lea.vmem %s0, 768
  %v1435 = vld [vmem:[%s1434] sm:$0xff]
  %v1436 = vld [vmem:[%s1434 + $0x8] sm:$0xff]
  %v1437 = vld [vmem:[%s1434 + $0x10] sm:$0xff]
  %v1438 = vld [vmem:[%s1434 + $0x18] sm:$0xff]
  %v1439 = vld [vmem:[%s1434 + $0x20] sm:$0xff]
  %v1440 = vld [vmem:[%s1434 + $0x28] sm:$0xff]
  %v1441 = vld [vmem:[%s1434 + $0x30] sm:$0xff]
  %v1442 = vld [vmem:[%s1434 + $0x38] sm:$0xff]
  %v1443 = vld [vmem:[%s1434 + $0x40] sm:$0xff]
  %v1444 = vld [vmem:[%s1434 + $0x48] sm:$0xff]
  %v1445 = vld [vmem:[%s1434 + $0x50] sm:$0xff]
  %v1446 = vld [vmem:[%s1434 + $0x58] sm:$0xff]
  %v1447 = vld [vmem:[%s1434 + $0x60] sm:$0xff]
  %v1448 = vld [vmem:[%s1434 + $0x68] sm:$0xff]
  %v1449 = vld [vmem:[%s1434 + $0x70] sm:$0xff]
  %v1450 = vld [vmem:[%s1434 + $0x78] sm:$0xff]
  %v1451 = vld [vmem:[%s1434 + $0x80] sm:$0xff]
  %v1452 = vld [vmem:[%s1434 + $0x88] sm:$0xff]
  %v1453 = vld [vmem:[%s1434 + $0x90] sm:$0xff]
  %v1454 = vld [vmem:[%s1434 + $0x98] sm:$0xff]
  %v1455 = vld [vmem:[%s1434 + $0xa0] sm:$0xff]
  %v1456 = vld [vmem:[%s1434 + $0xa8] sm:$0xff]
  %v1457 = vld [vmem:[%s1434 + $0xb0] sm:$0xff]
  %v1458 = vld [vmem:[%s1434 + $0xb8] sm:$0xff]
  %v1459 = vld [vmem:[%s1434 + $0xc0] sm:$0xff]
  %v1460 = vld [vmem:[%s1434 + $0xc8] sm:$0xff]
  %v1461 = vld [vmem:[%s1434 + $0xd0] sm:$0xff]
  %v1462 = vld [vmem:[%s1434 + $0xd8] sm:$0xff]
  %v1463 = vld [vmem:[%s1434 + $0xe0] sm:$0xff]
  %v1464 = vld [vmem:[%s1434 + $0xe8] sm:$0xff]
  %v1465 = vld [vmem:[%s1434 + $0xf0] sm:$0xff]
  %v1466 = vld [vmem:[%s1434 + $0xf8] sm:$0xff]
  %v1499 = vunpack.c.l.b16 %v1435
  %v1500 = vunpack.c.h.b16 %v1435
  %v1501 = vunpack.c.l.b16 %v1436
  %v1502 = vunpack.c.h.b16 %v1436
  %v1503 = vunpack.c.l.b16 %v1437
  %v1504 = vunpack.c.h.b16 %v1437
  %v1505 = vunpack.c.l.b16 %v1438
  %v1506 = vunpack.c.h.b16 %v1438
  %v1507 = vunpack.c.l.b16 %v1439
  %v1508 = vunpack.c.h.b16 %v1439
  %v1509 = vunpack.c.l.b16 %v1440
  %v1510 = vunpack.c.h.b16 %v1440
  %v1511 = vunpack.c.l.b16 %v1441
  %v1512 = vunpack.c.h.b16 %v1441
  %v1513 = vunpack.c.l.b16 %v1442
  %v1514 = vunpack.c.h.b16 %v1442
  %v1515 = vunpack.c.l.b16 %v1443
  %v1516 = vunpack.c.h.b16 %v1443
  %v1517 = vunpack.c.l.b16 %v1444
  %v1518 = vunpack.c.h.b16 %v1444
  %v1519 = vunpack.c.l.b16 %v1445
  %v1520 = vunpack.c.h.b16 %v1445
  %v1521 = vunpack.c.l.b16 %v1446
  %v1522 = vunpack.c.h.b16 %v1446
  %v1523 = vunpack.c.l.b16 %v1447
  %v1524 = vunpack.c.h.b16 %v1447
  %v1525 = vunpack.c.l.b16 %v1448
  %v1526 = vunpack.c.h.b16 %v1448
  %v1527 = vunpack.c.l.b16 %v1449
  %v1528 = vunpack.c.h.b16 %v1449
  %v1529 = vunpack.c.l.b16 %v1450
  %v1530 = vunpack.c.h.b16 %v1450
  %v1531 = vunpack.c.l.b16 %v1451
  %v1532 = vunpack.c.h.b16 %v1451
  %v1533 = vunpack.c.l.b16 %v1452
  %v1534 = vunpack.c.h.b16 %v1452
  %v1535 = vunpack.c.l.b16 %v1453
  %v1536 = vunpack.c.h.b16 %v1453
  %v1537 = vunpack.c.l.b16 %v1454
  %v1538 = vunpack.c.h.b16 %v1454
  %v1539 = vunpack.c.l.b16 %v1455
  %v1540 = vunpack.c.h.b16 %v1455
  %v1541 = vunpack.c.l.b16 %v1456
  %v1542 = vunpack.c.h.b16 %v1456
  %v1543 = vunpack.c.l.b16 %v1457
  %v1544 = vunpack.c.h.b16 %v1457
  %v1545 = vunpack.c.l.b16 %v1458
  %v1546 = vunpack.c.h.b16 %v1458
  %v1547 = vunpack.c.l.b16 %v1459
  %v1548 = vunpack.c.h.b16 %v1459
  %v1549 = vunpack.c.l.b16 %v1460
  %v1550 = vunpack.c.h.b16 %v1460
  %v1551 = vunpack.c.l.b16 %v1461
  %v1552 = vunpack.c.h.b16 %v1461
  %v1553 = vunpack.c.l.b16 %v1462
  %v1554 = vunpack.c.h.b16 %v1462
  %v1555 = vunpack.c.l.b16 %v1463
  %v1556 = vunpack.c.h.b16 %v1463
  %v1557 = vunpack.c.l.b16 %v1464
  %v1558 = vunpack.c.h.b16 %v1464
  %v1559 = vunpack.c.l.b16 %v1465
  %v1560 = vunpack.c.h.b16 %v1465
  %v1561 = vunpack.c.l.b16 %v1466
  %v1562 = vunpack.c.h.b16 %v1466
  %v1563 = vpack.c.b16 %v1503, %v1499
  %v1564 = vpack.c.b16 %v1504, %v1500
  %v1565 = vpack.c.b16 %v1505, %v1501
  %v1566 = vpack.c.b16 %v1506, %v1502
  %v1567 = vpack.c.b16 %v1511, %v1507
  %v1568 = vpack.c.b16 %v1512, %v1508
  %v1569 = vpack.c.b16 %v1513, %v1509
  %v1570 = vpack.c.b16 %v1514, %v1510
  %v1571 = vpack.c.b16 %v1519, %v1515
  %v1572 = vpack.c.b16 %v1520, %v1516
  %v1573 = vpack.c.b16 %v1521, %v1517
  %v1574 = vpack.c.b16 %v1522, %v1518
  %v1575 = vpack.c.b16 %v1527, %v1523
  %v1576 = vpack.c.b16 %v1528, %v1524
  %v1577 = vpack.c.b16 %v1529, %v1525
  %v1578 = vpack.c.b16 %v1530, %v1526
  %v1579 = vpack.c.b16 %v1535, %v1531
  %v1580 = vpack.c.b16 %v1536, %v1532
  %v1581 = vpack.c.b16 %v1537, %v1533
  %v1582 = vpack.c.b16 %v1538, %v1534
  %v1583 = vpack.c.b16 %v1543, %v1539
  %v1584 = vpack.c.b16 %v1544, %v1540
  %v1585 = vpack.c.b16 %v1545, %v1541
  %v1586 = vpack.c.b16 %v1546, %v1542
  %v1587 = vpack.c.b16 %v1551, %v1547
  %v1588 = vpack.c.b16 %v1552, %v1548
  %v1589 = vpack.c.b16 %v1553, %v1549
  %v1590 = vpack.c.b16 %v1554, %v1550
  %v1591 = vpack.c.b16 %v1559, %v1555
  %v1592 = vpack.c.b16 %v1560, %v1556
  %v1593 = vpack.c.b16 %v1561, %v1557
  %v1594 = vpack.c.b16 %v1562, %v1558
  %1627 = vmatprep.subr.bf16.mxu0 0
  %1628 = vmatpush1.bf16.msra.mxu0 %v402
  %1629 = vmatprep.subr.bf16.mxu0 0
  %1630 = vmatpush1.bf16.msra.mxu0 %v403
  %1631 = vmatprep.subr.bf16.mxu0 0
  %1632 = vmatpush1.bf16.msra.mxu0 %v404
  %1633 = vmatprep.subr.bf16.mxu0 0
  %1634 = vmatpush1.bf16.msra.mxu0 %v405
  %1635 = vmatprep.subr.bf16.mxu0 0
  %1636 = vmatpush1.bf16.msra.mxu0 %v406
  %1637 = vmatprep.subr.bf16.mxu0 0
  %1638 = vmatpush1.bf16.msra.mxu0 %v407
  %1639 = vmatprep.subr.bf16.mxu0 0
  %1640 = vmatpush1.bf16.msra.mxu0 %v408
  %1641 = vmatprep.subr.bf16.mxu0 0
  %1642 = vmatpush1.bf16.msra.mxu0 %v409
  %1643 = vmatprep.subr.bf16.mxu0 0
  %1644 = vmatpush1.bf16.msra.mxu0 %v410
  %1645 = vmatprep.subr.bf16.mxu0 0
  %1646 = vmatpush1.bf16.msra.mxu0 %v411
  %1647 = vmatprep.subr.bf16.mxu0 0
  %1648 = vmatpush1.bf16.msra.mxu0 %v412
  %1649 = vmatprep.subr.bf16.mxu0 0
  %1650 = vmatpush1.bf16.msra.mxu0 %v413
  %1651 = vmatprep.subr.bf16.mxu0 0
  %1652 = vmatpush1.bf16.msra.mxu0 %v414
  %1653 = vmatprep.subr.bf16.mxu0 0
  %1654 = vmatpush1.bf16.msra.mxu0 %v415
  %1655 = vmatprep.subr.bf16.mxu0 0
  %1656 = vmatpush1.bf16.msra.mxu0 %v416
  %1657 = vmatprep.subr.bf16.mxu0 0
  %1658 = vmatpush1.bf16.msra.mxu0 %v417
  %1659 = vmatprep.mubr.bf16.mxu0 %v1564
  %1660 = vmatmul.mubr.bf16.gmra.mrb[0].mxu0 %v1563
  %v1661 = vpop.f32.mrb[0].mxu0
  %v1662 = vadd.f32 0.0, %v1661
  %v1663 = vpop.f32.mrb[0].mxu0
  %v1664 = vpop.f32.mrb[0].mxu0
  %v1665 = vadd.f32 0.0, %v1664
  %v1666 = vpop.f32.mrb[0].mxu0
  %1667 = vmatprep.mubr.bf16.mxu0 %v1568
  %1668 = vmatmul.mubr.bf16.gmra.mrb[0].mxu0 %v1567
  %v1669 = vpop.f32.mrb[0].mxu0
  %v1670 = vadd.f32 0.0, %v1669
  %v1671 = vpop.f32.mrb[0].mxu0
  %v1672 = vpop.f32.mrb[0].mxu0
  %v1673 = vadd.f32 0.0, %v1672
  %v1674 = vpop.f32.mrb[0].mxu0
  %1675 = vmatprep.mubr.bf16.mxu0 %v1572
  %1676 = vmatmul.mubr.bf16.gmra.mrb[0].mxu0 %v1571
  %v1677 = vpop.f32.mrb[0].mxu0
  %v1678 = vadd.f32 0.0, %v1677
  %v1679 = vpop.f32.mrb[0].mxu0
  %v1680 = vpop.f32.mrb[0].mxu0
  %v1681 = vadd.f32 0.0, %v1680
  %v1682 = vpop.f32.mrb[0].mxu0
  %1683 = vmatprep.mubr.bf16.mxu0 %v1576
  %1684 = vmatmul.mubr.bf16.gmra.mrb[0].mxu0 %v1575
  %v1685 = vpop.f32.mrb[0].mxu0
  %v1686 = vadd.f32 0.0, %v1685
  %v1687 = vpop.f32.mrb[0].mxu0
  %v1688 = vpop.f32.mrb[0].mxu0
  %v1689 = vadd.f32 0.0, %v1688
  %v1690 = vpop.f32.mrb[0].mxu0
  %1691 = vmatprep.mubr.bf16.mxu0 %v1580
  %1692 = vmatmul.mubr.bf16.gmra.mrb[0].mxu0 %v1579
  %v1693 = vpop.f32.mrb[0].mxu0
  %v1694 = vadd.f32 0.0, %v1693
  %v1695 = vpop.f32.mrb[0].mxu0
  %v1696 = vpop.f32.mrb[0].mxu0
  %v1697 = vadd.f32 0.0, %v1696
  %v1698 = vpop.f32.mrb[0].mxu0
  %1699 = vmatprep.mubr.bf16.mxu0 %v1584
  %1700 = vmatmul.mubr.bf16.gmra.mrb[0].mxu0 %v1583
  %v1701 = vpop.f32.mrb[0].mxu0
  %v1702 = vadd.f32 0.0, %v1701
  %v1703 = vpop.f32.mrb[0].mxu0
  %v1704 = vpop.f32.mrb[0].mxu0
  %v1705 = vadd.f32 0.0, %v1704
  %v1706 = vpop.f32.mrb[0].mxu0
  %1707 = vmatprep.mubr.bf16.mxu0 %v1588
  %1708 = vmatmul.mubr.bf16.gmra.mrb[0].mxu0 %v1587
  %v1709 = vpop.f32.mrb[0].mxu0
  %v1710 = vadd.f32 0.0, %v1709
  %v1711 = vpop.f32.mrb[0].mxu0
  %v1712 = vpop.f32.mrb[0].mxu0
  %v1713 = vadd.f32 0.0, %v1712
  %v1714 = vpop.f32.mrb[0].mxu0
  %1715 = vmatprep.mubr.bf16.mxu0 %v1592
  %1716 = vmatmul.mubr.bf16.gmra.mrb[0].mxu0 %v1591
  %v1717 = vpop.f32.mrb[0].mxu0
  %v1718 = vadd.f32 0.0, %v1717
  %v1719 = vpop.f32.mrb[0].mxu0
  %v1720 = vpop.f32.mrb[0].mxu0
  %v1721 = vadd.f32 0.0, %v1720
  %v1722 = vpop.f32.mrb[0].mxu0
  %1723 = vdwg.mxu0
  %1724 = vmatprep.subr.bf16.mxu0 0
  %1725 = vmatpush1.bf16.msra.mxu0 %v418
  %1726 = vmatprep.subr.bf16.mxu0 0
  %1727 = vmatpush1.bf16.msra.mxu0 %v419
  %1728 = vmatprep.subr.bf16.mxu0 0
  %1729 = vmatpush1.bf16.msra.mxu0 %v420
  %1730 = vmatprep.subr.bf16.mxu0 0
  %1731 = vmatpush1.bf16.msra.mxu0 %v421
  %1732 = vmatprep.subr.bf16.mxu0 0
  %1733 = vmatpush1.bf16.msra.mxu0 %v422
  %1734 = vmatprep.subr.bf16.mxu0 0
  %1735 = vmatpush1.bf16.msra.mxu0 %v423
  %1736 = vmatprep.subr.bf16.mxu0 0
  %1737 = vmatpush1.bf16.msra.mxu0 %v424
  %1738 = vmatprep.subr.bf16.mxu0 0
  %1739 = vmatpush1.bf16.msra.mxu0 %v425
  %1740 = vmatprep.subr.bf16.mxu0 0
  %1741 = vmatpush1.bf16.msra.mxu0 %v426
  %1742 = vmatprep.subr.bf16.mxu0 0
  %1743 = vmatpush1.bf16.msra.mxu0 %v427
  %1744 = vmatprep.subr.bf16.mxu0 0
  %1745 = vmatpush1.bf16.msra.mxu0 %v428
  %1746 = vmatprep.subr.bf16.mxu0 0
  %1747 = vmatpush1.bf16.msra.mxu0 %v429
  %1748 = vmatprep.subr.bf16.mxu0 0
  %1749 = vmatpush1.bf16.msra.mxu0 %v430
  %1750 = vmatprep.subr.bf16.mxu0 0
  %1751 = vmatpush1.bf16.msra.mxu0 %v431
  %1752 = vmatprep.subr.bf16.mxu0 0
  %1753 = vmatpush1.bf16.msra.mxu0 %v432
  %1754 = vmatprep.subr.bf16.mxu0 0
  %1755 = vmatpush1.bf16.msra.mxu0 %v433
  %1756 = vmatprep.mubr.bf16.mxu0 %v1566
  %1757 = vmatmul.mubr.bf16.gmra.mrb[0].mxu0 %v1565
  %v1758 = vpop.f32.mrb[0].mxu0
  %v1759 = vadd.f32 %v1662, %v1758
  %v1760 = vpop.f32.mrb[0].mxu0
  %v1761 = vpop.f32.mrb[0].mxu0
  %v1762 = vadd.f32 %v1665, %v1761
  %v1763 = vpop.f32.mrb[0].mxu0
  %1764 = vmatprep.mubr.bf16.mxu0 %v1570
  %1765 = vmatmul.mubr.bf16.gmra.mrb[0].mxu0 %v1569
  %v1766 = vpop.f32.mrb[0].mxu0
  %v1767 = vadd.f32 %v1670, %v1766
  %v1768 = vpop.f32.mrb[0].mxu0
  %v1769 = vpop.f32.mrb[0].mxu0
  %v1770 = vadd.f32 %v1673, %v1769
  %v1771 = vpop.f32.mrb[0].mxu0
  %1772 = vmatprep.mubr.bf16.mxu0 %v1574
  %1773 = vmatmul.mubr.bf16.gmra.mrb[0].mxu0 %v1573
  %v1774 = vpop.f32.mrb[0].mxu0
  %v1775 = vadd.f32 %v1678, %v1774
  %v1776 = vpop.f32.mrb[0].mxu0
  %v1777 = vpop.f32.mrb[0].mxu0
  %v1778 = vadd.f32 %v1681, %v1777
  %v1779 = vpop.f32.mrb[0].mxu0
  %1780 = vmatprep.mubr.bf16.mxu0 %v1578
  %1781 = vmatmul.mubr.bf16.gmra.mrb[0].mxu0 %v1577
  %v1782 = vpop.f32.mrb[0].mxu0
  %v1783 = vadd.f32 %v1686, %v1782
  %v1784 = vpop.f32.mrb[0].mxu0
  %v1785 = vpop.f32.mrb[0].mxu0
  %v1786 = vadd.f32 %v1689, %v1785
  %v1787 = vpop.f32.mrb[0].mxu0
  %1788 = vmatprep.mubr.bf16.mxu0 %v1582
  %1789 = vmatmul.mubr.bf16.gmra.mrb[0].mxu0 %v1581
  %v1790 = vpop.f32.mrb[0].mxu0
  %v1791 = vadd.f32 %v1694, %v1790
  %v1792 = vpop.f32.mrb[0].mxu0
  %v1793 = vpop.f32.mrb[0].mxu0
  %v1794 = vadd.f32 %v1697, %v1793
  %v1795 = vpop.f32.mrb[0].mxu0
  %1796 = vmatprep.mubr.bf16.mxu0 %v1586
  %1797 = vmatmul.mubr.bf16.gmra.mrb[0].mxu0 %v1585
  %v1798 = vpop.f32.mrb[0].mxu0
  %v1799 = vadd.f32 %v1702, %v1798
  %v1800 = vpop.f32.mrb[0].mxu0
  %v1801 = vpop.f32.mrb[0].mxu0
  %v1802 = vadd.f32 %v1705, %v1801
  %v1803 = vpop.f32.mrb[0].mxu0
  %1804 = vmatprep.mubr.bf16.mxu0 %v1590
  %1805 = vmatmul.mubr.bf16.gmra.mrb[0].mxu0 %v1589
  %v1806 = vpop.f32.mrb[0].mxu0
  %v1807 = vadd.f32 %v1710, %v1806
  %v1808 = vpop.f32.mrb[0].mxu0
  %v1809 = vpop.f32.mrb[0].mxu0
  %v1810 = vadd.f32 %v1713, %v1809
  %v1811 = vpop.f32.mrb[0].mxu0
  %1812 = vmatprep.mubr.bf16.mxu0 %v1594
  %1813 = vmatmul.mubr.bf16.gmra.mrb[0].mxu0 %v1593
  %v1814 = vpop.f32.mrb[0].mxu0
  %v1815 = vadd.f32 %v1718, %v1814
  %v1816 = vpop.f32.mrb[0].mxu0
  %v1817 = vpop.f32.mrb[0].mxu0
  %v1818 = vadd.f32 %v1721, %v1817
  %v1819 = vpop.f32.mrb[0].mxu0
  %1820 = vdwg.mxu0
  %vm1821 = vcmask 261120
  %v1822 = vsel %vm1821, %v598, 0.0
  %v1823 = vsel %vm1821, %v601, 0.0
  %v1824 = vadd.f32 %v1822, %v1823
  %v1825 = vsel %vm1821, %v606, 0.0
  %v1826 = vadd.f32 %v1824, %v1825
  %v1827 = vsel %vm1821, %v609, 0.0
  %v1828 = vadd.f32 %v1826, %v1827
  %v1829 = vsel %vm1821, %v614, 0.0
  %v1830 = vadd.f32 %v1828, %v1829
  %v1831 = vsel %vm1821, %v617, 0.0
  %v1832 = vadd.f32 %v1830, %v1831
  %v1833 = vsel %vm1821, %v622, 0.0
  %v1834 = vadd.f32 %v1832, %v1833
  %v1835 = vsel %vm1821, %v625, 0.0
  %v1836 = vadd.f32 %v1834, %v1835
  %v1837 = vsel %vm1821, %v630, 0.0
  %v1838 = vadd.f32 %v1836, %v1837
  %v1839 = vsel %vm1821, %v633, 0.0
  %v1840 = vadd.f32 %v1838, %v1839
  %v1841 = vsel %vm1821, %v638, 0.0
  %v1842 = vadd.f32 %v1840, %v1841
  %v1843 = vsel %vm1821, %v641, 0.0
  %v1844 = vadd.f32 %v1842, %v1843
  %v1845 = vsel %vm1821, %v646, 0.0
  %v1846 = vadd.f32 %v1844, %v1845
  %v1847 = vsel %vm1821, %v649, 0.0
  %v1848 = vadd.f32 %v1846, %v1847
  %v1849 = vsel %vm1821, %v654, 0.0
  %v1850 = vadd.f32 %v1848, %v1849
  %v1851 = vsel %vm1821, %v657, 0.0
  %v1852 = vadd.f32 %v1850, %v1851
  %v1853 = vrot.slane %v1852, 4
  %v1854 = vadd.f32 %v1852, %v1853
  %v1855 = vrot.slane %v1854, 2
  %v1856 = vadd.f32 %v1854, %v1855
  %v1857 = vrot.slane %v1856, 1
  %v1858 = vadd.f32 %v1856, %v1857
  %v1859 = vsel %vm1821, %v985, 0.0
  %v1860 = vsel %vm1821, %v988, 0.0
  %v1861 = vadd.f32 %v1859, %v1860
  %v1862 = vsel %vm1821, %v993, 0.0
  %v1863 = vadd.f32 %v1861, %v1862
  %v1864 = vsel %vm1821, %v996, 0.0
  %v1865 = vadd.f32 %v1863, %v1864
  %v1866 = vsel %vm1821, %v1001, 0.0
  %v1867 = vadd.f32 %v1865, %v1866
  %v1868 = vsel %vm1821, %v1004, 0.0
  %v1869 = vadd.f32 %v1867, %v1868
  %v1870 = vsel %vm1821, %v1009, 0.0
  %v1871 = vadd.f32 %v1869, %v1870
  %v1872 = vsel %vm1821, %v1012, 0.0
  %v1873 = vadd.f32 %v1871, %v1872
  %v1874 = vsel %vm1821, %v1017, 0.0
  %v1875 = vadd.f32 %v1873, %v1874
  %v1876 = vsel %vm1821, %v1020, 0.0
  %v1877 = vadd.f32 %v1875, %v1876
  %v1878 = vsel %vm1821, %v1025, 0.0
  %v1879 = vadd.f32 %v1877, %v1878
  %v1880 = vsel %vm1821, %v1028, 0.0
  %v1881 = vadd.f32 %v1879, %v1880
  %v1882 = vsel %vm1821, %v1033, 0.0
  %v1883 = vadd.f32 %v1881, %v1882
  %v1884 = vsel %vm1821, %v1036, 0.0
  %v1885 = vadd.f32 %v1883, %v1884
  %v1886 = vsel %vm1821, %v1041, 0.0
  %v1887 = vadd.f32 %v1885, %v1886
  %v1888 = vsel %vm1821, %v1044, 0.0
  %v1889 = vadd.f32 %v1887, %v1888
  %v1890 = vrot.slane %v1889, 4
  %v1891 = vadd.f32 %v1889, %v1890
  %v1892 = vrot.slane %v1891, 2
  %v1893 = vadd.f32 %v1891, %v1892
  %v1894 = vrot.slane %v1893, 1
  %v1895 = vadd.f32 %v1893, %v1894
  %v1896 = vadd.f32 %v1858, %v1895
  %v1897 = vsel %vm1821, %v1372, 0.0
  %v1898 = vsel %vm1821, %v1375, 0.0
  %v1899 = vadd.f32 %v1897, %v1898
  %v1900 = vsel %vm1821, %v1380, 0.0
  %v1901 = vadd.f32 %v1899, %v1900
  %v1902 = vsel %vm1821, %v1383, 0.0
  %v1903 = vadd.f32 %v1901, %v1902
  %v1904 = vsel %vm1821, %v1388, 0.0
  %v1905 = vadd.f32 %v1903, %v1904
  %v1906 = vsel %vm1821, %v1391, 0.0
  %v1907 = vadd.f32 %v1905, %v1906
  %v1908 = vsel %vm1821, %v1396, 0.0
  %v1909 = vadd.f32 %v1907, %v1908
  %v1910 = vsel %vm1821, %v1399, 0.0
  %v1911 = vadd.f32 %v1909, %v1910
  %v1912 = vsel %vm1821, %v1404, 0.0
  %v1913 = vadd.f32 %v1911, %v1912
  %v1914 = vsel %vm1821, %v1407, 0.0
  %v1915 = vadd.f32 %v1913, %v1914
  %v1916 = vsel %vm1821, %v1412, 0.0
  %v1917 = vadd.f32 %v1915, %v1916
  %v1918 = vsel %vm1821, %v1415, 0.0
  %v1919 = vadd.f32 %v1917, %v1918
  %v1920 = vsel %vm1821, %v1420, 0.0
  %v1921 = vadd.f32 %v1919, %v1920
  %v1922 = vsel %vm1821, %v1423, 0.0
  %v1923 = vadd.f32 %v1921, %v1922
  %v1924 = vsel %vm1821, %v1428, 0.0
  %v1925 = vadd.f32 %v1923, %v1924
  %v1926 = vsel %vm1821, %v1431, 0.0
  %v1927 = vadd.f32 %v1925, %v1926
  %v1928 = vrot.slane %v1927, 4
  %v1929 = vadd.f32 %v1927, %v1928
  %v1930 = vrot.slane %v1929, 2
  %v1931 = vadd.f32 %v1929, %v1930
  %v1932 = vrot.slane %v1931, 1
  %v1933 = vadd.f32 %v1931, %v1932
  %v1934 = vadd.f32 %v1896, %v1933
  %v1935 = vsel %vm1821, %v1759, 0.0
  %v1936 = vsel %vm1821, %v1762, 0.0
  %v1937 = vadd.f32 %v1935, %v1936
  %v1938 = vsel %vm1821, %v1767, 0.0
  %v1939 = vadd.f32 %v1937, %v1938
  %v1940 = vsel %vm1821, %v1770, 0.0
  %v1941 = vadd.f32 %v1939, %v1940
  %v1942 = vsel %vm1821, %v1775, 0.0
  %v1943 = vadd.f32 %v1941, %v1942
  %v1944 = vsel %vm1821, %v1778, 0.0
  %v1945 = vadd.f32 %v1943, %v1944
  %v1946 = vsel %vm1821, %v1783, 0.0
  %v1947 = vadd.f32 %v1945, %v1946
  %v1948 = vsel %vm1821, %v1786, 0.0
  %v1949 = vadd.f32 %v1947, %v1948
  %v1950 = vsel %vm1821, %v1791, 0.0
  %v1951 = vadd.f32 %v1949, %v1950
  %v1952 = vsel %vm1821, %v1794, 0.0
  %v1953 = vadd.f32 %v1951, %v1952
  %v1954 = vsel %vm1821, %v1799, 0.0
  %v1955 = vadd.f32 %v1953, %v1954
  %v1956 = vsel %vm1821, %v1802, 0.0
  %v1957 = vadd.f32 %v1955, %v1956
  %v1958 = vsel %vm1821, %v1807, 0.0
  %v1959 = vadd.f32 %v1957, %v1958
  %v1960 = vsel %vm1821, %v1810, 0.0
  %v1961 = vadd.f32 %v1959, %v1960
  %v1962 = vsel %vm1821, %v1815, 0.0
  %v1963 = vadd.f32 %v1961, %v1962
  %v1964 = vsel %vm1821, %v1818, 0.0
  %v1965 = vadd.f32 %v1963, %v1964
  %v1966 = vrot.slane %v1965, 4
  %v1967 = vadd.f32 %v1965, %v1966
  %v1968 = vrot.slane %v1967, 2
  %v1969 = vadd.f32 %v1967, %v1968
  %v1970 = vrot.slane %v1969, 1
  %v1971 = vadd.f32 %v1969, %v1970
  %v1972 = vadd.f32 %v1934, %v1971
  %v1973 = vmul.f32 %v598, %v598
  %v1974 = vmul.f32 %v601, %v601
  %v1975 = vmul.f32 %v606, %v606
  %v1976 = vmul.f32 %v609, %v609
  %v1977 = vmul.f32 %v614, %v614
  %v1978 = vmul.f32 %v617, %v617
  %v1979 = vmul.f32 %v622, %v622
  %v1980 = vmul.f32 %v625, %v625
  %v1981 = vmul.f32 %v630, %v630
  %v1982 = vmul.f32 %v633, %v633
  %v1983 = vmul.f32 %v638, %v638
  %v1984 = vmul.f32 %v641, %v641
  %v1985 = vmul.f32 %v646, %v646
  %v1986 = vmul.f32 %v649, %v649
  %v1987 = vmul.f32 %v654, %v654
  %v1988 = vmul.f32 %v657, %v657
  %v1989 = vsel %vm1821, %v1973, 0.0
  %v1990 = vsel %vm1821, %v1974, 0.0
  %v1991 = vadd.f32 %v1989, %v1990
  %v1992 = vsel %vm1821, %v1975, 0.0
  %v1993 = vadd.f32 %v1991, %v1992
  %v1994 = vsel %vm1821, %v1976, 0.0
  %v1995 = vadd.f32 %v1993, %v1994
  %v1996 = vsel %vm1821, %v1977, 0.0
  %v1997 = vadd.f32 %v1995, %v1996
  %v1998 = vsel %vm1821, %v1978, 0.0
  %v1999 = vadd.f32 %v1997, %v1998
  %v2000 = vsel %vm1821, %v1979, 0.0
  %v2001 = vadd.f32 %v1999, %v2000
  %v2002 = vsel %vm1821, %v1980, 0.0
  %v2003 = vadd.f32 %v2001, %v2002
  %v2004 = vsel %vm1821, %v1981, 0.0
  %v2005 = vadd.f32 %v2003, %v2004
  %v2006 = vsel %vm1821, %v1982, 0.0
  %v2007 = vadd.f32 %v2005, %v2006
  %v2008 = vsel %vm1821, %v1983, 0.0
  %v2009 = vadd.f32 %v2007, %v2008
  %v2010 = vsel %vm1821, %v1984, 0.0
  %v2011 = vadd.f32 %v2009, %v2010
  %v2012 = vsel %vm1821, %v1985, 0.0
  %v2013 = vadd.f32 %v2011, %v2012
  %v2014 = vsel %vm1821, %v1986, 0.0
  %v2015 = vadd.f32 %v2013, %v2014
  %v2016 = vsel %vm1821, %v1987, 0.0
  %v2017 = vadd.f32 %v2015, %v2016
  %v2018 = vsel %vm1821, %v1988, 0.0
  %v2019 = vadd.f32 %v2017, %v2018
  %v2020 = vrot.slane %v2019, 4
  %v2021 = vadd.f32 %v2019, %v2020
  %v2022 = vrot.slane %v2021, 2
  %v2023 = vadd.f32 %v2021, %v2022
  %v2024 = vrot.slane %v2023, 1
  %v2025 = vadd.f32 %v2023, %v2024
  %v2026 = vmul.f32 %v985, %v985
  %v2027 = vmul.f32 %v988, %v988
  %v2028 = vmul.f32 %v993, %v993
  %v2029 = vmul.f32 %v996, %v996
  %v2030 = vmul.f32 %v1001, %v1001
  %v2031 = vmul.f32 %v1004, %v1004
  %v2032 = vmul.f32 %v1009, %v1009
  %v2033 = vmul.f32 %v1012, %v1012
  %v2034 = vmul.f32 %v1017, %v1017
  %v2035 = vmul.f32 %v1020, %v1020
  %v2036 = vmul.f32 %v1025, %v1025
  %v2037 = vmul.f32 %v1028, %v1028
  %v2038 = vmul.f32 %v1033, %v1033
  %v2039 = vmul.f32 %v1036, %v1036
  %v2040 = vmul.f32 %v1041, %v1041
  %v2041 = vmul.f32 %v1044, %v1044
  %v2042 = vsel %vm1821, %v2026, 0.0
  %v2043 = vsel %vm1821, %v2027, 0.0
  %v2044 = vadd.f32 %v2042, %v2043
  %v2045 = vsel %vm1821, %v2028, 0.0
  %v2046 = vadd.f32 %v2044, %v2045
  %v2047 = vsel %vm1821, %v2029, 0.0
  %v2048 = vadd.f32 %v2046, %v2047
  %v2049 = vsel %vm1821, %v2030, 0.0
  %v2050 = vadd.f32 %v2048, %v2049
  %v2051 = vsel %vm1821, %v2031, 0.0
  %v2052 = vadd.f32 %v2050, %v2051
  %v2053 = vsel %vm1821, %v2032, 0.0
  %v2054 = vadd.f32 %v2052, %v2053
  %v2055 = vsel %vm1821, %v2033, 0.0
  %v2056 = vadd.f32 %v2054, %v2055
  %v2057 = vsel %vm1821, %v2034, 0.0
  %v2058 = vadd.f32 %v2056, %v2057
  %v2059 = vsel %vm1821, %v2035, 0.0
  %v2060 = vadd.f32 %v2058, %v2059
  %v2061 = vsel %vm1821, %v2036, 0.0
  %v2062 = vadd.f32 %v2060, %v2061
  %v2063 = vsel %vm1821, %v2037, 0.0
  %v2064 = vadd.f32 %v2062, %v2063
  %v2065 = vsel %vm1821, %v2038, 0.0
  %v2066 = vadd.f32 %v2064, %v2065
  %v2067 = vsel %vm1821, %v2039, 0.0
  %v2068 = vadd.f32 %v2066, %v2067
  %v2069 = vsel %vm1821, %v2040, 0.0
  %v2070 = vadd.f32 %v2068, %v2069
  %v2071 = vsel %vm1821, %v2041, 0.0
  %v2072 = vadd.f32 %v2070, %v2071
  %v2073 = vrot.slane %v2072, 4
  %v2074 = vadd.f32 %v2072, %v2073
  %v2075 = vrot.slane %v2074, 2
  %v2076 = vadd.f32 %v2074, %v2075
  %v2077 = vrot.slane %v2076, 1
  %v2078 = vadd.f32 %v2076, %v2077
  %v2079 = vadd.f32 %v2025, %v2078
  %v2080 = vmul.f32 %v1372, %v1372
  %v2081 = vmul.f32 %v1375, %v1375
  %v2082 = vmul.f32 %v1380, %v1380
  %v2083 = vmul.f32 %v1383, %v1383
  %v2084 = vmul.f32 %v1388, %v1388
  %v2085 = vmul.f32 %v1391, %v1391
  %v2086 = vmul.f32 %v1396, %v1396
  %v2087 = vmul.f32 %v1399, %v1399
  %v2088 = vmul.f32 %v1404, %v1404
  %v2089 = vmul.f32 %v1407, %v1407
  %v2090 = vmul.f32 %v1412, %v1412
  %v2091 = vmul.f32 %v1415, %v1415
  %v2092 = vmul.f32 %v1420, %v1420
  %v2093 = vmul.f32 %v1423, %v1423
  %v2094 = vmul.f32 %v1428, %v1428
  %v2095 = vmul.f32 %v1431, %v1431
  %v2096 = vsel %vm1821, %v2080, 0.0
  %v2097 = vsel %vm1821, %v2081, 0.0
  %v2098 = vadd.f32 %v2096, %v2097
  %v2099 = vsel %vm1821, %v2082, 0.0
  %v2100 = vadd.f32 %v2098, %v2099
  %v2101 = vsel %vm1821, %v2083, 0.0
  %v2102 = vadd.f32 %v2100, %v2101
  %v2103 = vsel %vm1821, %v2084, 0.0
  %v2104 = vadd.f32 %v2102, %v2103
  %v2105 = vsel %vm1821, %v2085, 0.0
  %v2106 = vadd.f32 %v2104, %v2105
  %v2107 = vsel %vm1821, %v2086, 0.0
  %v2108 = vadd.f32 %v2106, %v2107
  %v2109 = vsel %vm1821, %v2087, 0.0
  %v2110 = vadd.f32 %v2108, %v2109
  %v2111 = vsel %vm1821, %v2088, 0.0
  %v2112 = vadd.f32 %v2110, %v2111
  %v2113 = vsel %vm1821, %v2089, 0.0
  %v2114 = vadd.f32 %v2112, %v2113
  %v2115 = vsel %vm1821, %v2090, 0.0
  %v2116 = vadd.f32 %v2114, %v2115
  %v2117 = vsel %vm1821, %v2091, 0.0
  %v2118 = vadd.f32 %v2116, %v2117
  %v2119 = vsel %vm1821, %v2092, 0.0
  %v2120 = vadd.f32 %v2118, %v2119
  %v2121 = vsel %vm1821, %v2093, 0.0
  %v2122 = vadd.f32 %v2120, %v2121
  %v2123 = vsel %vm1821, %v2094, 0.0
  %v2124 = vadd.f32 %v2122, %v2123
  %v2125 = vsel %vm1821, %v2095, 0.0
  %v2126 = vadd.f32 %v2124, %v2125
  %v2127 = vrot.slane %v2126, 4
  %v2128 = vadd.f32 %v2126, %v2127
  %v2129 = vrot.slane %v2128, 2
  %v2130 = vadd.f32 %v2128, %v2129
  %v2131 = vrot.slane %v2130, 1
  %v2132 = vadd.f32 %v2130, %v2131
  %v2133 = vadd.f32 %v2079, %v2132
  %v2134 = vmul.f32 %v1759, %v1759
  %v2135 = vmul.f32 %v1762, %v1762
  %v2136 = vmul.f32 %v1767, %v1767
  %v2137 = vmul.f32 %v1770, %v1770
  %v2138 = vmul.f32 %v1775, %v1775
  %v2139 = vmul.f32 %v1778, %v1778
  %v2140 = vmul.f32 %v1783, %v1783
  %v2141 = vmul.f32 %v1786, %v1786
  %v2142 = vmul.f32 %v1791, %v1791
  %v2143 = vmul.f32 %v1794, %v1794
  %v2144 = vmul.f32 %v1799, %v1799
  %v2145 = vmul.f32 %v1802, %v1802
  %v2146 = vmul.f32 %v1807, %v1807
  %v2147 = vmul.f32 %v1810, %v1810
  %v2148 = vmul.f32 %v1815, %v1815
  %v2149 = vmul.f32 %v1818, %v1818
  %v2150 = vsel %vm1821, %v2134, 0.0
  %v2151 = vsel %vm1821, %v2135, 0.0
  %v2152 = vadd.f32 %v2150, %v2151
  %v2153 = vsel %vm1821, %v2136, 0.0
  %v2154 = vadd.f32 %v2152, %v2153
  %v2155 = vsel %vm1821, %v2137, 0.0
  %v2156 = vadd.f32 %v2154, %v2155
  %v2157 = vsel %vm1821, %v2138, 0.0
  %v2158 = vadd.f32 %v2156, %v2157
  %v2159 = vsel %vm1821, %v2139, 0.0
  %v2160 = vadd.f32 %v2158, %v2159
  %v2161 = vsel %vm1821, %v2140, 0.0
  %v2162 = vadd.f32 %v2160, %v2161
  %v2163 = vsel %vm1821, %v2141, 0.0
  %v2164 = vadd.f32 %v2162, %v2163
  %v2165 = vsel %vm1821, %v2142, 0.0
  %v2166 = vadd.f32 %v2164, %v2165
  %v2167 = vsel %vm1821, %v2143, 0.0
  %v2168 = vadd.f32 %v2166, %v2167
  %v2169 = vsel %vm1821, %v2144, 0.0
  %v2170 = vadd.f32 %v2168, %v2169
  %v2171 = vsel %vm1821, %v2145, 0.0
  %v2172 = vadd.f32 %v2170, %v2171
  %v2173 = vsel %vm1821, %v2146, 0.0
  %v2174 = vadd.f32 %v2172, %v2173
  %v2175 = vsel %vm1821, %v2147, 0.0
  %v2176 = vadd.f32 %v2174, %v2175
  %v2177 = vsel %vm1821, %v2148, 0.0
  %v2178 = vadd.f32 %v2176, %v2177
  %v2179 = vsel %vm1821, %v2149, 0.0
  %v2180 = vadd.f32 %v2178, %v2179
  %v2181 = vrot.slane %v2180, 4
  %v2182 = vadd.f32 %v2180, %v2181
  %v2183 = vrot.slane %v2182, 2
  %v2184 = vadd.f32 %v2182, %v2183
  %v2185 = vrot.slane %v2184, 1
  %v2186 = vadd.f32 %v2184, %v2185
  %v2187 = vadd.f32 %v2133, %v2186
  %v2188 = vrcp.pop 512.0
  %v2189 = vmul.f32 %v1972, %v2188
  %v2190 = vmul.f32 %v2187, %v2188
  %v2191 = vmul.f32 %v2189, %v2189
  %v2192 = vsub.f32 %v2190, %v2191
  %v2193 = vld [vmem:[%s2] sm:$0x1]
  %v2194 = vadd.f32 %v2192, 1e-05
  %v2195 = vrsqrt.pop %v2194
  %v2196 = vmul.f32 %v2193, %v2195
  %v2197 = vld [vmem:[%s3] sm:$0x1]
  %v2198 = vmul.f32 %v2189, %v2196
  %v2199 = vsub.f32 %v2197, %v2198
  %v2201 = vlaneseq
  %v2202 = vshrl.u32 %v2201, 7
  %v2203 = vsub.s32 0, %v2202
  %v2204 = vrot.slane %v2196, %v2203
  %v2206 = vmul.f32 %v598, %v2204
  %v2207 = vmul.f32 %v601, %v2204
  %v2208 = vmul.f32 %v606, %v2204
  %v2209 = vmul.f32 %v609, %v2204
  %v2210 = vmul.f32 %v614, %v2204
  %v2211 = vmul.f32 %v617, %v2204
  %v2212 = vmul.f32 %v622, %v2204
  %v2213 = vmul.f32 %v625, %v2204
  %v2214 = vmul.f32 %v630, %v2204
  %v2215 = vmul.f32 %v633, %v2204
  %v2216 = vmul.f32 %v638, %v2204
  %v2217 = vmul.f32 %v641, %v2204
  %v2218 = vmul.f32 %v646, %v2204
  %v2219 = vmul.f32 %v649, %v2204
  %v2220 = vmul.f32 %v654, %v2204
  %v2221 = vmul.f32 %v657, %v2204
  %v2223 = vlaneseq
  %v2224 = vshrl.u32 %v2223, 7
  %v2225 = vsub.s32 0, %v2224
  %v2226 = vrot.slane %v2199, %v2225
  %v2228 = vadd.f32 %v2206, %v2226
  %v2229 = vadd.f32 %v2207, %v2226
  %v2230 = vadd.f32 %v2208, %v2226
  %v2231 = vadd.f32 %v2209, %v2226
  %v2232 = vadd.f32 %v2210, %v2226
  %v2233 = vadd.f32 %v2211, %v2226
  %v2234 = vadd.f32 %v2212, %v2226
  %v2235 = vadd.f32 %v2213, %v2226
  %v2236 = vadd.f32 %v2214, %v2226
  %v2237 = vadd.f32 %v2215, %v2226
  %v2238 = vadd.f32 %v2216, %v2226
  %v2239 = vadd.f32 %v2217, %v2226
  %v2240 = vadd.f32 %v2218, %v2226
  %v2241 = vadd.f32 %v2219, %v2226
  %v2242 = vadd.f32 %v2220, %v2226
  %v2243 = vadd.f32 %v2221, %v2226
  %v2244 = vmax.f32 %v2228, 0.0
  %v2245 = vmax.f32 %v2229, 0.0
  %v2246 = vmax.f32 %v2230, 0.0
  %v2247 = vmax.f32 %v2231, 0.0
  %v2248 = vmax.f32 %v2232, 0.0
  %v2249 = vmax.f32 %v2233, 0.0
  %v2250 = vmax.f32 %v2234, 0.0
  %v2251 = vmax.f32 %v2235, 0.0
  %v2252 = vmax.f32 %v2236, 0.0
  %v2253 = vmax.f32 %v2237, 0.0
  %v2254 = vmax.f32 %v2238, 0.0
  %v2255 = vmax.f32 %v2239, 0.0
  %v2256 = vmax.f32 %v2240, 0.0
  %v2257 = vmax.f32 %v2241, 0.0
  %v2258 = vmax.f32 %v2242, 0.0
  %v2259 = vmax.f32 %v2243, 0.0
  %v2260 = vmul.f32 %v985, %v2204
  %v2261 = vmul.f32 %v988, %v2204
  %v2262 = vmul.f32 %v993, %v2204
  %v2263 = vmul.f32 %v996, %v2204
  %v2264 = vmul.f32 %v1001, %v2204
  %v2265 = vmul.f32 %v1004, %v2204
  %v2266 = vmul.f32 %v1009, %v2204
  %v2267 = vmul.f32 %v1012, %v2204
  %v2268 = vmul.f32 %v1017, %v2204
  %v2269 = vmul.f32 %v1020, %v2204
  %v2270 = vmul.f32 %v1025, %v2204
  %v2271 = vmul.f32 %v1028, %v2204
  %v2272 = vmul.f32 %v1033, %v2204
  %v2273 = vmul.f32 %v1036, %v2204
  %v2274 = vmul.f32 %v1041, %v2204
  %v2275 = vmul.f32 %v1044, %v2204
  %v2276 = vadd.f32 %v2260, %v2226
  %v2277 = vadd.f32 %v2261, %v2226
  %v2278 = vadd.f32 %v2262, %v2226
  %v2279 = vadd.f32 %v2263, %v2226
  %v2280 = vadd.f32 %v2264, %v2226
  %v2281 = vadd.f32 %v2265, %v2226
  %v2282 = vadd.f32 %v2266, %v2226
  %v2283 = vadd.f32 %v2267, %v2226
  %v2284 = vadd.f32 %v2268, %v2226
  %v2285 = vadd.f32 %v2269, %v2226
  %v2286 = vadd.f32 %v2270, %v2226
  %v2287 = vadd.f32 %v2271, %v2226
  %v2288 = vadd.f32 %v2272, %v2226
  %v2289 = vadd.f32 %v2273, %v2226
  %v2290 = vadd.f32 %v2274, %v2226
  %v2291 = vadd.f32 %v2275, %v2226
  %v2292 = vmax.f32 %v2276, 0.0
  %v2293 = vmax.f32 %v2277, 0.0
  %v2294 = vmax.f32 %v2278, 0.0
  %v2295 = vmax.f32 %v2279, 0.0
  %v2296 = vmax.f32 %v2280, 0.0
  %v2297 = vmax.f32 %v2281, 0.0
  %v2298 = vmax.f32 %v2282, 0.0
  %v2299 = vmax.f32 %v2283, 0.0
  %v2300 = vmax.f32 %v2284, 0.0
  %v2301 = vmax.f32 %v2285, 0.0
  %v2302 = vmax.f32 %v2286, 0.0
  %v2303 = vmax.f32 %v2287, 0.0
  %v2304 = vmax.f32 %v2288, 0.0
  %v2305 = vmax.f32 %v2289, 0.0
  %v2306 = vmax.f32 %v2290, 0.0
  %v2307 = vmax.f32 %v2291, 0.0
  %v2308 = vmul.f32 %v1372, %v2204
  %v2309 = vmul.f32 %v1375, %v2204
  %v2310 = vmul.f32 %v1380, %v2204
  %v2311 = vmul.f32 %v1383, %v2204
  %v2312 = vmul.f32 %v1388, %v2204
  %v2313 = vmul.f32 %v1391, %v2204
  %v2314 = vmul.f32 %v1396, %v2204
  %v2315 = vmul.f32 %v1399, %v2204
  %v2316 = vmul.f32 %v1404, %v2204
  %v2317 = vmul.f32 %v1407, %v2204
  %v2318 = vmul.f32 %v1412, %v2204
  %v2319 = vmul.f32 %v1415, %v2204
  %v2320 = vmul.f32 %v1420, %v2204
  %v2321 = vmul.f32 %v1423, %v2204
  %v2322 = vmul.f32 %v1428, %v2204
  %v2323 = vmul.f32 %v1431, %v2204
  %v2324 = vadd.f32 %v2308, %v2226
  %v2325 = vadd.f32 %v2309, %v2226
  %v2326 = vadd.f32 %v2310, %v2226
  %v2327 = vadd.f32 %v2311, %v2226
  %v2328 = vadd.f32 %v2312, %v2226
  %v2329 = vadd.f32 %v2313, %v2226
  %v2330 = vadd.f32 %v2314, %v2226
  %v2331 = vadd.f32 %v2315, %v2226
  %v2332 = vadd.f32 %v2316, %v2226
  %v2333 = vadd.f32 %v2317, %v2226
  %v2334 = vadd.f32 %v2318, %v2226
  %v2335 = vadd.f32 %v2319, %v2226
  %v2336 = vadd.f32 %v2320, %v2226
  %v2337 = vadd.f32 %v2321, %v2226
  %v2338 = vadd.f32 %v2322, %v2226
  %v2339 = vadd.f32 %v2323, %v2226
  %v2340 = vmax.f32 %v2324, 0.0
  %v2341 = vmax.f32 %v2325, 0.0
  %v2342 = vmax.f32 %v2326, 0.0
  %v2343 = vmax.f32 %v2327, 0.0
  %v2344 = vmax.f32 %v2328, 0.0
  %v2345 = vmax.f32 %v2329, 0.0
  %v2346 = vmax.f32 %v2330, 0.0
  %v2347 = vmax.f32 %v2331, 0.0
  %v2348 = vmax.f32 %v2332, 0.0
  %v2349 = vmax.f32 %v2333, 0.0
  %v2350 = vmax.f32 %v2334, 0.0
  %v2351 = vmax.f32 %v2335, 0.0
  %v2352 = vmax.f32 %v2336, 0.0
  %v2353 = vmax.f32 %v2337, 0.0
  %v2354 = vmax.f32 %v2338, 0.0
  %v2355 = vmax.f32 %v2339, 0.0
  %v2356 = vmul.f32 %v1759, %v2204
  %v2357 = vmul.f32 %v1762, %v2204
  %v2358 = vmul.f32 %v1767, %v2204
  %v2359 = vmul.f32 %v1770, %v2204
  %v2360 = vmul.f32 %v1775, %v2204
  %v2361 = vmul.f32 %v1778, %v2204
  %v2362 = vmul.f32 %v1783, %v2204
  %v2363 = vmul.f32 %v1786, %v2204
  %v2364 = vmul.f32 %v1791, %v2204
  %v2365 = vmul.f32 %v1794, %v2204
  %v2366 = vmul.f32 %v1799, %v2204
  %v2367 = vmul.f32 %v1802, %v2204
  %v2368 = vmul.f32 %v1807, %v2204
  %v2369 = vmul.f32 %v1810, %v2204
  %v2370 = vmul.f32 %v1815, %v2204
  %v2371 = vmul.f32 %v1818, %v2204
  %v2372 = vadd.f32 %v2356, %v2226
  %v2373 = vadd.f32 %v2357, %v2226
  %v2374 = vadd.f32 %v2358, %v2226
  %v2375 = vadd.f32 %v2359, %v2226
  %v2376 = vadd.f32 %v2360, %v2226
  %v2377 = vadd.f32 %v2361, %v2226
  %v2378 = vadd.f32 %v2362, %v2226
  %v2379 = vadd.f32 %v2363, %v2226
  %v2380 = vadd.f32 %v2364, %v2226
  %v2381 = vadd.f32 %v2365, %v2226
  %v2382 = vadd.f32 %v2366, %v2226
  %v2383 = vadd.f32 %v2367, %v2226
  %v2384 = vadd.f32 %v2368, %v2226
  %v2385 = vadd.f32 %v2369, %v2226
  %v2386 = vadd.f32 %v2370, %v2226
  %v2387 = vadd.f32 %v2371, %v2226
  %v2388 = vmax.f32 %v2372, 0.0
  %v2389 = vmax.f32 %v2373, 0.0
  %v2390 = vmax.f32 %v2374, 0.0
  %v2391 = vmax.f32 %v2375, 0.0
  %v2392 = vmax.f32 %v2376, 0.0
  %v2393 = vmax.f32 %v2377, 0.0
  %v2394 = vmax.f32 %v2378, 0.0
  %v2395 = vmax.f32 %v2379, 0.0
  %v2396 = vmax.f32 %v2380, 0.0
  %v2397 = vmax.f32 %v2381, 0.0
  %v2398 = vmax.f32 %v2382, 0.0
  %v2399 = vmax.f32 %v2383, 0.0
  %v2400 = vmax.f32 %v2384, 0.0
  %v2401 = vmax.f32 %v2385, 0.0
  %v2402 = vmax.f32 %v2386, 0.0
  %v2403 = vmax.f32 %v2387, 0.0
  %v2404 = vmax.f32 %v2244, %v2292
  %v2405 = vmax.f32 %v2245, %v2293
  %v2406 = vmax.f32 %v2246, %v2294
  %v2407 = vmax.f32 %v2247, %v2295
  %v2408 = vmax.f32 %v2248, %v2296
  %v2409 = vmax.f32 %v2249, %v2297
  %v2410 = vmax.f32 %v2250, %v2298
  %v2411 = vmax.f32 %v2251, %v2299
  %v2412 = vmax.f32 %v2252, %v2300
  %v2413 = vmax.f32 %v2253, %v2301
  %v2414 = vmax.f32 %v2254, %v2302
  %v2415 = vmax.f32 %v2255, %v2303
  %v2416 = vmax.f32 %v2256, %v2304
  %v2417 = vmax.f32 %v2257, %v2305
  %v2418 = vmax.f32 %v2258, %v2306
  %v2419 = vmax.f32 %v2259, %v2307
  %v2420 = vmax.f32 %v2340, %v2388
  %v2421 = vmax.f32 %v2341, %v2389
  %v2422 = vmax.f32 %v2342, %v2390
  %v2423 = vmax.f32 %v2343, %v2391
  %v2424 = vmax.f32 %v2344, %v2392
  %v2425 = vmax.f32 %v2345, %v2393
  %v2426 = vmax.f32 %v2346, %v2394
  %v2427 = vmax.f32 %v2347, %v2395
  %v2428 = vmax.f32 %v2348, %v2396
  %v2429 = vmax.f32 %v2349, %v2397
  %v2430 = vmax.f32 %v2350, %v2398
  %v2431 = vmax.f32 %v2351, %v2399
  %v2432 = vmax.f32 %v2352, %v2400
  %v2433 = vmax.f32 %v2353, %v2401
  %v2434 = vmax.f32 %v2354, %v2402
  %v2435 = vmax.f32 %v2355, %v2403
  %v2436 = vmax.f32 %v2404, %v2420
  %v2437 = vmax.f32 %v2405, %v2421
  %v2438 = vmax.f32 %v2406, %v2422
  %v2439 = vmax.f32 %v2407, %v2423
  %v2440 = vmax.f32 %v2408, %v2424
  %v2441 = vmax.f32 %v2409, %v2425
  %v2442 = vmax.f32 %v2410, %v2426
  %v2443 = vmax.f32 %v2411, %v2427
  %v2444 = vmax.f32 %v2412, %v2428
  %v2445 = vmax.f32 %v2413, %v2429
  %v2446 = vmax.f32 %v2414, %v2430
  %v2447 = vmax.f32 %v2415, %v2431
  %v2448 = vmax.f32 %v2416, %v2432
  %v2449 = vmax.f32 %v2417, %v2433
  %v2450 = vmax.f32 %v2418, %v2434
  %v2451 = vmax.f32 %v2419, %v2435
  %2452 = vst.msk [vmem:[%s4] sm:$0xff] %vm1821, %v2436
  %2453 = vst.msk [vmem:[%s4 + $0x8] sm:$0xff] %vm1821, %v2437
  %2454 = vst.msk [vmem:[%s4 + $0x10] sm:$0xff] %vm1821, %v2438
  %2455 = vst.msk [vmem:[%s4 + $0x18] sm:$0xff] %vm1821, %v2439
  %2456 = vst.msk [vmem:[%s4 + $0x20] sm:$0xff] %vm1821, %v2440
  %2457 = vst.msk [vmem:[%s4 + $0x28] sm:$0xff] %vm1821, %v2441
  %2458 = vst.msk [vmem:[%s4 + $0x30] sm:$0xff] %vm1821, %v2442
  %2459 = vst.msk [vmem:[%s4 + $0x38] sm:$0xff] %vm1821, %v2443
  %2460 = vst.msk [vmem:[%s4 + $0x40] sm:$0xff] %vm1821, %v2444
  %2461 = vst.msk [vmem:[%s4 + $0x48] sm:$0xff] %vm1821, %v2445
  %2462 = vst.msk [vmem:[%s4 + $0x50] sm:$0xff] %vm1821, %v2446
  %2463 = vst.msk [vmem:[%s4 + $0x58] sm:$0xff] %vm1821, %v2447
  %2464 = vst.msk [vmem:[%s4 + $0x60] sm:$0xff] %vm1821, %v2448
  %2465 = vst.msk [vmem:[%s4 + $0x68] sm:$0xff] %vm1821, %v2449
  %2466 = vst.msk [vmem:[%s4 + $0x70] sm:$0xff] %vm1821, %v2450
  %2467 = vst.msk [vmem:[%s4 + $0x78] sm:$0xff] %vm1821, %v2451
  // Predicated region
  $region18: #{cnn_forward.4} parent=0 // pred_check
    _
  $region19: #{cnn_forward.4} parent=0 // pred_check_branch
    %2469 = sbr.rel (0) target = $region21
  $region20: #{cnn_forward.4} parent=0 // pred_region
    _
  $region21: #{cnn_forward.4} parent=0 // pred_fallthru
    _
  // Predicated region
  $region22: #{cnn_forward.4} parent=0 // pred_check
    _
  $region23: #{cnn_forward.4} parent=0 // pred_check_branch
    %2471 = sbr.rel (0) target = $region25
  $region24: #{cnn_forward.4} parent=0 // pred_region
    _
  $region25: #{cnn_forward.4} parent=0 // pred_fallthru
    _

// kernel: cnn_forward.5
$region0: #{cnn_forward.5}
  #allocation0 [shape = 'u32[]', space=smem, size = 0x4, offset = 0x4, fixed_abs, tag = 'smem constant byte address 0x4 - core index']
  #allocation1 [shape = 'u32[144,128]{1,0:T(1,128)}', space=vmem, size = 0x12000, scoped, tag = 'internal scratch']
  %s0 = inlined_call_operand.vmem [shape: f32[2,2048], index: 0, kind: input, shape index: {}]
  %s1 = inlined_call_operand.vmem [shape: f32[2048,10], index: 1, kind: input, shape index: {}]
  %s2 = inlined_call_operand.vmem [shape: f32[1,10], index: 2, kind: input, shape index: {}]
  %s3 = inlined_call_operand.hbm [shape: f32[2,10], index: 3, kind: output, shape index: {}]
  %s4 = sld [smem:[#allocation0]]
  $region22: #{cnn_forward.5} parent=0
    _
  %s6 = ssub.s32 1, %s4
  %s7 = scalar_select 0, %s6, %s4
  $region1: #{cnn_forward.5} parent=0
    #allocation2 [shape = 'u8[1024]{0}', space=vmem, size = 0x400, scoped, tag = 'output window, operand 0, single buffered']
    #allocation3 [shape = 's32[1]{0}', space=sflag, size = 0x4, scoped, tag = 'scoped memory for cnn_forward.5']
    %8 = vsyncpa [#allocation3], 0
    // Predicated region
    $region2: #{cnn_forward.5} parent=1 // pred_check
      _
    $region3: #{cnn_forward.5} parent=1 // pred_check_branch
      %10 = sbr.rel (0) target = $region5
    $region4: #{cnn_forward.5} parent=1 // pred_region
      _
    $region5: #{cnn_forward.5} parent=1 // pred_fallthru
      _
    // Predicated region
    $region6: #{cnn_forward.5} parent=1 // pred_check
      _
    $region7: #{cnn_forward.5} parent=1 // pred_check_branch
      %12 = sbr.rel (0) target = $region9
    $region8: #{cnn_forward.5} parent=1 // pred_region
      _
    $region9: #{cnn_forward.5} parent=1 // pred_fallthru
      _
    // Predicated region
    $region10: #{cnn_forward.5} parent=1 // pred_check
      _
    $region11: #{cnn_forward.5} parent=1 // pred_check_branch
      %14 = sbr.rel (0) target = $region13
    $region12: #{cnn_forward.5} parent=1 // pred_region
      _
    $region13: #{cnn_forward.5} parent=1 // pred_fallthru
      _
    %v15 = vld [vmem:[%s0] sm:$0xff]
    %v16 = vld [vmem:[%s0 + $0x8] sm:$0xff]
    %v17 = vld [vmem:[%s0 + $0x10] sm:$0xff]
    %v18 = vld [vmem:[%s0 + $0x18] sm:$0xff]
    %v19 = vld [vmem:[%s1] sm:$0xff]
    %v20 = vld [vmem:[%s1 + $0x8] sm:$0xff]
    %v21 = vld [vmem:[%s1 + $0x10] sm:$0xff]
    %v22 = vld [vmem:[%s1 + $0x18] sm:$0xff]
    %v23 = vld [vmem:[%s1 + $0x20] sm:$0xff]
    %v24 = vld [vmem:[%s1 + $0x28] sm:$0xff]
    %v25 = vld [vmem:[%s1 + $0x30] sm:$0xff]
    %v26 = vld [vmem:[%s1 + $0x38] sm:$0xff]
    %v27 = vld [vmem:[%s1 + $0x40] sm:$0xff]
    %v28 = vld [vmem:[%s1 + $0x48] sm:$0xff]
    %v29 = vld [vmem:[%s1 + $0x50] sm:$0xff]
    %v30 = vld [vmem:[%s1 + $0x58] sm:$0xff]
    %v31 = vld [vmem:[%s1 + $0x60] sm:$0xff]
    %v32 = vld [vmem:[%s1 + $0x68] sm:$0xff]
    %v33 = vld [vmem:[%s1 + $0x70] sm:$0xff]
    %v34 = vld [vmem:[%s1 + $0x78] sm:$0xff]
    %v35 = vld [vmem:[%s1 + $0x80] sm:$0xff]
    %v36 = vld [vmem:[%s1 + $0x88] sm:$0xff]
    %v37 = vld [vmem:[%s1 + $0x90] sm:$0xff]
    %v38 = vld [vmem:[%s1 + $0x98] sm:$0xff]
    %v39 = vld [vmem:[%s1 + $0xa0] sm:$0xff]
    %v40 = vld [vmem:[%s1 + $0xa8] sm:$0xff]
    %v41 = vld [vmem:[%s1 + $0xb0] sm:$0xff]
    %v42 = vld [vmem:[%s1 + $0xb8] sm:$0xff]
    %v43 = vld [vmem:[%s1 + $0xc0] sm:$0xff]
    %v44 = vld [vmem:[%s1 + $0xc8] sm:$0xff]
    %v45 = vld [vmem:[%s1 + $0xd0] sm:$0xff]
    %v46 = vld [vmem:[%s1 + $0xd8] sm:$0xff]
    %v47 = vld [vmem:[%s1 + $0xe0] sm:$0xff]
    %v48 = vld [vmem:[%s1 + $0xe8] sm:$0xff]
    %v49 = vld [vmem:[%s1 + $0xf0] sm:$0xff]
    %v50 = vld [vmem:[%s1 + $0xf8] sm:$0xff]
    %v51 = vld [vmem:[%s1 + $0x100] sm:$0xff]
    %v52 = vld [vmem:[%s1 + $0x108] sm:$0xff]
    %v53 = vld [vmem:[%s1 + $0x110] sm:$0xff]
    %v54 = vld [vmem:[%s1 + $0x118] sm:$0xff]
    %v55 = vld [vmem:[%s1 + $0x120] sm:$0xff]
    %v56 = vld [vmem:[%s1 + $0x128] sm:$0xff]
    %v57 = vld [vmem:[%s1 + $0x130] sm:$0xff]
    %v58 = vld [vmem:[%s1 + $0x138] sm:$0xff]
    %v59 = vld [vmem:[%s1 + $0x140] sm:$0xff]
    %v60 = vld [vmem:[%s1 + $0x148] sm:$0xff]
    %v61 = vld [vmem:[%s1 + $0x150] sm:$0xff]
    %v62 = vld [vmem:[%s1 + $0x158] sm:$0xff]
    %v63 = vld [vmem:[%s1 + $0x160] sm:$0xff]
    %v64 = vld [vmem:[%s1 + $0x168] sm:$0xff]
    %v65 = vld [vmem:[%s1 + $0x170] sm:$0xff]
    %v66 = vld [vmem:[%s1 + $0x178] sm:$0xff]
    %v67 = vld [vmem:[%s1 + $0x180] sm:$0xff]
    %v68 = vld [vmem:[%s1 + $0x188] sm:$0xff]
    %v69 = vld [vmem:[%s1 + $0x190] sm:$0xff]
    %v70 = vld [vmem:[%s1 + $0x198] sm:$0xff]
    %v71 = vld [vmem:[%s1 + $0x1a0] sm:$0xff]
    %v72 = vld [vmem:[%s1 + $0x1a8] sm:$0xff]
    %v73 = vld [vmem:[%s1 + $0x1b0] sm:$0xff]
    %v74 = vld [vmem:[%s1 + $0x1b8] sm:$0xff]
    %v75 = vld [vmem:[%s1 + $0x1c0] sm:$0xff]
    %v76 = vld [vmem:[%s1 + $0x1c8] sm:$0xff]
    %v77 = vld [vmem:[%s1 + $0x1d0] sm:$0xff]
    %v78 = vld [vmem:[%s1 + $0x1d8] sm:$0xff]
    %v79 = vld [vmem:[%s1 + $0x1e0] sm:$0xff]
    %v80 = vld [vmem:[%s1 + $0x1e8] sm:$0xff]
    %v81 = vld [vmem:[%s1 + $0x1f0] sm:$0xff]
    %v82 = vld [vmem:[%s1 + $0x1f8] sm:$0xff]
    %v83 = vld [vmem:[%s1 + $0x200] sm:$0xff]
    %v84 = vld [vmem:[%s1 + $0x208] sm:$0xff]
    %v85 = vld [vmem:[%s1 + $0x210] sm:$0xff]
    %v86 = vld [vmem:[%s1 + $0x218] sm:$0xff]
    %v87 = vld [vmem:[%s1 + $0x220] sm:$0xff]
    %v88 = vld [vmem:[%s1 + $0x228] sm:$0xff]
    %v89 = vld [vmem:[%s1 + $0x230] sm:$0xff]
    %v90 = vld [vmem:[%s1 + $0x238] sm:$0xff]
    %v91 = vld [vmem:[%s1 + $0x240] sm:$0xff]
    %v92 = vld [vmem:[%s1 + $0x248] sm:$0xff]
    %v93 = vld [vmem:[%s1 + $0x250] sm:$0xff]
    %v94 = vld [vmem:[%s1 + $0x258] sm:$0xff]
    %v95 = vld [vmem:[%s1 + $0x260] sm:$0xff]
    %v96 = vld [vmem:[%s1 + $0x268] sm:$0xff]
    %v97 = vld [vmem:[%s1 + $0x270] sm:$0xff]
    %v98 = vld [vmem:[%s1 + $0x278] sm:$0xff]
    %v99 = vld [vmem:[%s1 + $0x280] sm:$0xff]
    %v100 = vld [vmem:[%s1 + $0x288] sm:$0xff]
    %v101 = vld [vmem:[%s1 + $0x290] sm:$0xff]
    %v102 = vld [vmem:[%s1 + $0x298] sm:$0xff]
    %v103 = vld [vmem:[%s1 + $0x2a0] sm:$0xff]
    %v104 = vld [vmem:[%s1 + $0x2a8] sm:$0xff]
    %v105 = vld [vmem:[%s1 + $0x2b0] sm:$0xff]
    %v106 = vld [vmem:[%s1 + $0x2b8] sm:$0xff]
    %v107 = vld [vmem:[%s1 + $0x2c0] sm:$0xff]
    %v108 = vld [vmem:[%s1 + $0x2c8] sm:$0xff]
    %v109 = vld [vmem:[%s1 + $0x2d0] sm:$0xff]
    %v110 = vld [vmem:[%s1 + $0x2d8] sm:$0xff]
    %v111 = vld [vmem:[%s1 + $0x2e0] sm:$0xff]
    %v112 = vld [vmem:[%s1 + $0x2e8] sm:$0xff]
    %v113 = vld [vmem:[%s1 + $0x2f0] sm:$0xff]
    %v114 = vld [vmem:[%s1 + $0x2f8] sm:$0xff]
    %v115 = vld [vmem:[%s1 + $0x300] sm:$0xff]
    %v116 = vld [vmem:[%s1 + $0x308] sm:$0xff]
    %v117 = vld [vmem:[%s1 + $0x310] sm:$0xff]
    %v118 = vld [vmem:[%s1 + $0x318] sm:$0xff]
    %v119 = vld [vmem:[%s1 + $0x320] sm:$0xff]
    %v120 = vld [vmem:[%s1 + $0x328] sm:$0xff]
    %v121 = vld [vmem:[%s1 + $0x330] sm:$0xff]
    %v122 = vld [vmem:[%s1 + $0x338] sm:$0xff]
    %v123 = vld [vmem:[%s1 + $0x340] sm:$0xff]
    %v124 = vld [vmem:[%s1 + $0x348] sm:$0xff]
    %v125 = vld [vmem:[%s1 + $0x350] sm:$0xff]
    %v126 = vld [vmem:[%s1 + $0x358] sm:$0xff]
    %v127 = vld [vmem:[%s1 + $0x360] sm:$0xff]
    %v128 = vld [vmem:[%s1 + $0x368] sm:$0xff]
    %v129 = vld [vmem:[%s1 + $0x370] sm:$0xff]
    %v130 = vld [vmem:[%s1 + $0x378] sm:$0xff]
    %v131 = vld [vmem:[%s1 + $0x380] sm:$0xff]
    %v132 = vld [vmem:[%s1 + $0x388] sm:$0xff]
    %v133 = vld [vmem:[%s1 + $0x390] sm:$0xff]
    %v134 = vld [vmem:[%s1 + $0x398] sm:$0xff]
    %v135 = vld [vmem:[%s1 + $0x3a0] sm:$0xff]
    %v136 = vld [vmem:[%s1 + $0x3a8] sm:$0xff]
    %v137 = vld [vmem:[%s1 + $0x3b0] sm:$0xff]
    %v138 = vld [vmem:[%s1 + $0x3b8] sm:$0xff]
    %v139 = vld [vmem:[%s1 + $0x3c0] sm:$0xff]
    %v140 = vld [vmem:[%s1 + $0x3c8] sm:$0xff]
    %v141 = vld [vmem:[%s1 + $0x3d0] sm:$0xff]
    %v142 = vld [vmem:[%s1 + $0x3d8] sm:$0xff]
    %v143 = vld [vmem:[%s1 + $0x3e0] sm:$0xff]
    %v144 = vld [vmem:[%s1 + $0x3e8] sm:$0xff]
    %v145 = vld [vmem:[%s1 + $0x3f0] sm:$0xff]
    %v146 = vld [vmem:[%s1 + $0x3f8] sm:$0xff]
    %v147 = vld [vmem:[%s1 + $0x400] sm:$0xff]
    %v148 = vld [vmem:[%s1 + $0x408] sm:$0xff]
    %v149 = vld [vmem:[%s1 + $0x410] sm:$0xff]
    %v150 = vld [vmem:[%s1 + $0x418] sm:$0xff]
    %v151 = vld [vmem:[%s1 + $0x420] sm:$0xff]
    %v152 = vld [vmem:[%s1 + $0x428] sm:$0xff]
    %v153 = vld [vmem:[%s1 + $0x430] sm:$0xff]
    %v154 = vld [vmem:[%s1 + $0x438] sm:$0xff]
    %v155 = vld [vmem:[%s1 + $0x440] sm:$0xff]
    %v156 = vld [vmem:[%s1 + $0x448] sm:$0xff]
    %v157 = vld [vmem:[%s1 + $0x450] sm:$0xff]
    %v158 = vld [vmem:[%s1 + $0x458] sm:$0xff]
    %v159 = vld [vmem:[%s1 + $0x460] sm:$0xff]
    %v160 = vld [vmem:[%s1 + $0x468] sm:$0xff]
    %v161 = vld [vmem:[%s1 + $0x470] sm:$0xff]
    %v162 = vld [vmem:[%s1 + $0x478] sm:$0xff]
    %v163 = vld [vmem:[%s1 + $0x480] sm:$0xff]
    %v164 = vld [vmem:[%s1 + $0x488] sm:$0xff]
    %v165 = vld [vmem:[%s1 + $0x490] sm:$0xff]
    %v166 = vld [vmem:[%s1 + $0x498] sm:$0xff]
    %v167 = vld [vmem:[%s1 + $0x4a0] sm:$0xff]
    %v168 = vld [vmem:[%s1 + $0x4a8] sm:$0xff]
    %v169 = vld [vmem:[%s1 + $0x4b0] sm:$0xff]
    %v170 = vld [vmem:[%s1 + $0x4b8] sm:$0xff]
    %v171 = vld [vmem:[%s1 + $0x4c0] sm:$0xff]
    %v172 = vld [vmem:[%s1 + $0x4c8] sm:$0xff]
    %v173 = vld [vmem:[%s1 + $0x4d0] sm:$0xff]
    %v174 = vld [vmem:[%s1 + $0x4d8] sm:$0xff]
    %v175 = vld [vmem:[%s1 + $0x4e0] sm:$0xff]
    %v176 = vld [vmem:[%s1 + $0x4e8] sm:$0xff]
    %v177 = vld [vmem:[%s1 + $0x4f0] sm:$0xff]
    %v178 = vld [vmem:[%s1 + $0x4f8] sm:$0xff]
    %v179 = vld [vmem:[%s1 + $0x500] sm:$0xff]
    %v180 = vld [vmem:[%s1 + $0x508] sm:$0xff]
    %v181 = vld [vmem:[%s1 + $0x510] sm:$0xff]
    %v182 = vld [vmem:[%s1 + $0x518] sm:$0xff]
    %v183 = vld [vmem:[%s1 + $0x520] sm:$0xff]
    %v184 = vld [vmem:[%s1 + $0x528] sm:$0xff]
    %v185 = vld [vmem:[%s1 + $0x530] sm:$0xff]
    %v186 = vld [vmem:[%s1 + $0x538] sm:$0xff]
    %v187 = vld [vmem:[%s1 + $0x540] sm:$0xff]
    %v188 = vld [vmem:[%s1 + $0x548] sm:$0xff]
    %v189 = vld [vmem:[%s1 + $0x550] sm:$0xff]
    %v190 = vld [vmem:[%s1 + $0x558] sm:$0xff]
    %v191 = vld [vmem:[%s1 + $0x560] sm:$0xff]
    %v192 = vld [vmem:[%s1 + $0x568] sm:$0xff]
    %v193 = vld [vmem:[%s1 + $0x570] sm:$0xff]
    %v194 = vld [vmem:[%s1 + $0x578] sm:$0xff]
    %v195 = vld [vmem:[%s1 + $0x580] sm:$0xff]
    %v196 = vld [vmem:[%s1 + $0x588] sm:$0xff]
    %v197 = vld [vmem:[%s1 + $0x590] sm:$0xff]
    %v198 = vld [vmem:[%s1 + $0x598] sm:$0xff]
    %v199 = vld [vmem:[%s1 + $0x5a0] sm:$0xff]
    %v200 = vld [vmem:[%s1 + $0x5a8] sm:$0xff]
    %v201 = vld [vmem:[%s1 + $0x5b0] sm:$0xff]
    %v202 = vld [vmem:[%s1 + $0x5b8] sm:$0xff]
    %v203 = vld [vmem:[%s1 + $0x5c0] sm:$0xff]
    %v204 = vld [vmem:[%s1 + $0x5c8] sm:$0xff]
    %v205 = vld [vmem:[%s1 + $0x5d0] sm:$0xff]
    %v206 = vld [vmem:[%s1 + $0x5d8] sm:$0xff]
    %v207 = vld [vmem:[%s1 + $0x5e0] sm:$0xff]
    %v208 = vld [vmem:[%s1 + $0x5e8] sm:$0xff]
    %v209 = vld [vmem:[%s1 + $0x5f0] sm:$0xff]
    %v210 = vld [vmem:[%s1 + $0x5f8] sm:$0xff]
    %v211 = vld [vmem:[%s1 + $0x600] sm:$0xff]
    %v212 = vld [vmem:[%s1 + $0x608] sm:$0xff]
    %v213 = vld [vmem:[%s1 + $0x610] sm:$0xff]
    %v214 = vld [vmem:[%s1 + $0x618] sm:$0xff]
    %v215 = vld [vmem:[%s1 + $0x620] sm:$0xff]
    %v216 = vld [vmem:[%s1 + $0x628] sm:$0xff]
    %v217 = vld [vmem:[%s1 + $0x630] sm:$0xff]
    %v218 = vld [vmem:[%s1 + $0x638] sm:$0xff]
    %v219 = vld [vmem:[%s1 + $0x640] sm:$0xff]
    %v220 = vld [vmem:[%s1 + $0x648] sm:$0xff]
    %v221 = vld [vmem:[%s1 + $0x650] sm:$0xff]
    %v222 = vld [vmem:[%s1 + $0x658] sm:$0xff]
    %v223 = vld [vmem:[%s1 + $0x660] sm:$0xff]
    %v224 = vld [vmem:[%s1 + $0x668] sm:$0xff]
    %v225 = vld [vmem:[%s1 + $0x670] sm:$0xff]
    %v226 = vld [vmem:[%s1 + $0x678] sm:$0xff]
    %v227 = vld [vmem:[%s1 + $0x680] sm:$0xff]
    %v228 = vld [vmem:[%s1 + $0x688] sm:$0xff]
    %v229 = vld [vmem:[%s1 + $0x690] sm:$0xff]
    %v230 = vld [vmem:[%s1 + $0x698] sm:$0xff]
    %v231 = vld [vmem:[%s1 + $0x6a0] sm:$0xff]
    %v232 = vld [vmem:[%s1 + $0x6a8] sm:$0xff]
    %v233 = vld [vmem:[%s1 + $0x6b0] sm:$0xff]
    %v234 = vld [vmem:[%s1 + $0x6b8] sm:$0xff]
    %v235 = vld [vmem:[%s1 + $0x6c0] sm:$0xff]
    %v236 = vld [vmem:[%s1 + $0x6c8] sm:$0xff]
    %v237 = vld [vmem:[%s1 + $0x6d0] sm:$0xff]
    %v238 = vld [vmem:[%s1 + $0x6d8] sm:$0xff]
    %v239 = vld [vmem:[%s1 + $0x6e0] sm:$0xff]
    %v240 = vld [vmem:[%s1 + $0x6e8] sm:$0xff]
    %v241 = vld [vmem:[%s1 + $0x6f0] sm:$0xff]
    %v242 = vld [vmem:[%s1 + $0x6f8] sm:$0xff]
    %v243 = vld [vmem:[%s1 + $0x700] sm:$0xff]
    %v244 = vld [vmem:[%s1 + $0x708] sm:$0xff]
    %v245 = vld [vmem:[%s1 + $0x710] sm:$0xff]
    %v246 = vld [vmem:[%s1 + $0x718] sm:$0xff]
    %v247 = vld [vmem:[%s1 + $0x720] sm:$0xff]
    %v248 = vld [vmem:[%s1 + $0x728] sm:$0xff]
    %v249 = vld [vmem:[%s1 + $0x730] sm:$0xff]
    %v250 = vld [vmem:[%s1 + $0x738] sm:$0xff]
    %v251 = vld [vmem:[%s1 + $0x740] sm:$0xff]
    %v252 = vld [vmem:[%s1 + $0x748] sm:$0xff]
    %v253 = vld [vmem:[%s1 + $0x750] sm:$0xff]
    %v254 = vld [vmem:[%s1 + $0x758] sm:$0xff]
    %v255 = vld [vmem:[%s1 + $0x760] sm:$0xff]
    %v256 = vld [vmem:[%s1 + $0x768] sm:$0xff]
    %v257 = vld [vmem:[%s1 + $0x770] sm:$0xff]
    %v258 = vld [vmem:[%s1 + $0x778] sm:$0xff]
    %v259 = vld [vmem:[%s1 + $0x780] sm:$0xff]
    %v260 = vld [vmem:[%s1 + $0x788] sm:$0xff]
    %v261 = vld [vmem:[%s1 + $0x790] sm:$0xff]
    %v262 = vld [vmem:[%s1 + $0x798] sm:$0xff]
    %v263 = vld [vmem:[%s1 + $0x7a0] sm:$0xff]
    %v264 = vld [vmem:[%s1 + $0x7a8] sm:$0xff]
    %v265 = vld [vmem:[%s1 + $0x7b0] sm:$0xff]
    %v266 = vld [vmem:[%s1 + $0x7b8] sm:$0xff]
    %v267 = vld [vmem:[%s1 + $0x7c0] sm:$0xff]
    %v268 = vld [vmem:[%s1 + $0x7c8] sm:$0xff]
    %v269 = vld [vmem:[%s1 + $0x7d0] sm:$0xff]
    %v270 = vld [vmem:[%s1 + $0x7d8] sm:$0xff]
    %v271 = vld [vmem:[%s1 + $0x7e0] sm:$0xff]
    %v272 = vld [vmem:[%s1 + $0x7e8] sm:$0xff]
    %v273 = vld [vmem:[%s1 + $0x7f0] sm:$0xff]
    %v274 = vld [vmem:[%s1 + $0x7f8] sm:$0xff]
    %v275 = vld [vmem:[%s2] sm:$0x1]
    %v277 = vlaneseq
    %v278 = vshrl.u32 %v277, 7
    %v279 = vsub.s32 0, %v278
    %v280 = vrot.slane %v275, %v279
    %v286 = vcombine.high %v15, %v15
    %v288 = vunpack.c.l.s4 1983009808
    %v289 = vunpack.c.0.s8 %v288
    %v290 = vlaneseq
    %v291 = vshrl.u32 %v290, 7
    %v292 = vsub.s32 %v289, %v291
    %v293 = vrot.slane %v15, %v292
    %v295 = vunpack.c.l.s4 1983009808
    %v296 = vunpack.c.0.s8 %v295
    %v297 = vlaneseq
    %v298 = vshrl.u32 %v297, 7
    %v299 = vsub.s32 %v296, %v298
    %v300 = vrot.slane %v286, %v299
    %v301 = vcombine.high %v293, %v293
    %v302 = vcombine.high %v300, %v300
    %v303 = vcombine.high %v16, %v16
    %v305 = vunpack.c.l.s4 1983009808
    %v306 = vunpack.c.0.s8 %v305
    %v307 = vlaneseq
    %v308 = vshrl.u32 %v307, 7
    %v309 = vsub.s32 %v306, %v308
    %v310 = vrot.slane %v16, %v309
    %v312 = vunpack.c.l.s4 1983009808
    %v313 = vunpack.c.0.s8 %v312
    %v314 = vlaneseq
    %v315 = vshrl.u32 %v314, 7
    %v316 = vsub.s32 %v313, %v315
    %v317 = vrot.slane %v303, %v316
    %v318 = vcombine.high %v310, %v310
    %v319 = vcombine.high %v317, %v317
    %v320 = vcombine.high %v17, %v17
    %v322 = vunpack.c.l.s4 1983009808
    %v323 = vunpack.c.0.s8 %v322
    %v324 = vlaneseq
    %v325 = vshrl.u32 %v324, 7
    %v326 = vsub.s32 %v323, %v325
    %v327 = vrot.slane %v17, %v326
    %v329 = vunpack.c.l.s4 1983009808
    %v330 = vunpack.c.0.s8 %v329
    %v331 = vlaneseq
    %v332 = vshrl.u32 %v331, 7
    %v333 = vsub.s32 %v330, %v332
    %v334 = vrot.slane %v320, %v333
    %v335 = vcombine.high %v327, %v327
    %v336 = vcombine.high %v334, %v334
    %v337 = vcombine.high %v18, %v18
    %v339 = vunpack.c.l.s4 1983009808
    %v340 = vunpack.c.0.s8 %v339
    %v341 = vlaneseq
    %v342 = vshrl.u32 %v341, 7
    %v343 = vsub.s32 %v340, %v342
    %v344 = vrot.slane %v18, %v343
    %v346 = vunpack.c.l.s4 1983009808
    %v347 = vunpack.c.0.s8 %v346
    %v348 = vlaneseq
    %v349 = vshrl.u32 %v348, 7
    %v350 = vsub.s32 %v347, %v349
    %v351 = vrot.slane %v337, %v350
    %v352 = vcombine.high %v344, %v344
    %v353 = vcombine.high %v351, %v351
    %370 = vmatprep.subr.mxu0 0.0
    %371 = vmatpush1.msra.mxu0 %v19
    %372 = vmatprep.subr.mxu0 0.0
    %373 = vmatpush1.msra.mxu0 %v20
    %374 = vmatprep.subr.mxu0 0.0
    %375 = vmatpush1.msra.mxu0 %v21
    %376 = vmatprep.subr.mxu0 0.0
    %377 = vmatpush1.msra.mxu0 %v22
    %378 = vmatprep.subr.mxu0 0.0
    %379 = vmatpush1.msra.mxu0 %v23
    %380 = vmatprep.subr.mxu0 0.0
    %381 = vmatpush1.msra.mxu0 %v24
    %382 = vmatprep.subr.mxu0 0.0
    %383 = vmatpush1.msra.mxu0 %v25
    %384 = vmatprep.subr.mxu0 0.0
    %385 = vmatpush1.msra.mxu0 %v26
    %386 = vmatprep.subr.mxu0 0.0
    %387 = vmatpush1.msra.mxu0 %v27
    %388 = vmatprep.subr.mxu0 0.0
    %389 = vmatpush1.msra.mxu0 %v28
    %390 = vmatprep.subr.mxu0 0.0
    %391 = vmatpush1.msra.mxu0 %v29
    %392 = vmatprep.subr.mxu0 0.0
    %393 = vmatpush1.msra.mxu0 %v30
    %394 = vmatprep.subr.mxu0 0.0
    %395 = vmatpush1.msra.mxu0 %v31
    %396 = vmatprep.subr.mxu0 0.0
    %397 = vmatpush1.msra.mxu0 %v32
    %398 = vmatprep.subr.mxu0 0.0
    %399 = vmatpush1.msra.mxu0 %v33
    %400 = vmatprep.subr.mxu0 0.0
    %401 = vmatpush1.msra.mxu0 %v34
    %402 = vmatprep.subr.mxu0 0.0
    %403 = vmatpush1.msra.mxu0 %v35
    %404 = vmatprep.subr.mxu0 0.0
    %405 = vmatpush1.msra.mxu0 %v36
    %406 = vmatprep.subr.mxu0 0.0
    %407 = vmatpush1.msra.mxu0 %v37
    %408 = vmatprep.subr.mxu0 0.0
    %409 = vmatpush1.msra.mxu0 %v38
    %410 = vmatprep.subr.mxu0 0.0
    %411 = vmatpush1.msra.mxu0 %v39
    %412 = vmatprep.subr.mxu0 0.0
    %413 = vmatpush1.msra.mxu0 %v40
    %414 = vmatprep.subr.mxu0 0.0
    %415 = vmatpush1.msra.mxu0 %v41
    %416 = vmatprep.subr.mxu0 0.0
    %417 = vmatpush1.msra.mxu0 %v42
    %418 = vmatprep.subr.mxu0 0.0
    %419 = vmatpush1.msra.mxu0 %v43
    %420 = vmatprep.subr.mxu0 0.0
    %421 = vmatpush1.msra.mxu0 %v44
    %422 = vmatprep.subr.mxu0 0.0
    %423 = vmatpush1.msra.mxu0 %v45
    %424 = vmatprep.subr.mxu0 0.0
    %425 = vmatpush1.msra.mxu0 %v46
    %426 = vmatprep.subr.mxu0 0.0
    %427 = vmatpush1.msra.mxu0 %v47
    %428 = vmatprep.subr.mxu0 0.0
    %429 = vmatpush1.msra.mxu0 %v48
    %430 = vmatprep.subr.mxu0 0.0
    %431 = vmatpush1.msra.mxu0 %v49
    %432 = vmatprep.subr.mxu0 0.0
    %433 = vmatpush1.msra.mxu0 %v50
    %434 = vmatprep.mubr.f32.mxu0 %v301
    %435 = vmatmul.mubr.f32.gmra.mrb[0].mxu0 %v293
    %v436 = vpop.f32.mrb[0].mxu0
    %v437 = vadd.f32 %v280, %v436
    %v438 = vpop.f32.mrb[0].mxu0
    %439 = vdwg.mxu0
    %440 = vmatprep.subr.mxu0 0.0
    %441 = vmatpush1.msra.mxu0 %v51
    %442 = vmatprep.subr.mxu0 0.0
    %443 = vmatpush1.msra.mxu0 %v52
    %444 = vmatprep.subr.mxu0 0.0
    %445 = vmatpush1.msra.mxu0 %v53
    %446 = vmatprep.subr.mxu0 0.0
    %447 = vmatpush1.msra.mxu0 %v54
    %448 = vmatprep.subr.mxu0 0.0
    %449 = vmatpush1.msra.mxu0 %v55
    %450 = vmatprep.subr.mxu0 0.0
    %451 = vmatpush1.msra.mxu0 %v56
    %452 = vmatprep.subr.mxu0 0.0
    %453 = vmatpush1.msra.mxu0 %v57
    %454 = vmatprep.subr.mxu0 0.0
    %455 = vmatpush1.msra.mxu0 %v58
    %456 = vmatprep.subr.mxu0 0.0
    %457 = vmatpush1.msra.mxu0 %v59
    %458 = vmatprep.subr.mxu0 0.0
    %459 = vmatpush1.msra.mxu0 %v60
    %460 = vmatprep.subr.mxu0 0.0
    %461 = vmatpush1.msra.mxu0 %v61
    %462 = vmatprep.subr.mxu0 0.0
    %463 = vmatpush1.msra.mxu0 %v62
    %464 = vmatprep.subr.mxu0 0.0
    %465 = vmatpush1.msra.mxu0 %v63
    %466 = vmatprep.subr.mxu0 0.0
    %467 = vmatpush1.msra.mxu0 %v64
    %468 = vmatprep.subr.mxu0 0.0
    %469 = vmatpush1.msra.mxu0 %v65
    %470 = vmatprep.subr.mxu0 0.0
    %471 = vmatpush1.msra.mxu0 %v66
    %472 = vmatprep.subr.mxu0 0.0
    %473 = vmatpush1.msra.mxu0 %v67
    %474 = vmatprep.subr.mxu0 0.0
    %475 = vmatpush1.msra.mxu0 %v68
    %476 = vmatprep.subr.mxu0 0.0
    %477 = vmatpush1.msra.mxu0 %v69
    %478 = vmatprep.subr.mxu0 0.0
    %479 = vmatpush1.msra.mxu0 %v70
    %480 = vmatprep.subr.mxu0 0.0
    %481 = vmatpush1.msra.mxu0 %v71
    %482 = vmatprep.subr.mxu0 0.0
    %483 = vmatpush1.msra.mxu0 %v72
    %484 = vmatprep.subr.mxu0 0.0
    %485 = vmatpush1.msra.mxu0 %v73
    %486 = vmatprep.subr.mxu0 0.0
    %487 = vmatpush1.msra.mxu0 %v74
    %488 = vmatprep.subr.mxu0 0.0
    %489 = vmatpush1.msra.mxu0 %v75
    %490 = vmatprep.subr.mxu0 0.0
    %491 = vmatpush1.msra.mxu0 %v76
    %492 = vmatprep.subr.mxu0 0.0
    %493 = vmatpush1.msra.mxu0 %v77
    %494 = vmatprep.subr.mxu0 0.0
    %495 = vmatpush1.msra.mxu0 %v78
    %496 = vmatprep.subr.mxu0 0.0
    %497 = vmatpush1.msra.mxu0 %v79
    %498 = vmatprep.subr.mxu0 0.0
    %499 = vmatpush1.msra.mxu0 %v80
    %500 = vmatprep.subr.mxu0 0.0
    %501 = vmatpush1.msra.mxu0 %v81
    %502 = vmatprep.subr.mxu0 0.0
    %503 = vmatpush1.msra.mxu0 %v82
    %504 = vmatprep.mubr.f32.mxu0 %v302
    %505 = vmatmul.mubr.f32.gmra.mrb[0].mxu0 %v300
    %v506 = vpop.f32.mrb[0].mxu0
    %v507 = vadd.f32 %v437, %v506
    %v508 = vpop.f32.mrb[0].mxu0
    %509 = vdwg.mxu0
    %510 = vmatprep.subr.mxu0 0.0
    %511 = vmatpush1.msra.mxu0 %v83
    %512 = vmatprep.subr.mxu0 0.0
    %513 = vmatpush1.msra.mxu0 %v84
    %514 = vmatprep.subr.mxu0 0.0
    %515 = vmatpush1.msra.mxu0 %v85
    %516 = vmatprep.subr.mxu0 0.0
    %517 = vmatpush1.msra.mxu0 %v86
    %518 = vmatprep.subr.mxu0 0.0
    %519 = vmatpush1.msra.mxu0 %v87
    %520 = vmatprep.subr.mxu0 0.0
    %521 = vmatpush1.msra.mxu0 %v88
    %522 = vmatprep.subr.mxu0 0.0
    %523 = vmatpush1.msra.mxu0 %v89
    %524 = vmatprep.subr.mxu0 0.0
    %525 = vmatpush1.msra.mxu0 %v90
    %526 = vmatprep.subr.mxu0 0.0
    %527 = vmatpush1.msra.mxu0 %v91
    %528 = vmatprep.subr.mxu0 0.0
    %529 = vmatpush1.msra.mxu0 %v92
    %530 = vmatprep.subr.mxu0 0.0
    %531 = vmatpush1.msra.mxu0 %v93
    %532 = vmatprep.subr.mxu0 0.0
    %533 = vmatpush1.msra.mxu0 %v94
    %534 = vmatprep.subr.mxu0 0.0
    %535 = vmatpush1.msra.mxu0 %v95
    %536 = vmatprep.subr.mxu0 0.0
    %537 = vmatpush1.msra.mxu0 %v96
    %538 = vmatprep.subr.mxu0 0.0
    %539 = vmatpush1.msra.mxu0 %v97
    %540 = vmatprep.subr.mxu0 0.0
    %541 = vmatpush1.msra.mxu0 %v98
    %542 = vmatprep.subr.mxu0 0.0
    %543 = vmatpush1.msra.mxu0 %v99
    %544 = vmatprep.subr.mxu0 0.0
    %545 = vmatpush1.msra.mxu0 %v100
    %546 = vmatprep.subr.mxu0 0.0
    %547 = vmatpush1.msra.mxu0 %v101
    %548 = vmatprep.subr.mxu0 0.0
    %549 = vmatpush1.msra.mxu0 %v102
    %550 = vmatprep.subr.mxu0 0.0
    %551 = vmatpush1.msra.mxu0 %v103
    %552 = vmatprep.subr.mxu0 0.0
    %553 = vmatpush1.msra.mxu0 %v104
    %554 = vmatprep.subr.mxu0 0.0
    %555 = vmatpush1.msra.mxu0 %v105
    %556 = vmatprep.subr.mxu0 0.0
    %557 = vmatpush1.msra.mxu0 %v106
    %558 = vmatprep.subr.mxu0 0.0
    %559 = vmatpush1.msra.mxu0 %v107
    %560 = vmatprep.subr.mxu0 0.0
    %561 = vmatpush1.msra.mxu0 %v108
    %562 = vmatprep.subr.mxu0 0.0
    %563 = vmatpush1.msra.mxu0 %v109
    %564 = vmatprep.subr.mxu0 0.0
    %565 = vmatpush1.msra.mxu0 %v110
    %566 = vmatprep.subr.mxu0 0.0
    %567 = vmatpush1.msra.mxu0 %v111
    %568 = vmatprep.subr.mxu0 0.0
    %569 = vmatpush1.msra.mxu0 %v112
    %570 = vmatprep.subr.mxu0 0.0
    %571 = vmatpush1.msra.mxu0 %v113
    %572 = vmatprep.subr.mxu0 0.0
    %573 = vmatpush1.msra.mxu0 %v114
    %574 = vmatprep.mubr.f32.mxu0 %v318
    %575 = vmatmul.mubr.f32.gmra.mrb[0].mxu0 %v310
    %v576 = vpop.f32.mrb[0].mxu0
    %v577 = vadd.f32 %v507, %v576
    %v578 = vpop.f32.mrb[0].mxu0
    %579 = vdwg.mxu0
    %580 = vmatprep.subr.mxu0 0.0
    %581 = vmatpush1.msra.mxu0 %v115
    %582 = vmatprep.subr.mxu0 0.0
    %583 = vmatpush1.msra.mxu0 %v116
    %584 = vmatprep.subr.mxu0 0.0
    %585 = vmatpush1.msra.mxu0 %v117
    %586 = vmatprep.subr.mxu0 0.0
    %587 = vmatpush1.msra.mxu0 %v118
    %588 = vmatprep.subr.mxu0 0.0
    %589 = vmatpush1.msra.mxu0 %v119
    %590 = vmatprep.subr.mxu0 0.0
    %591 = vmatpush1.msra.mxu0 %v120
    %592 = vmatprep.subr.mxu0 0.0
    %593 = vmatpush1.msra.mxu0 %v121
    %594 = vmatprep.subr.mxu0 0.0
    %595 = vmatpush1.msra.mxu0 %v122
    %596 = vmatprep.subr.mxu0 0.0
    %597 = vmatpush1.msra.mxu0 %v123
    %598 = vmatprep.subr.mxu0 0.0
    %599 = vmatpush1.msra.mxu0 %v124
    %600 = vmatprep.subr.mxu0 0.0
    %601 = vmatpush1.msra.mxu0 %v125
    %602 = vmatprep.subr.mxu0 0.0
    %603 = vmatpush1.msra.mxu0 %v126
    %604 = vmatprep.subr.mxu0 0.0
    %605 = vmatpush1.msra.mxu0 %v127
    %606 = vmatprep.subr.mxu0 0.0
    %607 = vmatpush1.msra.mxu0 %v128
    %608 = vmatprep.subr.mxu0 0.0
    %609 = vmatpush1.msra.mxu0 %v129
    %610 = vmatprep.subr.mxu0 0.0
    %611 = vmatpush1.msra.mxu0 %v130
    %612 = vmatprep.subr.mxu0 0.0
    %613 = vmatpush1.msra.mxu0 %v131
    %614 = vmatprep.subr.mxu0 0.0
    %615 = vmatpush1.msra.mxu0 %v132
    %616 = vmatprep.subr.mxu0 0.0
    %617 = vmatpush1.msra.mxu0 %v133
    %618 = vmatprep.subr.mxu0 0.0
    %619 = vmatpush1.msra.mxu0 %v134
    %620 = vmatprep.subr.mxu0 0.0
    %621 = vmatpush1.msra.mxu0 %v135
    %622 = vmatprep.subr.mxu0 0.0
    %623 = vmatpush1.msra.mxu0 %v136
    %624 = vmatprep.subr.mxu0 0.0
    %625 = vmatpush1.msra.mxu0 %v137
    %626 = vmatprep.subr.mxu0 0.0
    %627 = vmatpush1.msra.mxu0 %v138
    %628 = vmatprep.subr.mxu0 0.0
    %629 = vmatpush1.msra.mxu0 %v139
    %630 = vmatprep.subr.mxu0 0.0
    %631 = vmatpush1.msra.mxu0 %v140
    %632 = vmatprep.subr.mxu0 0.0
    %633 = vmatpush1.msra.mxu0 %v141
    %634 = vmatprep.subr.mxu0 0.0
    %635 = vmatpush1.msra.mxu0 %v142
    %636 = vmatprep.subr.mxu0 0.0
    %637 = vmatpush1.msra.mxu0 %v143
    %638 = vmatprep.subr.mxu0 0.0
    %639 = vmatpush1.msra.mxu0 %v144
    %640 = vmatprep.subr.mxu0 0.0
    %641 = vmatpush1.msra.mxu0 %v145
    %642 = vmatprep.subr.mxu0 0.0
    %643 = vmatpush1.msra.mxu0 %v146
    %644 = vmatprep.mubr.f32.mxu0 %v319
    %645 = vmatmul.mubr.f32.gmra.mrb[0].mxu0 %v317
    %v646 = vpop.f32.mrb[0].mxu0
    %v647 = vadd.f32 %v577, %v646
    %v648 = vpop.f32.mrb[0].mxu0
    %649 = vdwg.mxu0
    %650 = vmatprep.subr.mxu0 0.0
    %651 = vmatpush1.msra.mxu0 %v147
    %652 = vmatprep.subr.mxu0 0.0
    %653 = vmatpush1.msra.mxu0 %v148
    %654 = vmatprep.subr.mxu0 0.0
    %655 = vmatpush1.msra.mxu0 %v149
    %656 = vmatprep.subr.mxu0 0.0
    %657 = vmatpush1.msra.mxu0 %v150
    %658 = vmatprep.subr.mxu0 0.0
    %659 = vmatpush1.msra.mxu0 %v151
    %660 = vmatprep.subr.mxu0 0.0
    %661 = vmatpush1.msra.mxu0 %v152
    %662 = vmatprep.subr.mxu0 0.0
    %663 = vmatpush1.msra.mxu0 %v153
    %664 = vmatprep.subr.mxu0 0.0
    %665 = vmatpush1.msra.mxu0 %v154
    %666 = vmatprep.subr.mxu0 0.0
    %667 = vmatpush1.msra.mxu0 %v155
    %668 = vmatprep.subr.mxu0 0.0
    %669 = vmatpush1.msra.mxu0 %v156
    %670 = vmatprep.subr.mxu0 0.0
    %671 = vmatpush1.msra.mxu0 %v157
    %672 = vmatprep.subr.mxu0 0.0
    %673 = vmatpush1.msra.mxu0 %v158
    %674 = vmatprep.subr.mxu0 0.0
    %675 = vmatpush1.msra.mxu0 %v159
    %676 = vmatprep.subr.mxu0 0.0
    %677 = vmatpush1.msra.mxu0 %v160
    %678 = vmatprep.subr.mxu0 0.0
    %679 = vmatpush1.msra.mxu0 %v161
    %680 = vmatprep.subr.mxu0 0.0
    %681 = vmatpush1.msra.mxu0 %v162
    %682 = vmatprep.subr.mxu0 0.0
    %683 = vmatpush1.msra.mxu0 %v163
    %684 = vmatprep.subr.mxu0 0.0
    %685 = vmatpush1.msra.mxu0 %v164
    %686 = vmatprep.subr.mxu0 0.0
    %687 = vmatpush1.msra.mxu0 %v165
    %688 = vmatprep.subr.mxu0 0.0
    %689 = vmatpush1.msra.mxu0 %v166
    %690 = vmatprep.subr.mxu0 0.0
    %691 = vmatpush1.msra.mxu0 %v167
    %692 = vmatprep.subr.mxu0 0.0
    %693 = vmatpush1.msra.mxu0 %v168
    %694 = vmatprep.subr.mxu0 0.0
    %695 = vmatpush1.msra.mxu0 %v169
    %696 = vmatprep.subr.mxu0 0.0
    %697 = vmatpush1.msra.mxu0 %v170
    %698 = vmatprep.subr.mxu0 0.0
    %699 = vmatpush1.msra.mxu0 %v171
    %700 = vmatprep.subr.mxu0 0.0
    %701 = vmatpush1.msra.mxu0 %v172
    %702 = vmatprep.subr.mxu0 0.0
    %703 = vmatpush1.msra.mxu0 %v173
    %704 = vmatprep.subr.mxu0 0.0
    %705 = vmatpush1.msra.mxu0 %v174
    %706 = vmatprep.subr.mxu0 0.0
    %707 = vmatpush1.msra.mxu0 %v175
    %708 = vmatprep.subr.mxu0 0.0
    %709 = vmatpush1.msra.mxu0 %v176
    %710 = vmatprep.subr.mxu0 0.0
    %711 = vmatpush1.msra.mxu0 %v177
    %712 = vmatprep.subr.mxu0 0.0
    %713 = vmatpush1.msra.mxu0 %v178
    %714 = vmatprep.mubr.f32.mxu0 %v335
    %715 = vmatmul.mubr.f32.gmra.mrb[0].mxu0 %v327
    %v716 = vpop.f32.mrb[0].mxu0
    %v717 = vadd.f32 %v647, %v716
    %v718 = vpop.f32.mrb[0].mxu0
    %719 = vdwg.mxu0
    %720 = vmatprep.subr.mxu0 0.0
    %721 = vmatpush1.msra.mxu0 %v179
    %722 = vmatprep.subr.mxu0 0.0
    %723 = vmatpush1.msra.mxu0 %v180
    %724 = vmatprep.subr.mxu0 0.0
    %725 = vmatpush1.msra.mxu0 %v181
    %726 = vmatprep.subr.mxu0 0.0
    %727 = vmatpush1.msra.mxu0 %v182
    %728 = vmatprep.subr.mxu0 0.0
    %729 = vmatpush1.msra.mxu0 %v183
    %730 = vmatprep.subr.mxu0 0.0
    %731 = vmatpush1.msra.mxu0 %v184
    %732 = vmatprep.subr.mxu0 0.0
    %733 = vmatpush1.msra.mxu0 %v185
    %734 = vmatprep.subr.mxu0 0.0
    %735 = vmatpush1.msra.mxu0 %v186
    %736 = vmatprep.subr.mxu0 0.0
    %737 = vmatpush1.msra.mxu0 %v187
    %738 = vmatprep.subr.mxu0 0.0
    %739 = vmatpush1.msra.mxu0 %v188
    %740 = vmatprep.subr.mxu0 0.0
    %741 = vmatpush1.msra.mxu0 %v189
    %742 = vmatprep.subr.mxu0 0.0
    %743 = vmatpush1.msra.mxu0 %v190
    %744 = vmatprep.subr.mxu0 0.0
    %745 = vmatpush1.msra.mxu0 %v191
    %746 = vmatprep.subr.mxu0 0.0
    %747 = vmatpush1.msra.mxu0 %v192
    %748 = vmatprep.subr.mxu0 0.0
    %749 = vmatpush1.msra.mxu0 %v193
    %750 = vmatprep.subr.mxu0 0.0
    %751 = vmatpush1.msra.mxu0 %v194
    %752 = vmatprep.subr.mxu0 0.0
    %753 = vmatpush1.msra.mxu0 %v195
    %754 = vmatprep.subr.mxu0 0.0
    %755 = vmatpush1.msra.mxu0 %v196
    %756 = vmatprep.subr.mxu0 0.0
    %757 = vmatpush1.msra.mxu0 %v197
    %758 = vmatprep.subr.mxu0 0.0
    %759 = vmatpush1.msra.mxu0 %v198
    %760 = vmatprep.subr.mxu0 0.0
    %761 = vmatpush1.msra.mxu0 %v199
    %762 = vmatprep.subr.mxu0 0.0
    %763 = vmatpush1.msra.mxu0 %v200
    %764 = vmatprep.subr.mxu0 0.0
    %765 = vmatpush1.msra.mxu0 %v201
    %766 = vmatprep.subr.mxu0 0.0
    %767 = vmatpush1.msra.mxu0 %v202
    %768 = vmatprep.subr.mxu0 0.0
    %769 = vmatpush1.msra.mxu0 %v203
    %770 = vmatprep.subr.mxu0 0.0
    %771 = vmatpush1.msra.mxu0 %v204
    %772 = vmatprep.subr.mxu0 0.0
    %773 = vmatpush1.msra.mxu0 %v205
    %774 = vmatprep.subr.mxu0 0.0
    %775 = vmatpush1.msra.mxu0 %v206
    %776 = vmatprep.subr.mxu0 0.0
    %777 = vmatpush1.msra.mxu0 %v207
    %778 = vmatprep.subr.mxu0 0.0
    %779 = vmatpush1.msra.mxu0 %v208
    %780 = vmatprep.subr.mxu0 0.0
    %781 = vmatpush1.msra.mxu0 %v209
    %782 = vmatprep.subr.mxu0 0.0
    %783 = vmatpush1.msra.mxu0 %v210
    %784 = vmatprep.mubr.f32.mxu0 %v336
    %785 = vmatmul.mubr.f32.gmra.mrb[0].mxu0 %v334
    %v786 = vpop.f32.mrb[0].mxu0
    %v787 = vadd.f32 %v717, %v786
    %v788 = vpop.f32.mrb[0].mxu0
    %789 = vdwg.mxu0
    %790 = vmatprep.subr.mxu0 0.0
    %791 = vmatpush1.msra.mxu0 %v211
    %792 = vmatprep.subr.mxu0 0.0
    %793 = vmatpush1.msra.mxu0 %v212
    %794 = vmatprep.subr.mxu0 0.0
    %795 = vmatpush1.msra.mxu0 %v213
    %796 = vmatprep.subr.mxu0 0.0
    %797 = vmatpush1.msra.mxu0 %v214
    %798 = vmatprep.subr.mxu0 0.0
    %799 = vmatpush1.msra.mxu0 %v215
    %800 = vmatprep.subr.mxu0 0.0
    %801 = vmatpush1.msra.mxu0 %v216
    %802 = vmatprep.subr.mxu0 0.0
    %803 = vmatpush1.msra.mxu0 %v217
    %804 = vmatprep.subr.mxu0 0.0
    %805 = vmatpush1.msra.mxu0 %v218
    %806 = vmatprep.subr.mxu0 0.0
    %807 = vmatpush1.msra.mxu0 %v219
    %808 = vmatprep.subr.mxu0 0.0
    %809 = vmatpush1.msra.mxu0 %v220
    %810 = vmatprep.subr.mxu0 0.0
    %811 = vmatpush1.msra.mxu0 %v221
    %812 = vmatprep.subr.mxu0 0.0
    %813 = vmatpush1.msra.mxu0 %v222
    %814 = vmatprep.subr.mxu0 0.0
    %815 = vmatpush1.msra.mxu0 %v223
    %816 = vmatprep.subr.mxu0 0.0
    %817 = vmatpush1.msra.mxu0 %v224
    %818 = vmatprep.subr.mxu0 0.0
    %819 = vmatpush1.msra.mxu0 %v225
    %820 = vmatprep.subr.mxu0 0.0
    %821 = vmatpush1.msra.mxu0 %v226
    %822 = vmatprep.subr.mxu0 0.0
    %823 = vmatpush1.msra.mxu0 %v227
    %824 = vmatprep.subr.mxu0 0.0
    %825 = vmatpush1.msra.mxu0 %v228
    %826 = vmatprep.subr.mxu0 0.0
    %827 = vmatpush1.msra.mxu0 %v229
    %828 = vmatprep.subr.mxu0 0.0
    %829 = vmatpush1.msra.mxu0 %v230
    %830 = vmatprep.subr.mxu0 0.0
    %831 = vmatpush1.msra.mxu0 %v231
    %832 = vmatprep.subr.mxu0 0.0
    %833 = vmatpush1.msra.mxu0 %v232
    %834 = vmatprep.subr.mxu0 0.0
    %835 = vmatpush1.msra.mxu0 %v233
    %836 = vmatprep.subr.mxu0 0.0
    %837 = vmatpush1.msra.mxu0 %v234
    %838 = vmatprep.subr.mxu0 0.0
    %839 = vmatpush1.msra.mxu0 %v235
    %840 = vmatprep.subr.mxu0 0.0
    %841 = vmatpush1.msra.mxu0 %v236
    %842 = vmatprep.subr.mxu0 0.0
    %843 = vmatpush1.msra.mxu0 %v237
    %844 = vmatprep.subr.mxu0 0.0
    %845 = vmatpush1.msra.mxu0 %v238
    %846 = vmatprep.subr.mxu0 0.0
    %847 = vmatpush1.msra.mxu0 %v239
    %848 = vmatprep.subr.mxu0 0.0
    %849 = vmatpush1.msra.mxu0 %v240
    %850 = vmatprep.subr.mxu0 0.0
    %851 = vmatpush1.msra.mxu0 %v241
    %852 = vmatprep.subr.mxu0 0.0
    %853 = vmatpush1.msra.mxu0 %v242
    %854 = vmatprep.mubr.f32.mxu0 %v352
    %855 = vmatmul.mubr.f32.gmra.mrb[0].mxu0 %v344
    %v856 = vpop.f32.mrb[0].mxu0
    %v857 = vadd.f32 %v787, %v856
    %v858 = vpop.f32.mrb[0].mxu0
    %859 = vdwg.mxu0
    %860 = vmatprep.subr.mxu0 0.0
    %861 = vmatpush1.msra.mxu0 %v243
    %862 = vmatprep.subr.mxu0 0.0
    %863 = vmatpush1.msra.mxu0 %v244
    %864 = vmatprep.subr.mxu0 0.0
    %865 = vmatpush1.msra.mxu0 %v245
    %866 = vmatprep.subr.mxu0 0.0
    %867 = vmatpush1.msra.mxu0 %v246
    %868 = vmatprep.subr.mxu0 0.0
    %869 = vmatpush1.msra.mxu0 %v247
    %870 = vmatprep.subr.mxu0 0.0
    %871 = vmatpush1.msra.mxu0 %v248
    %872 = vmatprep.subr.mxu0 0.0
    %873 = vmatpush1.msra.mxu0 %v249
    %874 = vmatprep.subr.mxu0 0.0
    %875 = vmatpush1.msra.mxu0 %v250
    %876 = vmatprep.subr.mxu0 0.0
    %877 = vmatpush1.msra.mxu0 %v251
    %878 = vmatprep.subr.mxu0 0.0
    %879 = vmatpush1.msra.mxu0 %v252
    %880 = vmatprep.subr.mxu0 0.0
    %881 = vmatpush1.msra.mxu0 %v253
    %882 = vmatprep.subr.mxu0 0.0
    %883 = vmatpush1.msra.mxu0 %v254
    %884 = vmatprep.subr.mxu0 0.0
    %885 = vmatpush1.msra.mxu0 %v255
    %886 = vmatprep.subr.mxu0 0.0
    %887 = vmatpush1.msra.mxu0 %v256
    %888 = vmatprep.subr.mxu0 0.0
    %889 = vmatpush1.msra.mxu0 %v257
    %890 = vmatprep.subr.mxu0 0.0
    %891 = vmatpush1.msra.mxu0 %v258
    %892 = vmatprep.subr.mxu0 0.0
    %893 = vmatpush1.msra.mxu0 %v259
    %894 = vmatprep.subr.mxu0 0.0
    %895 = vmatpush1.msra.mxu0 %v260
    %896 = vmatprep.subr.mxu0 0.0
    %897 = vmatpush1.msra.mxu0 %v261
    %898 = vmatprep.subr.mxu0 0.0
    %899 = vmatpush1.msra.mxu0 %v262
    %900 = vmatprep.subr.mxu0 0.0
    %901 = vmatpush1.msra.mxu0 %v263
    %902 = vmatprep.subr.mxu0 0.0
    %903 = vmatpush1.msra.mxu0 %v264
    %904 = vmatprep.subr.mxu0 0.0
    %905 = vmatpush1.msra.mxu0 %v265
    %906 = vmatprep.subr.mxu0 0.0
    %907 = vmatpush1.msra.mxu0 %v266
    %908 = vmatprep.subr.mxu0 0.0
    %909 = vmatpush1.msra.mxu0 %v267
    %910 = vmatprep.subr.mxu0 0.0
    %911 = vmatpush1.msra.mxu0 %v268
    %912 = vmatprep.subr.mxu0 0.0
    %913 = vmatpush1.msra.mxu0 %v269
    %914 = vmatprep.subr.mxu0 0.0
    %915 = vmatpush1.msra.mxu0 %v270
    %916 = vmatprep.subr.mxu0 0.0
    %917 = vmatpush1.msra.mxu0 %v271
    %918 = vmatprep.subr.mxu0 0.0
    %919 = vmatpush1.msra.mxu0 %v272
    %920 = vmatprep.subr.mxu0 0.0
    %921 = vmatpush1.msra.mxu0 %v273
    %922 = vmatprep.subr.mxu0 0.0
    %923 = vmatpush1.msra.mxu0 %v274
    %924 = vmatprep.mubr.f32.mxu0 %v353
    %925 = vmatmul.mubr.f32.gmra.mrb[0].mxu0 %v351
    %v926 = vpop.f32.mrb[0].mxu0
    %v927 = vadd.f32 %v857, %v926
    %v928 = vpop.f32.mrb[0].mxu0
    %929 = vdwg.mxu0
    %vm930 = vcmask 74752
    %931 = vst.msk [vmem:[#allocation2] sm:$0x3] %vm930, %v927
    // Predicated region
    $region14: #{cnn_forward.5} parent=1 // pred_check
      _
    $region15: #{cnn_forward.5} parent=1 // pred_check_branch
      %933 = sbr.rel (0) target = $region17
    $region16: #{cnn_forward.5} parent=1 // pred_region
      %s935 = ssub.s32 32, 32
      %936 = vsyncadd [#allocation3], %s935
      %s938 = sshll.u32 [#allocation2], 4
      %s939 = int_to_ptr.vmem [resolvable:$true] %s938
      %941 = dma.vmem_to_hbm [thread:$0]  %s939, 32, %s3, [#allocation3]
    $region17: #{cnn_forward.5} parent=1 // pred_fallthru
      _
    // Predicated region
    $region18: #{cnn_forward.5} parent=1 // pred_check
      _
    $region19: #{cnn_forward.5} parent=1 // pred_check_branch
      %943 = sbr.rel (0) target = $region21
    $region20: #{cnn_forward.5} parent=1 // pred_region
      %944 = dma.done [#allocation3], 32
    $region21: #{cnn_forward.5} parent=1 // pred_fallthru
      _
    %945 = vsyncpa [#allocation3], 1

</llo_original>
